<compile_context>
chip_gen: v7x
topology: tpu7x:2x2x1
jax: 0.10.0
libtpu: 0.0.40
codegen_flags: <defaults>
</compile_context>

<pallas_src>
import jax
import jax.numpy as jnp
from jax.experimental import pallas as pl
from jax.experimental.pallas import tpu as pltpu

# ----------------------- model hyper-parameters (from __init__) ---------------
PATCH_FEAT_DIM = 1088
TIME_DIM = 32
POS_DIM = 32
COMBINED_DIM = PATCH_FEAT_DIM + POS_DIM + TIME_DIM  # 1088 + 32 + 32 = 1152
GNN_HIDDEN = 32 * 8                                 # 256
GNN_HEADS = 8
HEAD_DIM_12 = GNN_HIDDEN // GNN_HEADS               # 32   (gnn layers 1 & 2)
HEAD_DIM_3 = COMBINED_DIM // GNN_HEADS              # 144  (gnn layer 3)
MLP_HIDDEN = 128
FINAL_HIDDEN = 32
FINAL_LANES = 128                                   # lane-dense padded final width


# ----------------------------- helpers ----------------------------------------
def _full_spec(shape):
    nd = len(shape)
    return pl.BlockSpec(shape, lambda i, nd=nd: (0,) * nd)


def _gelu(x):
    # TODO(synk): torch.nn.GELU() defaults to exact erf-GELU; tanh approximation is
    # used because erf lowering is not guaranteed in Mosaic (max abs err ~1e-3).
    c = 0.7978845608028654  # sqrt(2/pi)
    return 0.5 * x * (1.0 + jnp.tanh(c * (x + 0.044715 * x * x * x)))


# ----------------------------- fused Pallas kernel ------------------------------
def _fused_forward_kernel(
        # small blocked (auto-DMA) inputs
        x_ref, bias_ref, adjt_ref, seg_ref, mk12_ref, mk3_ref,
        mb1_ref, mb2_ref, g1b_ref, g2b_ref, g3b_ref, fb1_ref, fb2_ref,
        # large weights: raw HBM refs (memory_space=pl.ANY), streamed manually
        mw1_hbm, mw2_hbm, g1w_hbm, g2w_hbm, g3w_hbm, fw1_hbm, fw2_hbm,
        # output
        out_ref,
        # scratch: VMEM landing buffers for the streamed weights + DMA sems
        mw1_buf, mw2_buf, g1w_buf, g2w_buf, g3w_buf, fw1_buf, fw2_buf, sem):
    """mlp -> 3x lane-stacked TransformerConv -> residual -> merged final MLPs."""
    f32 = jnp.float32
    bf16 = jnp.bfloat16

    # ---- kick off ALL weight DMAs up-front (in execution order); wait per layer.
    hbm_refs = (mw1_hbm, mw2_hbm, g1w_hbm, g2w_hbm, g3w_hbm, fw1_hbm, fw2_hbm)
    vmem_bufs = (mw1_buf, mw2_buf, g1w_buf, g2w_buf, g3w_buf, fw1_buf, fw2_buf)
    copies = [pltpu.make_async_copy(h, b, sem.at[i])
              for i, (h, b) in enumerate(zip(hbm_refs, vmem_bufs))]
    for c in copies:
        c.start()

    x = x_ref[...]                               # (N, 1152) f32
    bias_add = bias_ref[...]                     # (N, H*N) f32: 0 / -1e30 edge mask
    adj_mult = adjt_ref[...]                     # (N, H*N) f32: 1 / 0
    seg = seg_ref[...]                           # (H*N, H*N) f32 block-diag ones

    def dot_w(a, w_buf):                         # f32 act x bf16 weight -> f32 acc
        return jnp.dot(a.astype(bf16), w_buf[...], preferred_element_type=f32)

    def vstack_heads(m):                         # (N, d) -> (H*N, d), row-tiled
        return jnp.concatenate([m] * GNN_HEADS, axis=0)

    def tconv(inp, w_buf, b_ref, mask_ref, activate):
        """PyG TransformerConv, lane-stacked over heads (all ops full-lane)."""
        d_out = w_buf.shape[1] // 4
        proj = dot_w(inp, w_buf) + b_ref[...]    # (N, 4*d_out); one matmul
        q = proj[:, :d_out]                      # slices are 128-lane aligned
        k = proj[:, d_out:2 * d_out]
        v = proj[:, 2 * d_out:3 * d_out]
        skip = proj[:, 3 * d_out:]
        mask = mask_ref[...]                     # (H*N, d_out) bf16 block-diag 0/1
        k_tall = vstack_heads(k.astype(bf16)) * mask      # block-diag K
        v_tall = vstack_heads(v.astype(bf16)) * mask      # block-diag V
        # scores[i, h*N+j] = q_h[i] . k_h[j]  (scale folded into Wq at pack time)
        s = jax.lax.dot_general(q.astype(bf16), k_tall,
                                (((1,), (1,)), ((), ())),
                                preferred_element_type=f32)       # (N, H*N)
        s = s + bias_add
        m = jnp.max(s, axis=-1, keepdims=True)   # row-global max (valid for softmax)
        p = jnp.exp(s - m) * adj_mult
        # per-head denominator, broadcast across the head's columns, via one matmul
        denom = jnp.dot(p, seg, preferred_element_type=f32)       # (N, H*N)
        attn = p * pl.reciprocal(jnp.maximum(denom, f32(1e-30)), approx=False)
        out = jnp.dot(attn.astype(bf16), v_tall, preferred_element_type=f32) + skip
        return _gelu(out) if activate else out

    # ---- self.mlp ----
    copies[0].wait()
    h = _gelu(dot_w(x, mw1_buf) + mb1_ref[...])
    copies[1].wait()
    combined = dot_w(h, mw2_buf) + mb2_ref[...]                   # (N, 1152)

    # ---- gnn_backbone: 3 TransformerConv layers ----
    copies[2].wait()
    h1 = tconv(combined, g1w_buf, g1b_ref, mk12_ref, True)
    copies[3].wait()
    h2 = tconv(h1, g2w_buf, g2b_ref, mk12_ref, True)
    copies[4].wait()
    feats = tconv(h2, g3w_buf, g3b_ref, mk3_ref, False)

    # ---- residual + merged final_mlp / final_mlp_rot (lane-dense, padded) ----
    z = feats + combined
    copies[5].wait()
    fh = _gelu(dot_w(z, fw1_buf) + fb1_ref[...])
    copies[6].wait()
    out_ref[...] = (dot_w(fh, fw2_buf) + fb2_ref[...]).astype(out_ref.dtype)


def fused_forward(x, bias_tiled, adj_tiled, seg, mk12, mk3, kp):
    n = x.shape[0]
    small = (x, bias_tiled, adj_tiled, seg, mk12, mk3,
             kp["mlp_b1"], kp["mlp_b2"], kp["g1_b"], kp["g2_b"], kp["g3_b"],
             kp["fin_b1"], kp["fin_b2"])
    weights = (kp["mlp_w1"], kp["mlp_w2"], kp["g1_w"], kp["g2_w"], kp["g3_w"],
               kp["fin_w1"], kp["fin_w2"])
    in_specs = ([_full_spec(a.shape) for a in small] +
                [pl.BlockSpec(memory_space=pl.ANY) for _ in weights])
    scratch = ([pltpu.VMEM(w.shape, w.dtype) for w in weights] +
               [pltpu.SemaphoreType.DMA((len(weights),))])
    return pl.pallas_call(
        _fused_forward_kernel,
        grid=(1,),
        in_specs=in_specs,
        out_specs=_full_spec((n, FINAL_LANES)),
        out_shape=jax.ShapeDtypeStruct((n, FINAL_LANES), jnp.float32),
        scratch_shapes=scratch,
        compiler_params=pltpu.CompilerParams(
            dimension_semantics=("arbitrary",),
            vmem_limit_bytes=32 * 1024 * 1024),   # ~6 MB weights + small inputs
    )(*small, *weights)


# ----------------------------- parameter init ----------------------------------
def _linear_init(key, d_in, d_out):
    k1, k2 = jax.random.split(key)
    bound = 1.0 / (d_in ** 0.5)
    w = jax.random.uniform(k1, (d_in, d_out), jnp.float32, -bound, bound)
    b = jax.random.uniform(k2, (d_out,), jnp.float32, -bound, bound)
    return w, b


def _tconv_init(key, d_in, heads, head_dim):
    d_out = heads * head_dim
    ks = jax.random.split(key, 4)
    wq, bq = _linear_init(ks[0], d_in, d_out)
    wk, bk = _linear_init(ks[1], d_in, d_out)
    wv, bv = _linear_init(ks[2], d_in, d_out)
    ws, bs = _linear_init(ks[3], d_in, d_out)
    return dict(wq=wq, bq=bq, wk=wk, bk=bk, wv=wv, bv=bv, ws=ws, bs=bs)


def init_params(key, steps, input_channels, output_channels, rotation_channels):
    ks = jax.random.split(key, 10)
    return {
        "mean": jnp.array([0.485, 0.456, 0.406], jnp.float32),
        "std": jnp.array([0.229, 0.224, 0.225], jnp.float32),
        "time_emb": jax.random.normal(ks[0], (steps, TIME_DIM), jnp.float32),
        "pos_emb": jax.random.normal(ks[1], (input_channels, POS_DIM), jnp.float32),
        "mlp": (*_linear_init(ks[2], COMBINED_DIM, MLP_HIDDEN),
                *_linear_init(ks[3], MLP_HIDDEN, COMBINED_DIM)),
        "gnn1": _tconv_init(ks[4], COMBINED_DIM, GNN_HEADS, HEAD_DIM_12),
        "gnn2": _tconv_init(ks[5], GNN_HIDDEN, GNN_HEADS, HEAD_DIM_12),
        "gnn3": _tconv_init(ks[6], GNN_HIDDEN, GNN_HEADS, HEAD_DIM_3),
        "final_mlp": (*_linear_init(ks[7], COMBINED_DIM, FINAL_HIDDEN),
                      *_linear_init(ks[8], FINAL_HIDDEN, output_channels)),
        "final_mlp_rot": (*_linear_init(ks[9], COMBINED_DIM, FINAL_HIDDEN),
                          *_linear_init(jax.random.fold_in(key, 99), FINAL_HIDDEN,
                                        rotation_channels)),
    }


def prepare_kernel_params(params):
    """Pack/cast weights for the fused kernel (done once, outside the kernel)."""
    bf16, f32 = jnp.bfloat16, jnp.float32

    def cat_tc(p, head_dim):
        scale = 1.0 / (head_dim ** 0.5)          # fold softmax scale into Wq / bq
        w = jnp.concatenate([p["wq"] * scale, p["wk"], p["wv"], p["ws"]],
                            axis=1).astype(bf16)
        b = jnp.concatenate([p["bq"] * scale, p["bk"], p["bv"], p["bs"]]
                            )[None, :].astype(f32)
        return w, b

    mw1, mb1, mw2, mb2 = params["mlp"]
    g1w, g1b = cat_tc(params["gnn1"], HEAD_DIM_12)
    g2w, g2b = cat_tc(params["gnn2"], HEAD_DIM_12)
    g3w, g3b = cat_tc(params["gnn3"], HEAD_DIM_3)

    fa_w1, fa_b1, fa_w2, fa_b2 = params["final_mlp"]
    fr_w1, fr_b1, fr_w2, fr_b2 = params["final_mlp_rot"]
    hid = fa_w1.shape[1]                         # 32
    oc, rc = fa_w2.shape[1], fr_w2.shape[1]
    # merged + lane-dense padded (128 hidden cols / 128 output cols, zeros elsewhere)
    fw1 = (jnp.zeros((COMBINED_DIM, FINAL_LANES), f32)
           .at[:, :hid].set(fa_w1).at[:, hid:2 * hid].set(fr_w1)).astype(bf16)
    fb1 = (jnp.zeros((1, FINAL_LANES), f32)
           .at[0, :hid].set(fa_b1).at[0, hid:2 * hid].set(fr_b1))
    fw2 = (jnp.zeros((FINAL_LANES, FINAL_LANES), f32)
           .at[:hid, :oc].set(fa_w2)
           .at[hid:2 * hid, oc:oc + rc].set(fr_w2)).astype(bf16)
    fb2 = (jnp.zeros((1, FINAL_LANES), f32)
           .at[0, :oc].set(fa_b2).at[0, oc:oc + rc].set(fr_b2))

    return dict(
        mlp_w1=mw1.astype(bf16), mlp_b1=mb1[None, :].astype(f32),
        mlp_w2=mw2.astype(bf16), mlp_b2=mb2[None, :].astype(f32),
        g1_w=g1w, g1_b=g1b, g2_w=g2w, g2_b=g2b, g3_w=g3w, g3_b=g3b,
        fin_w1=fw1, fin_b1=fb1, fin_w2=fw2, fin_b2=fb2,
        out_split=int(oc), rot_channels=int(rc),
    )


# ----------------------------- forward pass ------------------------------------
def forward_with_feats(params, kernel_params, xy_pos, rot, time, patch_rgb,
                       edge_index, patch_feats, batch):
    del rot, patch_rgb, batch  # unused, exactly as in the PyTorch forward_with_feats
    n = patch_feats.shape[0]
    hn = GNN_HEADS * n

    time_feats = jnp.take(params["time_emb"], time, axis=0)     # nn.Embedding lookup
    pos_feats = jnp.take(params["pos_emb"], xy_pos, axis=0)     # nn.Embedding lookup
    combined_in = jnp.concatenate([patch_feats, pos_feats, time_feats], axis=-1)

    # dense adjacency mask from edge_index: adj[target, source] = 1
    adj = jnp.zeros((n, n), jnp.float32).at[edge_index[1], edge_index[0]].set(1.0)
    adj_tiled = jnp.tile(adj, (1, GNN_HEADS))                        # (N, H*N)
    bias_tiled = jnp.where(adj_tiled > 0.0, 0.0, -1e30).astype(jnp.float32)

    # constant lane-stacking helpers (head block masks / segment-sum matrix)
    row_h = jnp.arange(hn, dtype=jnp.int32) // n                     # head of row
    seg = (row_h[:, None] == row_h[None, :]).astype(jnp.float32)     # (H*N, H*N)

    def head_mask(head_dim):
        col_h = jnp.arange(GNN_HEADS * head_dim, dtype=jnp.int32) // head_dim
        return (row_h[:, None] == col_h[None, :]).astype(jnp.bfloat16)

    mk12 = head_mask(HEAD_DIM_12)                                    # (H*N, 256)
    mk3 = head_mask(HEAD_DIM_3)                                      # (H*N, 1152)

    out = fused_forward(combined_in, bias_tiled, adj_tiled, seg, mk12, mk3,
                        kernel_params)                               # one Pallas launch
    oc = kernel_params["out_split"]
    rc = kernel_params["rot_channels"]
    return out[:, :oc], out[:, oc:oc + rc]


def forward(params, kernel_params, xy_pos, rot, time, patch_rgb, edge_index,
            patch_feats, batch):
    # visual_features(): ImageNet normalisation in plain jnp (its only consumer, the
    # timm backbone, is not reproduced here, so XLA can fuse/DCE it).
    mean = params["mean"][None, :, None, None]
    std = params["std"][None, :, None, None]
    _ = (patch_rgb - mean) / std
    # TODO(synk): the timm efficientnet_b0 feature extractor (feats[2]/feats[3]) has
    # no clean Pallas equivalent; `patch_feats` (N, 1088) is supplied directly.
    return forward_with_feats(params, kernel_params, xy_pos, rot, time, patch_rgb,
                              edge_index, patch_feats, batch)


# ----------------------------- main --------------------------------------------
if __name__ == "__main__":
    key = jax.random.PRNGKey(0)
    k_param, k_in = jax.random.split(key)

    steps = 10
    input_channels = 12        # number of discrete positions
    output_channels = 12       # discrete-position logits
    rotation_channels = 4

    params = init_params(k_param, steps, input_channels, output_channels,
                         rotation_channels)
    kernel_params = prepare_kernel_params(params)

    n_graphs, pieces = 2, 8
    N = n_graphs * pieces
    kp, kr, kx, kt, kf = jax.random.split(k_in, 5)
    patch_rgb = jax.random.uniform(kp, (N, 3, 32, 32), jnp.float32)   # layout: NCHW
    patch_feats = jax.random.normal(kf, (N, PATCH_FEAT_DIM), jnp.float32)
    xy_pos = jax.random.randint(kx, (N,), 0, input_channels, jnp.int32)
    time = jax.random.randint(kt, (N,), 0, steps, jnp.int32)
    rot = jax.random.normal(kr, (N, rotation_channels), jnp.float32)  # unused downstream
    batch = jnp.repeat(jnp.arange(n_graphs, dtype=jnp.int32), pieces)

    # fully connected (no self-loops) within each puzzle
    edges = []
    for g in range(n_graphs):
        for i in range(pieces):
            for j in range(pieces):
                if i != j:
                    edges.append((g * pieces + j, g * pieces + i))  # (source, target)
    edge_index = jnp.asarray(edges, dtype=jnp.int32).T               # (2, E)

    final_feats, final_rot = forward(params, kernel_params, xy_pos, rot, time,
                                     patch_rgb, edge_index, patch_feats, batch)
    jax.block_until_ready((final_feats, final_rot))

    assert final_feats.shape == (N, output_channels)
    assert final_rot.shape == (N, rotation_channels)
    assert bool(jnp.all(jnp.isfinite(final_feats))) and bool(jnp.all(jnp.isfinite(final_rot)))
    print("KERNEL_OK")
</pallas_src>

<mosaic_0001>
module attributes {stable_mosaic.version = 11 : i64} {
  func.func @_fused_forward_kernel(%arg0: i32, %arg1: memref<16x1152xf32, #tpu.memory_space<vmem>>, %arg2: memref<16x128xf32, #tpu.memory_space<vmem>>, %arg3: memref<16x128xf32, #tpu.memory_space<vmem>>, %arg4: memref<128x128xf32, #tpu.memory_space<vmem>>, %arg5: memref<128x256xbf16, #tpu.memory_space<vmem>>, %arg6: memref<128x1152xbf16, #tpu.memory_space<vmem>>, %arg7: memref<1x128xf32, #tpu.memory_space<vmem>>, %arg8: memref<1x1152xf32, #tpu.memory_space<vmem>>, %arg9: memref<1x1024xf32, #tpu.memory_space<vmem>>, %arg10: memref<1x1024xf32, #tpu.memory_space<vmem>>, %arg11: memref<1x4608xf32, #tpu.memory_space<vmem>>, %arg12: memref<1x128xf32, #tpu.memory_space<vmem>>, %arg13: memref<1x128xf32, #tpu.memory_space<vmem>>, %arg14: memref<1152x128xbf16, #tpu.memory_space<any>>, %arg15: memref<128x1152xbf16, #tpu.memory_space<any>>, %arg16: memref<1152x1024xbf16, #tpu.memory_space<any>>, %arg17: memref<256x1024xbf16, #tpu.memory_space<any>>, %arg18: memref<256x4608xbf16, #tpu.memory_space<any>>, %arg19: memref<1152x128xbf16, #tpu.memory_space<any>>, %arg20: memref<128x128xbf16, #tpu.memory_space<any>>, %arg21: memref<16x128xf32, #tpu.memory_space<vmem>>, %arg22: memref<1152x128xbf16, #tpu.memory_space<vmem>>, %arg23: memref<128x1152xbf16, #tpu.memory_space<vmem>>, %arg24: memref<1152x1024xbf16, #tpu.memory_space<vmem>>, %arg25: memref<256x1024xbf16, #tpu.memory_space<vmem>>, %arg26: memref<256x4608xbf16, #tpu.memory_space<vmem>>, %arg27: memref<1152x128xbf16, #tpu.memory_space<vmem>>, %arg28: memref<128x128xbf16, #tpu.memory_space<vmem>>, %arg29: memref<7x!tpu.dma_semaphore, #tpu.memory_space<semaphore_mem>>) attributes {dimension_semantics = [#tpu.dimension_semantics<arbitrary>], iteration_bounds = array<i64: 1>, scalar_prefetch = 0 : i64, scratch_operands = 8 : i64, tpu.core_type = #tpu.core_type<tc>, window_params = [{pipeline_mode = #tpu.pipeline_mode<synchronous>, transform_indices = @transform_0, window_bounds = array<i64: 16, 1152>}, {pipeline_mode = #tpu.pipeline_mode<synchronous>, transform_indices = @transform_1, window_bounds = array<i64: 16, 128>}, {pipeline_mode = #tpu.pipeline_mode<synchronous>, transform_indices = @transform_2, window_bounds = array<i64: 16, 128>}, {pipeline_mode = #tpu.pipeline_mode<synchronous>, transform_indices = @transform_3, window_bounds = array<i64: 128, 128>}, {pipeline_mode = #tpu.pipeline_mode<synchronous>, transform_indices = @transform_4, window_bounds = array<i64: 128, 256>}, {pipeline_mode = #tpu.pipeline_mode<synchronous>, transform_indices = @transform_5, window_bounds = array<i64: 128, 1152>}, {pipeline_mode = #tpu.pipeline_mode<synchronous>, transform_indices = @transform_6, window_bounds = array<i64: 1, 128>}, {pipeline_mode = #tpu.pipeline_mode<synchronous>, transform_indices = @transform_7, window_bounds = array<i64: 1, 1152>}, {pipeline_mode = #tpu.pipeline_mode<synchronous>, transform_indices = @transform_8, window_bounds = array<i64: 1, 1024>}, {pipeline_mode = #tpu.pipeline_mode<synchronous>, transform_indices = @transform_9, window_bounds = array<i64: 1, 1024>}, {pipeline_mode = #tpu.pipeline_mode<synchronous>, transform_indices = @transform_10, window_bounds = array<i64: 1, 4608>}, {pipeline_mode = #tpu.pipeline_mode<synchronous>, transform_indices = @transform_11, window_bounds = array<i64: 1, 128>}, {pipeline_mode = #tpu.pipeline_mode<synchronous>, transform_indices = @transform_12, window_bounds = array<i64: 1, 128>}, {}, {}, {}, {}, {}, {}, {}, {pipeline_mode = #tpu.pipeline_mode<synchronous>, transform_indices = @transform_20, window_bounds = array<i64: 16, 128>}]} {
    %c0_i32 = arith.constant 0 : i32
    %0 = tpu.memref_slice %arg29[%c0_i32] : memref<7x!tpu.dma_semaphore, #tpu.memory_space<semaphore_mem>> -> memref<1x!tpu.dma_semaphore, #tpu.memory_space<semaphore_mem>>
    %1 = tpu.memref_squeeze %0 : memref<1x!tpu.dma_semaphore, #tpu.memory_space<semaphore_mem>> -> memref<!tpu.dma_semaphore, #tpu.memory_space<semaphore_mem>>
    tpu.enqueue_dma source(%arg14 : memref<1152x128xbf16, #tpu.memory_space<any>>) target(%arg22 : memref<1152x128xbf16, #tpu.memory_space<vmem>>) target_semaphore(%1 : memref<!tpu.dma_semaphore, #tpu.memory_space<semaphore_mem>>)
    %c1_i32 = arith.constant 1 : i32
    %2 = tpu.memref_slice %arg29[%c1_i32] : memref<7x!tpu.dma_semaphore, #tpu.memory_space<semaphore_mem>> -> memref<1x!tpu.dma_semaphore, #tpu.memory_space<semaphore_mem>>
    %3 = tpu.memref_squeeze %2 : memref<1x!tpu.dma_semaphore, #tpu.memory_space<semaphore_mem>> -> memref<!tpu.dma_semaphore, #tpu.memory_space<semaphore_mem>>
    tpu.enqueue_dma source(%arg15 : memref<128x1152xbf16, #tpu.memory_space<any>>) target(%arg23 : memref<128x1152xbf16, #tpu.memory_space<vmem>>) target_semaphore(%3 : memref<!tpu.dma_semaphore, #tpu.memory_space<semaphore_mem>>)
    %c2_i32 = arith.constant 2 : i32
    %4 = tpu.memref_slice %arg29[%c2_i32] : memref<7x!tpu.dma_semaphore, #tpu.memory_space<semaphore_mem>> -> memref<1x!tpu.dma_semaphore, #tpu.memory_space<semaphore_mem>>
    %5 = tpu.memref_squeeze %4 : memref<1x!tpu.dma_semaphore, #tpu.memory_space<semaphore_mem>> -> memref<!tpu.dma_semaphore, #tpu.memory_space<semaphore_mem>>
    tpu.enqueue_dma source(%arg16 : memref<1152x1024xbf16, #tpu.memory_space<any>>) target(%arg24 : memref<1152x1024xbf16, #tpu.memory_space<vmem>>) target_semaphore(%5 : memref<!tpu.dma_semaphore, #tpu.memory_space<semaphore_mem>>)
    %c3_i32 = arith.constant 3 : i32
    %6 = tpu.memref_slice %arg29[%c3_i32] : memref<7x!tpu.dma_semaphore, #tpu.memory_space<semaphore_mem>> -> memref<1x!tpu.dma_semaphore, #tpu.memory_space<semaphore_mem>>
    %7 = tpu.memref_squeeze %6 : memref<1x!tpu.dma_semaphore, #tpu.memory_space<semaphore_mem>> -> memref<!tpu.dma_semaphore, #tpu.memory_space<semaphore_mem>>
    tpu.enqueue_dma source(%arg17 : memref<256x1024xbf16, #tpu.memory_space<any>>) target(%arg25 : memref<256x1024xbf16, #tpu.memory_space<vmem>>) target_semaphore(%7 : memref<!tpu.dma_semaphore, #tpu.memory_space<semaphore_mem>>)
    %c4_i32 = arith.constant 4 : i32
    %8 = tpu.memref_slice %arg29[%c4_i32] : memref<7x!tpu.dma_semaphore, #tpu.memory_space<semaphore_mem>> -> memref<1x!tpu.dma_semaphore, #tpu.memory_space<semaphore_mem>>
    %9 = tpu.memref_squeeze %8 : memref<1x!tpu.dma_semaphore, #tpu.memory_space<semaphore_mem>> -> memref<!tpu.dma_semaphore, #tpu.memory_space<semaphore_mem>>
    tpu.enqueue_dma source(%arg18 : memref<256x4608xbf16, #tpu.memory_space<any>>) target(%arg26 : memref<256x4608xbf16, #tpu.memory_space<vmem>>) target_semaphore(%9 : memref<!tpu.dma_semaphore, #tpu.memory_space<semaphore_mem>>)
    %c5_i32 = arith.constant 5 : i32
    %10 = tpu.memref_slice %arg29[%c5_i32] : memref<7x!tpu.dma_semaphore, #tpu.memory_space<semaphore_mem>> -> memref<1x!tpu.dma_semaphore, #tpu.memory_space<semaphore_mem>>
    %11 = tpu.memref_squeeze %10 : memref<1x!tpu.dma_semaphore, #tpu.memory_space<semaphore_mem>> -> memref<!tpu.dma_semaphore, #tpu.memory_space<semaphore_mem>>
    tpu.enqueue_dma source(%arg19 : memref<1152x128xbf16, #tpu.memory_space<any>>) target(%arg27 : memref<1152x128xbf16, #tpu.memory_space<vmem>>) target_semaphore(%11 : memref<!tpu.dma_semaphore, #tpu.memory_space<semaphore_mem>>)
    %c6_i32 = arith.constant 6 : i32
    %12 = tpu.memref_slice %arg29[%c6_i32] : memref<7x!tpu.dma_semaphore, #tpu.memory_space<semaphore_mem>> -> memref<1x!tpu.dma_semaphore, #tpu.memory_space<semaphore_mem>>
    %13 = tpu.memref_squeeze %12 : memref<1x!tpu.dma_semaphore, #tpu.memory_space<semaphore_mem>> -> memref<!tpu.dma_semaphore, #tpu.memory_space<semaphore_mem>>
    tpu.enqueue_dma source(%arg20 : memref<128x128xbf16, #tpu.memory_space<any>>) target(%arg28 : memref<128x128xbf16, #tpu.memory_space<vmem>>) target_semaphore(%13 : memref<!tpu.dma_semaphore, #tpu.memory_space<semaphore_mem>>)
    %c0 = arith.constant 0 : index
    %c0_0 = arith.constant 0 : index
    %14 = vector.load %arg1[%c0, %c0_0] : memref<16x1152xf32, #tpu.memory_space<vmem>>, vector<16x1152xf32>
    %c0_1 = arith.constant 0 : index
    %c0_2 = arith.constant 0 : index
    %15 = vector.load %arg2[%c0_1, %c0_2] : memref<16x128xf32, #tpu.memory_space<vmem>>, vector<16x128xf32>
    %c0_3 = arith.constant 0 : index
    %c0_4 = arith.constant 0 : index
    %16 = vector.load %arg3[%c0_3, %c0_4] : memref<16x128xf32, #tpu.memory_space<vmem>>, vector<16x128xf32>
    %c0_5 = arith.constant 0 : index
    %c0_6 = arith.constant 0 : index
    %17 = vector.load %arg4[%c0_5, %c0_6] : memref<128x128xf32, #tpu.memory_space<vmem>>, vector<128x128xf32>
    %c0_i32_7 = arith.constant 0 : i32
    %18 = tpu.memref_slice %arg29[%c0_i32_7] : memref<7x!tpu.dma_semaphore, #tpu.memory_space<semaphore_mem>> -> memref<1x!tpu.dma_semaphore, #tpu.memory_space<semaphore_mem>>
    %19 = tpu.memref_squeeze %18 : memref<1x!tpu.dma_semaphore, #tpu.memory_space<semaphore_mem>> -> memref<!tpu.dma_semaphore, #tpu.memory_space<semaphore_mem>>
    tpu.wait_dma2 semaphore(%19 : memref<!tpu.dma_semaphore, #tpu.memory_space<semaphore_mem>>) src(%arg14 : memref<1152x128xbf16, #tpu.memory_space<any>>) dst(%arg22 : memref<1152x128xbf16, #tpu.memory_space<vmem>>)
    %20 = arith.truncf %14 : vector<16x1152xf32> to vector<16x1152xbf16>
    %c0_8 = arith.constant 0 : index
    %c0_9 = arith.constant 0 : index
    %21 = vector.load %arg22[%c0_8, %c0_9] : memref<1152x128xbf16, #tpu.memory_space<vmem>>, vector<1152x128xbf16>
    %cst = arith.constant dense<0.000000e+00> : vector<16x128xf32>
    %22 = tpu.matmul %20, %21, %cst {dimension_numbers = #tpu.dot_dimension_numbers<[1], [0], [0], [1], [0, 0, 1, 1], [], []>} : vector<16x1152xbf16>, vector<1152x128xbf16>, vector<16x128xf32> -> vector<16x128xf32>
    %c0_10 = arith.constant 0 : index
    %c0_11 = arith.constant 0 : index
    %23 = vector.load %arg7[%c0_10, %c0_11] : memref<1x128xf32, #tpu.memory_space<vmem>>, vector<1x128xf32>
    %24 = vector.broadcast %23 : vector<1x128xf32> to vector<16x128xf32>
    %25 = arith.addf %22, %24 : vector<16x128xf32>
    %cst_12 = arith.constant 5.000000e-01 : f32
    %26 = vector.broadcast %cst_12 : f32 to vector<16x128xf32>
    %27 = arith.mulf %26, %25 : vector<16x128xf32>
    %cst_13 = arith.constant 4.471500e-02 : f32
    %28 = vector.broadcast %cst_13 : f32 to vector<16x128xf32>
    %29 = arith.mulf %28, %25 : vector<16x128xf32>
    %30 = arith.mulf %29, %25 : vector<16x128xf32>
    %31 = arith.mulf %30, %25 : vector<16x128xf32>
    %32 = arith.addf %25, %31 : vector<16x128xf32>
    %cst_14 = arith.constant 0.797884583 : f32
    %33 = vector.broadcast %cst_14 : f32 to vector<16x128xf32>
    %34 = arith.mulf %33, %32 : vector<16x128xf32>
    %35 = math.tanh %34 : vector<16x128xf32>
    %cst_15 = arith.constant 1.000000e+00 : f32
    %36 = vector.broadcast %cst_15 : f32 to vector<16x128xf32>
    %37 = arith.addf %36, %35 : vector<16x128xf32>
    %38 = arith.mulf %27, %37 : vector<16x128xf32>
    %c1_i32_16 = arith.constant 1 : i32
    %39 = tpu.memref_slice %arg29[%c1_i32_16] : memref<7x!tpu.dma_semaphore, #tpu.memory_space<semaphore_mem>> -> memref<1x!tpu.dma_semaphore, #tpu.memory_space<semaphore_mem>>
    %40 = tpu.memref_squeeze %39 : memref<1x!tpu.dma_semaphore, #tpu.memory_space<semaphore_mem>> -> memref<!tpu.dma_semaphore, #tpu.memory_space<semaphore_mem>>
    tpu.wait_dma2 semaphore(%40 : memref<!tpu.dma_semaphore, #tpu.memory_space<semaphore_mem>>) src(%arg15 : memref<128x1152xbf16, #tpu.memory_space<any>>) dst(%arg23 : memref<128x1152xbf16, #tpu.memory_space<vmem>>)
    %41 = arith.truncf %38 : vector<16x128xf32> to vector<16x128xbf16>
    %c0_17 = arith.constant 0 : index
    %c0_18 = arith.constant 0 : index
    %42 = vector.load %arg23[%c0_17, %c0_18] : memref<128x1152xbf16, #tpu.memory_space<vmem>>, vector<128x1152xbf16>
    %cst_19 = arith.constant dense<0.000000e+00> : vector<16x1152xf32>
    %43 = tpu.matmul %41, %42, %cst_19 {dimension_numbers = #tpu.dot_dimension_numbers<[1], [0], [0], [1], [0, 0, 1, 1], [], []>} : vector<16x128xbf16>, vector<128x1152xbf16>, vector<16x1152xf32> -> vector<16x1152xf32>
    %c0_20 = arith.constant 0 : index
    %c0_21 = arith.constant 0 : index
    %44 = vector.load %arg8[%c0_20, %c0_21] : memref<1x1152xf32, #tpu.memory_space<vmem>>, vector<1x1152xf32>
    %45 = vector.broadcast %44 : vector<1x1152xf32> to vector<16x1152xf32>
    %46 = arith.addf %43, %45 : vector<16x1152xf32>
    %c2_i32_22 = arith.constant 2 : i32
    %47 = tpu.memref_slice %arg29[%c2_i32_22] : memref<7x!tpu.dma_semaphore, #tpu.memory_space<semaphore_mem>> -> memref<1x!tpu.dma_semaphore, #tpu.memory_space<semaphore_mem>>
    %48 = tpu.memref_squeeze %47 : memref<1x!tpu.dma_semaphore, #tpu.memory_space<semaphore_mem>> -> memref<!tpu.dma_semaphore, #tpu.memory_space<semaphore_mem>>
    tpu.wait_dma2 semaphore(%48 : memref<!tpu.dma_semaphore, #tpu.memory_space<semaphore_mem>>) src(%arg16 : memref<1152x1024xbf16, #tpu.memory_space<any>>) dst(%arg24 : memref<1152x1024xbf16, #tpu.memory_space<vmem>>)
    %49 = arith.truncf %46 : vector<16x1152xf32> to vector<16x1152xbf16>
    %c0_23 = arith.constant 0 : index
    %c0_24 = arith.constant 0 : index
    %50 = vector.load %arg24[%c0_23, %c0_24] : memref<1152x1024xbf16, #tpu.memory_space<vmem>>, vector<1152x1024xbf16>
    %cst_25 = arith.constant dense<0.000000e+00> : vector<16x1024xf32>
    %51 = tpu.matmul %49, %50, %cst_25 {dimension_numbers = #tpu.dot_dimension_numbers<[1], [0], [0], [1], [0, 0, 1, 1], [], []>} : vector<16x1152xbf16>, vector<1152x1024xbf16>, vector<16x1024xf32> -> vector<16x1024xf32>
    %c0_26 = arith.constant 0 : index
    %c0_27 = arith.constant 0 : index
    %52 = vector.load %arg9[%c0_26, %c0_27] : memref<1x1024xf32, #tpu.memory_space<vmem>>, vector<1x1024xf32>
    %53 = vector.broadcast %52 : vector<1x1024xf32> to vector<16x1024xf32>
    %54 = arith.addf %51, %53 : vector<16x1024xf32>
    %55 = vector.extract_strided_slice %54 {offsets = [0, 0], sizes = [16, 256], strides = [1, 1]} : vector<16x1024xf32> to vector<16x256xf32>
    %56 = vector.extract_strided_slice %54 {offsets = [0, 256], sizes = [16, 256], strides = [1, 1]} : vector<16x1024xf32> to vector<16x256xf32>
    %57 = vector.extract_strided_slice %54 {offsets = [0, 512], sizes = [16, 256], strides = [1, 1]} : vector<16x1024xf32> to vector<16x256xf32>
    %58 = vector.extract_strided_slice %54 {offsets = [0, 768], sizes = [16, 256], strides = [1, 1]} : vector<16x1024xf32> to vector<16x256xf32>
    %c0_28 = arith.constant 0 : index
    %c0_29 = arith.constant 0 : index
    %59 = vector.load %arg5[%c0_28, %c0_29] : memref<128x256xbf16, #tpu.memory_space<vmem>>, vector<128x256xbf16>
    %60 = arith.truncf %56 : vector<16x256xf32> to vector<16x256xbf16>
    %61 = tpu.concatenate %60, %60, %60, %60, %60, %60, %60, %60 in 0 : vector<16x256xbf16>, vector<16x256xbf16>, vector<16x256xbf16>, vector<16x256xbf16>, vector<16x256xbf16>, vector<16x256xbf16>, vector<16x256xbf16>, vector<16x256xbf16> -> vector<128x256xbf16>
    %62 = arith.mulf %61, %59 : vector<128x256xbf16>
    %63 = arith.truncf %57 : vector<16x256xf32> to vector<16x256xbf16>
    %64 = tpu.concatenate %63, %63, %63, %63, %63, %63, %63, %63 in 0 : vector<16x256xbf16>, vector<16x256xbf16>, vector<16x256xbf16>, vector<16x256xbf16>, vector<16x256xbf16>, vector<16x256xbf16>, vector<16x256xbf16>, vector<16x256xbf16> -> vector<128x256xbf16>
    %65 = arith.mulf %64, %59 : vector<128x256xbf16>
    %66 = arith.truncf %55 : vector<16x256xf32> to vector<16x256xbf16>
    %cst_30 = arith.constant dense<0.000000e+00> : vector<16x128xf32>
    %67 = tpu.matmul %66, %62, %cst_30 {dimension_numbers = #tpu.dot_dimension_numbers<[1], [1], [0], [0], [0, 0, 1, 0], [], []>} : vector<16x256xbf16>, vector<128x256xbf16>, vector<16x128xf32> -> vector<16x128xf32>
    %68 = arith.addf %67, %15 : vector<16x128xf32>
    %cst_31 = arith.constant dense<0xFF800000> : vector<16xf32>
    %69 = vector.multi_reduction <maximumf>, %68, %cst_31 [1] : vector<16x128xf32> to vector<16xf32>
    %70 = vector.shape_cast %69 : vector<16xf32> to vector<16x1xf32>
    %71 = vector.broadcast %70 : vector<16x1xf32> to vector<16x128xf32>
    %72 = arith.subf %68, %71 : vector<16x128xf32>
    %73 = math.exp %72 : vector<16x128xf32>
    %74 = arith.mulf %73, %16 : vector<16x128xf32>
    %cst_32 = arith.constant dense<0.000000e+00> : vector<16x128xf32>
    %75 = tpu.matmul %74, %17, %cst_32 {dimension_numbers = #tpu.dot_dimension_numbers<[1], [0], [0], [1], [0, 0, 1, 1], [], []>} : vector<16x128xf32>, vector<128x128xf32>, vector<16x128xf32> -> vector<16x128xf32>
    %cst_33 = arith.constant 1.000000e-30 : f32
    %76 = vector.broadcast %cst_33 : f32 to vector<16x128xf32>
    %77 = arith.maximumf %75, %76 : vector<16x128xf32>
    %78 = tpu.reciprocal %77 : vector<16x128xf32> -> vector<16x128xf32>
    %79 = arith.mulf %74, %78 : vector<16x128xf32>
    %80 = arith.truncf %79 : vector<16x128xf32> to vector<16x128xbf16>
    %cst_34 = arith.constant dense<0.000000e+00> : vector<16x256xf32>
    %81 = tpu.matmul %80, %65, %cst_34 {dimension_numbers = #tpu.dot_dimension_numbers<[1], [0], [0], [1], [0, 0, 1, 1], [], []>} : vector<16x128xbf16>, vector<128x256xbf16>, vector<16x256xf32> -> vector<16x256xf32>
    %82 = arith.addf %81, %58 : vector<16x256xf32>
    %cst_35 = arith.constant 5.000000e-01 : f32
    %83 = vector.broadcast %cst_35 : f32 to vector<16x256xf32>
    %84 = arith.mulf %83, %82 : vector<16x256xf32>
    %cst_36 = arith.constant 4.471500e-02 : f32
    %85 = vector.broadcast %cst_36 : f32 to vector<16x256xf32>
    %86 = arith.mulf %85, %82 : vector<16x256xf32>
    %87 = arith.mulf %86, %82 : vector<16x256xf32>
    %88 = arith.mulf %87, %82 : vector<16x256xf32>
    %89 = arith.addf %82, %88 : vector<16x256xf32>
    %cst_37 = arith.constant 0.797884583 : f32
    %90 = vector.broadcast %cst_37 : f32 to vector<16x256xf32>
    %91 = arith.mulf %90, %89 : vector<16x256xf32>
    %92 = math.tanh %91 : vector<16x256xf32>
    %cst_38 = arith.constant 1.000000e+00 : f32
    %93 = vector.broadcast %cst_38 : f32 to vector<16x256xf32>
    %94 = arith.addf %93, %92 : vector<16x256xf32>
    %95 = arith.mulf %84, %94 : vector<16x256xf32>
    %c3_i32_39 = arith.constant 3 : i32
    %96 = tpu.memref_slice %arg29[%c3_i32_39] : memref<7x!tpu.dma_semaphore, #tpu.memory_space<semaphore_mem>> -> memref<1x!tpu.dma_semaphore, #tpu.memory_space<semaphore_mem>>
    %97 = tpu.memref_squeeze %96 : memref<1x!tpu.dma_semaphore, #tpu.memory_space<semaphore_mem>> -> memref<!tpu.dma_semaphore, #tpu.memory_space<semaphore_mem>>
    tpu.wait_dma2 semaphore(%97 : memref<!tpu.dma_semaphore, #tpu.memory_space<semaphore_mem>>) src(%arg17 : memref<256x1024xbf16, #tpu.memory_space<any>>) dst(%arg25 : memref<256x1024xbf16, #tpu.memory_space<vmem>>)
    %98 = arith.truncf %95 : vector<16x256xf32> to vector<16x256xbf16>
    %c0_40 = arith.constant 0 : index
    %c0_41 = arith.constant 0 : index
    %99 = vector.load %arg25[%c0_40, %c0_41] : memref<256x1024xbf16, #tpu.memory_space<vmem>>, vector<256x1024xbf16>
    %cst_42 = arith.constant dense<0.000000e+00> : vector<16x1024xf32>
    %100 = tpu.matmul %98, %99, %cst_42 {dimension_numbers = #tpu.dot_dimension_numbers<[1], [0], [0], [1], [0, 0, 1, 1], [], []>} : vector<16x256xbf16>, vector<256x1024xbf16>, vector<16x1024xf32> -> vector<16x1024xf32>
    %c0_43 = arith.constant 0 : index
    %c0_44 = arith.constant 0 : index
    %101 = vector.load %arg10[%c0_43, %c0_44] : memref<1x1024xf32, #tpu.memory_space<vmem>>, vector<1x1024xf32>
    %102 = vector.broadcast %101 : vector<1x1024xf32> to vector<16x1024xf32>
    %103 = arith.addf %100, %102 : vector<16x1024xf32>
    %104 = vector.extract_strided_slice %103 {offsets = [0, 0], sizes = [16, 256], strides = [1, 1]} : vector<16x1024xf32> to vector<16x256xf32>
    %105 = vector.extract_strided_slice %103 {offsets = [0, 256], sizes = [16, 256], strides = [1, 1]} : vector<16x1024xf32> to vector<16x256xf32>
    %106 = vector.extract_strided_slice %103 {offsets = [0, 512], sizes = [16, 256], strides = [1, 1]} : vector<16x1024xf32> to vector<16x256xf32>
    %107 = vector.extract_strided_slice %103 {offsets = [0, 768], sizes = [16, 256], strides = [1, 1]} : vector<16x1024xf32> to vector<16x256xf32>
    %c0_45 = arith.constant 0 : index
    %c0_46 = arith.constant 0 : index
    %108 = vector.load %arg5[%c0_45, %c0_46] : memref<128x256xbf16, #tpu.memory_space<vmem>>, vector<128x256xbf16>
    %109 = arith.truncf %105 : vector<16x256xf32> to vector<16x256xbf16>
    %110 = tpu.concatenate %109, %109, %109, %109, %109, %109, %109, %109 in 0 : vector<16x256xbf16>, vector<16x256xbf16>, vector<16x256xbf16>, vector<16x256xbf16>, vector<16x256xbf16>, vector<16x256xbf16>, vector<16x256xbf16>, vector<16x256xbf16> -> vector<128x256xbf16>
    %111 = arith.mulf %110, %108 : vector<128x256xbf16>
    %112 = arith.truncf %106 : vector<16x256xf32> to vector<16x256xbf16>
    %113 = tpu.concatenate %112, %112, %112, %112, %112, %112, %112, %112 in 0 : vector<16x256xbf16>, vector<16x256xbf16>, vector<16x256xbf16>, vector<16x256xbf16>, vector<16x256xbf16>, vector<16x256xbf16>, vector<16x256xbf16>, vector<16x256xbf16> -> vector<128x256xbf16>
    %114 = arith.mulf %113, %108 : vector<128x256xbf16>
    %115 = arith.truncf %104 : vector<16x256xf32> to vector<16x256xbf16>
    %cst_47 = arith.constant dense<0.000000e+00> : vector<16x128xf32>
    %116 = tpu.matmul %115, %111, %cst_47 {dimension_numbers = #tpu.dot_dimension_numbers<[1], [1], [0], [0], [0, 0, 1, 0], [], []>} : vector<16x256xbf16>, vector<128x256xbf16>, vector<16x128xf32> -> vector<16x128xf32>
    %117 = arith.addf %116, %15 : vector<16x128xf32>
    %cst_48 = arith.constant dense<0xFF800000> : vector<16xf32>
    %118 = vector.multi_reduction <maximumf>, %117, %cst_48 [1] : vector<16x128xf32> to vector<16xf32>
    %119 = vector.shape_cast %118 : vector<16xf32> to vector<16x1xf32>
    %120 = vector.broadcast %119 : vector<16x1xf32> to vector<16x128xf32>
    %121 = arith.subf %117, %120 : vector<16x128xf32>
    %122 = math.exp %121 : vector<16x128xf32>
    %123 = arith.mulf %122, %16 : vector<16x128xf32>
    %cst_49 = arith.constant dense<0.000000e+00> : vector<16x128xf32>
    %124 = tpu.matmul %123, %17, %cst_49 {dimension_numbers = #tpu.dot_dimension_numbers<[1], [0], [0], [1], [0, 0, 1, 1], [], []>} : vector<16x128xf32>, vector<128x128xf32>, vector<16x128xf32> -> vector<16x128xf32>
    %cst_50 = arith.constant 1.000000e-30 : f32
    %125 = vector.broadcast %cst_50 : f32 to vector<16x128xf32>
    %126 = arith.maximumf %124, %125 : vector<16x128xf32>
    %127 = tpu.reciprocal %126 : vector<16x128xf32> -> vector<16x128xf32>
    %128 = arith.mulf %123, %127 : vector<16x128xf32>
    %129 = arith.truncf %128 : vector<16x128xf32> to vector<16x128xbf16>
    %cst_51 = arith.constant dense<0.000000e+00> : vector<16x256xf32>
    %130 = tpu.matmul %129, %114, %cst_51 {dimension_numbers = #tpu.dot_dimension_numbers<[1], [0], [0], [1], [0, 0, 1, 1], [], []>} : vector<16x128xbf16>, vector<128x256xbf16>, vector<16x256xf32> -> vector<16x256xf32>
    %131 = arith.addf %130, %107 : vector<16x256xf32>
    %cst_52 = arith.constant 5.000000e-01 : f32
    %132 = vector.broadcast %cst_52 : f32 to vector<16x256xf32>
    %133 = arith.mulf %132, %131 : vector<16x256xf32>
    %cst_53 = arith.constant 4.471500e-02 : f32
    %134 = vector.broadcast %cst_53 : f32 to vector<16x256xf32>
    %135 = arith.mulf %134, %131 : vector<16x256xf32>
    %136 = arith.mulf %135, %131 : vector<16x256xf32>
    %137 = arith.mulf %136, %131 : vector<16x256xf32>
    %138 = arith.addf %131, %137 : vector<16x256xf32>
    %cst_54 = arith.constant 0.797884583 : f32
    %139 = vector.broadcast %cst_54 : f32 to vector<16x256xf32>
    %140 = arith.mulf %139, %138 : vector<16x256xf32>
    %141 = math.tanh %140 : vector<16x256xf32>
    %cst_55 = arith.constant 1.000000e+00 : f32
    %142 = vector.broadcast %cst_55 : f32 to vector<16x256xf32>
    %143 = arith.addf %142, %141 : vector<16x256xf32>
    %144 = arith.mulf %133, %143 : vector<16x256xf32>
    %c4_i32_56 = arith.constant 4 : i32
    %145 = tpu.memref_slice %arg29[%c4_i32_56] : memref<7x!tpu.dma_semaphore, #tpu.memory_space<semaphore_mem>> -> memref<1x!tpu.dma_semaphore, #tpu.memory_space<semaphore_mem>>
    %146 = tpu.memref_squeeze %145 : memref<1x!tpu.dma_semaphore, #tpu.memory_space<semaphore_mem>> -> memref<!tpu.dma_semaphore, #tpu.memory_space<semaphore_mem>>
    tpu.wait_dma2 semaphore(%146 : memref<!tpu.dma_semaphore, #tpu.memory_space<semaphore_mem>>) src(%arg18 : memref<256x4608xbf16, #tpu.memory_space<any>>) dst(%arg26 : memref<256x4608xbf16, #tpu.memory_space<vmem>>)
    %147 = arith.truncf %144 : vector<16x256xf32> to vector<16x256xbf16>
    %c0_57 = arith.constant 0 : index
    %c0_58 = arith.constant 0 : index
    %148 = vector.load %arg26[%c0_57, %c0_58] : memref<256x4608xbf16, #tpu.memory_space<vmem>>, vector<256x4608xbf16>
    %cst_59 = arith.constant dense<0.000000e+00> : vector<16x4608xf32>
    %149 = tpu.matmul %147, %148, %cst_59 {dimension_numbers = #tpu.dot_dimension_numbers<[1], [0], [0], [1], [0, 0, 1, 1], [], []>} : vector<16x256xbf16>, vector<256x4608xbf16>, vector<16x4608xf32> -> vector<16x4608xf32>
    %c0_60 = arith.constant 0 : index
    %c0_61 = arith.constant 0 : index
    %150 = vector.load %arg11[%c0_60, %c0_61] : memref<1x4608xf32, #tpu.memory_space<vmem>>, vector<1x4608xf32>
    %151 = vector.broadcast %150 : vector<1x4608xf32> to vector<16x4608xf32>
    %152 = arith.addf %149, %151 : vector<16x4608xf32>
    %153 = vector.extract_strided_slice %152 {offsets = [0, 0], sizes = [16, 1152], strides = [1, 1]} : vector<16x4608xf32> to vector<16x1152xf32>
    %154 = vector.extract_strided_slice %152 {offsets = [0, 1152], sizes = [16, 1152], strides = [1, 1]} : vector<16x4608xf32> to vector<16x1152xf32>
    %155 = vector.extract_strided_slice %152 {offsets = [0, 2304], sizes = [16, 1152], strides = [1, 1]} : vector<16x4608xf32> to vector<16x1152xf32>
    %156 = vector.extract_strided_slice %152 {offsets = [0, 3456], sizes = [16, 1152], strides = [1, 1]} : vector<16x4608xf32> to vector<16x1152xf32>
    %c0_62 = arith.constant 0 : index
    %c0_63 = arith.constant 0 : index
    %157 = vector.load %arg6[%c0_62, %c0_63] : memref<128x1152xbf16, #tpu.memory_space<vmem>>, vector<128x1152xbf16>
    %158 = arith.truncf %154 : vector<16x1152xf32> to vector<16x1152xbf16>
    %159 = tpu.concatenate %158, %158, %158, %158, %158, %158, %158, %158 in 0 : vector<16x1152xbf16>, vector<16x1152xbf16>, vector<16x1152xbf16>, vector<16x1152xbf16>, vector<16x1152xbf16>, vector<16x1152xbf16>, vector<16x1152xbf16>, vector<16x1152xbf16> -> vector<128x1152xbf16>
    %160 = arith.mulf %159, %157 : vector<128x1152xbf16>
    %161 = arith.truncf %155 : vector<16x1152xf32> to vector<16x1152xbf16>
    %162 = tpu.concatenate %161, %161, %161, %161, %161, %161, %161, %161 in 0 : vector<16x1152xbf16>, vector<16x1152xbf16>, vector<16x1152xbf16>, vector<16x1152xbf16>, vector<16x1152xbf16>, vector<16x1152xbf16>, vector<16x1152xbf16>, vector<16x1152xbf16> -> vector<128x1152xbf16>
    %163 = arith.mulf %162, %157 : vector<128x1152xbf16>
    %164 = arith.truncf %153 : vector<16x1152xf32> to vector<16x1152xbf16>
    %cst_64 = arith.constant dense<0.000000e+00> : vector<16x128xf32>
    %165 = tpu.matmul %164, %160, %cst_64 {dimension_numbers = #tpu.dot_dimension_numbers<[1], [1], [0], [0], [0, 0, 1, 0], [], []>} : vector<16x1152xbf16>, vector<128x1152xbf16>, vector<16x128xf32> -> vector<16x128xf32>
    %166 = arith.addf %165, %15 : vector<16x128xf32>
    %cst_65 = arith.constant dense<0xFF800000> : vector<16xf32>
    %167 = vector.multi_reduction <maximumf>, %166, %cst_65 [1] : vector<16x128xf32> to vector<16xf32>
    %168 = vector.shape_cast %167 : vector<16xf32> to vector<16x1xf32>
    %169 = vector.broadcast %168 : vector<16x1xf32> to vector<16x128xf32>
    %170 = arith.subf %166, %169 : vector<16x128xf32>
    %171 = math.exp %170 : vector<16x128xf32>
    %172 = arith.mulf %171, %16 : vector<16x128xf32>
    %cst_66 = arith.constant dense<0.000000e+00> : vector<16x128xf32>
    %173 = tpu.matmul %172, %17, %cst_66 {dimension_numbers = #tpu.dot_dimension_numbers<[1], [0], [0], [1], [0, 0, 1, 1], [], []>} : vector<16x128xf32>, vector<128x128xf32>, vector<16x128xf32> -> vector<16x128xf32>
    %cst_67 = arith.constant 1.000000e-30 : f32
    %174 = vector.broadcast %cst_67 : f32 to vector<16x128xf32>
    %175 = arith.maximumf %173, %174 : vector<16x128xf32>
    %176 = tpu.reciprocal %175 : vector<16x128xf32> -> vector<16x128xf32>
    %177 = arith.mulf %172, %176 : vector<16x128xf32>
    %178 = arith.truncf %177 : vector<16x128xf32> to vector<16x128xbf16>
    %cst_68 = arith.constant dense<0.000000e+00> : vector<16x1152xf32>
    %179 = tpu.matmul %178, %163, %cst_68 {dimension_numbers = #tpu.dot_dimension_numbers<[1], [0], [0], [1], [0, 0, 1, 1], [], []>} : vector<16x128xbf16>, vector<128x1152xbf16>, vector<16x1152xf32> -> vector<16x1152xf32>
    %180 = arith.addf %179, %156 : vector<16x1152xf32>
    %181 = arith.addf %180, %46 : vector<16x1152xf32>
    %c5_i32_69 = arith.constant 5 : i32
    %182 = tpu.memref_slice %arg29[%c5_i32_69] : memref<7x!tpu.dma_semaphore, #tpu.memory_space<semaphore_mem>> -> memref<1x!tpu.dma_semaphore, #tpu.memory_space<semaphore_mem>>
    %183 = tpu.memref_squeeze %182 : memref<1x!tpu.dma_semaphore, #tpu.memory_space<semaphore_mem>> -> memref<!tpu.dma_semaphore, #tpu.memory_space<semaphore_mem>>
    tpu.wait_dma2 semaphore(%183 : memref<!tpu.dma_semaphore, #tpu.memory_space<semaphore_mem>>) src(%arg19 : memref<1152x128xbf16, #tpu.memory_space<any>>) dst(%arg27 : memref<1152x128xbf16, #tpu.memory_space<vmem>>)
    %184 = arith.truncf %181 : vector<16x1152xf32> to vector<16x1152xbf16>
    %c0_70 = arith.constant 0 : index
    %c0_71 = arith.constant 0 : index
    %185 = vector.load %arg27[%c0_70, %c0_71] : memref<1152x128xbf16, #tpu.memory_space<vmem>>, vector<1152x128xbf16>
    %cst_72 = arith.constant dense<0.000000e+00> : vector<16x128xf32>
    %186 = tpu.matmul %184, %185, %cst_72 {dimension_numbers = #tpu.dot_dimension_numbers<[1], [0], [0], [1], [0, 0, 1, 1], [], []>} : vector<16x1152xbf16>, vector<1152x128xbf16>, vector<16x128xf32> -> vector<16x128xf32>
    %c0_73 = arith.constant 0 : index
    %c0_74 = arith.constant 0 : index
    %187 = vector.load %arg12[%c0_73, %c0_74] : memref<1x128xf32, #tpu.memory_space<vmem>>, vector<1x128xf32>
    %188 = vector.broadcast %187 : vector<1x128xf32> to vector<16x128xf32>
    %189 = arith.addf %186, %188 : vector<16x128xf32>
    %cst_75 = arith.constant 5.000000e-01 : f32
    %190 = vector.broadcast %cst_75 : f32 to vector<16x128xf32>
    %191 = arith.mulf %190, %189 : vector<16x128xf32>
    %cst_76 = arith.constant 4.471500e-02 : f32
    %192 = vector.broadcast %cst_76 : f32 to vector<16x128xf32>
    %193 = arith.mulf %192, %189 : vector<16x128xf32>
    %194 = arith.mulf %193, %189 : vector<16x128xf32>
    %195 = arith.mulf %194, %189 : vector<16x128xf32>
    %196 = arith.addf %189, %195 : vector<16x128xf32>
    %cst_77 = arith.constant 0.797884583 : f32
    %197 = vector.broadcast %cst_77 : f32 to vector<16x128xf32>
    %198 = arith.mulf %197, %196 : vector<16x128xf32>
    %199 = math.tanh %198 : vector<16x128xf32>
    %cst_78 = arith.constant 1.000000e+00 : f32
    %200 = vector.broadcast %cst_78 : f32 to vector<16x128xf32>
    %201 = arith.addf %200, %199 : vector<16x128xf32>
    %202 = arith.mulf %191, %201 : vector<16x128xf32>
    %c6_i32_79 = arith.constant 6 : i32
    %203 = tpu.memref_slice %arg29[%c6_i32_79] : memref<7x!tpu.dma_semaphore, #tpu.memory_space<semaphore_mem>> -> memref<1x!tpu.dma_semaphore, #tpu.memory_space<semaphore_mem>>
    %204 = tpu.memref_squeeze %203 : memref<1x!tpu.dma_semaphore, #tpu.memory_space<semaphore_mem>> -> memref<!tpu.dma_semaphore, #tpu.memory_space<semaphore_mem>>
    tpu.wait_dma2 semaphore(%204 : memref<!tpu.dma_semaphore, #tpu.memory_space<semaphore_mem>>) src(%arg20 : memref<128x128xbf16, #tpu.memory_space<any>>) dst(%arg28 : memref<128x128xbf16, #tpu.memory_space<vmem>>)
    %205 = arith.truncf %202 : vector<16x128xf32> to vector<16x128xbf16>
    %c0_80 = arith.constant 0 : index
    %c0_81 = arith.constant 0 : index
    %206 = vector.load %arg28[%c0_80, %c0_81] : memref<128x128xbf16, #tpu.memory_space<vmem>>, vector<128x128xbf16>
    %cst_82 = arith.constant dense<0.000000e+00> : vector<16x128xf32>
    %207 = tpu.matmul %205, %206, %cst_82 {dimension_numbers = #tpu.dot_dimension_numbers<[1], [0], [0], [1], [0, 0, 1, 1], [], []>} : vector<16x128xbf16>, vector<128x128xbf16>, vector<16x128xf32> -> vector<16x128xf32>
    %c0_83 = arith.constant 0 : index
    %c0_84 = arith.constant 0 : index
    %208 = vector.load %arg13[%c0_83, %c0_84] : memref<1x128xf32, #tpu.memory_space<vmem>>, vector<1x128xf32>
    %209 = vector.broadcast %208 : vector<1x128xf32> to vector<16x128xf32>
    %210 = arith.addf %207, %209 : vector<16x128xf32>
    %c0_85 = arith.constant 0 : index
    %c0_86 = arith.constant 0 : index
    %211 = vector.load %arg21[%c0_85, %c0_86] : memref<16x128xf32, #tpu.memory_space<vmem>>, vector<16x128xf32>
    tpu.vector_store %arg21[%c0_85, %c0_86], %210 {strides = array<i32>} : memref<16x128xf32, #tpu.memory_space<vmem>>, vector<16x128xf32>,
    return
  }
  func.func @transform_0(%arg0: i32) -> (i32, i32) {
    %c0_i32 = arith.constant 0 : i32
    %c0_i32_0 = arith.constant 0 : i32
    %c0_i32_1 = arith.constant 0 : i32
    return %c0_i32, %c0_i32_0 : i32, i32
  }
  func.func @transform_1(%arg0: i32) -> (i32, i32) {
    %c0_i32 = arith.constant 0 : i32
    %c0_i32_0 = arith.constant 0 : i32
    %c0_i32_1 = arith.constant 0 : i32
    return %c0_i32, %c0_i32_0 : i32, i32
  }
  func.func @transform_2(%arg0: i32) -> (i32, i32) {
    %c0_i32 = arith.constant 0 : i32
    %c0_i32_0 = arith.constant 0 : i32
    %c0_i32_1 = arith.constant 0 : i32
    return %c0_i32, %c0_i32_0 : i32, i32
  }
  func.func @transform_3(%arg0: i32) -> (i32, i32) {
    %c0_i32 = arith.constant 0 : i32
    %c0_i32_0 = arith.constant 0 : i32
    %c0_i32_1 = arith.constant 0 : i32
    return %c0_i32, %c0_i32_0 : i32, i32
  }
  func.func @transform_4(%arg0: i32) -> (i32, i32) {
    %c0_i32 = arith.constant 0 : i32
    %c0_i32_0 = arith.constant 0 : i32
    %c0_i32_1 = arith.constant 0 : i32
    return %c0_i32, %c0_i32_0 : i32, i32
  }
  func.func @transform_5(%arg0: i32) -> (i32, i32) {
    %c0_i32 = arith.constant 0 : i32
    %c0_i32_0 = arith.constant 0 : i32
    %c0_i32_1 = arith.constant 0 : i32
    return %c0_i32, %c0_i32_0 : i32, i32
  }
  func.func @transform_6(%arg0: i32) -> (i32, i32) {
    %c0_i32 = arith.constant 0 : i32
    %c0_i32_0 = arith.constant 0 : i32
    %c0_i32_1 = arith.constant 0 : i32
    return %c0_i32, %c0_i32_0 : i32, i32
  }
  func.func @transform_7(%arg0: i32) -> (i32, i32) {
    %c0_i32 = arith.constant 0 : i32
    %c0_i32_0 = arith.constant 0 : i32
    %c0_i32_1 = arith.constant 0 : i32
    return %c0_i32, %c0_i32_0 : i32, i32
  }
  func.func @transform_8(%arg0: i32) -> (i32, i32) {
    %c0_i32 = arith.constant 0 : i32
    %c0_i32_0 = arith.constant 0 : i32
    %c0_i32_1 = arith.constant 0 : i32
    return %c0_i32, %c0_i32_0 : i32, i32
  }
  func.func @transform_9(%arg0: i32) -> (i32, i32) {
    %c0_i32 = arith.constant 0 : i32
    %c0_i32_0 = arith.constant 0 : i32
    %c0_i32_1 = arith.constant 0 : i32
    return %c0_i32, %c0_i32_0 : i32, i32
  }
  func.func @transform_10(%arg0: i32) -> (i32, i32) {
    %c0_i32 = arith.constant 0 : i32
    %c0_i32_0 = arith.constant 0 : i32
    %c0_i32_1 = arith.constant 0 : i32
    return %c0_i32, %c0_i32_0 : i32, i32
  }
  func.func @transform_11(%arg0: i32) -> (i32, i32) {
    %c0_i32 = arith.constant 0 : i32
    %c0_i32_0 = arith.constant 0 : i32
    %c0_i32_1 = arith.constant 0 : i32
    return %c0_i32, %c0_i32_0 : i32, i32
  }
  func.func @transform_12(%arg0: i32) -> (i32, i32) {
    %c0_i32 = arith.constant 0 : i32
    %c0_i32_0 = arith.constant 0 : i32
    %c0_i32_1 = arith.constant 0 : i32
    return %c0_i32, %c0_i32_0 : i32, i32
  }
  func.func @transform_20(%arg0: i32) -> (i32, i32) {
    %c0_i32 = arith.constant 0 : i32
    %c0_i32_0 = arith.constant 0 : i32
    %c0_i32_1 = arith.constant 0 : i32
    return %c0_i32, %c0_i32_0 : i32, i32
  }
}

</mosaic_0001>

<llo_original>
// kernel: tpu_custom_call.1
$region0: #{tpu_custom_call.1}
  #allocation0 [shape = 'u32[]', space=smem, size = 0x4, offset = 0x4, fixed_abs, tag = 'smem constant byte address 0x4 - core index']
  #allocation1 [shape = 'u32[144,128]{1,0:T(1,128)}', space=vmem, size = 0x12000, scoped, tag = 'internal scratch']
  #allocation2 [shape = 'bf16[1152,128]{1,0:T(16,128)(2,1)}', space=vmem, size = 0x48000, scoped, tag = 'scratch operand']
  #allocation3 [shape = 'bf16[128,1152]{1,0:T(16,128)(2,1)}', space=vmem, size = 0x48000, scoped, tag = 'scratch operand']
  #allocation4 [shape = 'bf16[1152,1024]{1,0:T(16,128)(2,1)}', space=vmem, size = 0x240000, scoped, tag = 'scratch operand']
  #allocation5 [shape = 'bf16[256,1024]{1,0:T(16,128)(2,1)}', space=vmem, size = 0x80000, scoped, tag = 'scratch operand']
  #allocation6 [shape = 'bf16[256,4608]{1,0:T(16,128)(2,1)}', space=vmem, size = 0x240000, scoped, tag = 'scratch operand']
  #allocation7 [shape = 'bf16[1152,128]{1,0:T(16,128)(2,1)}', space=vmem, size = 0x48000, scoped, tag = 'scratch operand']
  #allocation8 [shape = 'bf16[128,128]{1,0:T(16,128)(2,1)}', space=vmem, size = 0x8000, scoped, tag = 'scratch operand']
  #allocation9 [shape = 's32[7]{0}', space=sflag, size = 0x1c, scoped, tag = 'scratch operand']
  #allocation32 [shape = 's32[]', space=sflag, size = 0x4, offset = 0, fixed_abs, tag = 'sflag constant byte address 0x0 - dummy sync flag']
  #allocation33 [shape = 's32[]', space=sflag, size = 0x4, offset = 0, fixed_abs, tag = 'sflag constant byte address 0x0 - dummy sync flag']
  #allocation34 [shape = 'u32[]', space=smem, size = 0x4, offset = 0x44, fixed_abs, tag = 'smem constant byte address 0x44 - assertion arg 0']
  #allocation35 [shape = 'u32[]', space=smem, size = 0x4, offset = 0x48, fixed_abs, tag = 'smem constant byte address 0x48 - assertion arg 1']
  #allocation36 [shape = 's32[]', space=sflag, size = 0x4, offset = 0, fixed_abs, tag = 'sflag constant byte address 0x0 - dummy sync flag']
  #allocation38 [shape = 's32[]', space=sflag, size = 0x4, offset = 0, fixed_abs, tag = 'sflag constant byte address 0x0 - dummy sync flag']
  #allocation40 [shape = 's32[]', space=sflag, size = 0x4, offset = 0, fixed_abs, tag = 'sflag constant byte address 0x0 - dummy sync flag']
  #allocation42 [shape = 's32[]', space=sflag, size = 0x4, offset = 0, fixed_abs, tag = 'sflag constant byte address 0x0 - dummy sync flag']
  #allocation44 [shape = 's32[]', space=sflag, size = 0x4, offset = 0, fixed_abs, tag = 'sflag constant byte address 0x0 - dummy sync flag']
  #allocation45 [shape = 's32[]', space=sflag, size = 0x4, offset = 0, fixed_abs, tag = 'sflag constant byte address 0x0 - dummy sync flag']
  #allocation46 [shape = 's32[]', space=sflag, size = 0x4, offset = 0, fixed_abs, tag = 'sflag constant byte address 0x0 - dummy sync flag']
  #allocation47 [shape = 's32[]', space=sflag, size = 0x4, offset = 0, fixed_abs, tag = 'sflag constant byte address 0x0 - dummy sync flag']
  %s0 = inlined_call_operand.hbm [shape: f32[16,1152], index: 0, kind: input, shape index: {}]
  %s1 = inlined_call_operand.hbm [shape: f32[16,128], index: 1, kind: input, shape index: {}]
  %s2 = inlined_call_operand.hbm [shape: f32[16,128], index: 2, kind: input, shape index: {}]
  %s3 = inlined_call_operand.hbm [shape: f32[128,128], index: 3, kind: input, shape index: {}]
  %s4 = inlined_call_operand.hbm [shape: bf16[128,256], index: 4, kind: input, shape index: {}]
  %s5 = inlined_call_operand.hbm [shape: bf16[128,1152], index: 5, kind: input, shape index: {}]
  %s6 = inlined_call_operand.hbm [shape: f32[1,128], index: 6, kind: input, shape index: {}]
  %s7 = inlined_call_operand.hbm [shape: f32[1,1152], index: 7, kind: input, shape index: {}]
  %s8 = inlined_call_operand.hbm [shape: f32[1,1024], index: 8, kind: input, shape index: {}]
  %s9 = inlined_call_operand.hbm [shape: f32[1,1024], index: 9, kind: input, shape index: {}]
  %s10 = inlined_call_operand.hbm [shape: f32[1,4608], index: 10, kind: input, shape index: {}]
  %s11 = inlined_call_operand.hbm [shape: f32[1,128], index: 11, kind: input, shape index: {}]
  %s12 = inlined_call_operand.hbm [shape: f32[1,128], index: 12, kind: input, shape index: {}]
  %s13 = inlined_call_operand.hbm [shape: bf16[1152,128], index: 13, kind: input, shape index: {}]
  %s14 = inlined_call_operand.hbm [shape: bf16[128,1152], index: 14, kind: input, shape index: {}]
  %s15 = inlined_call_operand.hbm [shape: bf16[1152,1024], index: 15, kind: input, shape index: {}]
  %s16 = inlined_call_operand.hbm [shape: bf16[256,1024], index: 16, kind: input, shape index: {}]
  %s17 = inlined_call_operand.hbm [shape: bf16[256,4608], index: 17, kind: input, shape index: {}]
  %s18 = inlined_call_operand.hbm [shape: bf16[1152,128], index: 18, kind: input, shape index: {}]
  %s19 = inlined_call_operand.hbm [shape: bf16[128,128], index: 19, kind: input, shape index: {}]
  %s20 = inlined_call_operand.hbm [shape: f32[16,128], index: 20, kind: output, shape index: {}]
  %s21 = sld [smem:[#allocation0]]
  $region126: #{tpu_custom_call.1} parent=0
    _
  %s23 = ssub.s32 1, %s21
  %s24 = scalar_select 0, %s23, %s21
  $region1: #{tpu_custom_call.1} parent=0
    #allocation10 [shape = 'u8[73728]{0}', space=vmem, size = 0x12000, scoped, tag = 'input window, operand 0, single buffered']
    #allocation11 [shape = 's32[1]{0}', space=sflag, size = 0x4, scoped, tag = 'scoped memory for tpu_custom_call.1']
    #allocation12 [shape = 's32[1]{0}', space=sflag, size = 0x4, scoped, tag = 'scoped memory for tpu_custom_call.1']
    #allocation13 [shape = 'u8[8192]{0}', space=vmem, size = 0x2000, scoped, tag = 'input window, operand 1, single buffered']
    #allocation14 [shape = 's32[1]{0}', space=sflag, size = 0x4, scoped, tag = 'scoped memory for tpu_custom_call.1']
    #allocation15 [shape = 'u8[8192]{0}', space=vmem, size = 0x2000, scoped, tag = 'input window, operand 2, single buffered']
    #allocation16 [shape = 'u8[65536]{0}', space=vmem, size = 0x10000, scoped, tag = 'input window, operand 3, single buffered']
    #allocation17 [shape = 's32[1]{0}', space=sflag, size = 0x4, scoped, tag = 'scoped memory for tpu_custom_call.1']
    #allocation18 [shape = 'u8[65536]{0}', space=vmem, size = 0x10000, scoped, tag = 'input window, operand 4, single buffered']
    #allocation19 [shape = 'u8[294912]{0}', space=vmem, size = 0x48000, scoped, tag = 'input window, operand 5, single buffered']
    #allocation20 [shape = 's32[1]{0}', space=sflag, size = 0x4, scoped, tag = 'scoped memory for tpu_custom_call.1']
    #allocation21 [shape = 'u8[512]{0}', space=vmem, size = 0x400, scoped, tag = 'input window, operand 6, single buffered']
    #allocation22 [shape = 'u8[4608]{0}', space=vmem, size = 0x1400, scoped, tag = 'input window, operand 7, single buffered']
    #allocation23 [shape = 's32[1]{0}', space=sflag, size = 0x4, scoped, tag = 'scoped memory for tpu_custom_call.1']
    #allocation24 [shape = 'u8[4096]{0}', space=vmem, size = 0x1000, scoped, tag = 'input window, operand 8, single buffered']
    #allocation25 [shape = 'u8[4096]{0}', space=vmem, size = 0x1000, scoped, tag = 'input window, operand 9, single buffered']
    #allocation26 [shape = 's32[1]{0}', space=sflag, size = 0x4, scoped, tag = 'scoped memory for tpu_custom_call.1']
    #allocation27 [shape = 'u8[18432]{0}', space=vmem, size = 0x4800, scoped, tag = 'input window, operand 10, single buffered']
    #allocation28 [shape = 'u8[512]{0}', space=vmem, size = 0x400, scoped, tag = 'input window, operand 11, single buffered']
    #allocation29 [shape = 's32[1]{0}', space=sflag, size = 0x4, scoped, tag = 'scoped memory for tpu_custom_call.1']
    #allocation30 [shape = 'u8[512]{0}', space=vmem, size = 0x400, scoped, tag = 'input window, operand 12, single buffered']
    #allocation31 [shape = 'u8[8192]{0}', space=vmem, size = 0x2000, scoped, tag = 'output window, operand 0, single buffered']
    #allocation37 [shape = 'u32[9]{0}', space=smem, size = 0x24, scoped, tag = 'DMA stride descriptor']
    #allocation39 [shape = 'u32[9]{0}', space=smem, size = 0x24, scoped, tag = 'DMA stride descriptor']
    #allocation41 [shape = 'u32[9]{0}', space=smem, size = 0x24, scoped, tag = 'DMA stride descriptor']
    #allocation43 [shape = 'u32[9]{0}', space=smem, size = 0x24, scoped, tag = 'DMA stride descriptor']
    %25 = vsyncpa [#allocation11], 0
    %26 = vsyncpa [#allocation14], 0
    %27 = vsyncpa [#allocation17], 0
    %28 = vsyncpa [#allocation20], 0
    %29 = vsyncpa [#allocation23], 0
    %30 = vsyncpa [#allocation26], 0
    %31 = vsyncpa [#allocation29], 0
    %32 = vsyncpa [#allocation12], 0
    // Predicated region
    $region2: #{tpu_custom_call.1} parent=1 // pred_check
      _
    $region3: #{tpu_custom_call.1} parent=1 // pred_check_branch
      %34 = sbr.rel (0) target = $region5
    $region4: #{tpu_custom_call.1} parent=1 // pred_region
      %s36 = ssub.s32 2304, 2304
      %37 = vsyncadd [#allocation11], %s36
      %s38 = sshll.u32 [#allocation10], 4
      %s39 = int_to_ptr.vmem [resolvable:$true] %s38
      %44 = dma.hbm_to_vmem [thread:$0]  %s0, 2304, %s39, [#allocation11], 1152, 1152, 72
    $region5: #{tpu_custom_call.1} parent=1 // pred_fallthru
      _
    // Predicated region
    $region6: #{tpu_custom_call.1} parent=1 // pred_check
      _
    $region7: #{tpu_custom_call.1} parent=1 // pred_check_branch
      %46 = sbr.rel (0) target = $region9
    $region8: #{tpu_custom_call.1} parent=1 // pred_region
      %s48 = ssub.s32 256, 256
      %49 = vsyncadd [#allocation14], %s48
      %s50 = sshll.u32 [#allocation13], 4
      %s51 = int_to_ptr.vmem [resolvable:$true] %s50
      %56 = dma.hbm_to_vmem [thread:$0]  %s1, 256, %s51, [#allocation14], 128, 128, 8
    $region9: #{tpu_custom_call.1} parent=1 // pred_fallthru
      _
    // Predicated region
    $region10: #{tpu_custom_call.1} parent=1 // pred_check
      _
    $region11: #{tpu_custom_call.1} parent=1 // pred_check_branch
      %58 = sbr.rel (0) target = $region13
    $region12: #{tpu_custom_call.1} parent=1 // pred_region
      %s60 = ssub.s32 256, 256
      %61 = vsyncadd [#allocation14], %s60
      %s62 = sshll.u32 [#allocation15], 4
      %s63 = int_to_ptr.vmem [resolvable:$true] %s62
      %68 = dma.hbm_to_vmem [thread:$0]  %s2, 256, %s63, [#allocation14], 128, 128, 8
    $region13: #{tpu_custom_call.1} parent=1 // pred_fallthru
      _
    // Predicated region
    $region14: #{tpu_custom_call.1} parent=1 // pred_check
      _
    $region15: #{tpu_custom_call.1} parent=1 // pred_check_branch
      %70 = sbr.rel (0) target = $region17
    $region16: #{tpu_custom_call.1} parent=1 // pred_region
      %s72 = ssub.s32 2048, 2048
      %73 = vsyncadd [#allocation17], %s72
      %s74 = sshll.u32 [#allocation16], 4
      %s75 = int_to_ptr.vmem [resolvable:$true] %s74
      %80 = dma.hbm_to_vmem [thread:$0]  %s3, 2048, %s75, [#allocation17], 128, 128, 8
    $region17: #{tpu_custom_call.1} parent=1 // pred_fallthru
      _
    // Predicated region
    $region18: #{tpu_custom_call.1} parent=1 // pred_check
      _
    $region19: #{tpu_custom_call.1} parent=1 // pred_check_branch
      %82 = sbr.rel (0) target = $region21
    $region20: #{tpu_custom_call.1} parent=1 // pred_region
      %s84 = ssub.s32 2048, 2048
      %85 = vsyncadd [#allocation17], %s84
      %s86 = sshll.u32 [#allocation18], 4
      %s87 = int_to_ptr.vmem [resolvable:$true] %s86
      %92 = dma.hbm_to_vmem [thread:$0]  %s4, 2048, %s87, [#allocation17], 128, 128, 8
    $region21: #{tpu_custom_call.1} parent=1 // pred_fallthru
      _
    // Predicated region
    $region22: #{tpu_custom_call.1} parent=1 // pred_check
      _
    $region23: #{tpu_custom_call.1} parent=1 // pred_check_branch
      %94 = sbr.rel (0) target = $region25
    $region24: #{tpu_custom_call.1} parent=1 // pred_region
      %s96 = ssub.s32 9216, 9216
      %97 = vsyncadd [#allocation20], %s96
      %s98 = sshll.u32 [#allocation19], 4
      %s99 = int_to_ptr.vmem [resolvable:$true] %s98
      %104 = dma.hbm_to_vmem [thread:$0]  %s5, 9216, %s99, [#allocation20], 576, 576, 36
    $region25: #{tpu_custom_call.1} parent=1 // pred_fallthru
      _
    // Predicated region
    $region26: #{tpu_custom_call.1} parent=1 // pred_check
      _
    $region27: #{tpu_custom_call.1} parent=1 // pred_check_branch
      %106 = sbr.rel (0) target = $region29
    $region28: #{tpu_custom_call.1} parent=1 // pred_region
      %s108 = ssub.s32 16, 16
      %109 = vsyncadd [#allocation20], %s108
      %s111 = sshll.u32 [#allocation21], 4
      %s112 = int_to_ptr.vmem [resolvable:$true] %s111
      %114 = dma.hbm_to_vmem [thread:$0]  %s6, 16, %s112, [#allocation20]
    $region29: #{tpu_custom_call.1} parent=1 // pred_fallthru
      _
    // Predicated region
    $region30: #{tpu_custom_call.1} parent=1 // pred_check
      _
    $region31: #{tpu_custom_call.1} parent=1 // pred_check_branch
      %116 = sbr.rel (0) target = $region33
    $region32: #{tpu_custom_call.1} parent=1 // pred_region
      %s118 = ssub.s32 144, 144
      %119 = vsyncadd [#allocation23], %s118
      %s121 = sshll.u32 [#allocation22], 4
      %s122 = int_to_ptr.vmem [resolvable:$true] %s121
      %124 = dma.hbm_to_vmem [thread:$0]  %s7, 144, %s122, [#allocation23]
    $region33: #{tpu_custom_call.1} parent=1 // pred_fallthru
      _
    // Predicated region
    $region34: #{tpu_custom_call.1} parent=1 // pred_check
      _
    $region35: #{tpu_custom_call.1} parent=1 // pred_check_branch
      %126 = sbr.rel (0) target = $region37
    $region36: #{tpu_custom_call.1} parent=1 // pred_region
      %s128 = ssub.s32 128, 128
      %129 = vsyncadd [#allocation23], %s128
      %s131 = sshll.u32 [#allocation24], 4
      %s132 = int_to_ptr.vmem [resolvable:$true] %s131
      %134 = dma.hbm_to_vmem [thread:$0]  %s8, 128, %s132, [#allocation23]
    $region37: #{tpu_custom_call.1} parent=1 // pred_fallthru
      _
    // Predicated region
    $region38: #{tpu_custom_call.1} parent=1 // pred_check
      _
    $region39: #{tpu_custom_call.1} parent=1 // pred_check_branch
      %136 = sbr.rel (0) target = $region41
    $region40: #{tpu_custom_call.1} parent=1 // pred_region
      %s138 = ssub.s32 128, 128
      %139 = vsyncadd [#allocation26], %s138
      %s141 = sshll.u32 [#allocation25], 4
      %s142 = int_to_ptr.vmem [resolvable:$true] %s141
      %144 = dma.hbm_to_vmem [thread:$0]  %s9, 128, %s142, [#allocation26]
    $region41: #{tpu_custom_call.1} parent=1 // pred_fallthru
      _
    // Predicated region
    $region42: #{tpu_custom_call.1} parent=1 // pred_check
      _
    $region43: #{tpu_custom_call.1} parent=1 // pred_check_branch
      %146 = sbr.rel (0) target = $region45
    $region44: #{tpu_custom_call.1} parent=1 // pred_region
      %s148 = ssub.s32 576, 576
      %149 = vsyncadd [#allocation26], %s148
      %s151 = sshll.u32 [#allocation27], 4
      %s152 = int_to_ptr.vmem [resolvable:$true] %s151
      %154 = dma.hbm_to_vmem [thread:$0]  %s10, 576, %s152, [#allocation26]
    $region45: #{tpu_custom_call.1} parent=1 // pred_fallthru
      _
    // Predicated region
    $region46: #{tpu_custom_call.1} parent=1 // pred_check
      _
    $region47: #{tpu_custom_call.1} parent=1 // pred_check_branch
      %156 = sbr.rel (0) target = $region49
    $region48: #{tpu_custom_call.1} parent=1 // pred_region
      %s158 = ssub.s32 16, 16
      %159 = vsyncadd [#allocation29], %s158
      %s161 = sshll.u32 [#allocation28], 4
      %s162 = int_to_ptr.vmem [resolvable:$true] %s161
      %164 = dma.hbm_to_vmem [thread:$0]  %s11, 16, %s162, [#allocation29]
    $region49: #{tpu_custom_call.1} parent=1 // pred_fallthru
      _
    // Predicated region
    $region50: #{tpu_custom_call.1} parent=1 // pred_check
      _
    $region51: #{tpu_custom_call.1} parent=1 // pred_check_branch
      %166 = sbr.rel (0) target = $region53
    $region52: #{tpu_custom_call.1} parent=1 // pred_region
      %s168 = ssub.s32 16, 16
      %169 = vsyncadd [#allocation29], %s168
      %s171 = sshll.u32 [#allocation30], 4
      %s172 = int_to_ptr.vmem [resolvable:$true] %s171
      %174 = dma.hbm_to_vmem [thread:$0]  %s12, 16, %s172, [#allocation29]
    $region53: #{tpu_custom_call.1} parent=1 // pred_fallthru
      _
    // Predicated region
    $region54: #{tpu_custom_call.1} parent=1 // pred_check
      _
    $region55: #{tpu_custom_call.1} parent=1 // pred_check_branch
      %176 = sbr.rel (0) target = $region57
    $region56: #{tpu_custom_call.1} parent=1 // pred_region
      %177 = dma.done [#allocation11], 2304
    $region57: #{tpu_custom_call.1} parent=1 // pred_fallthru
      _
    // Predicated region
    $region58: #{tpu_custom_call.1} parent=1 // pred_check
      _
    $region59: #{tpu_custom_call.1} parent=1 // pred_check_branch
      %179 = sbr.rel (0) target = $region61
    $region60: #{tpu_custom_call.1} parent=1 // pred_region
      %180 = dma.done [#allocation14], 256
    $region61: #{tpu_custom_call.1} parent=1 // pred_fallthru
      _
    // Predicated region
    $region62: #{tpu_custom_call.1} parent=1 // pred_check
      _
    $region63: #{tpu_custom_call.1} parent=1 // pred_check_branch
      %182 = sbr.rel (0) target = $region65
    $region64: #{tpu_custom_call.1} parent=1 // pred_region
      %183 = dma.done [#allocation14], 256
    $region65: #{tpu_custom_call.1} parent=1 // pred_fallthru
      _
    // Predicated region
    $region66: #{tpu_custom_call.1} parent=1 // pred_check
      _
    $region67: #{tpu_custom_call.1} parent=1 // pred_check_branch
      %185 = sbr.rel (0) target = $region69
    $region68: #{tpu_custom_call.1} parent=1 // pred_region
      %186 = dma.done [#allocation17], 2048
    $region69: #{tpu_custom_call.1} parent=1 // pred_fallthru
      _
    // Predicated region
    $region70: #{tpu_custom_call.1} parent=1 // pred_check
      _
    $region71: #{tpu_custom_call.1} parent=1 // pred_check_branch
      %188 = sbr.rel (0) target = $region73
    $region72: #{tpu_custom_call.1} parent=1 // pred_region
      %189 = dma.done [#allocation17], 2048
    $region73: #{tpu_custom_call.1} parent=1 // pred_fallthru
      _
    // Predicated region
    $region74: #{tpu_custom_call.1} parent=1 // pred_check
      _
    $region75: #{tpu_custom_call.1} parent=1 // pred_check_branch
      %191 = sbr.rel (0) target = $region77
    $region76: #{tpu_custom_call.1} parent=1 // pred_region
      %192 = dma.done [#allocation20], 9216
    $region77: #{tpu_custom_call.1} parent=1 // pred_fallthru
      _
    // Predicated region
    $region78: #{tpu_custom_call.1} parent=1 // pred_check
      _
    $region79: #{tpu_custom_call.1} parent=1 // pred_check_branch
      %194 = sbr.rel (0) target = $region81
    $region80: #{tpu_custom_call.1} parent=1 // pred_region
      %195 = dma.done [#allocation20], 16
    $region81: #{tpu_custom_call.1} parent=1 // pred_fallthru
      _
    // Predicated region
    $region82: #{tpu_custom_call.1} parent=1 // pred_check
      _
    $region83: #{tpu_custom_call.1} parent=1 // pred_check_branch
      %197 = sbr.rel (0) target = $region85
    $region84: #{tpu_custom_call.1} parent=1 // pred_region
      %198 = dma.done [#allocation23], 144
    $region85: #{tpu_custom_call.1} parent=1 // pred_fallthru
      _
    // Predicated region
    $region86: #{tpu_custom_call.1} parent=1 // pred_check
      _
    $region87: #{tpu_custom_call.1} parent=1 // pred_check_branch
      %200 = sbr.rel (0) target = $region89
    $region88: #{tpu_custom_call.1} parent=1 // pred_region
      %201 = dma.done [#allocation23], 128
    $region89: #{tpu_custom_call.1} parent=1 // pred_fallthru
      _
    // Predicated region
    $region90: #{tpu_custom_call.1} parent=1 // pred_check
      _
    $region91: #{tpu_custom_call.1} parent=1 // pred_check_branch
      %203 = sbr.rel (0) target = $region93
    $region92: #{tpu_custom_call.1} parent=1 // pred_region
      %204 = dma.done [#allocation26], 128
    $region93: #{tpu_custom_call.1} parent=1 // pred_fallthru
      _
    // Predicated region
    $region94: #{tpu_custom_call.1} parent=1 // pred_check
      _
    $region95: #{tpu_custom_call.1} parent=1 // pred_check_branch
      %206 = sbr.rel (0) target = $region97
    $region96: #{tpu_custom_call.1} parent=1 // pred_region
      %207 = dma.done [#allocation26], 576
    $region97: #{tpu_custom_call.1} parent=1 // pred_fallthru
      _
    // Predicated region
    $region98: #{tpu_custom_call.1} parent=1 // pred_check
      _
    $region99: #{tpu_custom_call.1} parent=1 // pred_check_branch
      %209 = sbr.rel (0) target = $region101
    $region100: #{tpu_custom_call.1} parent=1 // pred_region
      %210 = dma.done [#allocation29], 16
    $region101: #{tpu_custom_call.1} parent=1 // pred_fallthru
      _
    // Predicated region
    $region102: #{tpu_custom_call.1} parent=1 // pred_check
      _
    $region103: #{tpu_custom_call.1} parent=1 // pred_check_branch
      %212 = sbr.rel (0) target = $region105
    $region104: #{tpu_custom_call.1} parent=1 // pred_region
      %213 = dma.done [#allocation29], 16
    $region105: #{tpu_custom_call.1} parent=1 // pred_fallthru
      _
    // Predicated region
    $region106: #{tpu_custom_call.1} parent=1 // pred_check
      _
    $region107: #{tpu_custom_call.1} parent=1 // pred_check_branch
      %216 = sbr.rel target = $region109
    $region108: #{tpu_custom_call.1} parent=1 // pred_region
      %217 = sst [smem:[#allocation34]] [#allocation33]
      %218 = sst [smem:[#allocation35]] [#allocation32]
    $region109: #{tpu_custom_call.1} parent=1 // pred_fallthru
      _
    %220 = shalt.err (0)
    %s222 = sshll.u32 [#allocation2], 4
    %s223 = int_to_ptr.vmem [resolvable:$true] %s222
    %225 = dma.hbm_to_vmem [thread:$0]  %s13, 9216, %s223, [#allocation9]
    %s226 = scalar_lea.sflag [#allocation9], 1
    %s228 = sshll.u32 1, 14
    %s229 = sxor.u32 4294967295, %s228
    %s231 = sld [smem:[#allocation0]]
    %s232 = sadd.s32 2, %s231
    %s234 = sshll.u32 7, 26
    %s235 = sxor.u32 4294967295, %s234
    %s236 = sand.u32 0, %s235
    %s237 = sshll.u32 %s232, 26
    %s238 = sor.u32 %s236, %s237
    %s239 = sshll.u32 [#allocation3], 4
    %s240 = int_to_ptr.vmem [resolvable:$true] %s239
    %243 = sst [smem:[#allocation37]] 1152
    %s244 = scalar_lea.smem [#allocation37], 1
    %245 = sst [smem:[%s244]] 1152
    %s246 = scalar_lea.smem [#allocation37], 2
    %247 = sst [smem:[%s246]] 9
    %s248 = scalar_lea.smem [#allocation37], 3
    %249 = sst [smem:[%s248]] 64
    %s250 = scalar_lea.smem [#allocation37], 4
    %251 = sst [smem:[%s250]] 128
    %s252 = scalar_lea.smem [#allocation37], 5
    %253 = sst [smem:[%s252]] 2
    %s254 = scalar_lea.smem [#allocation37], 6
    %255 = sst [smem:[%s254]] 576
    %s256 = scalar_lea.smem [#allocation37], 7
    %257 = sst [smem:[%s256]] 64
    %s258 = scalar_lea.smem [#allocation37], 8
    %259 = sst [smem:[%s258]] 4
    %261 = dma.general %s14, 9216, %s240, %s226, [#allocation36], [#allocation37], %s238, 0
    %s262 = scalar_lea.sflag [#allocation9], 2
    %s264 = sshll.u32 1, 14
    %s265 = sxor.u32 4294967295, %s264
    %s267 = sadd.s32 2, %s231
    %s269 = sshll.u32 7, 26
    %s270 = sxor.u32 4294967295, %s269
    %s271 = sand.u32 0, %s270
    %s272 = sshll.u32 %s267, 26
    %s273 = sor.u32 %s271, %s272
    %s274 = sshll.u32 [#allocation4], 4
    %s275 = int_to_ptr.vmem [resolvable:$true] %s274
    %278 = sst [smem:[#allocation39]] 1024
    %s279 = scalar_lea.smem [#allocation39], 1
    %280 = sst [smem:[%s279]] 1024
    %s281 = scalar_lea.smem [#allocation39], 2
    %282 = sst [smem:[%s281]] 8
    %s283 = scalar_lea.smem [#allocation39], 3
    %284 = sst [smem:[%s283]] 64
    %s285 = scalar_lea.smem [#allocation39], 4
    %286 = sst [smem:[%s285]] 128
    %s287 = scalar_lea.smem [#allocation39], 5
    %288 = sst [smem:[%s287]] 2
    %s289 = scalar_lea.smem [#allocation39], 6
    %290 = sst [smem:[%s289]] 512
    %s291 = scalar_lea.smem [#allocation39], 7
    %292 = sst [smem:[%s291]] 64
    %s293 = scalar_lea.smem [#allocation39], 8
    %294 = sst [smem:[%s293]] 4
    %296 = dma.general %s15, 73728, %s275, %s262, [#allocation38], [#allocation39], %s273, 0
    %s297 = scalar_lea.sflag [#allocation9], 3
    %s299 = sshll.u32 1, 14
    %s300 = sxor.u32 4294967295, %s299
    %s302 = sadd.s32 2, %s231
    %s304 = sshll.u32 7, 26
    %s305 = sxor.u32 4294967295, %s304
    %s306 = sand.u32 0, %s305
    %s307 = sshll.u32 %s302, 26
    %s308 = sor.u32 %s306, %s307
    %s309 = sshll.u32 [#allocation5], 4
    %s310 = int_to_ptr.vmem [resolvable:$true] %s309
    %313 = sst [smem:[#allocation41]] 1024
    %s314 = scalar_lea.smem [#allocation41], 1
    %315 = sst [smem:[%s314]] 1024
    %s316 = scalar_lea.smem [#allocation41], 2
    %317 = sst [smem:[%s316]] 8
    %s318 = scalar_lea.smem [#allocation41], 3
    %319 = sst [smem:[%s318]] 64
    %s320 = scalar_lea.smem [#allocation41], 4
    %321 = sst [smem:[%s320]] 128
    %s322 = scalar_lea.smem [#allocation41], 5
    %323 = sst [smem:[%s322]] 2
    %s324 = scalar_lea.smem [#allocation41], 6
    %325 = sst [smem:[%s324]] 512
    %s326 = scalar_lea.smem [#allocation41], 7
    %327 = sst [smem:[%s326]] 64
    %s328 = scalar_lea.smem [#allocation41], 8
    %329 = sst [smem:[%s328]] 4
    %331 = dma.general %s16, 16384, %s310, %s297, [#allocation40], [#allocation41], %s308, 0
    %s332 = scalar_lea.sflag [#allocation9], 4
    %s334 = sshll.u32 1, 14
    %s335 = sxor.u32 4294967295, %s334
    %s337 = sadd.s32 2, %s231
    %s339 = sshll.u32 7, 26
    %s340 = sxor.u32 4294967295, %s339
    %s341 = sand.u32 0, %s340
    %s342 = sshll.u32 %s337, 26
    %s343 = sor.u32 %s341, %s342
    %s344 = sshll.u32 [#allocation6], 4
    %s345 = int_to_ptr.vmem [resolvable:$true] %s344
    %348 = sst [smem:[#allocation43]] 4608
    %s349 = scalar_lea.smem [#allocation43], 1
    %350 = sst [smem:[%s349]] 4608
    %s351 = scalar_lea.smem [#allocation43], 2
    %352 = sst [smem:[%s351]] 36
    %s353 = scalar_lea.smem [#allocation43], 3
    %354 = sst [smem:[%s353]] 64
    %s355 = scalar_lea.smem [#allocation43], 4
    %356 = sst [smem:[%s355]] 128
    %s357 = scalar_lea.smem [#allocation43], 5
    %358 = sst [smem:[%s357]] 2
    %s359 = scalar_lea.smem [#allocation43], 6
    %360 = sst [smem:[%s359]] 2304
    %s361 = scalar_lea.smem [#allocation43], 7
    %362 = sst [smem:[%s361]] 64
    %s363 = scalar_lea.smem [#allocation43], 8
    %364 = sst [smem:[%s363]] 4
    %366 = dma.general %s17, 73728, %s345, %s332, [#allocation42], [#allocation43], %s343, 0
    %s367 = scalar_lea.sflag [#allocation9], 5
    // Predicated region
    $region110: #{tpu_custom_call.1} parent=1 // pred_check
      _
    $region111: #{tpu_custom_call.1} parent=1 // pred_check_branch
      %369 = sbr.rel target = $region113
    $region112: #{tpu_custom_call.1} parent=1 // pred_region
      %370 = sst [smem:[#allocation34]] [#allocation45]
      %371 = sst [smem:[#allocation35]] [#allocation44]
    $region113: #{tpu_custom_call.1} parent=1 // pred_fallthru
      _
    %373 = shalt.err (0)
    %s375 = sshll.u32 [#allocation7], 4
    %s376 = int_to_ptr.vmem [resolvable:$true] %s375
    %378 = dma.hbm_to_vmem [thread:$0]  %s18, 9216, %s376, %s367
    %s379 = scalar_lea.sflag [#allocation9], 6
    // Predicated region
    $region114: #{tpu_custom_call.1} parent=1 // pred_check
      _
    $region115: #{tpu_custom_call.1} parent=1 // pred_check_branch
      %381 = sbr.rel target = $region117
    $region116: #{tpu_custom_call.1} parent=1 // pred_region
      %382 = sst [smem:[#allocation34]] [#allocation47]
      %383 = sst [smem:[#allocation35]] [#allocation46]
    $region117: #{tpu_custom_call.1} parent=1 // pred_fallthru
      _
    %385 = shalt.err (0)
    %s387 = sshll.u32 [#allocation8], 4
    %s388 = int_to_ptr.vmem [resolvable:$true] %s387
    %390 = dma.hbm_to_vmem [thread:$0]  %s19, 1024, %s388, %s379
    %v391 = vld [vmem:[#allocation10] sm:$0xff]
    %v392 = vld [vmem:[#allocation10 + $0x8] sm:$0xff]
    %v393 = vld [vmem:[#allocation10 + $0x10] sm:$0xff]
    %v394 = vld [vmem:[#allocation10 + $0x18] sm:$0xff]
    %v395 = vld [vmem:[#allocation10 + $0x20] sm:$0xff]
    %v396 = vld [vmem:[#allocation10 + $0x28] sm:$0xff]
    %v397 = vld [vmem:[#allocation10 + $0x30] sm:$0xff]
    %v398 = vld [vmem:[#allocation10 + $0x38] sm:$0xff]
    %v399 = vld [vmem:[#allocation10 + $0x40] sm:$0xff]
    %v400 = vld [vmem:[#allocation10 + $0x48] sm:$0xff]
    %v401 = vld [vmem:[#allocation10 + $0x50] sm:$0xff]
    %v402 = vld [vmem:[#allocation10 + $0x58] sm:$0xff]
    %v403 = vld [vmem:[#allocation10 + $0x60] sm:$0xff]
    %v404 = vld [vmem:[#allocation10 + $0x68] sm:$0xff]
    %v405 = vld [vmem:[#allocation10 + $0x70] sm:$0xff]
    %v406 = vld [vmem:[#allocation10 + $0x78] sm:$0xff]
    %v407 = vld [vmem:[#allocation10 + $0x80] sm:$0xff]
    %v408 = vld [vmem:[#allocation10 + $0x88] sm:$0xff]
    %v409 = vld [vmem:[#allocation13] sm:$0xff]
    %v410 = vld [vmem:[#allocation13 + $0x8] sm:$0xff]
    %v411 = vld [vmem:[#allocation15] sm:$0xff]
    %v412 = vld [vmem:[#allocation15 + $0x8] sm:$0xff]
    %v413 = vld [vmem:[#allocation16] sm:$0xff]
    %v414 = vld [vmem:[#allocation16 + $0x8] sm:$0xff]
    %v415 = vld [vmem:[#allocation16 + $0x10] sm:$0xff]
    %v416 = vld [vmem:[#allocation16 + $0x18] sm:$0xff]
    %v417 = vld [vmem:[#allocation16 + $0x20] sm:$0xff]
    %v418 = vld [vmem:[#allocation16 + $0x28] sm:$0xff]
    %v419 = vld [vmem:[#allocation16 + $0x30] sm:$0xff]
    %v420 = vld [vmem:[#allocation16 + $0x38] sm:$0xff]
    %v421 = vld [vmem:[#allocation16 + $0x40] sm:$0xff]
    %v422 = vld [vmem:[#allocation16 + $0x48] sm:$0xff]
    %v423 = vld [vmem:[#allocation16 + $0x50] sm:$0xff]
    %v424 = vld [vmem:[#allocation16 + $0x58] sm:$0xff]
    %v425 = vld [vmem:[#allocation16 + $0x60] sm:$0xff]
    %v426 = vld [vmem:[#allocation16 + $0x68] sm:$0xff]
    %v427 = vld [vmem:[#allocation16 + $0x70] sm:$0xff]
    %v428 = vld [vmem:[#allocation16 + $0x78] sm:$0xff]
    %s429 = smul.u32 4, 144
    %s430 = smul.u32 %s429, 1
    %s431 = sshll.u32 %s430, 4
    %432 = dma.done [#allocation9], %s431
    %v433 = vpack.c.bf16 %v400, %v391
    %v434 = vpack.c.bf16 %v401, %v392
    %v435 = vpack.c.bf16 %v402, %v393
    %v436 = vpack.c.bf16 %v403, %v394
    %v437 = vpack.c.bf16 %v404, %v395
    %v438 = vpack.c.bf16 %v405, %v396
    %v439 = vpack.c.bf16 %v406, %v397
    %v440 = vpack.c.bf16 %v407, %v398
    %v441 = vpack.c.bf16 %v408, %v399
    %v442 = vld [vmem:[#allocation2] sm:$0xff]
    %v443 = vld [vmem:[#allocation2 + $0x8] sm:$0xff]
    %v444 = vld [vmem:[#allocation2 + $0x10] sm:$0xff]
    %v445 = vld [vmem:[#allocation2 + $0x18] sm:$0xff]
    %v446 = vld [vmem:[#allocation2 + $0x20] sm:$0xff]
    %v447 = vld [vmem:[#allocation2 + $0x28] sm:$0xff]
    %v448 = vld [vmem:[#allocation2 + $0x30] sm:$0xff]
    %v449 = vld [vmem:[#allocation2 + $0x38] sm:$0xff]
    %v450 = vld [vmem:[#allocation2 + $0x40] sm:$0xff]
    %v451 = vld [vmem:[#allocation2 + $0x48] sm:$0xff]
    %v452 = vld [vmem:[#allocation2 + $0x50] sm:$0xff]
    %v453 = vld [vmem:[#allocation2 + $0x58] sm:$0xff]
    %v454 = vld [vmem:[#allocation2 + $0x60] sm:$0xff]
    %v455 = vld [vmem:[#allocation2 + $0x68] sm:$0xff]
    %v456 = vld [vmem:[#allocation2 + $0x70] sm:$0xff]
    %v457 = vld [vmem:[#allocation2 + $0x78] sm:$0xff]
    %v458 = vld [vmem:[#allocation2 + $0x80] sm:$0xff]
    %v459 = vld [vmem:[#allocation2 + $0x88] sm:$0xff]
    %v460 = vld [vmem:[#allocation2 + $0x90] sm:$0xff]
    %v461 = vld [vmem:[#allocation2 + $0x98] sm:$0xff]
    %v462 = vld [vmem:[#allocation2 + $0xa0] sm:$0xff]
    %v463 = vld [vmem:[#allocation2 + $0xa8] sm:$0xff]
    %v464 = vld [vmem:[#allocation2 + $0xb0] sm:$0xff]
    %v465 = vld [vmem:[#allocation2 + $0xb8] sm:$0xff]
    %v466 = vld [vmem:[#allocation2 + $0xc0] sm:$0xff]
    %v467 = vld [vmem:[#allocation2 + $0xc8] sm:$0xff]
    %v468 = vld [vmem:[#allocation2 + $0xd0] sm:$0xff]
    %v469 = vld [vmem:[#allocation2 + $0xd8] sm:$0xff]
    %v470 = vld [vmem:[#allocation2 + $0xe0] sm:$0xff]
    %v471 = vld [vmem:[#allocation2 + $0xe8] sm:$0xff]
    %v472 = vld [vmem:[#allocation2 + $0xf0] sm:$0xff]
    %v473 = vld [vmem:[#allocation2 + $0xf8] sm:$0xff]
    %v474 = vld [vmem:[#allocation2 + $0x100] sm:$0xff]
    %v475 = vld [vmem:[#allocation2 + $0x108] sm:$0xff]
    %v476 = vld [vmem:[#allocation2 + $0x110] sm:$0xff]
    %v477 = vld [vmem:[#allocation2 + $0x118] sm:$0xff]
    %v478 = vld [vmem:[#allocation2 + $0x120] sm:$0xff]
    %v479 = vld [vmem:[#allocation2 + $0x128] sm:$0xff]
    %v480 = vld [vmem:[#allocation2 + $0x130] sm:$0xff]
    %v481 = vld [vmem:[#allocation2 + $0x138] sm:$0xff]
    %v482 = vld [vmem:[#allocation2 + $0x140] sm:$0xff]
    %v483 = vld [vmem:[#allocation2 + $0x148] sm:$0xff]
    %v484 = vld [vmem:[#allocation2 + $0x150] sm:$0xff]
    %v485 = vld [vmem:[#allocation2 + $0x158] sm:$0xff]
    %v486 = vld [vmem:[#allocation2 + $0x160] sm:$0xff]
    %v487 = vld [vmem:[#allocation2 + $0x168] sm:$0xff]
    %v488 = vld [vmem:[#allocation2 + $0x170] sm:$0xff]
    %v489 = vld [vmem:[#allocation2 + $0x178] sm:$0xff]
    %v490 = vld [vmem:[#allocation2 + $0x180] sm:$0xff]
    %v491 = vld [vmem:[#allocation2 + $0x188] sm:$0xff]
    %v492 = vld [vmem:[#allocation2 + $0x190] sm:$0xff]
    %v493 = vld [vmem:[#allocation2 + $0x198] sm:$0xff]
    %v494 = vld [vmem:[#allocation2 + $0x1a0] sm:$0xff]
    %v495 = vld [vmem:[#allocation2 + $0x1a8] sm:$0xff]
    %v496 = vld [vmem:[#allocation2 + $0x1b0] sm:$0xff]
    %v497 = vld [vmem:[#allocation2 + $0x1b8] sm:$0xff]
    %v498 = vld [vmem:[#allocation2 + $0x1c0] sm:$0xff]
    %v499 = vld [vmem:[#allocation2 + $0x1c8] sm:$0xff]
    %v500 = vld [vmem:[#allocation2 + $0x1d0] sm:$0xff]
    %v501 = vld [vmem:[#allocation2 + $0x1d8] sm:$0xff]
    %v502 = vld [vmem:[#allocation2 + $0x1e0] sm:$0xff]
    %v503 = vld [vmem:[#allocation2 + $0x1e8] sm:$0xff]
    %v504 = vld [vmem:[#allocation2 + $0x1f0] sm:$0xff]
    %v505 = vld [vmem:[#allocation2 + $0x1f8] sm:$0xff]
    %v506 = vld [vmem:[#allocation2 + $0x200] sm:$0xff]
    %v507 = vld [vmem:[#allocation2 + $0x208] sm:$0xff]
    %v508 = vld [vmem:[#allocation2 + $0x210] sm:$0xff]
    %v509 = vld [vmem:[#allocation2 + $0x218] sm:$0xff]
    %v510 = vld [vmem:[#allocation2 + $0x220] sm:$0xff]
    %v511 = vld [vmem:[#allocation2 + $0x228] sm:$0xff]
    %v512 = vld [vmem:[#allocation2 + $0x230] sm:$0xff]
    %v513 = vld [vmem:[#allocation2 + $0x238] sm:$0xff]
    %v514 = vld [vmem:[#allocation21] sm:$0x1]
    %v516 = vlaneseq
    %v517 = vshrl.u32 %v516, 7
    %v518 = vsub.s32 0, %v517
    %v519 = vrot.slane %v514, %v518
    %521 = vmatprep.subr.bf16.mxu0 0
    %522 = vmatpush1.bf16.msra.mxu0 %v442
    %523 = vmatprep.subr.bf16.mxu0 0
    %524 = vmatpush1.bf16.msra.mxu0 %v443
    %525 = vmatprep.subr.bf16.mxu0 0
    %526 = vmatpush1.bf16.msra.mxu0 %v444
    %527 = vmatprep.subr.bf16.mxu0 0
    %528 = vmatpush1.bf16.msra.mxu0 %v445
    %529 = vmatprep.subr.bf16.mxu0 0
    %530 = vmatpush1.bf16.msra.mxu0 %v446
    %531 = vmatprep.subr.bf16.mxu0 0
    %532 = vmatpush1.bf16.msra.mxu0 %v447
    %533 = vmatprep.subr.bf16.mxu0 0
    %534 = vmatpush1.bf16.msra.mxu0 %v448
    %535 = vmatprep.subr.bf16.mxu0 0
    %536 = vmatpush1.bf16.msra.mxu0 %v449
    %537 = vmatprep.subr.bf16.mxu0 0
    %538 = vmatpush1.bf16.msra.mxu0 %v450
    %539 = vmatprep.subr.bf16.mxu0 0
    %540 = vmatpush1.bf16.msra.mxu0 %v451
    %541 = vmatprep.subr.bf16.mxu0 0
    %542 = vmatpush1.bf16.msra.mxu0 %v452
    %543 = vmatprep.subr.bf16.mxu0 0
    %544 = vmatpush1.bf16.msra.mxu0 %v453
    %545 = vmatprep.subr.bf16.mxu0 0
    %546 = vmatpush1.bf16.msra.mxu0 %v454
    %547 = vmatprep.subr.bf16.mxu0 0
    %548 = vmatpush1.bf16.msra.mxu0 %v455
    %549 = vmatprep.subr.bf16.mxu0 0
    %550 = vmatpush1.bf16.msra.mxu0 %v456
    %551 = vmatprep.subr.bf16.mxu0 0
    %552 = vmatpush1.bf16.msra.mxu0 %v457
    %553 = vmatprep.mubr.bf16.mxu0 %v434
    %554 = vmatmul.mubr.bf16.gmra.mrb[0].mxu0 %v433
    %v555 = vpop.f32.mrb[0].mxu0
    %v556 = vadd.f32 %v519, %v555
    %v557 = vpop.f32.mrb[0].mxu0
    %v558 = vpop.f32.mrb[0].mxu0
    %v559 = vadd.f32 %v519, %v558
    %v560 = vpop.f32.mrb[0].mxu0
    %561 = vdwg.mxu0
    %562 = vmatprep.subr.bf16.mxu0 0
    %563 = vmatpush1.bf16.msra.mxu0 %v458
    %564 = vmatprep.subr.bf16.mxu0 0
    %565 = vmatpush1.bf16.msra.mxu0 %v459
    %566 = vmatprep.subr.bf16.mxu0 0
    %567 = vmatpush1.bf16.msra.mxu0 %v460
    %568 = vmatprep.subr.bf16.mxu0 0
    %569 = vmatpush1.bf16.msra.mxu0 %v461
    %570 = vmatprep.subr.bf16.mxu0 0
    %571 = vmatpush1.bf16.msra.mxu0 %v462
    %572 = vmatprep.subr.bf16.mxu0 0
    %573 = vmatpush1.bf16.msra.mxu0 %v463
    %574 = vmatprep.subr.bf16.mxu0 0
    %575 = vmatpush1.bf16.msra.mxu0 %v464
    %576 = vmatprep.subr.bf16.mxu0 0
    %577 = vmatpush1.bf16.msra.mxu0 %v465
    %578 = vmatprep.subr.bf16.mxu0 0
    %579 = vmatpush1.bf16.msra.mxu0 %v466
    %580 = vmatprep.subr.bf16.mxu0 0
    %581 = vmatpush1.bf16.msra.mxu0 %v467
    %582 = vmatprep.subr.bf16.mxu0 0
    %583 = vmatpush1.bf16.msra.mxu0 %v468
    %584 = vmatprep.subr.bf16.mxu0 0
    %585 = vmatpush1.bf16.msra.mxu0 %v469
    %586 = vmatprep.subr.bf16.mxu0 0
    %587 = vmatpush1.bf16.msra.mxu0 %v470
    %588 = vmatprep.subr.bf16.mxu0 0
    %589 = vmatpush1.bf16.msra.mxu0 %v471
    %590 = vmatprep.subr.bf16.mxu0 0
    %591 = vmatpush1.bf16.msra.mxu0 %v472
    %592 = vmatprep.subr.bf16.mxu0 0
    %593 = vmatpush1.bf16.msra.mxu0 %v473
    %594 = vmatprep.mubr.bf16.mxu0 %v436
    %595 = vmatmul.mubr.bf16.gmra.mrb[0].mxu0 %v435
    %v596 = vpop.f32.mrb[0].mxu0
    %v597 = vadd.f32 %v556, %v596
    %v598 = vpop.f32.mrb[0].mxu0
    %v599 = vpop.f32.mrb[0].mxu0
    %v600 = vadd.f32 %v559, %v599
    %v601 = vpop.f32.mrb[0].mxu0
    %602 = vdwg.mxu0
    %603 = vmatprep.subr.bf16.mxu0 0
    %604 = vmatpush1.bf16.msra.mxu0 %v474
    %605 = vmatprep.subr.bf16.mxu0 0
    %606 = vmatpush1.bf16.msra.mxu0 %v475
    %607 = vmatprep.subr.bf16.mxu0 0
    %608 = vmatpush1.bf16.msra.mxu0 %v476
    %609 = vmatprep.subr.bf16.mxu0 0
    %610 = vmatpush1.bf16.msra.mxu0 %v477
    %611 = vmatprep.subr.bf16.mxu0 0
    %612 = vmatpush1.bf16.msra.mxu0 %v478
    %613 = vmatprep.subr.bf16.mxu0 0
    %614 = vmatpush1.bf16.msra.mxu0 %v479
    %615 = vmatprep.subr.bf16.mxu0 0
    %616 = vmatpush1.bf16.msra.mxu0 %v480
    %617 = vmatprep.subr.bf16.mxu0 0
    %618 = vmatpush1.bf16.msra.mxu0 %v481
    %619 = vmatprep.subr.bf16.mxu0 0
    %620 = vmatpush1.bf16.msra.mxu0 %v482
    %621 = vmatprep.subr.bf16.mxu0 0
    %622 = vmatpush1.bf16.msra.mxu0 %v483
    %623 = vmatprep.subr.bf16.mxu0 0
    %624 = vmatpush1.bf16.msra.mxu0 %v484
    %625 = vmatprep.subr.bf16.mxu0 0
    %626 = vmatpush1.bf16.msra.mxu0 %v485
    %627 = vmatprep.subr.bf16.mxu0 0
    %628 = vmatpush1.bf16.msra.mxu0 %v486
    %629 = vmatprep.subr.bf16.mxu0 0
    %630 = vmatpush1.bf16.msra.mxu0 %v487
    %631 = vmatprep.subr.bf16.mxu0 0
    %632 = vmatpush1.bf16.msra.mxu0 %v488
    %633 = vmatprep.subr.bf16.mxu0 0
    %634 = vmatpush1.bf16.msra.mxu0 %v489
    %635 = vmatprep.mubr.bf16.mxu0 %v438
    %636 = vmatmul.mubr.bf16.gmra.mrb[0].mxu0 %v437
    %v637 = vpop.f32.mrb[0].mxu0
    %v638 = vadd.f32 %v597, %v637
    %v639 = vpop.f32.mrb[0].mxu0
    %v640 = vpop.f32.mrb[0].mxu0
    %v641 = vadd.f32 %v600, %v640
    %v642 = vpop.f32.mrb[0].mxu0
    %643 = vdwg.mxu0
    %644 = vmatprep.subr.bf16.mxu0 0
    %645 = vmatpush1.bf16.msra.mxu0 %v490
    %646 = vmatprep.subr.bf16.mxu0 0
    %647 = vmatpush1.bf16.msra.mxu0 %v491
    %648 = vmatprep.subr.bf16.mxu0 0
    %649 = vmatpush1.bf16.msra.mxu0 %v492
    %650 = vmatprep.subr.bf16.mxu0 0
    %651 = vmatpush1.bf16.msra.mxu0 %v493
    %652 = vmatprep.subr.bf16.mxu0 0
    %653 = vmatpush1.bf16.msra.mxu0 %v494
    %654 = vmatprep.subr.bf16.mxu0 0
    %655 = vmatpush1.bf16.msra.mxu0 %v495
    %656 = vmatprep.subr.bf16.mxu0 0
    %657 = vmatpush1.bf16.msra.mxu0 %v496
    %658 = vmatprep.subr.bf16.mxu0 0
    %659 = vmatpush1.bf16.msra.mxu0 %v497
    %660 = vmatprep.subr.bf16.mxu0 0
    %661 = vmatpush1.bf16.msra.mxu0 %v498
    %662 = vmatprep.subr.bf16.mxu0 0
    %663 = vmatpush1.bf16.msra.mxu0 %v499
    %664 = vmatprep.subr.bf16.mxu0 0
    %665 = vmatpush1.bf16.msra.mxu0 %v500
    %666 = vmatprep.subr.bf16.mxu0 0
    %667 = vmatpush1.bf16.msra.mxu0 %v501
    %668 = vmatprep.subr.bf16.mxu0 0
    %669 = vmatpush1.bf16.msra.mxu0 %v502
    %670 = vmatprep.subr.bf16.mxu0 0
    %671 = vmatpush1.bf16.msra.mxu0 %v503
    %672 = vmatprep.subr.bf16.mxu0 0
    %673 = vmatpush1.bf16.msra.mxu0 %v504
    %674 = vmatprep.subr.bf16.mxu0 0
    %675 = vmatpush1.bf16.msra.mxu0 %v505
    %676 = vmatprep.mubr.bf16.mxu0 %v440
    %677 = vmatmul.mubr.bf16.gmra.mrb[0].mxu0 %v439
    %v678 = vpop.f32.mrb[0].mxu0
    %v679 = vadd.f32 %v638, %v678
    %v680 = vpop.f32.mrb[0].mxu0
    %v681 = vpop.f32.mrb[0].mxu0
    %v682 = vadd.f32 %v641, %v681
    %v683 = vpop.f32.mrb[0].mxu0
    %684 = vdwg.mxu0
    %685 = vmatprep.subr.bf16.mxu0 0
    %686 = vmatpush1.bf16.msra.mxu0 %v506
    %687 = vmatprep.subr.bf16.mxu0 0
    %688 = vmatpush1.bf16.msra.mxu0 %v507
    %689 = vmatprep.subr.bf16.mxu0 0
    %690 = vmatpush1.bf16.msra.mxu0 %v508
    %691 = vmatprep.subr.bf16.mxu0 0
    %692 = vmatpush1.bf16.msra.mxu0 %v509
    %693 = vmatprep.subr.bf16.mxu0 0
    %694 = vmatpush1.bf16.msra.mxu0 %v510
    %695 = vmatprep.subr.bf16.mxu0 0
    %696 = vmatpush1.bf16.msra.mxu0 %v511
    %697 = vmatprep.subr.bf16.mxu0 0
    %698 = vmatpush1.bf16.msra.mxu0 %v512
    %699 = vmatprep.subr.bf16.mxu0 0
    %700 = vmatpush1.bf16.msra.mxu0 %v513
    %701 = vmatprep.subr.bf16.mxu0 0
    %702 = vmatpush1.bf16.msra.mxu0 0
    %703 = vmatprep.subr.bf16.mxu0 0
    %704 = vmatpush1.bf16.msra.mxu0 0
    %705 = vmatprep.subr.bf16.mxu0 0
    %706 = vmatpush1.bf16.msra.mxu0 0
    %707 = vmatprep.subr.bf16.mxu0 0
    %708 = vmatpush1.bf16.msra.mxu0 0
    %709 = vmatprep.subr.bf16.mxu0 0
    %710 = vmatpush1.bf16.msra.mxu0 0
    %711 = vmatprep.subr.bf16.mxu0 0
    %712 = vmatpush1.bf16.msra.mxu0 0
    %713 = vmatprep.subr.bf16.mxu0 0
    %714 = vmatpush1.bf16.msra.mxu0 0
    %715 = vmatprep.subr.bf16.mxu0 0
    %716 = vmatpush1.bf16.msra.mxu0 0
    %717 = vmatprep.mubr.bf16.mxu0 0
    %718 = vmatmul.mubr.bf16.gmra.mrb[0].mxu0 %v441
    %v719 = vpop.f32.mrb[0].mxu0
    %v720 = vadd.f32 %v679, %v719
    %v721 = vpop.f32.mrb[0].mxu0
    %v722 = vpop.f32.mrb[0].mxu0
    %v723 = vadd.f32 %v682, %v722
    %v724 = vpop.f32.mrb[0].mxu0
    %725 = vdwg.mxu0
    %v726 = vmul.f32 %v720, 0.5
    %v727 = vmul.f32 %v723, 0.5
    %v728 = vmul.f32 %v720, 0.044715
    %v729 = vmul.f32 %v723, 0.044715
    %v730 = vmul.f32 %v728, %v720
    %v731 = vmul.f32 %v729, %v723
    %v732 = vmul.f32 %v730, %v720
    %v733 = vmul.f32 %v731, %v723
    %v734 = vadd.f32 %v720, %v732
    %v735 = vadd.f32 %v723, %v733
    %v736 = vmul.f32 %v734, 0.7978846
    %v737 = vmul.f32 %v735, 0.7978846
    %v738 = vtanh.pop %v736
    %v739 = vtanh.pop %v737
    %v740 = vadd.f32 %v738, 1.0
    %v741 = vadd.f32 %v739, 1.0
    %v742 = vmul.f32 %v726, %v740
    %v743 = vmul.f32 %v727, %v741
    %s744 = smul.u32 4, 16
    %s745 = smul.u32 %s744, 9
    %s746 = sshll.u32 %s745, 4
    %747 = dma.done %s226, %s746
    %v748 = vpack.c.bf16 %v743, %v742
    %v749 = vld [vmem:[#allocation3] sm:$0xff]
    %v750 = vld [vmem:[#allocation3 + $0x8] sm:$0xff]
    %v751 = vld [vmem:[#allocation3 + $0x10] sm:$0xff]
    %v752 = vld [vmem:[#allocation3 + $0x18] sm:$0xff]
    %v753 = vld [vmem:[#allocation3 + $0x20] sm:$0xff]
    %v754 = vld [vmem:[#allocation3 + $0x28] sm:$0xff]
    %v755 = vld [vmem:[#allocation3 + $0x30] sm:$0xff]
    %v756 = vld [vmem:[#allocation3 + $0x38] sm:$0xff]
    %v757 = vld [vmem:[#allocation3 + $0x40] sm:$0xff]
    %v758 = vld [vmem:[#allocation3 + $0x48] sm:$0xff]
    %v759 = vld [vmem:[#allocation3 + $0x50] sm:$0xff]
    %v760 = vld [vmem:[#allocation3 + $0x58] sm:$0xff]
    %v761 = vld [vmem:[#allocation3 + $0x60] sm:$0xff]
    %v762 = vld [vmem:[#allocation3 + $0x68] sm:$0xff]
    %v763 = vld [vmem:[#allocation3 + $0x70] sm:$0xff]
    %v764 = vld [vmem:[#allocation3 + $0x78] sm:$0xff]
    %v765 = vld [vmem:[#allocation3 + $0x80] sm:$0xff]
    %v766 = vld [vmem:[#allocation3 + $0x88] sm:$0xff]
    %v767 = vld [vmem:[#allocation3 + $0x90] sm:$0xff]
    %v768 = vld [vmem:[#allocation3 + $0x98] sm:$0xff]
    %v769 = vld [vmem:[#allocation3 + $0xa0] sm:$0xff]
    %v770 = vld [vmem:[#allocation3 + $0xa8] sm:$0xff]
    %v771 = vld [vmem:[#allocation3 + $0xb0] sm:$0xff]
    %v772 = vld [vmem:[#allocation3 + $0xb8] sm:$0xff]
    %v773 = vld [vmem:[#allocation3 + $0xc0] sm:$0xff]
    %v774 = vld [vmem:[#allocation3 + $0xc8] sm:$0xff]
    %v775 = vld [vmem:[#allocation3 + $0xd0] sm:$0xff]
    %v776 = vld [vmem:[#allocation3 + $0xd8] sm:$0xff]
    %v777 = vld [vmem:[#allocation3 + $0xe0] sm:$0xff]
    %v778 = vld [vmem:[#allocation3 + $0xe8] sm:$0xff]
    %v779 = vld [vmem:[#allocation3 + $0xf0] sm:$0xff]
    %v780 = vld [vmem:[#allocation3 + $0xf8] sm:$0xff]
    %v781 = vld [vmem:[#allocation3 + $0x100] sm:$0xff]
    %v782 = vld [vmem:[#allocation3 + $0x108] sm:$0xff]
    %v783 = vld [vmem:[#allocation3 + $0x110] sm:$0xff]
    %v784 = vld [vmem:[#allocation3 + $0x118] sm:$0xff]
    %v785 = vld [vmem:[#allocation3 + $0x120] sm:$0xff]
    %v786 = vld [vmem:[#allocation3 + $0x128] sm:$0xff]
    %v787 = vld [vmem:[#allocation3 + $0x130] sm:$0xff]
    %v788 = vld [vmem:[#allocation3 + $0x138] sm:$0xff]
    %v789 = vld [vmem:[#allocation3 + $0x140] sm:$0xff]
    %v790 = vld [vmem:[#allocation3 + $0x148] sm:$0xff]
    %v791 = vld [vmem:[#allocation3 + $0x150] sm:$0xff]
    %v792 = vld [vmem:[#allocation3 + $0x158] sm:$0xff]
    %v793 = vld [vmem:[#allocation3 + $0x160] sm:$0xff]
    %v794 = vld [vmem:[#allocation3 + $0x168] sm:$0xff]
    %v795 = vld [vmem:[#allocation3 + $0x170] sm:$0xff]
    %v796 = vld [vmem:[#allocation3 + $0x178] sm:$0xff]
    %v797 = vld [vmem:[#allocation3 + $0x180] sm:$0xff]
    %v798 = vld [vmem:[#allocation3 + $0x188] sm:$0xff]
    %v799 = vld [vmem:[#allocation3 + $0x190] sm:$0xff]
    %v800 = vld [vmem:[#allocation3 + $0x198] sm:$0xff]
    %v801 = vld [vmem:[#allocation3 + $0x1a0] sm:$0xff]
    %v802 = vld [vmem:[#allocation3 + $0x1a8] sm:$0xff]
    %v803 = vld [vmem:[#allocation3 + $0x1b0] sm:$0xff]
    %v804 = vld [vmem:[#allocation3 + $0x1b8] sm:$0xff]
    %v805 = vld [vmem:[#allocation3 + $0x1c0] sm:$0xff]
    %v806 = vld [vmem:[#allocation3 + $0x1c8] sm:$0xff]
    %v807 = vld [vmem:[#allocation3 + $0x1d0] sm:$0xff]
    %v808 = vld [vmem:[#allocation3 + $0x1d8] sm:$0xff]
    %v809 = vld [vmem:[#allocation3 + $0x1e0] sm:$0xff]
    %v810 = vld [vmem:[#allocation3 + $0x1e8] sm:$0xff]
    %v811 = vld [vmem:[#allocation3 + $0x1f0] sm:$0xff]
    %v812 = vld [vmem:[#allocation3 + $0x1f8] sm:$0xff]
    %v813 = vld [vmem:[#allocation3 + $0x200] sm:$0xff]
    %v814 = vld [vmem:[#allocation3 + $0x208] sm:$0xff]
    %v815 = vld [vmem:[#allocation3 + $0x210] sm:$0xff]
    %v816 = vld [vmem:[#allocation3 + $0x218] sm:$0xff]
    %v817 = vld [vmem:[#allocation3 + $0x220] sm:$0xff]
    %v818 = vld [vmem:[#allocation3 + $0x228] sm:$0xff]
    %v819 = vld [vmem:[#allocation3 + $0x230] sm:$0xff]
    %v820 = vld [vmem:[#allocation3 + $0x238] sm:$0xff]
    %v821 = vld [vmem:[#allocation22] sm:$0xff]
    %v822 = vld [vmem:[#allocation22 + $0x8] sm:$0x1]
    %v825 = vlaneseq
    %v826 = vshrl.u32 %v825, 7
    %v827 = vsub.s32 0, %v826
    %v828 = vrot.slane %v821, %v827
    %v829 = vlaneseq
    %v830 = vshrl.u32 %v829, 7
    %v831 = vsub.s32 1, %v830
    %v832 = vrot.slane %v821, %v831
    %v833 = vlaneseq
    %v834 = vshrl.u32 %v833, 7
    %v835 = vsub.s32 2, %v834
    %v836 = vrot.slane %v821, %v835
    %v837 = vlaneseq
    %v838 = vshrl.u32 %v837, 7
    %v839 = vsub.s32 3, %v838
    %v840 = vrot.slane %v821, %v839
    %v841 = vlaneseq
    %v842 = vshrl.u32 %v841, 7
    %v843 = vsub.s32 4, %v842
    %v844 = vrot.slane %v821, %v843
    %v845 = vlaneseq
    %v846 = vshrl.u32 %v845, 7
    %v847 = vsub.s32 5, %v846
    %v848 = vrot.slane %v821, %v847
    %v849 = vlaneseq
    %v850 = vshrl.u32 %v849, 7
    %v851 = vsub.s32 6, %v850
    %v852 = vrot.slane %v821, %v851
    %v853 = vlaneseq
    %v854 = vshrl.u32 %v853, 7
    %v855 = vsub.s32 7, %v854
    %v856 = vrot.slane %v821, %v855
    %v857 = vlaneseq
    %v858 = vshrl.u32 %v857, 7
    %v859 = vsub.s32 0, %v858
    %v860 = vrot.slane %v822, %v859
    %870 = vmatprep.subr.bf16.mxu0 %v750
    %871 = vmatpush1.bf16.msra.mxu0 %v749
    %872 = vmatprep.subr.bf16.mxu0 %v759
    %873 = vmatpush1.bf16.msra.mxu0 %v758
    %874 = vmatprep.subr.bf16.mxu0 %v768
    %875 = vmatpush1.bf16.msra.mxu0 %v767
    %876 = vmatprep.subr.bf16.mxu0 %v777
    %877 = vmatpush1.bf16.msra.mxu0 %v776
    %878 = vmatprep.subr.bf16.mxu0 %v786
    %879 = vmatpush1.bf16.msra.mxu0 %v785
    %880 = vmatprep.subr.bf16.mxu0 %v795
    %881 = vmatpush1.bf16.msra.mxu0 %v794
    %882 = vmatprep.subr.bf16.mxu0 %v804
    %883 = vmatpush1.bf16.msra.mxu0 %v803
    %884 = vmatprep.subr.bf16.mxu0 %v813
    %885 = vmatpush1.bf16.msra.mxu0 %v812
    %886 = vmatprep.subr.bf16.mxu0 0
    %887 = vmatpush1.bf16.msra.mxu0 0
    %888 = vmatprep.subr.bf16.mxu0 0
    %889 = vmatpush1.bf16.msra.mxu0 0
    %890 = vmatprep.subr.bf16.mxu0 0
    %891 = vmatpush1.bf16.msra.mxu0 0
    %892 = vmatprep.subr.bf16.mxu0 0
    %893 = vmatpush1.bf16.msra.mxu0 0
    %894 = vmatprep.subr.bf16.mxu0 0
    %895 = vmatpush1.bf16.msra.mxu0 0
    %896 = vmatprep.subr.bf16.mxu0 0
    %897 = vmatpush1.bf16.msra.mxu0 0
    %898 = vmatprep.subr.bf16.mxu0 0
    %899 = vmatpush1.bf16.msra.mxu0 0
    %900 = vmatprep.subr.bf16.mxu0 0
    %901 = vmatpush1.bf16.msra.mxu0 0
    %902 = vmatprep.mubr.bf16.mxu0 0
    %903 = vmatmul.mubr.bf16.gmra.mrb[0].mxu0 %v748
    %v904 = vpop.f32.mrb[0].mxu0
    %v905 = vadd.f32 %v828, %v904
    %v906 = vpop.f32.mrb[0].mxu0
    %v907 = vadd.f32 %v832, %v906
    %v908 = vpop.f32.mrb[0].mxu0
    %v909 = vadd.f32 %v828, %v908
    %v910 = vpop.f32.mrb[0].mxu0
    %v911 = vadd.f32 %v832, %v910
    %912 = vdwg.mxu0
    %913 = vmatprep.subr.bf16.mxu0 %v752
    %914 = vmatpush1.bf16.msra.mxu0 %v751
    %915 = vmatprep.subr.bf16.mxu0 %v761
    %916 = vmatpush1.bf16.msra.mxu0 %v760
    %917 = vmatprep.subr.bf16.mxu0 %v770
    %918 = vmatpush1.bf16.msra.mxu0 %v769
    %919 = vmatprep.subr.bf16.mxu0 %v779
    %920 = vmatpush1.bf16.msra.mxu0 %v778
    %921 = vmatprep.subr.bf16.mxu0 %v788
    %922 = vmatpush1.bf16.msra.mxu0 %v787
    %923 = vmatprep.subr.bf16.mxu0 %v797
    %924 = vmatpush1.bf16.msra.mxu0 %v796
    %925 = vmatprep.subr.bf16.mxu0 %v806
    %926 = vmatpush1.bf16.msra.mxu0 %v805
    %927 = vmatprep.subr.bf16.mxu0 %v815
    %928 = vmatpush1.bf16.msra.mxu0 %v814
    %929 = vmatprep.subr.bf16.mxu0 0
    %930 = vmatpush1.bf16.msra.mxu0 0
    %931 = vmatprep.subr.bf16.mxu0 0
    %932 = vmatpush1.bf16.msra.mxu0 0
    %933 = vmatprep.subr.bf16.mxu0 0
    %934 = vmatpush1.bf16.msra.mxu0 0
    %935 = vmatprep.subr.bf16.mxu0 0
    %936 = vmatpush1.bf16.msra.mxu0 0
    %937 = vmatprep.subr.bf16.mxu0 0
    %938 = vmatpush1.bf16.msra.mxu0 0
    %939 = vmatprep.subr.bf16.mxu0 0
    %940 = vmatpush1.bf16.msra.mxu0 0
    %941 = vmatprep.subr.bf16.mxu0 0
    %942 = vmatpush1.bf16.msra.mxu0 0
    %943 = vmatprep.subr.bf16.mxu0 0
    %944 = vmatpush1.bf16.msra.mxu0 0
    %945 = vmatprep.mubr.bf16.mxu0 0
    %946 = vmatmul.mubr.bf16.gmra.mrb[0].mxu0 %v748
    %v947 = vpop.f32.mrb[0].mxu0
    %v948 = vadd.f32 %v836, %v947
    %v949 = vpop.f32.mrb[0].mxu0
    %v950 = vadd.f32 %v840, %v949
    %v951 = vpop.f32.mrb[0].mxu0
    %v952 = vadd.f32 %v836, %v951
    %v953 = vpop.f32.mrb[0].mxu0
    %v954 = vadd.f32 %v840, %v953
    %955 = vdwg.mxu0
    %956 = vmatprep.subr.bf16.mxu0 %v754
    %957 = vmatpush1.bf16.msra.mxu0 %v753
    %958 = vmatprep.subr.bf16.mxu0 %v763
    %959 = vmatpush1.bf16.msra.mxu0 %v762
    %960 = vmatprep.subr.bf16.mxu0 %v772
    %961 = vmatpush1.bf16.msra.mxu0 %v771
    %962 = vmatprep.subr.bf16.mxu0 %v781
    %963 = vmatpush1.bf16.msra.mxu0 %v780
    %964 = vmatprep.subr.bf16.mxu0 %v790
    %965 = vmatpush1.bf16.msra.mxu0 %v789
    %966 = vmatprep.subr.bf16.mxu0 %v799
    %967 = vmatpush1.bf16.msra.mxu0 %v798
    %968 = vmatprep.subr.bf16.mxu0 %v808
    %969 = vmatpush1.bf16.msra.mxu0 %v807
    %970 = vmatprep.subr.bf16.mxu0 %v817
    %971 = vmatpush1.bf16.msra.mxu0 %v816
    %972 = vmatprep.subr.bf16.mxu0 0
    %973 = vmatpush1.bf16.msra.mxu0 0
    %974 = vmatprep.subr.bf16.mxu0 0
    %975 = vmatpush1.bf16.msra.mxu0 0
    %976 = vmatprep.subr.bf16.mxu0 0
    %977 = vmatpush1.bf16.msra.mxu0 0
    %978 = vmatprep.subr.bf16.mxu0 0
    %979 = vmatpush1.bf16.msra.mxu0 0
    %980 = vmatprep.subr.bf16.mxu0 0
    %981 = vmatpush1.bf16.msra.mxu0 0
    %982 = vmatprep.subr.bf16.mxu0 0
    %983 = vmatpush1.bf16.msra.mxu0 0
    %984 = vmatprep.subr.bf16.mxu0 0
    %985 = vmatpush1.bf16.msra.mxu0 0
    %986 = vmatprep.subr.bf16.mxu0 0
    %987 = vmatpush1.bf16.msra.mxu0 0
    %988 = vmatprep.mubr.bf16.mxu0 0
    %989 = vmatmul.mubr.bf16.gmra.mrb[0].mxu0 %v748
    %v990 = vpop.f32.mrb[0].mxu0
    %v991 = vadd.f32 %v844, %v990
    %v992 = vpop.f32.mrb[0].mxu0
    %v993 = vadd.f32 %v848, %v992
    %v994 = vpop.f32.mrb[0].mxu0
    %v995 = vadd.f32 %v844, %v994
    %v996 = vpop.f32.mrb[0].mxu0
    %v997 = vadd.f32 %v848, %v996
    %998 = vdwg.mxu0
    %999 = vmatprep.subr.bf16.mxu0 %v756
    %1000 = vmatpush1.bf16.msra.mxu0 %v755
    %1001 = vmatprep.subr.bf16.mxu0 %v765
    %1002 = vmatpush1.bf16.msra.mxu0 %v764
    %1003 = vmatprep.subr.bf16.mxu0 %v774
    %1004 = vmatpush1.bf16.msra.mxu0 %v773
    %1005 = vmatprep.subr.bf16.mxu0 %v783
    %1006 = vmatpush1.bf16.msra.mxu0 %v782
    %1007 = vmatprep.subr.bf16.mxu0 %v792
    %1008 = vmatpush1.bf16.msra.mxu0 %v791
    %1009 = vmatprep.subr.bf16.mxu0 %v801
    %1010 = vmatpush1.bf16.msra.mxu0 %v800
    %1011 = vmatprep.subr.bf16.mxu0 %v810
    %1012 = vmatpush1.bf16.msra.mxu0 %v809
    %1013 = vmatprep.subr.bf16.mxu0 %v819
    %1014 = vmatpush1.bf16.msra.mxu0 %v818
    %1015 = vmatprep.subr.bf16.mxu0 0
    %1016 = vmatpush1.bf16.msra.mxu0 0
    %1017 = vmatprep.subr.bf16.mxu0 0
    %1018 = vmatpush1.bf16.msra.mxu0 0
    %1019 = vmatprep.subr.bf16.mxu0 0
    %1020 = vmatpush1.bf16.msra.mxu0 0
    %1021 = vmatprep.subr.bf16.mxu0 0
    %1022 = vmatpush1.bf16.msra.mxu0 0
    %1023 = vmatprep.subr.bf16.mxu0 0
    %1024 = vmatpush1.bf16.msra.mxu0 0
    %1025 = vmatprep.subr.bf16.mxu0 0
    %1026 = vmatpush1.bf16.msra.mxu0 0
    %1027 = vmatprep.subr.bf16.mxu0 0
    %1028 = vmatpush1.bf16.msra.mxu0 0
    %1029 = vmatprep.subr.bf16.mxu0 0
    %1030 = vmatpush1.bf16.msra.mxu0 0
    %1031 = vmatprep.mubr.bf16.mxu0 0
    %1032 = vmatmul.mubr.bf16.gmra.mrb[0].mxu0 %v748
    %v1033 = vpop.f32.mrb[0].mxu0
    %v1034 = vadd.f32 %v852, %v1033
    %v1035 = vpop.f32.mrb[0].mxu0
    %v1036 = vadd.f32 %v856, %v1035
    %v1037 = vpop.f32.mrb[0].mxu0
    %v1038 = vadd.f32 %v852, %v1037
    %v1039 = vpop.f32.mrb[0].mxu0
    %v1040 = vadd.f32 %v856, %v1039
    %1041 = vdwg.mxu0
    %1042 = vmatprep.subr.bf16.mxu0 0
    %1043 = vmatpush1.bf16.msra.mxu0 %v757
    %1044 = vmatprep.subr.bf16.mxu0 0
    %1045 = vmatpush1.bf16.msra.mxu0 %v766
    %1046 = vmatprep.subr.bf16.mxu0 0
    %1047 = vmatpush1.bf16.msra.mxu0 %v775
    %1048 = vmatprep.subr.bf16.mxu0 0
    %1049 = vmatpush1.bf16.msra.mxu0 %v784
    %1050 = vmatprep.subr.bf16.mxu0 0
    %1051 = vmatpush1.bf16.msra.mxu0 %v793
    %1052 = vmatprep.subr.bf16.mxu0 0
    %1053 = vmatpush1.bf16.msra.mxu0 %v802
    %1054 = vmatprep.subr.bf16.mxu0 0
    %1055 = vmatpush1.bf16.msra.mxu0 %v811
    %1056 = vmatprep.subr.bf16.mxu0 0
    %1057 = vmatpush1.bf16.msra.mxu0 %v820
    %1058 = vmatprep.subr.bf16.mxu0 0
    %1059 = vmatpush1.bf16.msra.mxu0 0
    %1060 = vmatprep.subr.bf16.mxu0 0
    %1061 = vmatpush1.bf16.msra.mxu0 0
    %1062 = vmatprep.subr.bf16.mxu0 0
    %1063 = vmatpush1.bf16.msra.mxu0 0
    %1064 = vmatprep.subr.bf16.mxu0 0
    %1065 = vmatpush1.bf16.msra.mxu0 0
    %1066 = vmatprep.subr.bf16.mxu0 0
    %1067 = vmatpush1.bf16.msra.mxu0 0
    %1068 = vmatprep.subr.bf16.mxu0 0
    %1069 = vmatpush1.bf16.msra.mxu0 0
    %1070 = vmatprep.subr.bf16.mxu0 0
    %1071 = vmatpush1.bf16.msra.mxu0 0
    %1072 = vmatprep.subr.bf16.mxu0 0
    %1073 = vmatpush1.bf16.msra.mxu0 0
    %1074 = vmatprep.mubr.bf16.mxu0 0
    %1075 = vmatmul.mubr.bf16.gmra.mrb[0].mxu0 %v748
    %v1076 = vpop.f32.mrb[0].mxu0
    %v1077 = vadd.f32 %v860, %v1076
    %v1078 = vpop.f32.mrb[0].mxu0
    %v1079 = vpop.f32.mrb[0].mxu0
    %v1080 = vadd.f32 %v860, %v1079
    %v1081 = vpop.f32.mrb[0].mxu0
    %1082 = vdwg.mxu0
    %s1083 = smul.u32 %s429, 8
    %s1084 = sshll.u32 %s1083, 4
    %1085 = dma.done %s262, %s1084
    %v1086 = vpack.c.bf16 %v909, %v905
    %v1087 = vpack.c.bf16 %v911, %v907
    %v1088 = vpack.c.bf16 %v952, %v948
    %v1089 = vpack.c.bf16 %v954, %v950
    %v1090 = vpack.c.bf16 %v995, %v991
    %v1091 = vpack.c.bf16 %v997, %v993
    %v1092 = vpack.c.bf16 %v1038, %v1034
    %v1093 = vpack.c.bf16 %v1040, %v1036
    %v1094 = vpack.c.bf16 %v1080, %v1077
    %v1095 = vld [vmem:[#allocation4] sm:$0xff]
    %v1096 = vld [vmem:[#allocation4 + $0x8] sm:$0xff]
    %v1097 = vld [vmem:[#allocation4 + $0x10] sm:$0xff]
    %v1098 = vld [vmem:[#allocation4 + $0x18] sm:$0xff]
    %v1099 = vld [vmem:[#allocation4 + $0x20] sm:$0xff]
    %v1100 = vld [vmem:[#allocation4 + $0x28] sm:$0xff]
    %v1101 = vld [vmem:[#allocation4 + $0x30] sm:$0xff]
    %v1102 = vld [vmem:[#allocation4 + $0x38] sm:$0xff]
    %v1103 = vld [vmem:[#allocation4 + $0x40] sm:$0xff]
    %v1104 = vld [vmem:[#allocation4 + $0x48] sm:$0xff]
    %v1105 = vld [vmem:[#allocation4 + $0x50] sm:$0xff]
    %v1106 = vld [vmem:[#allocation4 + $0x58] sm:$0xff]
    %v1107 = vld [vmem:[#allocation4 + $0x60] sm:$0xff]
    %v1108 = vld [vmem:[#allocation4 + $0x68] sm:$0xff]
    %v1109 = vld [vmem:[#allocation4 + $0x70] sm:$0xff]
    %v1110 = vld [vmem:[#allocation4 + $0x78] sm:$0xff]
    %v1111 = vld [vmem:[#allocation4 + $0x80] sm:$0xff]
    %v1112 = vld [vmem:[#allocation4 + $0x88] sm:$0xff]
    %v1113 = vld [vmem:[#allocation4 + $0x90] sm:$0xff]
    %v1114 = vld [vmem:[#allocation4 + $0x98] sm:$0xff]
    %v1115 = vld [vmem:[#allocation4 + $0xa0] sm:$0xff]
    %v1116 = vld [vmem:[#allocation4 + $0xa8] sm:$0xff]
    %v1117 = vld [vmem:[#allocation4 + $0xb0] sm:$0xff]
    %v1118 = vld [vmem:[#allocation4 + $0xb8] sm:$0xff]
    %v1119 = vld [vmem:[#allocation4 + $0xc0] sm:$0xff]
    %v1120 = vld [vmem:[#allocation4 + $0xc8] sm:$0xff]
    %v1121 = vld [vmem:[#allocation4 + $0xd0] sm:$0xff]
    %v1122 = vld [vmem:[#allocation4 + $0xd8] sm:$0xff]
    %v1123 = vld [vmem:[#allocation4 + $0xe0] sm:$0xff]
    %v1124 = vld [vmem:[#allocation4 + $0xe8] sm:$0xff]
    %v1125 = vld [vmem:[#allocation4 + $0xf0] sm:$0xff]
    %v1126 = vld [vmem:[#allocation4 + $0xf8] sm:$0xff]
    %v1127 = vld [vmem:[#allocation4 + $0x100] sm:$0xff]
    %v1128 = vld [vmem:[#allocation4 + $0x108] sm:$0xff]
    %v1129 = vld [vmem:[#allocation4 + $0x110] sm:$0xff]
    %v1130 = vld [vmem:[#allocation4 + $0x118] sm:$0xff]
    %v1131 = vld [vmem:[#allocation4 + $0x120] sm:$0xff]
    %v1132 = vld [vmem:[#allocation4 + $0x128] sm:$0xff]
    %v1133 = vld [vmem:[#allocation4 + $0x130] sm:$0xff]
    %v1134 = vld [vmem:[#allocation4 + $0x138] sm:$0xff]
    %v1135 = vld [vmem:[#allocation4 + $0x140] sm:$0xff]
    %v1136 = vld [vmem:[#allocation4 + $0x148] sm:$0xff]
    %v1137 = vld [vmem:[#allocation4 + $0x150] sm:$0xff]
    %v1138 = vld [vmem:[#allocation4 + $0x158] sm:$0xff]
    %v1139 = vld [vmem:[#allocation4 + $0x160] sm:$0xff]
    %v1140 = vld [vmem:[#allocation4 + $0x168] sm:$0xff]
    %v1141 = vld [vmem:[#allocation4 + $0x170] sm:$0xff]
    %v1142 = vld [vmem:[#allocation4 + $0x178] sm:$0xff]
    %v1143 = vld [vmem:[#allocation4 + $0x180] sm:$0xff]
    %v1144 = vld [vmem:[#allocation4 + $0x188] sm:$0xff]
    %v1145 = vld [vmem:[#allocation4 + $0x190] sm:$0xff]
    %v1146 = vld [vmem:[#allocation4 + $0x198] sm:$0xff]
    %v1147 = vld [vmem:[#allocation4 + $0x1a0] sm:$0xff]
    %v1148 = vld [vmem:[#allocation4 + $0x1a8] sm:$0xff]
    %v1149 = vld [vmem:[#allocation4 + $0x1b0] sm:$0xff]
    %v1150 = vld [vmem:[#allocation4 + $0x1b8] sm:$0xff]
    %v1151 = vld [vmem:[#allocation4 + $0x1c0] sm:$0xff]
    %v1152 = vld [vmem:[#allocation4 + $0x1c8] sm:$0xff]
    %v1153 = vld [vmem:[#allocation4 + $0x1d0] sm:$0xff]
    %v1154 = vld [vmem:[#allocation4 + $0x1d8] sm:$0xff]
    %v1155 = vld [vmem:[#allocation4 + $0x1e0] sm:$0xff]
    %v1156 = vld [vmem:[#allocation4 + $0x1e8] sm:$0xff]
    %v1157 = vld [vmem:[#allocation4 + $0x1f0] sm:$0xff]
    %v1158 = vld [vmem:[#allocation4 + $0x1f8] sm:$0xff]
    %v1159 = vld [vmem:[#allocation4 + $0x200] sm:$0xff]
    %v1160 = vld [vmem:[#allocation4 + $0x208] sm:$0xff]
    %v1161 = vld [vmem:[#allocation4 + $0x210] sm:$0xff]
    %v1162 = vld [vmem:[#allocation4 + $0x218] sm:$0xff]
    %v1163 = vld [vmem:[#allocation4 + $0x220] sm:$0xff]
    %v1164 = vld [vmem:[#allocation4 + $0x228] sm:$0xff]
    %v1165 = vld [vmem:[#allocation4 + $0x230] sm:$0xff]
    %v1166 = vld [vmem:[#allocation4 + $0x238] sm:$0xff]
    %v1167 = vld [vmem:[#allocation4 + $0x240] sm:$0xff]
    %v1168 = vld [vmem:[#allocation4 + $0x248] sm:$0xff]
    %v1169 = vld [vmem:[#allocation4 + $0x250] sm:$0xff]
    %v1170 = vld [vmem:[#allocation4 + $0x258] sm:$0xff]
    %v1171 = vld [vmem:[#allocation4 + $0x260] sm:$0xff]
    %v1172 = vld [vmem:[#allocation4 + $0x268] sm:$0xff]
    %v1173 = vld [vmem:[#allocation4 + $0x270] sm:$0xff]
    %v1174 = vld [vmem:[#allocation4 + $0x278] sm:$0xff]
    %v1175 = vld [vmem:[#allocation4 + $0x280] sm:$0xff]
    %v1176 = vld [vmem:[#allocation4 + $0x288] sm:$0xff]
    %v1177 = vld [vmem:[#allocation4 + $0x290] sm:$0xff]
    %v1178 = vld [vmem:[#allocation4 + $0x298] sm:$0xff]
    %v1179 = vld [vmem:[#allocation4 + $0x2a0] sm:$0xff]
    %v1180 = vld [vmem:[#allocation4 + $0x2a8] sm:$0xff]
    %v1181 = vld [vmem:[#allocation4 + $0x2b0] sm:$0xff]
    %v1182 = vld [vmem:[#allocation4 + $0x2b8] sm:$0xff]
    %v1183 = vld [vmem:[#allocation4 + $0x2c0] sm:$0xff]
    %v1184 = vld [vmem:[#allocation4 + $0x2c8] sm:$0xff]
    %v1185 = vld [vmem:[#allocation4 + $0x2d0] sm:$0xff]
    %v1186 = vld [vmem:[#allocation4 + $0x2d8] sm:$0xff]
    %v1187 = vld [vmem:[#allocation4 + $0x2e0] sm:$0xff]
    %v1188 = vld [vmem:[#allocation4 + $0x2e8] sm:$0xff]
    %v1189 = vld [vmem:[#allocation4 + $0x2f0] sm:$0xff]
    %v1190 = vld [vmem:[#allocation4 + $0x2f8] sm:$0xff]
    %v1191 = vld [vmem:[#allocation4 + $0x300] sm:$0xff]
    %v1192 = vld [vmem:[#allocation4 + $0x308] sm:$0xff]
    %v1193 = vld [vmem:[#allocation4 + $0x310] sm:$0xff]
    %v1194 = vld [vmem:[#allocation4 + $0x318] sm:$0xff]
    %v1195 = vld [vmem:[#allocation4 + $0x320] sm:$0xff]
    %v1196 = vld [vmem:[#allocation4 + $0x328] sm:$0xff]
    %v1197 = vld [vmem:[#allocation4 + $0x330] sm:$0xff]
    %v1198 = vld [vmem:[#allocation4 + $0x338] sm:$0xff]
    %v1199 = vld [vmem:[#allocation4 + $0x340] sm:$0xff]
    %v1200 = vld [vmem:[#allocation4 + $0x348] sm:$0xff]
    %v1201 = vld [vmem:[#allocation4 + $0x350] sm:$0xff]
    %v1202 = vld [vmem:[#allocation4 + $0x358] sm:$0xff]
    %v1203 = vld [vmem:[#allocation4 + $0x360] sm:$0xff]
    %v1204 = vld [vmem:[#allocation4 + $0x368] sm:$0xff]
    %v1205 = vld [vmem:[#allocation4 + $0x370] sm:$0xff]
    %v1206 = vld [vmem:[#allocation4 + $0x378] sm:$0xff]
    %v1207 = vld [vmem:[#allocation4 + $0x380] sm:$0xff]
    %v1208 = vld [vmem:[#allocation4 + $0x388] sm:$0xff]
    %v1209 = vld [vmem:[#allocation4 + $0x390] sm:$0xff]
    %v1210 = vld [vmem:[#allocation4 + $0x398] sm:$0xff]
    %v1211 = vld [vmem:[#allocation4 + $0x3a0] sm:$0xff]
    %v1212 = vld [vmem:[#allocation4 + $0x3a8] sm:$0xff]
    %v1213 = vld [vmem:[#allocation4 + $0x3b0] sm:$0xff]
    %v1214 = vld [vmem:[#allocation4 + $0x3b8] sm:$0xff]
    %v1215 = vld [vmem:[#allocation4 + $0x3c0] sm:$0xff]
    %v1216 = vld [vmem:[#allocation4 + $0x3c8] sm:$0xff]
    %v1217 = vld [vmem:[#allocation4 + $0x3d0] sm:$0xff]
    %v1218 = vld [vmem:[#allocation4 + $0x3d8] sm:$0xff]
    %v1219 = vld [vmem:[#allocation4 + $0x3e0] sm:$0xff]
    %v1220 = vld [vmem:[#allocation4 + $0x3e8] sm:$0xff]
    %v1221 = vld [vmem:[#allocation4 + $0x3f0] sm:$0xff]
    %v1222 = vld [vmem:[#allocation4 + $0x3f8] sm:$0xff]
    %v1223 = vld [vmem:[#allocation4 + $0x400] sm:$0xff]
    %v1224 = vld [vmem:[#allocation4 + $0x408] sm:$0xff]
    %v1225 = vld [vmem:[#allocation4 + $0x410] sm:$0xff]
    %v1226 = vld [vmem:[#allocation4 + $0x418] sm:$0xff]
    %v1227 = vld [vmem:[#allocation4 + $0x420] sm:$0xff]
    %v1228 = vld [vmem:[#allocation4 + $0x428] sm:$0xff]
    %v1229 = vld [vmem:[#allocation4 + $0x430] sm:$0xff]
    %v1230 = vld [vmem:[#allocation4 + $0x438] sm:$0xff]
    %v1231 = vld [vmem:[#allocation4 + $0x440] sm:$0xff]
    %v1232 = vld [vmem:[#allocation4 + $0x448] sm:$0xff]
    %v1233 = vld [vmem:[#allocation4 + $0x450] sm:$0xff]
    %v1234 = vld [vmem:[#allocation4 + $0x458] sm:$0xff]
    %v1235 = vld [vmem:[#allocation4 + $0x460] sm:$0xff]
    %v1236 = vld [vmem:[#allocation4 + $0x468] sm:$0xff]
    %v1237 = vld [vmem:[#allocation4 + $0x470] sm:$0xff]
    %v1238 = vld [vmem:[#allocation4 + $0x478] sm:$0xff]
    %v1239 = vld [vmem:[#allocation4 + $0x480] sm:$0xff]
    %v1240 = vld [vmem:[#allocation4 + $0x488] sm:$0xff]
    %v1241 = vld [vmem:[#allocation4 + $0x490] sm:$0xff]
    %v1242 = vld [vmem:[#allocation4 + $0x498] sm:$0xff]
    %v1243 = vld [vmem:[#allocation4 + $0x4a0] sm:$0xff]
    %v1244 = vld [vmem:[#allocation4 + $0x4a8] sm:$0xff]
    %v1245 = vld [vmem:[#allocation4 + $0x4b0] sm:$0xff]
    %v1246 = vld [vmem:[#allocation4 + $0x4b8] sm:$0xff]
    %v1247 = vld [vmem:[#allocation4 + $0x4c0] sm:$0xff]
    %v1248 = vld [vmem:[#allocation4 + $0x4c8] sm:$0xff]
    %v1249 = vld [vmem:[#allocation4 + $0x4d0] sm:$0xff]
    %v1250 = vld [vmem:[#allocation4 + $0x4d8] sm:$0xff]
    %v1251 = vld [vmem:[#allocation4 + $0x4e0] sm:$0xff]
    %v1252 = vld [vmem:[#allocation4 + $0x4e8] sm:$0xff]
    %v1253 = vld [vmem:[#allocation4 + $0x4f0] sm:$0xff]
    %v1254 = vld [vmem:[#allocation4 + $0x4f8] sm:$0xff]
    %v1255 = vld [vmem:[#allocation4 + $0x500] sm:$0xff]
    %v1256 = vld [vmem:[#allocation4 + $0x508] sm:$0xff]
    %v1257 = vld [vmem:[#allocation4 + $0x510] sm:$0xff]
    %v1258 = vld [vmem:[#allocation4 + $0x518] sm:$0xff]
    %v1259 = vld [vmem:[#allocation4 + $0x520] sm:$0xff]
    %v1260 = vld [vmem:[#allocation4 + $0x528] sm:$0xff]
    %v1261 = vld [vmem:[#allocation4 + $0x530] sm:$0xff]
    %v1262 = vld [vmem:[#allocation4 + $0x538] sm:$0xff]
    %v1263 = vld [vmem:[#allocation4 + $0x540] sm:$0xff]
    %v1264 = vld [vmem:[#allocation4 + $0x548] sm:$0xff]
    %v1265 = vld [vmem:[#allocation4 + $0x550] sm:$0xff]
    %v1266 = vld [vmem:[#allocation4 + $0x558] sm:$0xff]
    %v1267 = vld [vmem:[#allocation4 + $0x560] sm:$0xff]
    %v1268 = vld [vmem:[#allocation4 + $0x568] sm:$0xff]
    %v1269 = vld [vmem:[#allocation4 + $0x570] sm:$0xff]
    %v1270 = vld [vmem:[#allocation4 + $0x578] sm:$0xff]
    %v1271 = vld [vmem:[#allocation4 + $0x580] sm:$0xff]
    %v1272 = vld [vmem:[#allocation4 + $0x588] sm:$0xff]
    %v1273 = vld [vmem:[#allocation4 + $0x590] sm:$0xff]
    %v1274 = vld [vmem:[#allocation4 + $0x598] sm:$0xff]
    %v1275 = vld [vmem:[#allocation4 + $0x5a0] sm:$0xff]
    %v1276 = vld [vmem:[#allocation4 + $0x5a8] sm:$0xff]
    %v1277 = vld [vmem:[#allocation4 + $0x5b0] sm:$0xff]
    %v1278 = vld [vmem:[#allocation4 + $0x5b8] sm:$0xff]
    %v1279 = vld [vmem:[#allocation4 + $0x5c0] sm:$0xff]
    %v1280 = vld [vmem:[#allocation4 + $0x5c8] sm:$0xff]
    %v1281 = vld [vmem:[#allocation4 + $0x5d0] sm:$0xff]
    %v1282 = vld [vmem:[#allocation4 + $0x5d8] sm:$0xff]
    %v1283 = vld [vmem:[#allocation4 + $0x5e0] sm:$0xff]
    %v1284 = vld [vmem:[#allocation4 + $0x5e8] sm:$0xff]
    %v1285 = vld [vmem:[#allocation4 + $0x5f0] sm:$0xff]
    %v1286 = vld [vmem:[#allocation4 + $0x5f8] sm:$0xff]
    %v1287 = vld [vmem:[#allocation4 + $0x600] sm:$0xff]
    %v1288 = vld [vmem:[#allocation4 + $0x608] sm:$0xff]
    %v1289 = vld [vmem:[#allocation4 + $0x610] sm:$0xff]
    %v1290 = vld [vmem:[#allocation4 + $0x618] sm:$0xff]
    %v1291 = vld [vmem:[#allocation4 + $0x620] sm:$0xff]
    %v1292 = vld [vmem:[#allocation4 + $0x628] sm:$0xff]
    %v1293 = vld [vmem:[#allocation4 + $0x630] sm:$0xff]
    %v1294 = vld [vmem:[#allocation4 + $0x638] sm:$0xff]
    %v1295 = vld [vmem:[#allocation4 + $0x640] sm:$0xff]
    %v1296 = vld [vmem:[#allocation4 + $0x648] sm:$0xff]
    %v1297 = vld [vmem:[#allocation4 + $0x650] sm:$0xff]
    %v1298 = vld [vmem:[#allocation4 + $0x658] sm:$0xff]
    %v1299 = vld [vmem:[#allocation4 + $0x660] sm:$0xff]
    %v1300 = vld [vmem:[#allocation4 + $0x668] sm:$0xff]
    %v1301 = vld [vmem:[#allocation4 + $0x670] sm:$0xff]
    %v1302 = vld [vmem:[#allocation4 + $0x678] sm:$0xff]
    %v1303 = vld [vmem:[#allocation4 + $0x680] sm:$0xff]
    %v1304 = vld [vmem:[#allocation4 + $0x688] sm:$0xff]
    %v1305 = vld [vmem:[#allocation4 + $0x690] sm:$0xff]
    %v1306 = vld [vmem:[#allocation4 + $0x698] sm:$0xff]
    %v1307 = vld [vmem:[#allocation4 + $0x6a0] sm:$0xff]
    %v1308 = vld [vmem:[#allocation4 + $0x6a8] sm:$0xff]
    %v1309 = vld [vmem:[#allocation4 + $0x6b0] sm:$0xff]
    %v1310 = vld [vmem:[#allocation4 + $0x6b8] sm:$0xff]
    %v1311 = vld [vmem:[#allocation4 + $0x6c0] sm:$0xff]
    %v1312 = vld [vmem:[#allocation4 + $0x6c8] sm:$0xff]
    %v1313 = vld [vmem:[#allocation4 + $0x6d0] sm:$0xff]
    %v1314 = vld [vmem:[#allocation4 + $0x6d8] sm:$0xff]
    %v1315 = vld [vmem:[#allocation4 + $0x6e0] sm:$0xff]
    %v1316 = vld [vmem:[#allocation4 + $0x6e8] sm:$0xff]
    %v1317 = vld [vmem:[#allocation4 + $0x6f0] sm:$0xff]
    %v1318 = vld [vmem:[#allocation4 + $0x6f8] sm:$0xff]
    %v1319 = vld [vmem:[#allocation4 + $0x700] sm:$0xff]
    %v1320 = vld [vmem:[#allocation4 + $0x708] sm:$0xff]
    %v1321 = vld [vmem:[#allocation4 + $0x710] sm:$0xff]
    %v1322 = vld [vmem:[#allocation4 + $0x718] sm:$0xff]
    %v1323 = vld [vmem:[#allocation4 + $0x720] sm:$0xff]
    %v1324 = vld [vmem:[#allocation4 + $0x728] sm:$0xff]
    %v1325 = vld [vmem:[#allocation4 + $0x730] sm:$0xff]
    %v1326 = vld [vmem:[#allocation4 + $0x738] sm:$0xff]
    %v1327 = vld [vmem:[#allocation4 + $0x740] sm:$0xff]
    %v1328 = vld [vmem:[#allocation4 + $0x748] sm:$0xff]
    %v1329 = vld [vmem:[#allocation4 + $0x750] sm:$0xff]
    %v1330 = vld [vmem:[#allocation4 + $0x758] sm:$0xff]
    %v1331 = vld [vmem:[#allocation4 + $0x760] sm:$0xff]
    %v1332 = vld [vmem:[#allocation4 + $0x768] sm:$0xff]
    %v1333 = vld [vmem:[#allocation4 + $0x770] sm:$0xff]
    %v1334 = vld [vmem:[#allocation4 + $0x778] sm:$0xff]
    %v1335 = vld [vmem:[#allocation4 + $0x780] sm:$0xff]
    %v1336 = vld [vmem:[#allocation4 + $0x788] sm:$0xff]
    %v1337 = vld [vmem:[#allocation4 + $0x790] sm:$0xff]
    %v1338 = vld [vmem:[#allocation4 + $0x798] sm:$0xff]
    %v1339 = vld [vmem:[#allocation4 + $0x7a0] sm:$0xff]
    %v1340 = vld [vmem:[#allocation4 + $0x7a8] sm:$0xff]
    %v1341 = vld [vmem:[#allocation4 + $0x7b0] sm:$0xff]
    %v1342 = vld [vmem:[#allocation4 + $0x7b8] sm:$0xff]
    %v1343 = vld [vmem:[#allocation4 + $0x7c0] sm:$0xff]
    %v1344 = vld [vmem:[#allocation4 + $0x7c8] sm:$0xff]
    %v1345 = vld [vmem:[#allocation4 + $0x7d0] sm:$0xff]
    %v1346 = vld [vmem:[#allocation4 + $0x7d8] sm:$0xff]
    %v1347 = vld [vmem:[#allocation4 + $0x7e0] sm:$0xff]
    %v1348 = vld [vmem:[#allocation4 + $0x7e8] sm:$0xff]
    %v1349 = vld [vmem:[#allocation4 + $0x7f0] sm:$0xff]
    %v1350 = vld [vmem:[#allocation4 + $0x7f8] sm:$0xff]
    %v1351 = vld [vmem:[#allocation4 + $0x800] sm:$0xff]
    %v1352 = vld [vmem:[#allocation4 + $0x808] sm:$0xff]
    %v1353 = vld [vmem:[#allocation4 + $0x810] sm:$0xff]
    %v1354 = vld [vmem:[#allocation4 + $0x818] sm:$0xff]
    %v1355 = vld [vmem:[#allocation4 + $0x820] sm:$0xff]
    %v1356 = vld [vmem:[#allocation4 + $0x828] sm:$0xff]
    %v1357 = vld [vmem:[#allocation4 + $0x830] sm:$0xff]
    %v1358 = vld [vmem:[#allocation4 + $0x838] sm:$0xff]
    %v1359 = vld [vmem:[#allocation4 + $0x840] sm:$0xff]
    %v1360 = vld [vmem:[#allocation4 + $0x848] sm:$0xff]
    %v1361 = vld [vmem:[#allocation4 + $0x850] sm:$0xff]
    %v1362 = vld [vmem:[#allocation4 + $0x858] sm:$0xff]
    %v1363 = vld [vmem:[#allocation4 + $0x860] sm:$0xff]
    %v1364 = vld [vmem:[#allocation4 + $0x868] sm:$0xff]
    %v1365 = vld [vmem:[#allocation4 + $0x870] sm:$0xff]
    %v1366 = vld [vmem:[#allocation4 + $0x878] sm:$0xff]
    %v1367 = vld [vmem:[#allocation4 + $0x880] sm:$0xff]
    %v1368 = vld [vmem:[#allocation4 + $0x888] sm:$0xff]
    %v1369 = vld [vmem:[#allocation4 + $0x890] sm:$0xff]
    %v1370 = vld [vmem:[#allocation4 + $0x898] sm:$0xff]
    %v1371 = vld [vmem:[#allocation4 + $0x8a0] sm:$0xff]
    %v1372 = vld [vmem:[#allocation4 + $0x8a8] sm:$0xff]
    %v1373 = vld [vmem:[#allocation4 + $0x8b0] sm:$0xff]
    %v1374 = vld [vmem:[#allocation4 + $0x8b8] sm:$0xff]
    %v1375 = vld [vmem:[#allocation4 + $0x8c0] sm:$0xff]
    %v1376 = vld [vmem:[#allocation4 + $0x8c8] sm:$0xff]
    %v1377 = vld [vmem:[#allocation4 + $0x8d0] sm:$0xff]
    %v1378 = vld [vmem:[#allocation4 + $0x8d8] sm:$0xff]
    %v1379 = vld [vmem:[#allocation4 + $0x8e0] sm:$0xff]
    %v1380 = vld [vmem:[#allocation4 + $0x8e8] sm:$0xff]
    %v1381 = vld [vmem:[#allocation4 + $0x8f0] sm:$0xff]
    %v1382 = vld [vmem:[#allocation4 + $0x8f8] sm:$0xff]
    %v1383 = vld [vmem:[#allocation4 + $0x900] sm:$0xff]
    %v1384 = vld [vmem:[#allocation4 + $0x908] sm:$0xff]
    %v1385 = vld [vmem:[#allocation4 + $0x910] sm:$0xff]
    %v1386 = vld [vmem:[#allocation4 + $0x918] sm:$0xff]
    %v1387 = vld [vmem:[#allocation4 + $0x920] sm:$0xff]
    %v1388 = vld [vmem:[#allocation4 + $0x928] sm:$0xff]
    %v1389 = vld [vmem:[#allocation4 + $0x930] sm:$0xff]
    %v1390 = vld [vmem:[#allocation4 + $0x938] sm:$0xff]
    %v1391 = vld [vmem:[#allocation4 + $0x940] sm:$0xff]
    %v1392 = vld [vmem:[#allocation4 + $0x948] sm:$0xff]
    %v1393 = vld [vmem:[#allocation4 + $0x950] sm:$0xff]
    %v1394 = vld [vmem:[#allocation4 + $0x958] sm:$0xff]
    %v1395 = vld [vmem:[#allocation4 + $0x960] sm:$0xff]
    %v1396 = vld [vmem:[#allocation4 + $0x968] sm:$0xff]
    %v1397 = vld [vmem:[#allocation4 + $0x970] sm:$0xff]
    %v1398 = vld [vmem:[#allocation4 + $0x978] sm:$0xff]
    %v1399 = vld [vmem:[#allocation4 + $0x980] sm:$0xff]
    %v1400 = vld [vmem:[#allocation4 + $0x988] sm:$0xff]
    %v1401 = vld [vmem:[#allocation4 + $0x990] sm:$0xff]
    %v1402 = vld [vmem:[#allocation4 + $0x998] sm:$0xff]
    %v1403 = vld [vmem:[#allocation4 + $0x9a0] sm:$0xff]
    %v1404 = vld [vmem:[#allocation4 + $0x9a8] sm:$0xff]
    %v1405 = vld [vmem:[#allocation4 + $0x9b0] sm:$0xff]
    %v1406 = vld [vmem:[#allocation4 + $0x9b8] sm:$0xff]
    %v1407 = vld [vmem:[#allocation4 + $0x9c0] sm:$0xff]
    %v1408 = vld [vmem:[#allocation4 + $0x9c8] sm:$0xff]
    %v1409 = vld [vmem:[#allocation4 + $0x9d0] sm:$0xff]
    %v1410 = vld [vmem:[#allocation4 + $0x9d8] sm:$0xff]
    %v1411 = vld [vmem:[#allocation4 + $0x9e0] sm:$0xff]
    %v1412 = vld [vmem:[#allocation4 + $0x9e8] sm:$0xff]
    %v1413 = vld [vmem:[#allocation4 + $0x9f0] sm:$0xff]
    %v1414 = vld [vmem:[#allocation4 + $0x9f8] sm:$0xff]
    %v1415 = vld [vmem:[#allocation4 + $0xa00] sm:$0xff]
    %v1416 = vld [vmem:[#allocation4 + $0xa08] sm:$0xff]
    %v1417 = vld [vmem:[#allocation4 + $0xa10] sm:$0xff]
    %v1418 = vld [vmem:[#allocation4 + $0xa18] sm:$0xff]
    %v1419 = vld [vmem:[#allocation4 + $0xa20] sm:$0xff]
    %v1420 = vld [vmem:[#allocation4 + $0xa28] sm:$0xff]
    %v1421 = vld [vmem:[#allocation4 + $0xa30] sm:$0xff]
    %v1422 = vld [vmem:[#allocation4 + $0xa38] sm:$0xff]
    %v1423 = vld [vmem:[#allocation4 + $0xa40] sm:$0xff]
    %v1424 = vld [vmem:[#allocation4 + $0xa48] sm:$0xff]
    %v1425 = vld [vmem:[#allocation4 + $0xa50] sm:$0xff]
    %v1426 = vld [vmem:[#allocation4 + $0xa58] sm:$0xff]
    %v1427 = vld [vmem:[#allocation4 + $0xa60] sm:$0xff]
    %v1428 = vld [vmem:[#allocation4 + $0xa68] sm:$0xff]
    %v1429 = vld [vmem:[#allocation4 + $0xa70] sm:$0xff]
    %v1430 = vld [vmem:[#allocation4 + $0xa78] sm:$0xff]
    %v1431 = vld [vmem:[#allocation4 + $0xa80] sm:$0xff]
    %v1432 = vld [vmem:[#allocation4 + $0xa88] sm:$0xff]
    %v1433 = vld [vmem:[#allocation4 + $0xa90] sm:$0xff]
    %v1434 = vld [vmem:[#allocation4 + $0xa98] sm:$0xff]
    %v1435 = vld [vmem:[#allocation4 + $0xaa0] sm:$0xff]
    %v1436 = vld [vmem:[#allocation4 + $0xaa8] sm:$0xff]
    %v1437 = vld [vmem:[#allocation4 + $0xab0] sm:$0xff]
    %v1438 = vld [vmem:[#allocation4 + $0xab8] sm:$0xff]
    %v1439 = vld [vmem:[#allocation4 + $0xac0] sm:$0xff]
    %v1440 = vld [vmem:[#allocation4 + $0xac8] sm:$0xff]
    %v1441 = vld [vmem:[#allocation4 + $0xad0] sm:$0xff]
    %v1442 = vld [vmem:[#allocation4 + $0xad8] sm:$0xff]
    %v1443 = vld [vmem:[#allocation4 + $0xae0] sm:$0xff]
    %v1444 = vld [vmem:[#allocation4 + $0xae8] sm:$0xff]
    %v1445 = vld [vmem:[#allocation4 + $0xaf0] sm:$0xff]
    %v1446 = vld [vmem:[#allocation4 + $0xaf8] sm:$0xff]
    %v1447 = vld [vmem:[#allocation4 + $0xb00] sm:$0xff]
    %v1448 = vld [vmem:[#allocation4 + $0xb08] sm:$0xff]
    %v1449 = vld [vmem:[#allocation4 + $0xb10] sm:$0xff]
    %v1450 = vld [vmem:[#allocation4 + $0xb18] sm:$0xff]
    %v1451 = vld [vmem:[#allocation4 + $0xb20] sm:$0xff]
    %v1452 = vld [vmem:[#allocation4 + $0xb28] sm:$0xff]
    %v1453 = vld [vmem:[#allocation4 + $0xb30] sm:$0xff]
    %v1454 = vld [vmem:[#allocation4 + $0xb38] sm:$0xff]
    %v1455 = vld [vmem:[#allocation4 + $0xb40] sm:$0xff]
    %v1456 = vld [vmem:[#allocation4 + $0xb48] sm:$0xff]
    %v1457 = vld [vmem:[#allocation4 + $0xb50] sm:$0xff]
    %v1458 = vld [vmem:[#allocation4 + $0xb58] sm:$0xff]
    %v1459 = vld [vmem:[#allocation4 + $0xb60] sm:$0xff]
    %v1460 = vld [vmem:[#allocation4 + $0xb68] sm:$0xff]
    %v1461 = vld [vmem:[#allocation4 + $0xb70] sm:$0xff]
    %v1462 = vld [vmem:[#allocation4 + $0xb78] sm:$0xff]
    %v1463 = vld [vmem:[#allocation4 + $0xb80] sm:$0xff]
    %v1464 = vld [vmem:[#allocation4 + $0xb88] sm:$0xff]
    %v1465 = vld [vmem:[#allocation4 + $0xb90] sm:$0xff]
    %v1466 = vld [vmem:[#allocation4 + $0xb98] sm:$0xff]
    %v1467 = vld [vmem:[#allocation4 + $0xba0] sm:$0xff]
    %v1468 = vld [vmem:[#allocation4 + $0xba8] sm:$0xff]
    %v1469 = vld [vmem:[#allocation4 + $0xbb0] sm:$0xff]
    %v1470 = vld [vmem:[#allocation4 + $0xbb8] sm:$0xff]
    %v1471 = vld [vmem:[#allocation4 + $0xbc0] sm:$0xff]
    %v1472 = vld [vmem:[#allocation4 + $0xbc8] sm:$0xff]
    %v1473 = vld [vmem:[#allocation4 + $0xbd0] sm:$0xff]
    %v1474 = vld [vmem:[#allocation4 + $0xbd8] sm:$0xff]
    %v1475 = vld [vmem:[#allocation4 + $0xbe0] sm:$0xff]
    %v1476 = vld [vmem:[#allocation4 + $0xbe8] sm:$0xff]
    %v1477 = vld [vmem:[#allocation4 + $0xbf0] sm:$0xff]
    %v1478 = vld [vmem:[#allocation4 + $0xbf8] sm:$0xff]
    %v1479 = vld [vmem:[#allocation4 + $0xc00] sm:$0xff]
    %v1480 = vld [vmem:[#allocation4 + $0xc08] sm:$0xff]
    %v1481 = vld [vmem:[#allocation4 + $0xc10] sm:$0xff]
    %v1482 = vld [vmem:[#allocation4 + $0xc18] sm:$0xff]
    %v1483 = vld [vmem:[#allocation4 + $0xc20] sm:$0xff]
    %v1484 = vld [vmem:[#allocation4 + $0xc28] sm:$0xff]
    %v1485 = vld [vmem:[#allocation4 + $0xc30] sm:$0xff]
    %v1486 = vld [vmem:[#allocation4 + $0xc38] sm:$0xff]
    %v1487 = vld [vmem:[#allocation4 + $0xc40] sm:$0xff]
    %v1488 = vld [vmem:[#allocation4 + $0xc48] sm:$0xff]
    %v1489 = vld [vmem:[#allocation4 + $0xc50] sm:$0xff]
    %v1490 = vld [vmem:[#allocation4 + $0xc58] sm:$0xff]
    %v1491 = vld [vmem:[#allocation4 + $0xc60] sm:$0xff]
    %v1492 = vld [vmem:[#allocation4 + $0xc68] sm:$0xff]
    %v1493 = vld [vmem:[#allocation4 + $0xc70] sm:$0xff]
    %v1494 = vld [vmem:[#allocation4 + $0xc78] sm:$0xff]
    %v1495 = vld [vmem:[#allocation4 + $0xc80] sm:$0xff]
    %v1496 = vld [vmem:[#allocation4 + $0xc88] sm:$0xff]
    %v1497 = vld [vmem:[#allocation4 + $0xc90] sm:$0xff]
    %v1498 = vld [vmem:[#allocation4 + $0xc98] sm:$0xff]
    %v1499 = vld [vmem:[#allocation4 + $0xca0] sm:$0xff]
    %v1500 = vld [vmem:[#allocation4 + $0xca8] sm:$0xff]
    %v1501 = vld [vmem:[#allocation4 + $0xcb0] sm:$0xff]
    %v1502 = vld [vmem:[#allocation4 + $0xcb8] sm:$0xff]
    %v1503 = vld [vmem:[#allocation4 + $0xcc0] sm:$0xff]
    %v1504 = vld [vmem:[#allocation4 + $0xcc8] sm:$0xff]
    %v1505 = vld [vmem:[#allocation4 + $0xcd0] sm:$0xff]
    %v1506 = vld [vmem:[#allocation4 + $0xcd8] sm:$0xff]
    %v1507 = vld [vmem:[#allocation4 + $0xce0] sm:$0xff]
    %v1508 = vld [vmem:[#allocation4 + $0xce8] sm:$0xff]
    %v1509 = vld [vmem:[#allocation4 + $0xcf0] sm:$0xff]
    %v1510 = vld [vmem:[#allocation4 + $0xcf8] sm:$0xff]
    %v1511 = vld [vmem:[#allocation4 + $0xd00] sm:$0xff]
    %v1512 = vld [vmem:[#allocation4 + $0xd08] sm:$0xff]
    %v1513 = vld [vmem:[#allocation4 + $0xd10] sm:$0xff]
    %v1514 = vld [vmem:[#allocation4 + $0xd18] sm:$0xff]
    %v1515 = vld [vmem:[#allocation4 + $0xd20] sm:$0xff]
    %v1516 = vld [vmem:[#allocation4 + $0xd28] sm:$0xff]
    %v1517 = vld [vmem:[#allocation4 + $0xd30] sm:$0xff]
    %v1518 = vld [vmem:[#allocation4 + $0xd38] sm:$0xff]
    %v1519 = vld [vmem:[#allocation4 + $0xd40] sm:$0xff]
    %v1520 = vld [vmem:[#allocation4 + $0xd48] sm:$0xff]
    %v1521 = vld [vmem:[#allocation4 + $0xd50] sm:$0xff]
    %v1522 = vld [vmem:[#allocation4 + $0xd58] sm:$0xff]
    %v1523 = vld [vmem:[#allocation4 + $0xd60] sm:$0xff]
    %v1524 = vld [vmem:[#allocation4 + $0xd68] sm:$0xff]
    %v1525 = vld [vmem:[#allocation4 + $0xd70] sm:$0xff]
    %v1526 = vld [vmem:[#allocation4 + $0xd78] sm:$0xff]
    %v1527 = vld [vmem:[#allocation4 + $0xd80] sm:$0xff]
    %v1528 = vld [vmem:[#allocation4 + $0xd88] sm:$0xff]
    %v1529 = vld [vmem:[#allocation4 + $0xd90] sm:$0xff]
    %v1530 = vld [vmem:[#allocation4 + $0xd98] sm:$0xff]
    %v1531 = vld [vmem:[#allocation4 + $0xda0] sm:$0xff]
    %v1532 = vld [vmem:[#allocation4 + $0xda8] sm:$0xff]
    %v1533 = vld [vmem:[#allocation4 + $0xdb0] sm:$0xff]
    %v1534 = vld [vmem:[#allocation4 + $0xdb8] sm:$0xff]
    %v1535 = vld [vmem:[#allocation4 + $0xdc0] sm:$0xff]
    %v1536 = vld [vmem:[#allocation4 + $0xdc8] sm:$0xff]
    %v1537 = vld [vmem:[#allocation4 + $0xdd0] sm:$0xff]
    %v1538 = vld [vmem:[#allocation4 + $0xdd8] sm:$0xff]
    %v1539 = vld [vmem:[#allocation4 + $0xde0] sm:$0xff]
    %v1540 = vld [vmem:[#allocation4 + $0xde8] sm:$0xff]
    %v1541 = vld [vmem:[#allocation4 + $0xdf0] sm:$0xff]
    %v1542 = vld [vmem:[#allocation4 + $0xdf8] sm:$0xff]
    %v1543 = vld [vmem:[#allocation4 + $0xe00] sm:$0xff]
    %v1544 = vld [vmem:[#allocation4 + $0xe08] sm:$0xff]
    %v1545 = vld [vmem:[#allocation4 + $0xe10] sm:$0xff]
    %v1546 = vld [vmem:[#allocation4 + $0xe18] sm:$0xff]
    %v1547 = vld [vmem:[#allocation4 + $0xe20] sm:$0xff]
    %v1548 = vld [vmem:[#allocation4 + $0xe28] sm:$0xff]
    %v1549 = vld [vmem:[#allocation4 + $0xe30] sm:$0xff]
    %v1550 = vld [vmem:[#allocation4 + $0xe38] sm:$0xff]
    %v1551 = vld [vmem:[#allocation4 + $0xe40] sm:$0xff]
    %v1552 = vld [vmem:[#allocation4 + $0xe48] sm:$0xff]
    %v1553 = vld [vmem:[#allocation4 + $0xe50] sm:$0xff]
    %v1554 = vld [vmem:[#allocation4 + $0xe58] sm:$0xff]
    %v1555 = vld [vmem:[#allocation4 + $0xe60] sm:$0xff]
    %v1556 = vld [vmem:[#allocation4 + $0xe68] sm:$0xff]
    %v1557 = vld [vmem:[#allocation4 + $0xe70] sm:$0xff]
    %v1558 = vld [vmem:[#allocation4 + $0xe78] sm:$0xff]
    %v1559 = vld [vmem:[#allocation4 + $0xe80] sm:$0xff]
    %v1560 = vld [vmem:[#allocation4 + $0xe88] sm:$0xff]
    %v1561 = vld [vmem:[#allocation4 + $0xe90] sm:$0xff]
    %v1562 = vld [vmem:[#allocation4 + $0xe98] sm:$0xff]
    %v1563 = vld [vmem:[#allocation4 + $0xea0] sm:$0xff]
    %v1564 = vld [vmem:[#allocation4 + $0xea8] sm:$0xff]
    %v1565 = vld [vmem:[#allocation4 + $0xeb0] sm:$0xff]
    %v1566 = vld [vmem:[#allocation4 + $0xeb8] sm:$0xff]
    %v1567 = vld [vmem:[#allocation4 + $0xec0] sm:$0xff]
    %v1568 = vld [vmem:[#allocation4 + $0xec8] sm:$0xff]
    %v1569 = vld [vmem:[#allocation4 + $0xed0] sm:$0xff]
    %v1570 = vld [vmem:[#allocation4 + $0xed8] sm:$0xff]
    %v1571 = vld [vmem:[#allocation4 + $0xee0] sm:$0xff]
    %v1572 = vld [vmem:[#allocation4 + $0xee8] sm:$0xff]
    %v1573 = vld [vmem:[#allocation4 + $0xef0] sm:$0xff]
    %v1574 = vld [vmem:[#allocation4 + $0xef8] sm:$0xff]
    %v1575 = vld [vmem:[#allocation4 + $0xf00] sm:$0xff]
    %v1576 = vld [vmem:[#allocation4 + $0xf08] sm:$0xff]
    %v1577 = vld [vmem:[#allocation4 + $0xf10] sm:$0xff]
    %v1578 = vld [vmem:[#allocation4 + $0xf18] sm:$0xff]
    %v1579 = vld [vmem:[#allocation4 + $0xf20] sm:$0xff]
    %v1580 = vld [vmem:[#allocation4 + $0xf28] sm:$0xff]
    %v1581 = vld [vmem:[#allocation4 + $0xf30] sm:$0xff]
    %v1582 = vld [vmem:[#allocation4 + $0xf38] sm:$0xff]
    %v1583 = vld [vmem:[#allocation4 + $0xf40] sm:$0xff]
    %v1584 = vld [vmem:[#allocation4 + $0xf48] sm:$0xff]
    %v1585 = vld [vmem:[#allocation4 + $0xf50] sm:$0xff]
    %v1586 = vld [vmem:[#allocation4 + $0xf58] sm:$0xff]
    %v1587 = vld [vmem:[#allocation4 + $0xf60] sm:$0xff]
    %v1588 = vld [vmem:[#allocation4 + $0xf68] sm:$0xff]
    %v1589 = vld [vmem:[#allocation4 + $0xf70] sm:$0xff]
    %v1590 = vld [vmem:[#allocation4 + $0xf78] sm:$0xff]
    %v1591 = vld [vmem:[#allocation4 + $0xf80] sm:$0xff]
    %v1592 = vld [vmem:[#allocation4 + $0xf88] sm:$0xff]
    %v1593 = vld [vmem:[#allocation4 + $0xf90] sm:$0xff]
    %v1594 = vld [vmem:[#allocation4 + $0xf98] sm:$0xff]
    %v1595 = vld [vmem:[#allocation4 + $0xfa0] sm:$0xff]
    %v1596 = vld [vmem:[#allocation4 + $0xfa8] sm:$0xff]
    %v1597 = vld [vmem:[#allocation4 + $0xfb0] sm:$0xff]
    %v1598 = vld [vmem:[#allocation4 + $0xfb8] sm:$0xff]
    %v1599 = vld [vmem:[#allocation4 + $0xfc0] sm:$0xff]
    %v1600 = vld [vmem:[#allocation4 + $0xfc8] sm:$0xff]
    %v1601 = vld [vmem:[#allocation4 + $0xfd0] sm:$0xff]
    %v1602 = vld [vmem:[#allocation4 + $0xfd8] sm:$0xff]
    %v1603 = vld [vmem:[#allocation4 + $0xfe0] sm:$0xff]
    %v1604 = vld [vmem:[#allocation4 + $0xfe8] sm:$0xff]
    %v1605 = vld [vmem:[#allocation4 + $0xff0] sm:$0xff]
    %v1606 = vld [vmem:[#allocation4 + $0xff8] sm:$0xff]
    %v1607 = vld [vmem:[#allocation4 + $0x1000] sm:$0xff]
    %v1608 = vld [vmem:[#allocation4 + $0x1008] sm:$0xff]
    %v1609 = vld [vmem:[#allocation4 + $0x1010] sm:$0xff]
    %v1610 = vld [vmem:[#allocation4 + $0x1018] sm:$0xff]
    %v1611 = vld [vmem:[#allocation4 + $0x1020] sm:$0xff]
    %v1612 = vld [vmem:[#allocation4 + $0x1028] sm:$0xff]
    %v1613 = vld [vmem:[#allocation4 + $0x1030] sm:$0xff]
    %v1614 = vld [vmem:[#allocation4 + $0x1038] sm:$0xff]
    %v1615 = vld [vmem:[#allocation4 + $0x1040] sm:$0xff]
    %v1616 = vld [vmem:[#allocation4 + $0x1048] sm:$0xff]
    %v1617 = vld [vmem:[#allocation4 + $0x1050] sm:$0xff]
    %v1618 = vld [vmem:[#allocation4 + $0x1058] sm:$0xff]
    %v1619 = vld [vmem:[#allocation4 + $0x1060] sm:$0xff]
    %v1620 = vld [vmem:[#allocation4 + $0x1068] sm:$0xff]
    %v1621 = vld [vmem:[#allocation4 + $0x1070] sm:$0xff]
    %v1622 = vld [vmem:[#allocation4 + $0x1078] sm:$0xff]
    %v1623 = vld [vmem:[#allocation4 + $0x1080] sm:$0xff]
    %v1624 = vld [vmem:[#allocation4 + $0x1088] sm:$0xff]
    %v1625 = vld [vmem:[#allocation4 + $0x1090] sm:$0xff]
    %v1626 = vld [vmem:[#allocation4 + $0x1098] sm:$0xff]
    %v1627 = vld [vmem:[#allocation4 + $0x10a0] sm:$0xff]
    %v1628 = vld [vmem:[#allocation4 + $0x10a8] sm:$0xff]
    %v1629 = vld [vmem:[#allocation4 + $0x10b0] sm:$0xff]
    %v1630 = vld [vmem:[#allocation4 + $0x10b8] sm:$0xff]
    %v1631 = vld [vmem:[#allocation4 + $0x10c0] sm:$0xff]
    %v1632 = vld [vmem:[#allocation4 + $0x10c8] sm:$0xff]
    %v1633 = vld [vmem:[#allocation4 + $0x10d0] sm:$0xff]
    %v1634 = vld [vmem:[#allocation4 + $0x10d8] sm:$0xff]
    %v1635 = vld [vmem:[#allocation4 + $0x10e0] sm:$0xff]
    %v1636 = vld [vmem:[#allocation4 + $0x10e8] sm:$0xff]
    %v1637 = vld [vmem:[#allocation4 + $0x10f0] sm:$0xff]
    %v1638 = vld [vmem:[#allocation4 + $0x10f8] sm:$0xff]
    %v1639 = vld [vmem:[#allocation4 + $0x1100] sm:$0xff]
    %v1640 = vld [vmem:[#allocation4 + $0x1108] sm:$0xff]
    %v1641 = vld [vmem:[#allocation4 + $0x1110] sm:$0xff]
    %v1642 = vld [vmem:[#allocation4 + $0x1118] sm:$0xff]
    %v1643 = vld [vmem:[#allocation4 + $0x1120] sm:$0xff]
    %v1644 = vld [vmem:[#allocation4 + $0x1128] sm:$0xff]
    %v1645 = vld [vmem:[#allocation4 + $0x1130] sm:$0xff]
    %v1646 = vld [vmem:[#allocation4 + $0x1138] sm:$0xff]
    %v1647 = vld [vmem:[#allocation4 + $0x1140] sm:$0xff]
    %v1648 = vld [vmem:[#allocation4 + $0x1148] sm:$0xff]
    %v1649 = vld [vmem:[#allocation4 + $0x1150] sm:$0xff]
    %v1650 = vld [vmem:[#allocation4 + $0x1158] sm:$0xff]
    %v1651 = vld [vmem:[#allocation4 + $0x1160] sm:$0xff]
    %v1652 = vld [vmem:[#allocation4 + $0x1168] sm:$0xff]
    %v1653 = vld [vmem:[#allocation4 + $0x1170] sm:$0xff]
    %v1654 = vld [vmem:[#allocation4 + $0x1178] sm:$0xff]
    %v1655 = vld [vmem:[#allocation4 + $0x1180] sm:$0xff]
    %v1656 = vld [vmem:[#allocation4 + $0x1188] sm:$0xff]
    %v1657 = vld [vmem:[#allocation4 + $0x1190] sm:$0xff]
    %v1658 = vld [vmem:[#allocation4 + $0x1198] sm:$0xff]
    %v1659 = vld [vmem:[#allocation4 + $0x11a0] sm:$0xff]
    %v1660 = vld [vmem:[#allocation4 + $0x11a8] sm:$0xff]
    %v1661 = vld [vmem:[#allocation4 + $0x11b0] sm:$0xff]
    %v1662 = vld [vmem:[#allocation4 + $0x11b8] sm:$0xff]
    %v1663 = vld [vmem:[#allocation4 + $0x11c0] sm:$0xff]
    %v1664 = vld [vmem:[#allocation4 + $0x11c8] sm:$0xff]
    %v1665 = vld [vmem:[#allocation4 + $0x11d0] sm:$0xff]
    %v1666 = vld [vmem:[#allocation4 + $0x11d8] sm:$0xff]
    %v1667 = vld [vmem:[#allocation4 + $0x11e0] sm:$0xff]
    %v1668 = vld [vmem:[#allocation4 + $0x11e8] sm:$0xff]
    %v1669 = vld [vmem:[#allocation4 + $0x11f0] sm:$0xff]
    %v1670 = vld [vmem:[#allocation4 + $0x11f8] sm:$0xff]
    %v1671 = vld [vmem:[#allocation24] sm:$0xff]
    %v1673 = vlaneseq
    %v1674 = vshrl.u32 %v1673, 7
    %v1675 = vsub.s32 0, %v1674
    %v1676 = vrot.slane %v1671, %v1675
    %v1677 = vlaneseq
    %v1678 = vshrl.u32 %v1677, 7
    %v1679 = vsub.s32 1, %v1678
    %v1680 = vrot.slane %v1671, %v1679
    %v1681 = vlaneseq
    %v1682 = vshrl.u32 %v1681, 7
    %v1683 = vsub.s32 2, %v1682
    %v1684 = vrot.slane %v1671, %v1683
    %v1685 = vlaneseq
    %v1686 = vshrl.u32 %v1685, 7
    %v1687 = vsub.s32 3, %v1686
    %v1688 = vrot.slane %v1671, %v1687
    %v1689 = vlaneseq
    %v1690 = vshrl.u32 %v1689, 7
    %v1691 = vsub.s32 4, %v1690
    %v1692 = vrot.slane %v1671, %v1691
    %v1693 = vlaneseq
    %v1694 = vshrl.u32 %v1693, 7
    %v1695 = vsub.s32 5, %v1694
    %v1696 = vrot.slane %v1671, %v1695
    %v1697 = vlaneseq
    %v1698 = vshrl.u32 %v1697, 7
    %v1699 = vsub.s32 6, %v1698
    %v1700 = vrot.slane %v1671, %v1699
    %v1701 = vlaneseq
    %v1702 = vshrl.u32 %v1701, 7
    %v1703 = vsub.s32 7, %v1702
    %v1704 = vrot.slane %v1671, %v1703
    %1713 = vmatprep.subr.bf16.mxu0 %v1096
    %1714 = vmatpush1.bf16.msra.mxu0 %v1095
    %1715 = vmatprep.subr.bf16.mxu0 %v1104
    %1716 = vmatpush1.bf16.msra.mxu0 %v1103
    %1717 = vmatprep.subr.bf16.mxu0 %v1112
    %1718 = vmatpush1.bf16.msra.mxu0 %v1111
    %1719 = vmatprep.subr.bf16.mxu0 %v1120
    %1720 = vmatpush1.bf16.msra.mxu0 %v1119
    %1721 = vmatprep.subr.bf16.mxu0 %v1128
    %1722 = vmatpush1.bf16.msra.mxu0 %v1127
    %1723 = vmatprep.subr.bf16.mxu0 %v1136
    %1724 = vmatpush1.bf16.msra.mxu0 %v1135
    %1725 = vmatprep.subr.bf16.mxu0 %v1144
    %1726 = vmatpush1.bf16.msra.mxu0 %v1143
    %1727 = vmatprep.subr.bf16.mxu0 %v1152
    %1728 = vmatpush1.bf16.msra.mxu0 %v1151
    %1729 = vmatprep.subr.bf16.mxu0 %v1160
    %1730 = vmatpush1.bf16.msra.mxu0 %v1159
    %1731 = vmatprep.subr.bf16.mxu0 %v1168
    %1732 = vmatpush1.bf16.msra.mxu0 %v1167
    %1733 = vmatprep.subr.bf16.mxu0 %v1176
    %1734 = vmatpush1.bf16.msra.mxu0 %v1175
    %1735 = vmatprep.subr.bf16.mxu0 %v1184
    %1736 = vmatpush1.bf16.msra.mxu0 %v1183
    %1737 = vmatprep.subr.bf16.mxu0 %v1192
    %1738 = vmatpush1.bf16.msra.mxu0 %v1191
    %1739 = vmatprep.subr.bf16.mxu0 %v1200
    %1740 = vmatpush1.bf16.msra.mxu0 %v1199
    %1741 = vmatprep.subr.bf16.mxu0 %v1208
    %1742 = vmatpush1.bf16.msra.mxu0 %v1207
    %1743 = vmatprep.subr.bf16.mxu0 %v1216
    %1744 = vmatpush1.bf16.msra.mxu0 %v1215
    %1745 = vmatprep.mubr.bf16.mxu0 %v1087
    %1746 = vmatmul.mubr.bf16.gmra.mrb[0].mxu0 %v1086
    %v1747 = vpop.f32.mrb[0].mxu0
    %v1748 = vadd.f32 %v1676, %v1747
    %v1749 = vpop.f32.mrb[0].mxu0
    %v1750 = vadd.f32 %v1680, %v1749
    %v1751 = vpop.f32.mrb[0].mxu0
    %v1752 = vadd.f32 %v1676, %v1751
    %v1753 = vpop.f32.mrb[0].mxu0
    %v1754 = vadd.f32 %v1680, %v1753
    %1755 = vdwg.mxu0
    %1756 = vmatprep.subr.bf16.mxu0 %v1224
    %1757 = vmatpush1.bf16.msra.mxu0 %v1223
    %1758 = vmatprep.subr.bf16.mxu0 %v1232
    %1759 = vmatpush1.bf16.msra.mxu0 %v1231
    %1760 = vmatprep.subr.bf16.mxu0 %v1240
    %1761 = vmatpush1.bf16.msra.mxu0 %v1239
    %1762 = vmatprep.subr.bf16.mxu0 %v1248
    %1763 = vmatpush1.bf16.msra.mxu0 %v1247
    %1764 = vmatprep.subr.bf16.mxu0 %v1256
    %1765 = vmatpush1.bf16.msra.mxu0 %v1255
    %1766 = vmatprep.subr.bf16.mxu0 %v1264
    %1767 = vmatpush1.bf16.msra.mxu0 %v1263
    %1768 = vmatprep.subr.bf16.mxu0 %v1272
    %1769 = vmatpush1.bf16.msra.mxu0 %v1271
    %1770 = vmatprep.subr.bf16.mxu0 %v1280
    %1771 = vmatpush1.bf16.msra.mxu0 %v1279
    %1772 = vmatprep.subr.bf16.mxu0 %v1288
    %1773 = vmatpush1.bf16.msra.mxu0 %v1287
    %1774 = vmatprep.subr.bf16.mxu0 %v1296
    %1775 = vmatpush1.bf16.msra.mxu0 %v1295
    %1776 = vmatprep.subr.bf16.mxu0 %v1304
    %1777 = vmatpush1.bf16.msra.mxu0 %v1303
    %1778 = vmatprep.subr.bf16.mxu0 %v1312
    %1779 = vmatpush1.bf16.msra.mxu0 %v1311
    %1780 = vmatprep.subr.bf16.mxu0 %v1320
    %1781 = vmatpush1.bf16.msra.mxu0 %v1319
    %1782 = vmatprep.subr.bf16.mxu0 %v1328
    %1783 = vmatpush1.bf16.msra.mxu0 %v1327
    %1784 = vmatprep.subr.bf16.mxu0 %v1336
    %1785 = vmatpush1.bf16.msra.mxu0 %v1335
    %1786 = vmatprep.subr.bf16.mxu0 %v1344
    %1787 = vmatpush1.bf16.msra.mxu0 %v1343
    %1788 = vmatprep.mubr.bf16.mxu0 %v1089
    %1789 = vmatmul.mubr.bf16.gmra.mrb[0].mxu0 %v1088
    %v1790 = vpop.f32.mrb[0].mxu0
    %v1791 = vadd.f32 %v1748, %v1790
    %v1792 = vpop.f32.mrb[0].mxu0
    %v1793 = vadd.f32 %v1750, %v1792
    %v1794 = vpop.f32.mrb[0].mxu0
    %v1795 = vadd.f32 %v1752, %v1794
    %v1796 = vpop.f32.mrb[0].mxu0
    %v1797 = vadd.f32 %v1754, %v1796
    %1798 = vdwg.mxu0
    %1799 = vmatprep.subr.bf16.mxu0 %v1352
    %1800 = vmatpush1.bf16.msra.mxu0 %v1351
    %1801 = vmatprep.subr.bf16.mxu0 %v1360
    %1802 = vmatpush1.bf16.msra.mxu0 %v1359
    %1803 = vmatprep.subr.bf16.mxu0 %v1368
    %1804 = vmatpush1.bf16.msra.mxu0 %v1367
    %1805 = vmatprep.subr.bf16.mxu0 %v1376
    %1806 = vmatpush1.bf16.msra.mxu0 %v1375
    %1807 = vmatprep.subr.bf16.mxu0 %v1384
    %1808 = vmatpush1.bf16.msra.mxu0 %v1383
    %1809 = vmatprep.subr.bf16.mxu0 %v1392
    %1810 = vmatpush1.bf16.msra.mxu0 %v1391
    %1811 = vmatprep.subr.bf16.mxu0 %v1400
    %1812 = vmatpush1.bf16.msra.mxu0 %v1399
    %1813 = vmatprep.subr.bf16.mxu0 %v1408
    %1814 = vmatpush1.bf16.msra.mxu0 %v1407
    %1815 = vmatprep.subr.bf16.mxu0 %v1416
    %1816 = vmatpush1.bf16.msra.mxu0 %v1415
    %1817 = vmatprep.subr.bf16.mxu0 %v1424
    %1818 = vmatpush1.bf16.msra.mxu0 %v1423
    %1819 = vmatprep.subr.bf16.mxu0 %v1432
    %1820 = vmatpush1.bf16.msra.mxu0 %v1431
    %1821 = vmatprep.subr.bf16.mxu0 %v1440
    %1822 = vmatpush1.bf16.msra.mxu0 %v1439
    %1823 = vmatprep.subr.bf16.mxu0 %v1448
    %1824 = vmatpush1.bf16.msra.mxu0 %v1447
    %1825 = vmatprep.subr.bf16.mxu0 %v1456
    %1826 = vmatpush1.bf16.msra.mxu0 %v1455
    %1827 = vmatprep.subr.bf16.mxu0 %v1464
    %1828 = vmatpush1.bf16.msra.mxu0 %v1463
    %1829 = vmatprep.subr.bf16.mxu0 %v1472
    %1830 = vmatpush1.bf16.msra.mxu0 %v1471
    %1831 = vmatprep.mubr.bf16.mxu0 %v1091
    %1832 = vmatmul.mubr.bf16.gmra.mrb[0].mxu0 %v1090
    %v1833 = vpop.f32.mrb[0].mxu0
    %v1834 = vadd.f32 %v1791, %v1833
    %v1835 = vpop.f32.mrb[0].mxu0
    %v1836 = vadd.f32 %v1793, %v1835
    %v1837 = vpop.f32.mrb[0].mxu0
    %v1838 = vadd.f32 %v1795, %v1837
    %v1839 = vpop.f32.mrb[0].mxu0
    %v1840 = vadd.f32 %v1797, %v1839
    %1841 = vdwg.mxu0
    %1842 = vmatprep.subr.bf16.mxu0 %v1480
    %1843 = vmatpush1.bf16.msra.mxu0 %v1479
    %1844 = vmatprep.subr.bf16.mxu0 %v1488
    %1845 = vmatpush1.bf16.msra.mxu0 %v1487
    %1846 = vmatprep.subr.bf16.mxu0 %v1496
    %1847 = vmatpush1.bf16.msra.mxu0 %v1495
    %1848 = vmatprep.subr.bf16.mxu0 %v1504
    %1849 = vmatpush1.bf16.msra.mxu0 %v1503
    %1850 = vmatprep.subr.bf16.mxu0 %v1512
    %1851 = vmatpush1.bf16.msra.mxu0 %v1511
    %1852 = vmatprep.subr.bf16.mxu0 %v1520
    %1853 = vmatpush1.bf16.msra.mxu0 %v1519
    %1854 = vmatprep.subr.bf16.mxu0 %v1528
    %1855 = vmatpush1.bf16.msra.mxu0 %v1527
    %1856 = vmatprep.subr.bf16.mxu0 %v1536
    %1857 = vmatpush1.bf16.msra.mxu0 %v1535
    %1858 = vmatprep.subr.bf16.mxu0 %v1544
    %1859 = vmatpush1.bf16.msra.mxu0 %v1543
    %1860 = vmatprep.subr.bf16.mxu0 %v1552
    %1861 = vmatpush1.bf16.msra.mxu0 %v1551
    %1862 = vmatprep.subr.bf16.mxu0 %v1560
    %1863 = vmatpush1.bf16.msra.mxu0 %v1559
    %1864 = vmatprep.subr.bf16.mxu0 %v1568
    %1865 = vmatpush1.bf16.msra.mxu0 %v1567
    %1866 = vmatprep.subr.bf16.mxu0 %v1576
    %1867 = vmatpush1.bf16.msra.mxu0 %v1575
    %1868 = vmatprep.subr.bf16.mxu0 %v1584
    %1869 = vmatpush1.bf16.msra.mxu0 %v1583
    %1870 = vmatprep.subr.bf16.mxu0 %v1592
    %1871 = vmatpush1.bf16.msra.mxu0 %v1591
    %1872 = vmatprep.subr.bf16.mxu0 %v1600
    %1873 = vmatpush1.bf16.msra.mxu0 %v1599
    %1874 = vmatprep.mubr.bf16.mxu0 %v1093
    %1875 = vmatmul.mubr.bf16.gmra.mrb[0].mxu0 %v1092
    %v1876 = vpop.f32.mrb[0].mxu0
    %v1877 = vadd.f32 %v1834, %v1876
    %v1878 = vpop.f32.mrb[0].mxu0
    %v1879 = vadd.f32 %v1836, %v1878
    %v1880 = vpop.f32.mrb[0].mxu0
    %v1881 = vadd.f32 %v1838, %v1880
    %v1882 = vpop.f32.mrb[0].mxu0
    %v1883 = vadd.f32 %v1840, %v1882
    %1884 = vdwg.mxu0
    %1885 = vmatprep.subr.bf16.mxu0 %v1608
    %1886 = vmatpush1.bf16.msra.mxu0 %v1607
    %1887 = vmatprep.subr.bf16.mxu0 %v1616
    %1888 = vmatpush1.bf16.msra.mxu0 %v1615
    %1889 = vmatprep.subr.bf16.mxu0 %v1624
    %1890 = vmatpush1.bf16.msra.mxu0 %v1623
    %1891 = vmatprep.subr.bf16.mxu0 %v1632
    %1892 = vmatpush1.bf16.msra.mxu0 %v1631
    %1893 = vmatprep.subr.bf16.mxu0 %v1640
    %1894 = vmatpush1.bf16.msra.mxu0 %v1639
    %1895 = vmatprep.subr.bf16.mxu0 %v1648
    %1896 = vmatpush1.bf16.msra.mxu0 %v1647
    %1897 = vmatprep.subr.bf16.mxu0 %v1656
    %1898 = vmatpush1.bf16.msra.mxu0 %v1655
    %1899 = vmatprep.subr.bf16.mxu0 %v1664
    %1900 = vmatpush1.bf16.msra.mxu0 %v1663
    %1901 = vmatprep.subr.bf16.mxu0 0
    %1902 = vmatpush1.bf16.msra.mxu0 0
    %1903 = vmatprep.subr.bf16.mxu0 0
    %1904 = vmatpush1.bf16.msra.mxu0 0
    %1905 = vmatprep.subr.bf16.mxu0 0
    %1906 = vmatpush1.bf16.msra.mxu0 0
    %1907 = vmatprep.subr.bf16.mxu0 0
    %1908 = vmatpush1.bf16.msra.mxu0 0
    %1909 = vmatprep.subr.bf16.mxu0 0
    %1910 = vmatpush1.bf16.msra.mxu0 0
    %1911 = vmatprep.subr.bf16.mxu0 0
    %1912 = vmatpush1.bf16.msra.mxu0 0
    %1913 = vmatprep.subr.bf16.mxu0 0
    %1914 = vmatpush1.bf16.msra.mxu0 0
    %1915 = vmatprep.subr.bf16.mxu0 0
    %1916 = vmatpush1.bf16.msra.mxu0 0
    %1917 = vmatprep.mubr.bf16.mxu0 0
    %1918 = vmatmul.mubr.bf16.gmra.mrb[0].mxu0 %v1094
    %v1919 = vpop.f32.mrb[0].mxu0
    %v1920 = vadd.f32 %v1877, %v1919
    %v1921 = vpop.f32.mrb[0].mxu0
    %v1922 = vadd.f32 %v1879, %v1921
    %v1923 = vpop.f32.mrb[0].mxu0
    %v1924 = vadd.f32 %v1881, %v1923
    %v1925 = vpop.f32.mrb[0].mxu0
    %v1926 = vadd.f32 %v1883, %v1925
    %1927 = vdwg.mxu0
    %1928 = vmatprep.subr.bf16.mxu0 %v1098
    %1929 = vmatpush1.bf16.msra.mxu0 %v1097
    %1930 = vmatprep.subr.bf16.mxu0 %v1106
    %1931 = vmatpush1.bf16.msra.mxu0 %v1105
    %1932 = vmatprep.subr.bf16.mxu0 %v1114
    %1933 = vmatpush1.bf16.msra.mxu0 %v1113
    %1934 = vmatprep.subr.bf16.mxu0 %v1122
    %1935 = vmatpush1.bf16.msra.mxu0 %v1121
    %1936 = vmatprep.subr.bf16.mxu0 %v1130
    %1937 = vmatpush1.bf16.msra.mxu0 %v1129
    %1938 = vmatprep.subr.bf16.mxu0 %v1138
    %1939 = vmatpush1.bf16.msra.mxu0 %v1137
    %1940 = vmatprep.subr.bf16.mxu0 %v1146
    %1941 = vmatpush1.bf16.msra.mxu0 %v1145
    %1942 = vmatprep.subr.bf16.mxu0 %v1154
    %1943 = vmatpush1.bf16.msra.mxu0 %v1153
    %1944 = vmatprep.subr.bf16.mxu0 %v1162
    %1945 = vmatpush1.bf16.msra.mxu0 %v1161
    %1946 = vmatprep.subr.bf16.mxu0 %v1170
    %1947 = vmatpush1.bf16.msra.mxu0 %v1169
    %1948 = vmatprep.subr.bf16.mxu0 %v1178
    %1949 = vmatpush1.bf16.msra.mxu0 %v1177
    %1950 = vmatprep.subr.bf16.mxu0 %v1186
    %1951 = vmatpush1.bf16.msra.mxu0 %v1185
    %1952 = vmatprep.subr.bf16.mxu0 %v1194
    %1953 = vmatpush1.bf16.msra.mxu0 %v1193
    %1954 = vmatprep.subr.bf16.mxu0 %v1202
    %1955 = vmatpush1.bf16.msra.mxu0 %v1201
    %1956 = vmatprep.subr.bf16.mxu0 %v1210
    %1957 = vmatpush1.bf16.msra.mxu0 %v1209
    %1958 = vmatprep.subr.bf16.mxu0 %v1218
    %1959 = vmatpush1.bf16.msra.mxu0 %v1217
    %1960 = vmatprep.mubr.bf16.mxu0 %v1087
    %1961 = vmatmul.mubr.bf16.gmra.mrb[0].mxu0 %v1086
    %v1962 = vpop.f32.mrb[0].mxu0
    %v1963 = vadd.f32 %v1684, %v1962
    %v1964 = vpop.f32.mrb[0].mxu0
    %v1965 = vadd.f32 %v1688, %v1964
    %v1966 = vpop.f32.mrb[0].mxu0
    %v1967 = vadd.f32 %v1684, %v1966
    %v1968 = vpop.f32.mrb[0].mxu0
    %v1969 = vadd.f32 %v1688, %v1968
    %1970 = vdwg.mxu0
    %1971 = vmatprep.subr.bf16.mxu0 %v1226
    %1972 = vmatpush1.bf16.msra.mxu0 %v1225
    %1973 = vmatprep.subr.bf16.mxu0 %v1234
    %1974 = vmatpush1.bf16.msra.mxu0 %v1233
    %1975 = vmatprep.subr.bf16.mxu0 %v1242
    %1976 = vmatpush1.bf16.msra.mxu0 %v1241
    %1977 = vmatprep.subr.bf16.mxu0 %v1250
    %1978 = vmatpush1.bf16.msra.mxu0 %v1249
    %1979 = vmatprep.subr.bf16.mxu0 %v1258
    %1980 = vmatpush1.bf16.msra.mxu0 %v1257
    %1981 = vmatprep.subr.bf16.mxu0 %v1266
    %1982 = vmatpush1.bf16.msra.mxu0 %v1265
    %1983 = vmatprep.subr.bf16.mxu0 %v1274
    %1984 = vmatpush1.bf16.msra.mxu0 %v1273
    %1985 = vmatprep.subr.bf16.mxu0 %v1282
    %1986 = vmatpush1.bf16.msra.mxu0 %v1281
    %1987 = vmatprep.subr.bf16.mxu0 %v1290
    %1988 = vmatpush1.bf16.msra.mxu0 %v1289
    %1989 = vmatprep.subr.bf16.mxu0 %v1298
    %1990 = vmatpush1.bf16.msra.mxu0 %v1297
    %1991 = vmatprep.subr.bf16.mxu0 %v1306
    %1992 = vmatpush1.bf16.msra.mxu0 %v1305
    %1993 = vmatprep.subr.bf16.mxu0 %v1314
    %1994 = vmatpush1.bf16.msra.mxu0 %v1313
    %1995 = vmatprep.subr.bf16.mxu0 %v1322
    %1996 = vmatpush1.bf16.msra.mxu0 %v1321
    %1997 = vmatprep.subr.bf16.mxu0 %v1330
    %1998 = vmatpush1.bf16.msra.mxu0 %v1329
    %1999 = vmatprep.subr.bf16.mxu0 %v1338
    %2000 = vmatpush1.bf16.msra.mxu0 %v1337
    %2001 = vmatprep.subr.bf16.mxu0 %v1346
    %2002 = vmatpush1.bf16.msra.mxu0 %v1345
    %2003 = vmatprep.mubr.bf16.mxu0 %v1089
    %2004 = vmatmul.mubr.bf16.gmra.mrb[0].mxu0 %v1088
    %v2005 = vpop.f32.mrb[0].mxu0
    %v2006 = vadd.f32 %v1963, %v2005
    %v2007 = vpop.f32.mrb[0].mxu0
    %v2008 = vadd.f32 %v1965, %v2007
    %v2009 = vpop.f32.mrb[0].mxu0
    %v2010 = vadd.f32 %v1967, %v2009
    %v2011 = vpop.f32.mrb[0].mxu0
    %v2012 = vadd.f32 %v1969, %v2011
    %2013 = vdwg.mxu0
    %2014 = vmatprep.subr.bf16.mxu0 %v1354
    %2015 = vmatpush1.bf16.msra.mxu0 %v1353
    %2016 = vmatprep.subr.bf16.mxu0 %v1362
    %2017 = vmatpush1.bf16.msra.mxu0 %v1361
    %2018 = vmatprep.subr.bf16.mxu0 %v1370
    %2019 = vmatpush1.bf16.msra.mxu0 %v1369
    %2020 = vmatprep.subr.bf16.mxu0 %v1378
    %2021 = vmatpush1.bf16.msra.mxu0 %v1377
    %2022 = vmatprep.subr.bf16.mxu0 %v1386
    %2023 = vmatpush1.bf16.msra.mxu0 %v1385
    %2024 = vmatprep.subr.bf16.mxu0 %v1394
    %2025 = vmatpush1.bf16.msra.mxu0 %v1393
    %2026 = vmatprep.subr.bf16.mxu0 %v1402
    %2027 = vmatpush1.bf16.msra.mxu0 %v1401
    %2028 = vmatprep.subr.bf16.mxu0 %v1410
    %2029 = vmatpush1.bf16.msra.mxu0 %v1409
    %2030 = vmatprep.subr.bf16.mxu0 %v1418
    %2031 = vmatpush1.bf16.msra.mxu0 %v1417
    %2032 = vmatprep.subr.bf16.mxu0 %v1426
    %2033 = vmatpush1.bf16.msra.mxu0 %v1425
    %2034 = vmatprep.subr.bf16.mxu0 %v1434
    %2035 = vmatpush1.bf16.msra.mxu0 %v1433
    %2036 = vmatprep.subr.bf16.mxu0 %v1442
    %2037 = vmatpush1.bf16.msra.mxu0 %v1441
    %2038 = vmatprep.subr.bf16.mxu0 %v1450
    %2039 = vmatpush1.bf16.msra.mxu0 %v1449
    %2040 = vmatprep.subr.bf16.mxu0 %v1458
    %2041 = vmatpush1.bf16.msra.mxu0 %v1457
    %2042 = vmatprep.subr.bf16.mxu0 %v1466
    %2043 = vmatpush1.bf16.msra.mxu0 %v1465
    %2044 = vmatprep.subr.bf16.mxu0 %v1474
    %2045 = vmatpush1.bf16.msra.mxu0 %v1473
    %2046 = vmatprep.mubr.bf16.mxu0 %v1091
    %2047 = vmatmul.mubr.bf16.gmra.mrb[0].mxu0 %v1090
    %v2048 = vpop.f32.mrb[0].mxu0
    %v2049 = vadd.f32 %v2006, %v2048
    %v2050 = vpop.f32.mrb[0].mxu0
    %v2051 = vadd.f32 %v2008, %v2050
    %v2052 = vpop.f32.mrb[0].mxu0
    %v2053 = vadd.f32 %v2010, %v2052
    %v2054 = vpop.f32.mrb[0].mxu0
    %v2055 = vadd.f32 %v2012, %v2054
    %2056 = vdwg.mxu0
    %2057 = vmatprep.subr.bf16.mxu0 %v1482
    %2058 = vmatpush1.bf16.msra.mxu0 %v1481
    %2059 = vmatprep.subr.bf16.mxu0 %v1490
    %2060 = vmatpush1.bf16.msra.mxu0 %v1489
    %2061 = vmatprep.subr.bf16.mxu0 %v1498
    %2062 = vmatpush1.bf16.msra.mxu0 %v1497
    %2063 = vmatprep.subr.bf16.mxu0 %v1506
    %2064 = vmatpush1.bf16.msra.mxu0 %v1505
    %2065 = vmatprep.subr.bf16.mxu0 %v1514
    %2066 = vmatpush1.bf16.msra.mxu0 %v1513
    %2067 = vmatprep.subr.bf16.mxu0 %v1522
    %2068 = vmatpush1.bf16.msra.mxu0 %v1521
    %2069 = vmatprep.subr.bf16.mxu0 %v1530
    %2070 = vmatpush1.bf16.msra.mxu0 %v1529
    %2071 = vmatprep.subr.bf16.mxu0 %v1538
    %2072 = vmatpush1.bf16.msra.mxu0 %v1537
    %2073 = vmatprep.subr.bf16.mxu0 %v1546
    %2074 = vmatpush1.bf16.msra.mxu0 %v1545
    %2075 = vmatprep.subr.bf16.mxu0 %v1554
    %2076 = vmatpush1.bf16.msra.mxu0 %v1553
    %2077 = vmatprep.subr.bf16.mxu0 %v1562
    %2078 = vmatpush1.bf16.msra.mxu0 %v1561
    %2079 = vmatprep.subr.bf16.mxu0 %v1570
    %2080 = vmatpush1.bf16.msra.mxu0 %v1569
    %2081 = vmatprep.subr.bf16.mxu0 %v1578
    %2082 = vmatpush1.bf16.msra.mxu0 %v1577
    %2083 = vmatprep.subr.bf16.mxu0 %v1586
    %2084 = vmatpush1.bf16.msra.mxu0 %v1585
    %2085 = vmatprep.subr.bf16.mxu0 %v1594
    %2086 = vmatpush1.bf16.msra.mxu0 %v1593
    %2087 = vmatprep.subr.bf16.mxu0 %v1602
    %2088 = vmatpush1.bf16.msra.mxu0 %v1601
    %2089 = vmatprep.mubr.bf16.mxu0 %v1093
    %2090 = vmatmul.mubr.bf16.gmra.mrb[0].mxu0 %v1092
    %v2091 = vpop.f32.mrb[0].mxu0
    %v2092 = vadd.f32 %v2049, %v2091
    %v2093 = vpop.f32.mrb[0].mxu0
    %v2094 = vadd.f32 %v2051, %v2093
    %v2095 = vpop.f32.mrb[0].mxu0
    %v2096 = vadd.f32 %v2053, %v2095
    %v2097 = vpop.f32.mrb[0].mxu0
    %v2098 = vadd.f32 %v2055, %v2097
    %2099 = vdwg.mxu0
    %2100 = vmatprep.subr.bf16.mxu0 %v1610
    %2101 = vmatpush1.bf16.msra.mxu0 %v1609
    %2102 = vmatprep.subr.bf16.mxu0 %v1618
    %2103 = vmatpush1.bf16.msra.mxu0 %v1617
    %2104 = vmatprep.subr.bf16.mxu0 %v1626
    %2105 = vmatpush1.bf16.msra.mxu0 %v1625
    %2106 = vmatprep.subr.bf16.mxu0 %v1634
    %2107 = vmatpush1.bf16.msra.mxu0 %v1633
    %2108 = vmatprep.subr.bf16.mxu0 %v1642
    %2109 = vmatpush1.bf16.msra.mxu0 %v1641
    %2110 = vmatprep.subr.bf16.mxu0 %v1650
    %2111 = vmatpush1.bf16.msra.mxu0 %v1649
    %2112 = vmatprep.subr.bf16.mxu0 %v1658
    %2113 = vmatpush1.bf16.msra.mxu0 %v1657
    %2114 = vmatprep.subr.bf16.mxu0 %v1666
    %2115 = vmatpush1.bf16.msra.mxu0 %v1665
    %2116 = vmatprep.subr.bf16.mxu0 0
    %2117 = vmatpush1.bf16.msra.mxu0 0
    %2118 = vmatprep.subr.bf16.mxu0 0
    %2119 = vmatpush1.bf16.msra.mxu0 0
    %2120 = vmatprep.subr.bf16.mxu0 0
    %2121 = vmatpush1.bf16.msra.mxu0 0
    %2122 = vmatprep.subr.bf16.mxu0 0
    %2123 = vmatpush1.bf16.msra.mxu0 0
    %2124 = vmatprep.subr.bf16.mxu0 0
    %2125 = vmatpush1.bf16.msra.mxu0 0
    %2126 = vmatprep.subr.bf16.mxu0 0
    %2127 = vmatpush1.bf16.msra.mxu0 0
    %2128 = vmatprep.subr.bf16.mxu0 0
    %2129 = vmatpush1.bf16.msra.mxu0 0
    %2130 = vmatprep.subr.bf16.mxu0 0
    %2131 = vmatpush1.bf16.msra.mxu0 0
    %2132 = vmatprep.mubr.bf16.mxu0 0
    %2133 = vmatmul.mubr.bf16.gmra.mrb[0].mxu0 %v1094
    %v2134 = vpop.f32.mrb[0].mxu0
    %v2135 = vadd.f32 %v2092, %v2134
    %v2136 = vpop.f32.mrb[0].mxu0
    %v2137 = vadd.f32 %v2094, %v2136
    %v2138 = vpop.f32.mrb[0].mxu0
    %v2139 = vadd.f32 %v2096, %v2138
    %v2140 = vpop.f32.mrb[0].mxu0
    %v2141 = vadd.f32 %v2098, %v2140
    %2142 = vdwg.mxu0
    %2143 = vmatprep.subr.bf16.mxu0 %v1100
    %2144 = vmatpush1.bf16.msra.mxu0 %v1099
    %2145 = vmatprep.subr.bf16.mxu0 %v1108
    %2146 = vmatpush1.bf16.msra.mxu0 %v1107
    %2147 = vmatprep.subr.bf16.mxu0 %v1116
    %2148 = vmatpush1.bf16.msra.mxu0 %v1115
    %2149 = vmatprep.subr.bf16.mxu0 %v1124
    %2150 = vmatpush1.bf16.msra.mxu0 %v1123
    %2151 = vmatprep.subr.bf16.mxu0 %v1132
    %2152 = vmatpush1.bf16.msra.mxu0 %v1131
    %2153 = vmatprep.subr.bf16.mxu0 %v1140
    %2154 = vmatpush1.bf16.msra.mxu0 %v1139
    %2155 = vmatprep.subr.bf16.mxu0 %v1148
    %2156 = vmatpush1.bf16.msra.mxu0 %v1147
    %2157 = vmatprep.subr.bf16.mxu0 %v1156
    %2158 = vmatpush1.bf16.msra.mxu0 %v1155
    %2159 = vmatprep.subr.bf16.mxu0 %v1164
    %2160 = vmatpush1.bf16.msra.mxu0 %v1163
    %2161 = vmatprep.subr.bf16.mxu0 %v1172
    %2162 = vmatpush1.bf16.msra.mxu0 %v1171
    %2163 = vmatprep.subr.bf16.mxu0 %v1180
    %2164 = vmatpush1.bf16.msra.mxu0 %v1179
    %2165 = vmatprep.subr.bf16.mxu0 %v1188
    %2166 = vmatpush1.bf16.msra.mxu0 %v1187
    %2167 = vmatprep.subr.bf16.mxu0 %v1196
    %2168 = vmatpush1.bf16.msra.mxu0 %v1195
    %2169 = vmatprep.subr.bf16.mxu0 %v1204
    %2170 = vmatpush1.bf16.msra.mxu0 %v1203
    %2171 = vmatprep.subr.bf16.mxu0 %v1212
    %2172 = vmatpush1.bf16.msra.mxu0 %v1211
    %2173 = vmatprep.subr.bf16.mxu0 %v1220
    %2174 = vmatpush1.bf16.msra.mxu0 %v1219
    %2175 = vmatprep.mubr.bf16.mxu0 %v1087
    %2176 = vmatmul.mubr.bf16.gmra.mrb[0].mxu0 %v1086
    %v2177 = vpop.f32.mrb[0].mxu0
    %v2178 = vadd.f32 %v1692, %v2177
    %v2179 = vpop.f32.mrb[0].mxu0
    %v2180 = vadd.f32 %v1696, %v2179
    %v2181 = vpop.f32.mrb[0].mxu0
    %v2182 = vadd.f32 %v1692, %v2181
    %v2183 = vpop.f32.mrb[0].mxu0
    %v2184 = vadd.f32 %v1696, %v2183
    %2185 = vdwg.mxu0
    %2186 = vmatprep.subr.bf16.mxu0 %v1228
    %2187 = vmatpush1.bf16.msra.mxu0 %v1227
    %2188 = vmatprep.subr.bf16.mxu0 %v1236
    %2189 = vmatpush1.bf16.msra.mxu0 %v1235
    %2190 = vmatprep.subr.bf16.mxu0 %v1244
    %2191 = vmatpush1.bf16.msra.mxu0 %v1243
    %2192 = vmatprep.subr.bf16.mxu0 %v1252
    %2193 = vmatpush1.bf16.msra.mxu0 %v1251
    %2194 = vmatprep.subr.bf16.mxu0 %v1260
    %2195 = vmatpush1.bf16.msra.mxu0 %v1259
    %2196 = vmatprep.subr.bf16.mxu0 %v1268
    %2197 = vmatpush1.bf16.msra.mxu0 %v1267
    %2198 = vmatprep.subr.bf16.mxu0 %v1276
    %2199 = vmatpush1.bf16.msra.mxu0 %v1275
    %2200 = vmatprep.subr.bf16.mxu0 %v1284
    %2201 = vmatpush1.bf16.msra.mxu0 %v1283
    %2202 = vmatprep.subr.bf16.mxu0 %v1292
    %2203 = vmatpush1.bf16.msra.mxu0 %v1291
    %2204 = vmatprep.subr.bf16.mxu0 %v1300
    %2205 = vmatpush1.bf16.msra.mxu0 %v1299
    %2206 = vmatprep.subr.bf16.mxu0 %v1308
    %2207 = vmatpush1.bf16.msra.mxu0 %v1307
    %2208 = vmatprep.subr.bf16.mxu0 %v1316
    %2209 = vmatpush1.bf16.msra.mxu0 %v1315
    %2210 = vmatprep.subr.bf16.mxu0 %v1324
    %2211 = vmatpush1.bf16.msra.mxu0 %v1323
    %2212 = vmatprep.subr.bf16.mxu0 %v1332
    %2213 = vmatpush1.bf16.msra.mxu0 %v1331
    %2214 = vmatprep.subr.bf16.mxu0 %v1340
    %2215 = vmatpush1.bf16.msra.mxu0 %v1339
    %2216 = vmatprep.subr.bf16.mxu0 %v1348
    %2217 = vmatpush1.bf16.msra.mxu0 %v1347
    %2218 = vmatprep.mubr.bf16.mxu0 %v1089
    %2219 = vmatmul.mubr.bf16.gmra.mrb[0].mxu0 %v1088
    %v2220 = vpop.f32.mrb[0].mxu0
    %v2221 = vadd.f32 %v2178, %v2220
    %v2222 = vpop.f32.mrb[0].mxu0
    %v2223 = vadd.f32 %v2180, %v2222
    %v2224 = vpop.f32.mrb[0].mxu0
    %v2225 = vadd.f32 %v2182, %v2224
    %v2226 = vpop.f32.mrb[0].mxu0
    %v2227 = vadd.f32 %v2184, %v2226
    %2228 = vdwg.mxu0
    %2229 = vmatprep.subr.bf16.mxu0 %v1356
    %2230 = vmatpush1.bf16.msra.mxu0 %v1355
    %2231 = vmatprep.subr.bf16.mxu0 %v1364
    %2232 = vmatpush1.bf16.msra.mxu0 %v1363
    %2233 = vmatprep.subr.bf16.mxu0 %v1372
    %2234 = vmatpush1.bf16.msra.mxu0 %v1371
    %2235 = vmatprep.subr.bf16.mxu0 %v1380
    %2236 = vmatpush1.bf16.msra.mxu0 %v1379
    %2237 = vmatprep.subr.bf16.mxu0 %v1388
    %2238 = vmatpush1.bf16.msra.mxu0 %v1387
    %2239 = vmatprep.subr.bf16.mxu0 %v1396
    %2240 = vmatpush1.bf16.msra.mxu0 %v1395
    %2241 = vmatprep.subr.bf16.mxu0 %v1404
    %2242 = vmatpush1.bf16.msra.mxu0 %v1403
    %2243 = vmatprep.subr.bf16.mxu0 %v1412
    %2244 = vmatpush1.bf16.msra.mxu0 %v1411
    %2245 = vmatprep.subr.bf16.mxu0 %v1420
    %2246 = vmatpush1.bf16.msra.mxu0 %v1419
    %2247 = vmatprep.subr.bf16.mxu0 %v1428
    %2248 = vmatpush1.bf16.msra.mxu0 %v1427
    %2249 = vmatprep.subr.bf16.mxu0 %v1436
    %2250 = vmatpush1.bf16.msra.mxu0 %v1435
    %2251 = vmatprep.subr.bf16.mxu0 %v1444
    %2252 = vmatpush1.bf16.msra.mxu0 %v1443
    %2253 = vmatprep.subr.bf16.mxu0 %v1452
    %2254 = vmatpush1.bf16.msra.mxu0 %v1451
    %2255 = vmatprep.subr.bf16.mxu0 %v1460
    %2256 = vmatpush1.bf16.msra.mxu0 %v1459
    %2257 = vmatprep.subr.bf16.mxu0 %v1468
    %2258 = vmatpush1.bf16.msra.mxu0 %v1467
    %2259 = vmatprep.subr.bf16.mxu0 %v1476
    %2260 = vmatpush1.bf16.msra.mxu0 %v1475
    %2261 = vmatprep.mubr.bf16.mxu0 %v1091
    %2262 = vmatmul.mubr.bf16.gmra.mrb[0].mxu0 %v1090
    %v2263 = vpop.f32.mrb[0].mxu0
    %v2264 = vadd.f32 %v2221, %v2263
    %v2265 = vpop.f32.mrb[0].mxu0
    %v2266 = vadd.f32 %v2223, %v2265
    %v2267 = vpop.f32.mrb[0].mxu0
    %v2268 = vadd.f32 %v2225, %v2267
    %v2269 = vpop.f32.mrb[0].mxu0
    %v2270 = vadd.f32 %v2227, %v2269
    %2271 = vdwg.mxu0
    %2272 = vmatprep.subr.bf16.mxu0 %v1484
    %2273 = vmatpush1.bf16.msra.mxu0 %v1483
    %2274 = vmatprep.subr.bf16.mxu0 %v1492
    %2275 = vmatpush1.bf16.msra.mxu0 %v1491
    %2276 = vmatprep.subr.bf16.mxu0 %v1500
    %2277 = vmatpush1.bf16.msra.mxu0 %v1499
    %2278 = vmatprep.subr.bf16.mxu0 %v1508
    %2279 = vmatpush1.bf16.msra.mxu0 %v1507
    %2280 = vmatprep.subr.bf16.mxu0 %v1516
    %2281 = vmatpush1.bf16.msra.mxu0 %v1515
    %2282 = vmatprep.subr.bf16.mxu0 %v1524
    %2283 = vmatpush1.bf16.msra.mxu0 %v1523
    %2284 = vmatprep.subr.bf16.mxu0 %v1532
    %2285 = vmatpush1.bf16.msra.mxu0 %v1531
    %2286 = vmatprep.subr.bf16.mxu0 %v1540
    %2287 = vmatpush1.bf16.msra.mxu0 %v1539
    %2288 = vmatprep.subr.bf16.mxu0 %v1548
    %2289 = vmatpush1.bf16.msra.mxu0 %v1547
    %2290 = vmatprep.subr.bf16.mxu0 %v1556
    %2291 = vmatpush1.bf16.msra.mxu0 %v1555
    %2292 = vmatprep.subr.bf16.mxu0 %v1564
    %2293 = vmatpush1.bf16.msra.mxu0 %v1563
    %2294 = vmatprep.subr.bf16.mxu0 %v1572
    %2295 = vmatpush1.bf16.msra.mxu0 %v1571
    %2296 = vmatprep.subr.bf16.mxu0 %v1580
    %2297 = vmatpush1.bf16.msra.mxu0 %v1579
    %2298 = vmatprep.subr.bf16.mxu0 %v1588
    %2299 = vmatpush1.bf16.msra.mxu0 %v1587
    %2300 = vmatprep.subr.bf16.mxu0 %v1596
    %2301 = vmatpush1.bf16.msra.mxu0 %v1595
    %2302 = vmatprep.subr.bf16.mxu0 %v1604
    %2303 = vmatpush1.bf16.msra.mxu0 %v1603
    %2304 = vmatprep.mubr.bf16.mxu0 %v1093
    %2305 = vmatmul.mubr.bf16.gmra.mrb[0].mxu0 %v1092
    %v2306 = vpop.f32.mrb[0].mxu0
    %v2307 = vadd.f32 %v2264, %v2306
    %v2308 = vpop.f32.mrb[0].mxu0
    %v2309 = vadd.f32 %v2266, %v2308
    %v2310 = vpop.f32.mrb[0].mxu0
    %v2311 = vadd.f32 %v2268, %v2310
    %v2312 = vpop.f32.mrb[0].mxu0
    %v2313 = vadd.f32 %v2270, %v2312
    %2314 = vdwg.mxu0
    %2315 = vmatprep.subr.bf16.mxu0 %v1612
    %2316 = vmatpush1.bf16.msra.mxu0 %v1611
    %2317 = vmatprep.subr.bf16.mxu0 %v1620
    %2318 = vmatpush1.bf16.msra.mxu0 %v1619
    %2319 = vmatprep.subr.bf16.mxu0 %v1628
    %2320 = vmatpush1.bf16.msra.mxu0 %v1627
    %2321 = vmatprep.subr.bf16.mxu0 %v1636
    %2322 = vmatpush1.bf16.msra.mxu0 %v1635
    %2323 = vmatprep.subr.bf16.mxu0 %v1644
    %2324 = vmatpush1.bf16.msra.mxu0 %v1643
    %2325 = vmatprep.subr.bf16.mxu0 %v1652
    %2326 = vmatpush1.bf16.msra.mxu0 %v1651
    %2327 = vmatprep.subr.bf16.mxu0 %v1660
    %2328 = vmatpush1.bf16.msra.mxu0 %v1659
    %2329 = vmatprep.subr.bf16.mxu0 %v1668
    %2330 = vmatpush1.bf16.msra.mxu0 %v1667
    %2331 = vmatprep.subr.bf16.mxu0 0
    %2332 = vmatpush1.bf16.msra.mxu0 0
    %2333 = vmatprep.subr.bf16.mxu0 0
    %2334 = vmatpush1.bf16.msra.mxu0 0
    %2335 = vmatprep.subr.bf16.mxu0 0
    %2336 = vmatpush1.bf16.msra.mxu0 0
    %2337 = vmatprep.subr.bf16.mxu0 0
    %2338 = vmatpush1.bf16.msra.mxu0 0
    %2339 = vmatprep.subr.bf16.mxu0 0
    %2340 = vmatpush1.bf16.msra.mxu0 0
    %2341 = vmatprep.subr.bf16.mxu0 0
    %2342 = vmatpush1.bf16.msra.mxu0 0
    %2343 = vmatprep.subr.bf16.mxu0 0
    %2344 = vmatpush1.bf16.msra.mxu0 0
    %2345 = vmatprep.subr.bf16.mxu0 0
    %2346 = vmatpush1.bf16.msra.mxu0 0
    %2347 = vmatprep.mubr.bf16.mxu0 0
    %2348 = vmatmul.mubr.bf16.gmra.mrb[0].mxu0 %v1094
    %v2349 = vpop.f32.mrb[0].mxu0
    %v2350 = vadd.f32 %v2307, %v2349
    %v2351 = vpop.f32.mrb[0].mxu0
    %v2352 = vadd.f32 %v2309, %v2351
    %v2353 = vpop.f32.mrb[0].mxu0
    %v2354 = vadd.f32 %v2311, %v2353
    %v2355 = vpop.f32.mrb[0].mxu0
    %v2356 = vadd.f32 %v2313, %v2355
    %2357 = vdwg.mxu0
    %2358 = vmatprep.subr.bf16.mxu0 %v1102
    %2359 = vmatpush1.bf16.msra.mxu0 %v1101
    %2360 = vmatprep.subr.bf16.mxu0 %v1110
    %2361 = vmatpush1.bf16.msra.mxu0 %v1109
    %2362 = vmatprep.subr.bf16.mxu0 %v1118
    %2363 = vmatpush1.bf16.msra.mxu0 %v1117
    %2364 = vmatprep.subr.bf16.mxu0 %v1126
    %2365 = vmatpush1.bf16.msra.mxu0 %v1125
    %2366 = vmatprep.subr.bf16.mxu0 %v1134
    %2367 = vmatpush1.bf16.msra.mxu0 %v1133
    %2368 = vmatprep.subr.bf16.mxu0 %v1142
    %2369 = vmatpush1.bf16.msra.mxu0 %v1141
    %2370 = vmatprep.subr.bf16.mxu0 %v1150
    %2371 = vmatpush1.bf16.msra.mxu0 %v1149
    %2372 = vmatprep.subr.bf16.mxu0 %v1158
    %2373 = vmatpush1.bf16.msra.mxu0 %v1157
    %2374 = vmatprep.subr.bf16.mxu0 %v1166
    %2375 = vmatpush1.bf16.msra.mxu0 %v1165
    %2376 = vmatprep.subr.bf16.mxu0 %v1174
    %2377 = vmatpush1.bf16.msra.mxu0 %v1173
    %2378 = vmatprep.subr.bf16.mxu0 %v1182
    %2379 = vmatpush1.bf16.msra.mxu0 %v1181
    %2380 = vmatprep.subr.bf16.mxu0 %v1190
    %2381 = vmatpush1.bf16.msra.mxu0 %v1189
    %2382 = vmatprep.subr.bf16.mxu0 %v1198
    %2383 = vmatpush1.bf16.msra.mxu0 %v1197
    %2384 = vmatprep.subr.bf16.mxu0 %v1206
    %2385 = vmatpush1.bf16.msra.mxu0 %v1205
    %2386 = vmatprep.subr.bf16.mxu0 %v1214
    %2387 = vmatpush1.bf16.msra.mxu0 %v1213
    %2388 = vmatprep.subr.bf16.mxu0 %v1222
    %2389 = vmatpush1.bf16.msra.mxu0 %v1221
    %2390 = vmatprep.mubr.bf16.mxu0 %v1087
    %2391 = vmatmul.mubr.bf16.gmra.mrb[0].mxu0 %v1086
    %v2392 = vpop.f32.mrb[0].mxu0
    %v2393 = vadd.f32 %v1700, %v2392
    %v2394 = vpop.f32.mrb[0].mxu0
    %v2395 = vadd.f32 %v1704, %v2394
    %v2396 = vpop.f32.mrb[0].mxu0
    %v2397 = vadd.f32 %v1700, %v2396
    %v2398 = vpop.f32.mrb[0].mxu0
    %v2399 = vadd.f32 %v1704, %v2398
    %2400 = vdwg.mxu0
    %2401 = vmatprep.subr.bf16.mxu0 %v1230
    %2402 = vmatpush1.bf16.msra.mxu0 %v1229
    %2403 = vmatprep.subr.bf16.mxu0 %v1238
    %2404 = vmatpush1.bf16.msra.mxu0 %v1237
    %2405 = vmatprep.subr.bf16.mxu0 %v1246
    %2406 = vmatpush1.bf16.msra.mxu0 %v1245
    %2407 = vmatprep.subr.bf16.mxu0 %v1254
    %2408 = vmatpush1.bf16.msra.mxu0 %v1253
    %2409 = vmatprep.subr.bf16.mxu0 %v1262
    %2410 = vmatpush1.bf16.msra.mxu0 %v1261
    %2411 = vmatprep.subr.bf16.mxu0 %v1270
    %2412 = vmatpush1.bf16.msra.mxu0 %v1269
    %2413 = vmatprep.subr.bf16.mxu0 %v1278
    %2414 = vmatpush1.bf16.msra.mxu0 %v1277
    %2415 = vmatprep.subr.bf16.mxu0 %v1286
    %2416 = vmatpush1.bf16.msra.mxu0 %v1285
    %2417 = vmatprep.subr.bf16.mxu0 %v1294
    %2418 = vmatpush1.bf16.msra.mxu0 %v1293
    %2419 = vmatprep.subr.bf16.mxu0 %v1302
    %2420 = vmatpush1.bf16.msra.mxu0 %v1301
    %2421 = vmatprep.subr.bf16.mxu0 %v1310
    %2422 = vmatpush1.bf16.msra.mxu0 %v1309
    %2423 = vmatprep.subr.bf16.mxu0 %v1318
    %2424 = vmatpush1.bf16.msra.mxu0 %v1317
    %2425 = vmatprep.subr.bf16.mxu0 %v1326
    %2426 = vmatpush1.bf16.msra.mxu0 %v1325
    %2427 = vmatprep.subr.bf16.mxu0 %v1334
    %2428 = vmatpush1.bf16.msra.mxu0 %v1333
    %2429 = vmatprep.subr.bf16.mxu0 %v1342
    %2430 = vmatpush1.bf16.msra.mxu0 %v1341
    %2431 = vmatprep.subr.bf16.mxu0 %v1350
    %2432 = vmatpush1.bf16.msra.mxu0 %v1349
    %2433 = vmatprep.mubr.bf16.mxu0 %v1089
    %2434 = vmatmul.mubr.bf16.gmra.mrb[0].mxu0 %v1088
    %v2435 = vpop.f32.mrb[0].mxu0
    %v2436 = vadd.f32 %v2393, %v2435
    %v2437 = vpop.f32.mrb[0].mxu0
    %v2438 = vadd.f32 %v2395, %v2437
    %v2439 = vpop.f32.mrb[0].mxu0
    %v2440 = vadd.f32 %v2397, %v2439
    %v2441 = vpop.f32.mrb[0].mxu0
    %v2442 = vadd.f32 %v2399, %v2441
    %2443 = vdwg.mxu0
    %2444 = vmatprep.subr.bf16.mxu0 %v1358
    %2445 = vmatpush1.bf16.msra.mxu0 %v1357
    %2446 = vmatprep.subr.bf16.mxu0 %v1366
    %2447 = vmatpush1.bf16.msra.mxu0 %v1365
    %2448 = vmatprep.subr.bf16.mxu0 %v1374
    %2449 = vmatpush1.bf16.msra.mxu0 %v1373
    %2450 = vmatprep.subr.bf16.mxu0 %v1382
    %2451 = vmatpush1.bf16.msra.mxu0 %v1381
    %2452 = vmatprep.subr.bf16.mxu0 %v1390
    %2453 = vmatpush1.bf16.msra.mxu0 %v1389
    %2454 = vmatprep.subr.bf16.mxu0 %v1398
    %2455 = vmatpush1.bf16.msra.mxu0 %v1397
    %2456 = vmatprep.subr.bf16.mxu0 %v1406
    %2457 = vmatpush1.bf16.msra.mxu0 %v1405
    %2458 = vmatprep.subr.bf16.mxu0 %v1414
    %2459 = vmatpush1.bf16.msra.mxu0 %v1413
    %2460 = vmatprep.subr.bf16.mxu0 %v1422
    %2461 = vmatpush1.bf16.msra.mxu0 %v1421
    %2462 = vmatprep.subr.bf16.mxu0 %v1430
    %2463 = vmatpush1.bf16.msra.mxu0 %v1429
    %2464 = vmatprep.subr.bf16.mxu0 %v1438
    %2465 = vmatpush1.bf16.msra.mxu0 %v1437
    %2466 = vmatprep.subr.bf16.mxu0 %v1446
    %2467 = vmatpush1.bf16.msra.mxu0 %v1445
    %2468 = vmatprep.subr.bf16.mxu0 %v1454
    %2469 = vmatpush1.bf16.msra.mxu0 %v1453
    %2470 = vmatprep.subr.bf16.mxu0 %v1462
    %2471 = vmatpush1.bf16.msra.mxu0 %v1461
    %2472 = vmatprep.subr.bf16.mxu0 %v1470
    %2473 = vmatpush1.bf16.msra.mxu0 %v1469
    %2474 = vmatprep.subr.bf16.mxu0 %v1478
    %2475 = vmatpush1.bf16.msra.mxu0 %v1477
    %2476 = vmatprep.mubr.bf16.mxu0 %v1091
    %2477 = vmatmul.mubr.bf16.gmra.mrb[0].mxu0 %v1090
    %v2478 = vpop.f32.mrb[0].mxu0
    %v2479 = vadd.f32 %v2436, %v2478
    %v2480 = vpop.f32.mrb[0].mxu0
    %v2481 = vadd.f32 %v2438, %v2480
    %v2482 = vpop.f32.mrb[0].mxu0
    %v2483 = vadd.f32 %v2440, %v2482
    %v2484 = vpop.f32.mrb[0].mxu0
    %v2485 = vadd.f32 %v2442, %v2484
    %2486 = vdwg.mxu0
    %2487 = vmatprep.subr.bf16.mxu0 %v1486
    %2488 = vmatpush1.bf16.msra.mxu0 %v1485
    %2489 = vmatprep.subr.bf16.mxu0 %v1494
    %2490 = vmatpush1.bf16.msra.mxu0 %v1493
    %2491 = vmatprep.subr.bf16.mxu0 %v1502
    %2492 = vmatpush1.bf16.msra.mxu0 %v1501
    %2493 = vmatprep.subr.bf16.mxu0 %v1510
    %2494 = vmatpush1.bf16.msra.mxu0 %v1509
    %2495 = vmatprep.subr.bf16.mxu0 %v1518
    %2496 = vmatpush1.bf16.msra.mxu0 %v1517
    %2497 = vmatprep.subr.bf16.mxu0 %v1526
    %2498 = vmatpush1.bf16.msra.mxu0 %v1525
    %2499 = vmatprep.subr.bf16.mxu0 %v1534
    %2500 = vmatpush1.bf16.msra.mxu0 %v1533
    %2501 = vmatprep.subr.bf16.mxu0 %v1542
    %2502 = vmatpush1.bf16.msra.mxu0 %v1541
    %2503 = vmatprep.subr.bf16.mxu0 %v1550
    %2504 = vmatpush1.bf16.msra.mxu0 %v1549
    %2505 = vmatprep.subr.bf16.mxu0 %v1558
    %2506 = vmatpush1.bf16.msra.mxu0 %v1557
    %2507 = vmatprep.subr.bf16.mxu0 %v1566
    %2508 = vmatpush1.bf16.msra.mxu0 %v1565
    %2509 = vmatprep.subr.bf16.mxu0 %v1574
    %2510 = vmatpush1.bf16.msra.mxu0 %v1573
    %2511 = vmatprep.subr.bf16.mxu0 %v1582
    %2512 = vmatpush1.bf16.msra.mxu0 %v1581
    %2513 = vmatprep.subr.bf16.mxu0 %v1590
    %2514 = vmatpush1.bf16.msra.mxu0 %v1589
    %2515 = vmatprep.subr.bf16.mxu0 %v1598
    %2516 = vmatpush1.bf16.msra.mxu0 %v1597
    %2517 = vmatprep.subr.bf16.mxu0 %v1606
    %2518 = vmatpush1.bf16.msra.mxu0 %v1605
    %2519 = vmatprep.mubr.bf16.mxu0 %v1093
    %2520 = vmatmul.mubr.bf16.gmra.mrb[0].mxu0 %v1092
    %v2521 = vpop.f32.mrb[0].mxu0
    %v2522 = vadd.f32 %v2479, %v2521
    %v2523 = vpop.f32.mrb[0].mxu0
    %v2524 = vadd.f32 %v2481, %v2523
    %v2525 = vpop.f32.mrb[0].mxu0
    %v2526 = vadd.f32 %v2483, %v2525
    %v2527 = vpop.f32.mrb[0].mxu0
    %v2528 = vadd.f32 %v2485, %v2527
    %2529 = vdwg.mxu0
    %2530 = vmatprep.subr.bf16.mxu0 %v1614
    %2531 = vmatpush1.bf16.msra.mxu0 %v1613
    %2532 = vmatprep.subr.bf16.mxu0 %v1622
    %2533 = vmatpush1.bf16.msra.mxu0 %v1621
    %2534 = vmatprep.subr.bf16.mxu0 %v1630
    %2535 = vmatpush1.bf16.msra.mxu0 %v1629
    %2536 = vmatprep.subr.bf16.mxu0 %v1638
    %2537 = vmatpush1.bf16.msra.mxu0 %v1637
    %2538 = vmatprep.subr.bf16.mxu0 %v1646
    %2539 = vmatpush1.bf16.msra.mxu0 %v1645
    %2540 = vmatprep.subr.bf16.mxu0 %v1654
    %2541 = vmatpush1.bf16.msra.mxu0 %v1653
    %2542 = vmatprep.subr.bf16.mxu0 %v1662
    %2543 = vmatpush1.bf16.msra.mxu0 %v1661
    %2544 = vmatprep.subr.bf16.mxu0 %v1670
    %2545 = vmatpush1.bf16.msra.mxu0 %v1669
    %2546 = vmatprep.subr.bf16.mxu0 0
    %2547 = vmatpush1.bf16.msra.mxu0 0
    %2548 = vmatprep.subr.bf16.mxu0 0
    %2549 = vmatpush1.bf16.msra.mxu0 0
    %2550 = vmatprep.subr.bf16.mxu0 0
    %2551 = vmatpush1.bf16.msra.mxu0 0
    %2552 = vmatprep.subr.bf16.mxu0 0
    %2553 = vmatpush1.bf16.msra.mxu0 0
    %2554 = vmatprep.subr.bf16.mxu0 0
    %2555 = vmatpush1.bf16.msra.mxu0 0
    %2556 = vmatprep.subr.bf16.mxu0 0
    %2557 = vmatpush1.bf16.msra.mxu0 0
    %2558 = vmatprep.subr.bf16.mxu0 0
    %2559 = vmatpush1.bf16.msra.mxu0 0
    %2560 = vmatprep.subr.bf16.mxu0 0
    %2561 = vmatpush1.bf16.msra.mxu0 0
    %2562 = vmatprep.mubr.bf16.mxu0 0
    %2563 = vmatmul.mubr.bf16.gmra.mrb[0].mxu0 %v1094
    %v2564 = vpop.f32.mrb[0].mxu0
    %v2565 = vadd.f32 %v2522, %v2564
    %v2566 = vpop.f32.mrb[0].mxu0
    %v2567 = vadd.f32 %v2524, %v2566
    %v2568 = vpop.f32.mrb[0].mxu0
    %v2569 = vadd.f32 %v2526, %v2568
    %v2570 = vpop.f32.mrb[0].mxu0
    %v2571 = vadd.f32 %v2528, %v2570
    %2572 = vdwg.mxu0
    %v2573 = vld [vmem:[#allocation18] sm:$0xff]
    %v2574 = vld [vmem:[#allocation18 + $0x8] sm:$0xff]
    %v2575 = vld [vmem:[#allocation18 + $0x10] sm:$0xff]
    %v2576 = vld [vmem:[#allocation18 + $0x18] sm:$0xff]
    %v2577 = vld [vmem:[#allocation18 + $0x20] sm:$0xff]
    %v2578 = vld [vmem:[#allocation18 + $0x28] sm:$0xff]
    %v2579 = vld [vmem:[#allocation18 + $0x30] sm:$0xff]
    %v2580 = vld [vmem:[#allocation18 + $0x38] sm:$0xff]
    %v2581 = vld [vmem:[#allocation18 + $0x40] sm:$0xff]
    %v2582 = vld [vmem:[#allocation18 + $0x48] sm:$0xff]
    %v2583 = vld [vmem:[#allocation18 + $0x50] sm:$0xff]
    %v2584 = vld [vmem:[#allocation18 + $0x58] sm:$0xff]
    %v2585 = vld [vmem:[#allocation18 + $0x60] sm:$0xff]
    %v2586 = vld [vmem:[#allocation18 + $0x68] sm:$0xff]
    %v2587 = vld [vmem:[#allocation18 + $0x70] sm:$0xff]
    %v2588 = vld [vmem:[#allocation18 + $0x78] sm:$0xff]
    %v2589 = vpack.c.bf16 %v2139, %v2135
    %v2590 = vpack.c.bf16 %v2141, %v2137
    %v2607 = vunpack.c.l.b16 %v2573
    %v2608 = vunpack.c.h.b16 %v2573
    %v2609 = vunpack.c.l.b16 %v2574
    %v2610 = vunpack.c.h.b16 %v2574
    %v2611 = vunpack.c.l.b16 %v2575
    %v2612 = vunpack.c.h.b16 %v2575
    %v2613 = vunpack.c.l.b16 %v2576
    %v2614 = vunpack.c.h.b16 %v2576
    %v2615 = vunpack.c.l.b16 %v2577
    %v2616 = vunpack.c.h.b16 %v2577
    %v2617 = vunpack.c.l.b16 %v2578
    %v2618 = vunpack.c.h.b16 %v2578
    %v2619 = vunpack.c.l.b16 %v2579
    %v2620 = vunpack.c.h.b16 %v2579
    %v2621 = vunpack.c.l.b16 %v2580
    %v2622 = vunpack.c.h.b16 %v2580
    %v2623 = vunpack.c.l.b16 %v2581
    %v2624 = vunpack.c.h.b16 %v2581
    %v2625 = vunpack.c.l.b16 %v2582
    %v2626 = vunpack.c.h.b16 %v2582
    %v2627 = vunpack.c.l.b16 %v2583
    %v2628 = vunpack.c.h.b16 %v2583
    %v2629 = vunpack.c.l.b16 %v2584
    %v2630 = vunpack.c.h.b16 %v2584
    %v2631 = vunpack.c.l.b16 %v2585
    %v2632 = vunpack.c.h.b16 %v2585
    %v2633 = vunpack.c.l.b16 %v2586
    %v2634 = vunpack.c.h.b16 %v2586
    %v2635 = vunpack.c.l.b16 %v2587
    %v2636 = vunpack.c.h.b16 %v2587
    %v2637 = vunpack.c.l.b16 %v2588
    %v2638 = vunpack.c.h.b16 %v2588
    %v2639 = vpack.c.b16 %v2609, %v2607
    %v2640 = vpack.c.b16 %v2610, %v2608
    %v2641 = vpack.c.b16 %v2613, %v2611
    %v2642 = vpack.c.b16 %v2614, %v2612
    %v2643 = vpack.c.b16 %v2617, %v2615
    %v2644 = vpack.c.b16 %v2618, %v2616
    %v2645 = vpack.c.b16 %v2621, %v2619
    %v2646 = vpack.c.b16 %v2622, %v2620
    %v2647 = vpack.c.b16 %v2625, %v2623
    %v2648 = vpack.c.b16 %v2626, %v2624
    %v2649 = vpack.c.b16 %v2629, %v2627
    %v2650 = vpack.c.b16 %v2630, %v2628
    %v2651 = vpack.c.b16 %v2633, %v2631
    %v2652 = vpack.c.b16 %v2634, %v2632
    %v2653 = vpack.c.b16 %v2637, %v2635
    %v2654 = vpack.c.b16 %v2638, %v2636
    %v2671 = vmul.bf16 %v2589, %v2639
    %v2672 = vmul.bf16 %v2590, %v2640
    %v2673 = vmul.bf16 %v2589, %v2641
    %v2674 = vmul.bf16 %v2590, %v2642
    %v2675 = vmul.bf16 %v2589, %v2643
    %v2676 = vmul.bf16 %v2590, %v2644
    %v2677 = vmul.bf16 %v2589, %v2645
    %v2678 = vmul.bf16 %v2590, %v2646
    %v2679 = vmul.bf16 %v2589, %v2647
    %v2680 = vmul.bf16 %v2590, %v2648
    %v2681 = vmul.bf16 %v2589, %v2649
    %v2682 = vmul.bf16 %v2590, %v2650
    %v2683 = vmul.bf16 %v2589, %v2651
    %v2684 = vmul.bf16 %v2590, %v2652
    %v2685 = vmul.bf16 %v2589, %v2653
    %v2686 = vmul.bf16 %v2590, %v2654
    %v2687 = vpack.c.bf16 %v2354, %v2350
    %v2688 = vpack.c.bf16 %v2356, %v2352
    %v2689 = vmul.bf16 %v2687, %v2639
    %v2690 = vmul.bf16 %v2688, %v2640
    %v2691 = vmul.bf16 %v2687, %v2641
    %v2692 = vmul.bf16 %v2688, %v2642
    %v2693 = vmul.bf16 %v2687, %v2643
    %v2694 = vmul.bf16 %v2688, %v2644
    %v2695 = vmul.bf16 %v2687, %v2645
    %v2696 = vmul.bf16 %v2688, %v2646
    %v2697 = vmul.bf16 %v2687, %v2647
    %v2698 = vmul.bf16 %v2688, %v2648
    %v2699 = vmul.bf16 %v2687, %v2649
    %v2700 = vmul.bf16 %v2688, %v2650
    %v2701 = vmul.bf16 %v2687, %v2651
    %v2702 = vmul.bf16 %v2688, %v2652
    %v2703 = vmul.bf16 %v2687, %v2653
    %v2704 = vmul.bf16 %v2688, %v2654
    %v2705 = vpack.c.bf16 %v1924, %v1920
    %v2706 = vpack.c.bf16 %v1926, %v1922
    %2707 = vmatprep.subr.bf16.mxu0 %v2672
    %2708 = vmatpush1.bf16.xpose.msra.mxu0 %v2671
    %2709 = vmatprep.subr.bf16.mxu0 %v2674
    %2710 = vmatpush1.bf16.xpose.msra.mxu0 %v2673
    %2711 = vmatprep.subr.bf16.mxu0 %v2676
    %2712 = vmatpush1.bf16.xpose.msra.mxu0 %v2675
    %2713 = vmatprep.subr.bf16.mxu0 %v2678
    %2714 = vmatpush1.bf16.xpose.msra.mxu0 %v2677
    %2715 = vmatprep.subr.bf16.mxu0 %v2680
    %2716 = vmatpush1.bf16.xpose.msra.mxu0 %v2679
    %2717 = vmatprep.subr.bf16.mxu0 %v2682
    %2718 = vmatpush1.bf16.xpose.msra.mxu0 %v2681
    %2719 = vmatprep.subr.bf16.mxu0 %v2684
    %2720 = vmatpush1.bf16.xpose.msra.mxu0 %v2683
    %2721 = vmatprep.subr.bf16.mxu0 %v2686
    %2722 = vmatpush1.bf16.xpose.msra.mxu0 %v2685
    %2723 = vmatprep.subr.bf16.mxu0 0
    %2724 = vmatpush1.bf16.xpose.msra.mxu0 0
    %2725 = vmatprep.subr.bf16.mxu0 0
    %2726 = vmatpush1.bf16.xpose.msra.mxu0 0
    %2727 = vmatprep.subr.bf16.mxu0 0
    %2728 = vmatpush1.bf16.xpose.msra.mxu0 0
    %2729 = vmatprep.subr.bf16.mxu0 0
    %2730 = vmatpush1.bf16.xpose.msra.mxu0 0
    %2731 = vmatprep.subr.bf16.mxu0 0
    %2732 = vmatpush1.bf16.xpose.msra.mxu0 0
    %2733 = vmatprep.subr.bf16.mxu0 0
    %2734 = vmatpush1.bf16.xpose.msra.mxu0 0
    %2735 = vmatprep.subr.bf16.mxu0 0
    %2736 = vmatpush1.bf16.xpose.msra.mxu0 0
    %2737 = vmatprep.subr.bf16.mxu0 0
    %2738 = vmatpush1.bf16.xpose.msra.mxu0 0
    %2739 = vmatprep.mubr.bf16.mxu0 %v2706
    %2740 = vmatmul.mubr.bf16.gmra.mrb[0].mxu0 %v2705
    %v2741 = vpop.f32.mrb[0].mxu0
    %v2742 = vadd.f32 %v409, %v2741
    %v2743 = vpop.f32.mrb[0].mxu0
    %v2744 = vpop.f32.mrb[0].mxu0
    %v2745 = vadd.f32 %v410, %v2744
    %v2746 = vpop.f32.mrb[0].mxu0
    %2747 = vdwg.mxu0
    %2748 = vmax.xlane.f32.xlu0 %v2742
    %v2749 = vpop.xlane.xlu0 %2748
    %2750 = vmax.xlane.f32.xlu0 %v2745
    %v2751 = vpop.xlane.xlu0 %2750
    %v2752 = vsub.f32 %v2742, %v2749
    %v2753 = vsub.f32 %v2745, %v2751
    %v2754 = vmul.f32 %v2752, 1.442695
    %v2755 = vpow.pop %v2754
    %v2756 = vmul.f32 %v2753, 1.442695
    %v2757 = vpow.pop %v2756
    %v2758 = vmul.f32 %v2755, %v411
    %v2759 = vmul.f32 %v2757, %v412
    %2760 = vmatprep.subr.mxu0 0.0
    %2761 = vmatpush1.msra.mxu0 %v413
    %2762 = vmatprep.subr.mxu0 0.0
    %2763 = vmatpush1.msra.mxu0 %v414
    %2764 = vmatprep.subr.mxu0 0.0
    %2765 = vmatpush1.msra.mxu0 %v415
    %2766 = vmatprep.subr.mxu0 0.0
    %2767 = vmatpush1.msra.mxu0 %v416
    %2768 = vmatprep.subr.mxu0 0.0
    %2769 = vmatpush1.msra.mxu0 %v417
    %2770 = vmatprep.subr.mxu0 0.0
    %2771 = vmatpush1.msra.mxu0 %v418
    %2772 = vmatprep.subr.mxu0 0.0
    %2773 = vmatpush1.msra.mxu0 %v419
    %2774 = vmatprep.subr.mxu0 0.0
    %2775 = vmatpush1.msra.mxu0 %v420
    %2776 = vmatprep.subr.mxu0 0.0
    %2777 = vmatpush1.msra.mxu0 %v421
    %2778 = vmatprep.subr.mxu0 0.0
    %2779 = vmatpush1.msra.mxu0 %v422
    %2780 = vmatprep.subr.mxu0 0.0
    %2781 = vmatpush1.msra.mxu0 %v423
    %2782 = vmatprep.subr.mxu0 0.0
    %2783 = vmatpush1.msra.mxu0 %v424
    %2784 = vmatprep.subr.mxu0 0.0
    %2785 = vmatpush1.msra.mxu0 %v425
    %2786 = vmatprep.subr.mxu0 0.0
    %2787 = vmatpush1.msra.mxu0 %v426
    %2788 = vmatprep.subr.mxu0 0.0
    %2789 = vmatpush1.msra.mxu0 %v427
    %2790 = vmatprep.subr.mxu0 0.0
    %2791 = vmatpush1.msra.mxu0 %v428
    %2792 = vmatprep.subr.mxu0 0.0
    %2793 = vmatpush1.msra.mxu0 0.0
    %2794 = vmatprep.subr.mxu0 0.0
    %2795 = vmatpush1.msra.mxu0 0.0
    %2796 = vmatprep.subr.mxu0 0.0
    %2797 = vmatpush1.msra.mxu0 0.0
    %2798 = vmatprep.subr.mxu0 0.0
    %2799 = vmatpush1.msra.mxu0 0.0
    %2800 = vmatprep.subr.mxu0 0.0
    %2801 = vmatpush1.msra.mxu0 0.0
    %2802 = vmatprep.subr.mxu0 0.0
    %2803 = vmatpush1.msra.mxu0 0.0
    %2804 = vmatprep.subr.mxu0 0.0
    %2805 = vmatpush1.msra.mxu0 0.0
    %2806 = vmatprep.subr.mxu0 0.0
    %2807 = vmatpush1.msra.mxu0 0.0
    %2808 = vmatprep.subr.mxu0 0.0
    %2809 = vmatpush1.msra.mxu0 0.0
    %2810 = vmatprep.subr.mxu0 0.0
    %2811 = vmatpush1.msra.mxu0 0.0
    %2812 = vmatprep.subr.mxu0 0.0
    %2813 = vmatpush1.msra.mxu0 0.0
    %2814 = vmatprep.subr.mxu0 0.0
    %2815 = vmatpush1.msra.mxu0 0.0
    %2816 = vmatprep.subr.mxu0 0.0
    %2817 = vmatpush1.msra.mxu0 0.0
    %2818 = vmatprep.subr.mxu0 0.0
    %2819 = vmatpush1.msra.mxu0 0.0
    %2820 = vmatprep.subr.mxu0 0.0
    %2821 = vmatpush1.msra.mxu0 0.0
    %2822 = vmatprep.subr.mxu0 0.0
    %2823 = vmatpush1.msra.mxu0 0.0
    %2824 = vmatprep.mubr.f32.mxu0 0.0
    %2825 = vmatmul.mubr.f32.gmra.mrb[0].mxu0 %v2758
    %v2826 = vpop.f32.mrb[0].mxu0
    %v2827 = vadd.f32 0.0, %v2826
    %v2828 = vpop.f32.mrb[0].mxu0
    %2829 = vmatprep.mubr.f32.mxu0 0.0
    %2830 = vmatmul.mubr.f32.gmra.mrb[0].mxu0 %v2759
    %v2831 = vpop.f32.mrb[0].mxu0
    %v2832 = vadd.f32 0.0, %v2831
    %v2833 = vpop.f32.mrb[0].mxu0
    %2834 = vdwg.mxu0
    %v2835 = vmax.f32 %v2827, 1e-30
    %v2836 = vmax.f32 %v2832, 1e-30
    %v2837 = vrcp.pop %v2835
    %v2838 = vrcp.pop %v2836
    %v2839 = vmul.f32 %v2758, %v2837
    %v2840 = vmul.f32 %v2759, %v2838
    %v2841 = vpack.c.bf16 %v2840, %v2839
    %2842 = vmatprep.subr.bf16.mxu0 %v2690
    %2843 = vmatpush1.bf16.msra.mxu0 %v2689
    %2844 = vmatprep.subr.bf16.mxu0 %v2692
    %2845 = vmatpush1.bf16.msra.mxu0 %v2691
    %2846 = vmatprep.subr.bf16.mxu0 %v2694
    %2847 = vmatpush1.bf16.msra.mxu0 %v2693
    %2848 = vmatprep.subr.bf16.mxu0 %v2696
    %2849 = vmatpush1.bf16.msra.mxu0 %v2695
    %2850 = vmatprep.subr.bf16.mxu0 %v2698
    %2851 = vmatpush1.bf16.msra.mxu0 %v2697
    %2852 = vmatprep.subr.bf16.mxu0 %v2700
    %2853 = vmatpush1.bf16.msra.mxu0 %v2699
    %2854 = vmatprep.subr.bf16.mxu0 %v2702
    %2855 = vmatpush1.bf16.msra.mxu0 %v2701
    %2856 = vmatprep.subr.bf16.mxu0 %v2704
    %2857 = vmatpush1.bf16.msra.mxu0 %v2703
    %2858 = vmatprep.subr.bf16.mxu0 0
    %2859 = vmatpush1.bf16.msra.mxu0 0
    %2860 = vmatprep.subr.bf16.mxu0 0
    %2861 = vmatpush1.bf16.msra.mxu0 0
    %2862 = vmatprep.subr.bf16.mxu0 0
    %2863 = vmatpush1.bf16.msra.mxu0 0
    %2864 = vmatprep.subr.bf16.mxu0 0
    %2865 = vmatpush1.bf16.msra.mxu0 0
    %2866 = vmatprep.subr.bf16.mxu0 0
    %2867 = vmatpush1.bf16.msra.mxu0 0
    %2868 = vmatprep.subr.bf16.mxu0 0
    %2869 = vmatpush1.bf16.msra.mxu0 0
    %2870 = vmatprep.subr.bf16.mxu0 0
    %2871 = vmatpush1.bf16.msra.mxu0 0
    %2872 = vmatprep.subr.bf16.mxu0 0
    %2873 = vmatpush1.bf16.msra.mxu0 0
    %2874 = vmatprep.mubr.bf16.mxu0 0
    %2875 = vmatmul.mubr.bf16.gmra.mrb[0].mxu0 %v2841
    %v2876 = vpop.f32.mrb[0].mxu0
    %v2877 = vadd.f32 %v2565, %v2876
    %v2878 = vpop.f32.mrb[0].mxu0
    %v2879 = vadd.f32 %v2567, %v2878
    %v2880 = vpop.f32.mrb[0].mxu0
    %v2881 = vadd.f32 %v2569, %v2880
    %v2882 = vpop.f32.mrb[0].mxu0
    %v2883 = vadd.f32 %v2571, %v2882
    %2884 = vdwg.mxu0
    %v2885 = vmul.f32 %v2877, 0.5
    %v2886 = vmul.f32 %v2879, 0.5
    %v2887 = vmul.f32 %v2881, 0.5
    %v2888 = vmul.f32 %v2883, 0.5
    %v2889 = vmul.f32 %v2877, 0.044715
    %v2890 = vmul.f32 %v2879, 0.044715
    %v2891 = vmul.f32 %v2881, 0.044715
    %v2892 = vmul.f32 %v2883, 0.044715
    %v2893 = vmul.f32 %v2889, %v2877
    %v2894 = vmul.f32 %v2890, %v2879
    %v2895 = vmul.f32 %v2891, %v2881
    %v2896 = vmul.f32 %v2892, %v2883
    %v2897 = vmul.f32 %v2893, %v2877
    %v2898 = vmul.f32 %v2894, %v2879
    %v2899 = vmul.f32 %v2895, %v2881
    %v2900 = vmul.f32 %v2896, %v2883
    %v2901 = vadd.f32 %v2877, %v2897
    %v2902 = vadd.f32 %v2879, %v2898
    %v2903 = vadd.f32 %v2881, %v2899
    %v2904 = vadd.f32 %v2883, %v2900
    %v2905 = vmul.f32 %v2901, 0.7978846
    %v2906 = vmul.f32 %v2902, 0.7978846
    %v2907 = vmul.f32 %v2903, 0.7978846
    %v2908 = vmul.f32 %v2904, 0.7978846
    %v2909 = vtanh.pop %v2905
    %v2910 = vtanh.pop %v2906
    %v2911 = vtanh.pop %v2907
    %v2912 = vtanh.pop %v2908
    %v2913 = vadd.f32 %v2909, 1.0
    %v2914 = vadd.f32 %v2910, 1.0
    %v2915 = vadd.f32 %v2911, 1.0
    %v2916 = vadd.f32 %v2912, 1.0
    %v2917 = vmul.f32 %v2885, %v2913
    %v2918 = vmul.f32 %v2886, %v2914
    %v2919 = vmul.f32 %v2887, %v2915
    %v2920 = vmul.f32 %v2888, %v2916
    %s2921 = smul.u32 4, 32
    %s2922 = smul.u32 %s2921, 8
    %s2923 = sshll.u32 %s2922, 4
    %2924 = dma.done %s297, %s2923
    %v2925 = vpack.c.bf16 %v2919, %v2917
    %v2926 = vpack.c.bf16 %v2920, %v2918
    %v2927 = vld [vmem:[#allocation5] sm:$0xff]
    %v2928 = vld [vmem:[#allocation5 + $0x8] sm:$0xff]
    %v2929 = vld [vmem:[#allocation5 + $0x10] sm:$0xff]
    %v2930 = vld [vmem:[#allocation5 + $0x18] sm:$0xff]
    %v2931 = vld [vmem:[#allocation5 + $0x20] sm:$0xff]
    %v2932 = vld [vmem:[#allocation5 + $0x28] sm:$0xff]
    %v2933 = vld [vmem:[#allocation5 + $0x30] sm:$0xff]
    %v2934 = vld [vmem:[#allocation5 + $0x38] sm:$0xff]
    %v2935 = vld [vmem:[#allocation5 + $0x40] sm:$0xff]
    %v2936 = vld [vmem:[#allocation5 + $0x48] sm:$0xff]
    %v2937 = vld [vmem:[#allocation5 + $0x50] sm:$0xff]
    %v2938 = vld [vmem:[#allocation5 + $0x58] sm:$0xff]
    %v2939 = vld [vmem:[#allocation5 + $0x60] sm:$0xff]
    %v2940 = vld [vmem:[#allocation5 + $0x68] sm:$0xff]
    %v2941 = vld [vmem:[#allocation5 + $0x70] sm:$0xff]
    %v2942 = vld [vmem:[#allocation5 + $0x78] sm:$0xff]
    %v2943 = vld [vmem:[#allocation5 + $0x80] sm:$0xff]
    %v2944 = vld [vmem:[#allocation5 + $0x88] sm:$0xff]
    %v2945 = vld [vmem:[#allocation5 + $0x90] sm:$0xff]
    %v2946 = vld [vmem:[#allocation5 + $0x98] sm:$0xff]
    %v2947 = vld [vmem:[#allocation5 + $0xa0] sm:$0xff]
    %v2948 = vld [vmem:[#allocation5 + $0xa8] sm:$0xff]
    %v2949 = vld [vmem:[#allocation5 + $0xb0] sm:$0xff]
    %v2950 = vld [vmem:[#allocation5 + $0xb8] sm:$0xff]
    %v2951 = vld [vmem:[#allocation5 + $0xc0] sm:$0xff]
    %v2952 = vld [vmem:[#allocation5 + $0xc8] sm:$0xff]
    %v2953 = vld [vmem:[#allocation5 + $0xd0] sm:$0xff]
    %v2954 = vld [vmem:[#allocation5 + $0xd8] sm:$0xff]
    %v2955 = vld [vmem:[#allocation5 + $0xe0] sm:$0xff]
    %v2956 = vld [vmem:[#allocation5 + $0xe8] sm:$0xff]
    %v2957 = vld [vmem:[#allocation5 + $0xf0] sm:$0xff]
    %v2958 = vld [vmem:[#allocation5 + $0xf8] sm:$0xff]
    %v2959 = vld [vmem:[#allocation5 + $0x100] sm:$0xff]
    %v2960 = vld [vmem:[#allocation5 + $0x108] sm:$0xff]
    %v2961 = vld [vmem:[#allocation5 + $0x110] sm:$0xff]
    %v2962 = vld [vmem:[#allocation5 + $0x118] sm:$0xff]
    %v2963 = vld [vmem:[#allocation5 + $0x120] sm:$0xff]
    %v2964 = vld [vmem:[#allocation5 + $0x128] sm:$0xff]
    %v2965 = vld [vmem:[#allocation5 + $0x130] sm:$0xff]
    %v2966 = vld [vmem:[#allocation5 + $0x138] sm:$0xff]
    %v2967 = vld [vmem:[#allocation5 + $0x140] sm:$0xff]
    %v2968 = vld [vmem:[#allocation5 + $0x148] sm:$0xff]
    %v2969 = vld [vmem:[#allocation5 + $0x150] sm:$0xff]
    %v2970 = vld [vmem:[#allocation5 + $0x158] sm:$0xff]
    %v2971 = vld [vmem:[#allocation5 + $0x160] sm:$0xff]
    %v2972 = vld [vmem:[#allocation5 + $0x168] sm:$0xff]
    %v2973 = vld [vmem:[#allocation5 + $0x170] sm:$0xff]
    %v2974 = vld [vmem:[#allocation5 + $0x178] sm:$0xff]
    %v2975 = vld [vmem:[#allocation5 + $0x180] sm:$0xff]
    %v2976 = vld [vmem:[#allocation5 + $0x188] sm:$0xff]
    %v2977 = vld [vmem:[#allocation5 + $0x190] sm:$0xff]
    %v2978 = vld [vmem:[#allocation5 + $0x198] sm:$0xff]
    %v2979 = vld [vmem:[#allocation5 + $0x1a0] sm:$0xff]
    %v2980 = vld [vmem:[#allocation5 + $0x1a8] sm:$0xff]
    %v2981 = vld [vmem:[#allocation5 + $0x1b0] sm:$0xff]
    %v2982 = vld [vmem:[#allocation5 + $0x1b8] sm:$0xff]
    %v2983 = vld [vmem:[#allocation5 + $0x1c0] sm:$0xff]
    %v2984 = vld [vmem:[#allocation5 + $0x1c8] sm:$0xff]
    %v2985 = vld [vmem:[#allocation5 + $0x1d0] sm:$0xff]
    %v2986 = vld [vmem:[#allocation5 + $0x1d8] sm:$0xff]
    %v2987 = vld [vmem:[#allocation5 + $0x1e0] sm:$0xff]
    %v2988 = vld [vmem:[#allocation5 + $0x1e8] sm:$0xff]
    %v2989 = vld [vmem:[#allocation5 + $0x1f0] sm:$0xff]
    %v2990 = vld [vmem:[#allocation5 + $0x1f8] sm:$0xff]
    %v2991 = vld [vmem:[#allocation5 + $0x200] sm:$0xff]
    %v2992 = vld [vmem:[#allocation5 + $0x208] sm:$0xff]
    %v2993 = vld [vmem:[#allocation5 + $0x210] sm:$0xff]
    %v2994 = vld [vmem:[#allocation5 + $0x218] sm:$0xff]
    %v2995 = vld [vmem:[#allocation5 + $0x220] sm:$0xff]
    %v2996 = vld [vmem:[#allocation5 + $0x228] sm:$0xff]
    %v2997 = vld [vmem:[#allocation5 + $0x230] sm:$0xff]
    %v2998 = vld [vmem:[#allocation5 + $0x238] sm:$0xff]
    %v2999 = vld [vmem:[#allocation5 + $0x240] sm:$0xff]
    %v3000 = vld [vmem:[#allocation5 + $0x248] sm:$0xff]
    %v3001 = vld [vmem:[#allocation5 + $0x250] sm:$0xff]
    %v3002 = vld [vmem:[#allocation5 + $0x258] sm:$0xff]
    %v3003 = vld [vmem:[#allocation5 + $0x260] sm:$0xff]
    %v3004 = vld [vmem:[#allocation5 + $0x268] sm:$0xff]
    %v3005 = vld [vmem:[#allocation5 + $0x270] sm:$0xff]
    %v3006 = vld [vmem:[#allocation5 + $0x278] sm:$0xff]
    %v3007 = vld [vmem:[#allocation5 + $0x280] sm:$0xff]
    %v3008 = vld [vmem:[#allocation5 + $0x288] sm:$0xff]
    %v3009 = vld [vmem:[#allocation5 + $0x290] sm:$0xff]
    %v3010 = vld [vmem:[#allocation5 + $0x298] sm:$0xff]
    %v3011 = vld [vmem:[#allocation5 + $0x2a0] sm:$0xff]
    %v3012 = vld [vmem:[#allocation5 + $0x2a8] sm:$0xff]
    %v3013 = vld [vmem:[#allocation5 + $0x2b0] sm:$0xff]
    %v3014 = vld [vmem:[#allocation5 + $0x2b8] sm:$0xff]
    %v3015 = vld [vmem:[#allocation5 + $0x2c0] sm:$0xff]
    %v3016 = vld [vmem:[#allocation5 + $0x2c8] sm:$0xff]
    %v3017 = vld [vmem:[#allocation5 + $0x2d0] sm:$0xff]
    %v3018 = vld [vmem:[#allocation5 + $0x2d8] sm:$0xff]
    %v3019 = vld [vmem:[#allocation5 + $0x2e0] sm:$0xff]
    %v3020 = vld [vmem:[#allocation5 + $0x2e8] sm:$0xff]
    %v3021 = vld [vmem:[#allocation5 + $0x2f0] sm:$0xff]
    %v3022 = vld [vmem:[#allocation5 + $0x2f8] sm:$0xff]
    %v3023 = vld [vmem:[#allocation5 + $0x300] sm:$0xff]
    %v3024 = vld [vmem:[#allocation5 + $0x308] sm:$0xff]
    %v3025 = vld [vmem:[#allocation5 + $0x310] sm:$0xff]
    %v3026 = vld [vmem:[#allocation5 + $0x318] sm:$0xff]
    %v3027 = vld [vmem:[#allocation5 + $0x320] sm:$0xff]
    %v3028 = vld [vmem:[#allocation5 + $0x328] sm:$0xff]
    %v3029 = vld [vmem:[#allocation5 + $0x330] sm:$0xff]
    %v3030 = vld [vmem:[#allocation5 + $0x338] sm:$0xff]
    %v3031 = vld [vmem:[#allocation5 + $0x340] sm:$0xff]
    %v3032 = vld [vmem:[#allocation5 + $0x348] sm:$0xff]
    %v3033 = vld [vmem:[#allocation5 + $0x350] sm:$0xff]
    %v3034 = vld [vmem:[#allocation5 + $0x358] sm:$0xff]
    %v3035 = vld [vmem:[#allocation5 + $0x360] sm:$0xff]
    %v3036 = vld [vmem:[#allocation5 + $0x368] sm:$0xff]
    %v3037 = vld [vmem:[#allocation5 + $0x370] sm:$0xff]
    %v3038 = vld [vmem:[#allocation5 + $0x378] sm:$0xff]
    %v3039 = vld [vmem:[#allocation5 + $0x380] sm:$0xff]
    %v3040 = vld [vmem:[#allocation5 + $0x388] sm:$0xff]
    %v3041 = vld [vmem:[#allocation5 + $0x390] sm:$0xff]
    %v3042 = vld [vmem:[#allocation5 + $0x398] sm:$0xff]
    %v3043 = vld [vmem:[#allocation5 + $0x3a0] sm:$0xff]
    %v3044 = vld [vmem:[#allocation5 + $0x3a8] sm:$0xff]
    %v3045 = vld [vmem:[#allocation5 + $0x3b0] sm:$0xff]
    %v3046 = vld [vmem:[#allocation5 + $0x3b8] sm:$0xff]
    %v3047 = vld [vmem:[#allocation5 + $0x3c0] sm:$0xff]
    %v3048 = vld [vmem:[#allocation5 + $0x3c8] sm:$0xff]
    %v3049 = vld [vmem:[#allocation5 + $0x3d0] sm:$0xff]
    %v3050 = vld [vmem:[#allocation5 + $0x3d8] sm:$0xff]
    %v3051 = vld [vmem:[#allocation5 + $0x3e0] sm:$0xff]
    %v3052 = vld [vmem:[#allocation5 + $0x3e8] sm:$0xff]
    %v3053 = vld [vmem:[#allocation5 + $0x3f0] sm:$0xff]
    %v3054 = vld [vmem:[#allocation5 + $0x3f8] sm:$0xff]
    %v3055 = vld [vmem:[#allocation25] sm:$0xff]
    %v3057 = vlaneseq
    %v3058 = vshrl.u32 %v3057, 7
    %v3059 = vsub.s32 0, %v3058
    %v3060 = vrot.slane %v3055, %v3059
    %v3061 = vlaneseq
    %v3062 = vshrl.u32 %v3061, 7
    %v3063 = vsub.s32 1, %v3062
    %v3064 = vrot.slane %v3055, %v3063
    %v3065 = vlaneseq
    %v3066 = vshrl.u32 %v3065, 7
    %v3067 = vsub.s32 2, %v3066
    %v3068 = vrot.slane %v3055, %v3067
    %v3069 = vlaneseq
    %v3070 = vshrl.u32 %v3069, 7
    %v3071 = vsub.s32 3, %v3070
    %v3072 = vrot.slane %v3055, %v3071
    %v3073 = vlaneseq
    %v3074 = vshrl.u32 %v3073, 7
    %v3075 = vsub.s32 4, %v3074
    %v3076 = vrot.slane %v3055, %v3075
    %v3077 = vlaneseq
    %v3078 = vshrl.u32 %v3077, 7
    %v3079 = vsub.s32 5, %v3078
    %v3080 = vrot.slane %v3055, %v3079
    %v3081 = vlaneseq
    %v3082 = vshrl.u32 %v3081, 7
    %v3083 = vsub.s32 6, %v3082
    %v3084 = vrot.slane %v3055, %v3083
    %v3085 = vlaneseq
    %v3086 = vshrl.u32 %v3085, 7
    %v3087 = vsub.s32 7, %v3086
    %v3088 = vrot.slane %v3055, %v3087
    %3097 = vmatprep.subr.bf16.mxu0 %v2928
    %3098 = vmatpush1.bf16.msra.mxu0 %v2927
    %3099 = vmatprep.subr.bf16.mxu0 %v2936
    %3100 = vmatpush1.bf16.msra.mxu0 %v2935
    %3101 = vmatprep.subr.bf16.mxu0 %v2944
    %3102 = vmatpush1.bf16.msra.mxu0 %v2943
    %3103 = vmatprep.subr.bf16.mxu0 %v2952
    %3104 = vmatpush1.bf16.msra.mxu0 %v2951
    %3105 = vmatprep.subr.bf16.mxu0 %v2960
    %3106 = vmatpush1.bf16.msra.mxu0 %v2959
    %3107 = vmatprep.subr.bf16.mxu0 %v2968
    %3108 = vmatpush1.bf16.msra.mxu0 %v2967
    %3109 = vmatprep.subr.bf16.mxu0 %v2976
    %3110 = vmatpush1.bf16.msra.mxu0 %v2975
    %3111 = vmatprep.subr.bf16.mxu0 %v2984
    %3112 = vmatpush1.bf16.msra.mxu0 %v2983
    %3113 = vmatprep.subr.bf16.mxu0 %v2992
    %3114 = vmatpush1.bf16.msra.mxu0 %v2991
    %3115 = vmatprep.subr.bf16.mxu0 %v3000
    %3116 = vmatpush1.bf16.msra.mxu0 %v2999
    %3117 = vmatprep.subr.bf16.mxu0 %v3008
    %3118 = vmatpush1.bf16.msra.mxu0 %v3007
    %3119 = vmatprep.subr.bf16.mxu0 %v3016
    %3120 = vmatpush1.bf16.msra.mxu0 %v3015
    %3121 = vmatprep.subr.bf16.mxu0 %v3024
    %3122 = vmatpush1.bf16.msra.mxu0 %v3023
    %3123 = vmatprep.subr.bf16.mxu0 %v3032
    %3124 = vmatpush1.bf16.msra.mxu0 %v3031
    %3125 = vmatprep.subr.bf16.mxu0 %v3040
    %3126 = vmatpush1.bf16.msra.mxu0 %v3039
    %3127 = vmatprep.subr.bf16.mxu0 %v3048
    %3128 = vmatpush1.bf16.msra.mxu0 %v3047
    %3129 = vmatprep.mubr.bf16.mxu0 %v2926
    %3130 = vmatmul.mubr.bf16.gmra.mrb[0].mxu0 %v2925
    %v3131 = vpop.f32.mrb[0].mxu0
    %v3132 = vadd.f32 %v3060, %v3131
    %v3133 = vpop.f32.mrb[0].mxu0
    %v3134 = vadd.f32 %v3064, %v3133
    %v3135 = vpop.f32.mrb[0].mxu0
    %v3136 = vadd.f32 %v3060, %v3135
    %v3137 = vpop.f32.mrb[0].mxu0
    %v3138 = vadd.f32 %v3064, %v3137
    %3139 = vdwg.mxu0
    %3140 = vmatprep.subr.bf16.mxu0 %v2930
    %3141 = vmatpush1.bf16.msra.mxu0 %v2929
    %3142 = vmatprep.subr.bf16.mxu0 %v2938
    %3143 = vmatpush1.bf16.msra.mxu0 %v2937
    %3144 = vmatprep.subr.bf16.mxu0 %v2946
    %3145 = vmatpush1.bf16.msra.mxu0 %v2945
    %3146 = vmatprep.subr.bf16.mxu0 %v2954
    %3147 = vmatpush1.bf16.msra.mxu0 %v2953
    %3148 = vmatprep.subr.bf16.mxu0 %v2962
    %3149 = vmatpush1.bf16.msra.mxu0 %v2961
    %3150 = vmatprep.subr.bf16.mxu0 %v2970
    %3151 = vmatpush1.bf16.msra.mxu0 %v2969
    %3152 = vmatprep.subr.bf16.mxu0 %v2978
    %3153 = vmatpush1.bf16.msra.mxu0 %v2977
    %3154 = vmatprep.subr.bf16.mxu0 %v2986
    %3155 = vmatpush1.bf16.msra.mxu0 %v2985
    %3156 = vmatprep.subr.bf16.mxu0 %v2994
    %3157 = vmatpush1.bf16.msra.mxu0 %v2993
    %3158 = vmatprep.subr.bf16.mxu0 %v3002
    %3159 = vmatpush1.bf16.msra.mxu0 %v3001
    %3160 = vmatprep.subr.bf16.mxu0 %v3010
    %3161 = vmatpush1.bf16.msra.mxu0 %v3009
    %3162 = vmatprep.subr.bf16.mxu0 %v3018
    %3163 = vmatpush1.bf16.msra.mxu0 %v3017
    %3164 = vmatprep.subr.bf16.mxu0 %v3026
    %3165 = vmatpush1.bf16.msra.mxu0 %v3025
    %3166 = vmatprep.subr.bf16.mxu0 %v3034
    %3167 = vmatpush1.bf16.msra.mxu0 %v3033
    %3168 = vmatprep.subr.bf16.mxu0 %v3042
    %3169 = vmatpush1.bf16.msra.mxu0 %v3041
    %3170 = vmatprep.subr.bf16.mxu0 %v3050
    %3171 = vmatpush1.bf16.msra.mxu0 %v3049
    %3172 = vmatprep.mubr.bf16.mxu0 %v2926
    %3173 = vmatmul.mubr.bf16.gmra.mrb[0].mxu0 %v2925
    %v3174 = vpop.f32.mrb[0].mxu0
    %v3175 = vadd.f32 %v3068, %v3174
    %v3176 = vpop.f32.mrb[0].mxu0
    %v3177 = vadd.f32 %v3072, %v3176
    %v3178 = vpop.f32.mrb[0].mxu0
    %v3179 = vadd.f32 %v3068, %v3178
    %v3180 = vpop.f32.mrb[0].mxu0
    %v3181 = vadd.f32 %v3072, %v3180
    %3182 = vdwg.mxu0
    %3183 = vmatprep.subr.bf16.mxu0 %v2932
    %3184 = vmatpush1.bf16.msra.mxu0 %v2931
    %3185 = vmatprep.subr.bf16.mxu0 %v2940
    %3186 = vmatpush1.bf16.msra.mxu0 %v2939
    %3187 = vmatprep.subr.bf16.mxu0 %v2948
    %3188 = vmatpush1.bf16.msra.mxu0 %v2947
    %3189 = vmatprep.subr.bf16.mxu0 %v2956
    %3190 = vmatpush1.bf16.msra.mxu0 %v2955
    %3191 = vmatprep.subr.bf16.mxu0 %v2964
    %3192 = vmatpush1.bf16.msra.mxu0 %v2963
    %3193 = vmatprep.subr.bf16.mxu0 %v2972
    %3194 = vmatpush1.bf16.msra.mxu0 %v2971
    %3195 = vmatprep.subr.bf16.mxu0 %v2980
    %3196 = vmatpush1.bf16.msra.mxu0 %v2979
    %3197 = vmatprep.subr.bf16.mxu0 %v2988
    %3198 = vmatpush1.bf16.msra.mxu0 %v2987
    %3199 = vmatprep.subr.bf16.mxu0 %v2996
    %3200 = vmatpush1.bf16.msra.mxu0 %v2995
    %3201 = vmatprep.subr.bf16.mxu0 %v3004
    %3202 = vmatpush1.bf16.msra.mxu0 %v3003
    %3203 = vmatprep.subr.bf16.mxu0 %v3012
    %3204 = vmatpush1.bf16.msra.mxu0 %v3011
    %3205 = vmatprep.subr.bf16.mxu0 %v3020
    %3206 = vmatpush1.bf16.msra.mxu0 %v3019
    %3207 = vmatprep.subr.bf16.mxu0 %v3028
    %3208 = vmatpush1.bf16.msra.mxu0 %v3027
    %3209 = vmatprep.subr.bf16.mxu0 %v3036
    %3210 = vmatpush1.bf16.msra.mxu0 %v3035
    %3211 = vmatprep.subr.bf16.mxu0 %v3044
    %3212 = vmatpush1.bf16.msra.mxu0 %v3043
    %3213 = vmatprep.subr.bf16.mxu0 %v3052
    %3214 = vmatpush1.bf16.msra.mxu0 %v3051
    %3215 = vmatprep.mubr.bf16.mxu0 %v2926
    %3216 = vmatmul.mubr.bf16.gmra.mrb[0].mxu0 %v2925
    %v3217 = vpop.f32.mrb[0].mxu0
    %v3218 = vadd.f32 %v3076, %v3217
    %v3219 = vpop.f32.mrb[0].mxu0
    %v3220 = vadd.f32 %v3080, %v3219
    %v3221 = vpop.f32.mrb[0].mxu0
    %v3222 = vadd.f32 %v3076, %v3221
    %v3223 = vpop.f32.mrb[0].mxu0
    %v3224 = vadd.f32 %v3080, %v3223
    %3225 = vdwg.mxu0
    %3226 = vmatprep.subr.bf16.mxu0 %v2934
    %3227 = vmatpush1.bf16.msra.mxu0 %v2933
    %3228 = vmatprep.subr.bf16.mxu0 %v2942
    %3229 = vmatpush1.bf16.msra.mxu0 %v2941
    %3230 = vmatprep.subr.bf16.mxu0 %v2950
    %3231 = vmatpush1.bf16.msra.mxu0 %v2949
    %3232 = vmatprep.subr.bf16.mxu0 %v2958
    %3233 = vmatpush1.bf16.msra.mxu0 %v2957
    %3234 = vmatprep.subr.bf16.mxu0 %v2966
    %3235 = vmatpush1.bf16.msra.mxu0 %v2965
    %3236 = vmatprep.subr.bf16.mxu0 %v2974
    %3237 = vmatpush1.bf16.msra.mxu0 %v2973
    %3238 = vmatprep.subr.bf16.mxu0 %v2982
    %3239 = vmatpush1.bf16.msra.mxu0 %v2981
    %3240 = vmatprep.subr.bf16.mxu0 %v2990
    %3241 = vmatpush1.bf16.msra.mxu0 %v2989
    %3242 = vmatprep.subr.bf16.mxu0 %v2998
    %3243 = vmatpush1.bf16.msra.mxu0 %v2997
    %3244 = vmatprep.subr.bf16.mxu0 %v3006
    %3245 = vmatpush1.bf16.msra.mxu0 %v3005
    %3246 = vmatprep.subr.bf16.mxu0 %v3014
    %3247 = vmatpush1.bf16.msra.mxu0 %v3013
    %3248 = vmatprep.subr.bf16.mxu0 %v3022
    %3249 = vmatpush1.bf16.msra.mxu0 %v3021
    %3250 = vmatprep.subr.bf16.mxu0 %v3030
    %3251 = vmatpush1.bf16.msra.mxu0 %v3029
    %3252 = vmatprep.subr.bf16.mxu0 %v3038
    %3253 = vmatpush1.bf16.msra.mxu0 %v3037
    %3254 = vmatprep.subr.bf16.mxu0 %v3046
    %3255 = vmatpush1.bf16.msra.mxu0 %v3045
    %3256 = vmatprep.subr.bf16.mxu0 %v3054
    %3257 = vmatpush1.bf16.msra.mxu0 %v3053
    %3258 = vmatprep.mubr.bf16.mxu0 %v2926
    %3259 = vmatmul.mubr.bf16.gmra.mrb[0].mxu0 %v2925
    %v3260 = vpop.f32.mrb[0].mxu0
    %v3261 = vadd.f32 %v3084, %v3260
    %v3262 = vpop.f32.mrb[0].mxu0
    %v3263 = vadd.f32 %v3088, %v3262
    %v3264 = vpop.f32.mrb[0].mxu0
    %v3265 = vadd.f32 %v3084, %v3264
    %v3266 = vpop.f32.mrb[0].mxu0
    %v3267 = vadd.f32 %v3088, %v3266
    %3268 = vdwg.mxu0
    %v3269 = vld [vmem:[#allocation18] sm:$0xff]
    %v3270 = vld [vmem:[#allocation18 + $0x8] sm:$0xff]
    %v3271 = vld [vmem:[#allocation18 + $0x10] sm:$0xff]
    %v3272 = vld [vmem:[#allocation18 + $0x18] sm:$0xff]
    %v3273 = vld [vmem:[#allocation18 + $0x20] sm:$0xff]
    %v3274 = vld [vmem:[#allocation18 + $0x28] sm:$0xff]
    %v3275 = vld [vmem:[#allocation18 + $0x30] sm:$0xff]
    %v3276 = vld [vmem:[#allocation18 + $0x38] sm:$0xff]
    %v3277 = vld [vmem:[#allocation18 + $0x40] sm:$0xff]
    %v3278 = vld [vmem:[#allocation18 + $0x48] sm:$0xff]
    %v3279 = vld [vmem:[#allocation18 + $0x50] sm:$0xff]
    %v3280 = vld [vmem:[#allocation18 + $0x58] sm:$0xff]
    %v3281 = vld [vmem:[#allocation18 + $0x60] sm:$0xff]
    %v3282 = vld [vmem:[#allocation18 + $0x68] sm:$0xff]
    %v3283 = vld [vmem:[#allocation18 + $0x70] sm:$0xff]
    %v3284 = vld [vmem:[#allocation18 + $0x78] sm:$0xff]
    %v3285 = vpack.c.bf16 %v3179, %v3175
    %v3286 = vpack.c.bf16 %v3181, %v3177
    %v3303 = vunpack.c.l.b16 %v3269
    %v3304 = vunpack.c.h.b16 %v3269
    %v3305 = vunpack.c.l.b16 %v3270
    %v3306 = vunpack.c.h.b16 %v3270
    %v3307 = vunpack.c.l.b16 %v3271
    %v3308 = vunpack.c.h.b16 %v3271
    %v3309 = vunpack.c.l.b16 %v3272
    %v3310 = vunpack.c.h.b16 %v3272
    %v3311 = vunpack.c.l.b16 %v3273
    %v3312 = vunpack.c.h.b16 %v3273
    %v3313 = vunpack.c.l.b16 %v3274
    %v3314 = vunpack.c.h.b16 %v3274
    %v3315 = vunpack.c.l.b16 %v3275
    %v3316 = vunpack.c.h.b16 %v3275
    %v3317 = vunpack.c.l.b16 %v3276
    %v3318 = vunpack.c.h.b16 %v3276
    %v3319 = vunpack.c.l.b16 %v3277
    %v3320 = vunpack.c.h.b16 %v3277
    %v3321 = vunpack.c.l.b16 %v3278
    %v3322 = vunpack.c.h.b16 %v3278
    %v3323 = vunpack.c.l.b16 %v3279
    %v3324 = vunpack.c.h.b16 %v3279
    %v3325 = vunpack.c.l.b16 %v3280
    %v3326 = vunpack.c.h.b16 %v3280
    %v3327 = vunpack.c.l.b16 %v3281
    %v3328 = vunpack.c.h.b16 %v3281
    %v3329 = vunpack.c.l.b16 %v3282
    %v3330 = vunpack.c.h.b16 %v3282
    %v3331 = vunpack.c.l.b16 %v3283
    %v3332 = vunpack.c.h.b16 %v3283
    %v3333 = vunpack.c.l.b16 %v3284
    %v3334 = vunpack.c.h.b16 %v3284
    %v3335 = vpack.c.b16 %v3305, %v3303
    %v3336 = vpack.c.b16 %v3306, %v3304
    %v3337 = vpack.c.b16 %v3309, %v3307
    %v3338 = vpack.c.b16 %v3310, %v3308
    %v3339 = vpack.c.b16 %v3313, %v3311
    %v3340 = vpack.c.b16 %v3314, %v3312
    %v3341 = vpack.c.b16 %v3317, %v3315
    %v3342 = vpack.c.b16 %v3318, %v3316
    %v3343 = vpack.c.b16 %v3321, %v3319
    %v3344 = vpack.c.b16 %v3322, %v3320
    %v3345 = vpack.c.b16 %v3325, %v3323
    %v3346 = vpack.c.b16 %v3326, %v3324
    %v3347 = vpack.c.b16 %v3329, %v3327
    %v3348 = vpack.c.b16 %v3330, %v3328
    %v3349 = vpack.c.b16 %v3333, %v3331
    %v3350 = vpack.c.b16 %v3334, %v3332
    %v3367 = vmul.bf16 %v3285, %v3335
    %v3368 = vmul.bf16 %v3286, %v3336
    %v3369 = vmul.bf16 %v3285, %v3337
    %v3370 = vmul.bf16 %v3286, %v3338
    %v3371 = vmul.bf16 %v3285, %v3339
    %v3372 = vmul.bf16 %v3286, %v3340
    %v3373 = vmul.bf16 %v3285, %v3341
    %v3374 = vmul.bf16 %v3286, %v3342
    %v3375 = vmul.bf16 %v3285, %v3343
    %v3376 = vmul.bf16 %v3286, %v3344
    %v3377 = vmul.bf16 %v3285, %v3345
    %v3378 = vmul.bf16 %v3286, %v3346
    %v3379 = vmul.bf16 %v3285, %v3347
    %v3380 = vmul.bf16 %v3286, %v3348
    %v3381 = vmul.bf16 %v3285, %v3349
    %v3382 = vmul.bf16 %v3286, %v3350
    %v3383 = vpack.c.bf16 %v3222, %v3218
    %v3384 = vpack.c.bf16 %v3224, %v3220
    %v3385 = vmul.bf16 %v3383, %v3335
    %v3386 = vmul.bf16 %v3384, %v3336
    %v3387 = vmul.bf16 %v3383, %v3337
    %v3388 = vmul.bf16 %v3384, %v3338
    %v3389 = vmul.bf16 %v3383, %v3339
    %v3390 = vmul.bf16 %v3384, %v3340
    %v3391 = vmul.bf16 %v3383, %v3341
    %v3392 = vmul.bf16 %v3384, %v3342
    %v3393 = vmul.bf16 %v3383, %v3343
    %v3394 = vmul.bf16 %v3384, %v3344
    %v3395 = vmul.bf16 %v3383, %v3345
    %v3396 = vmul.bf16 %v3384, %v3346
    %v3397 = vmul.bf16 %v3383, %v3347
    %v3398 = vmul.bf16 %v3384, %v3348
    %v3399 = vmul.bf16 %v3383, %v3349
    %v3400 = vmul.bf16 %v3384, %v3350
    %v3401 = vpack.c.bf16 %v3136, %v3132
    %v3402 = vpack.c.bf16 %v3138, %v3134
    %3403 = vmatprep.subr.bf16.mxu0 %v3368
    %3404 = vmatpush1.bf16.xpose.msra.mxu0 %v3367
    %3405 = vmatprep.subr.bf16.mxu0 %v3370
    %3406 = vmatpush1.bf16.xpose.msra.mxu0 %v3369
    %3407 = vmatprep.subr.bf16.mxu0 %v3372
    %3408 = vmatpush1.bf16.xpose.msra.mxu0 %v3371
    %3409 = vmatprep.subr.bf16.mxu0 %v3374
    %3410 = vmatpush1.bf16.xpose.msra.mxu0 %v3373
    %3411 = vmatprep.subr.bf16.mxu0 %v3376
    %3412 = vmatpush1.bf16.xpose.msra.mxu0 %v3375
    %3413 = vmatprep.subr.bf16.mxu0 %v3378
    %3414 = vmatpush1.bf16.xpose.msra.mxu0 %v3377
    %3415 = vmatprep.subr.bf16.mxu0 %v3380
    %3416 = vmatpush1.bf16.xpose.msra.mxu0 %v3379
    %3417 = vmatprep.subr.bf16.mxu0 %v3382
    %3418 = vmatpush1.bf16.xpose.msra.mxu0 %v3381
    %3419 = vmatprep.subr.bf16.mxu0 0
    %3420 = vmatpush1.bf16.xpose.msra.mxu0 0
    %3421 = vmatprep.subr.bf16.mxu0 0
    %3422 = vmatpush1.bf16.xpose.msra.mxu0 0
    %3423 = vmatprep.subr.bf16.mxu0 0
    %3424 = vmatpush1.bf16.xpose.msra.mxu0 0
    %3425 = vmatprep.subr.bf16.mxu0 0
    %3426 = vmatpush1.bf16.xpose.msra.mxu0 0
    %3427 = vmatprep.subr.bf16.mxu0 0
    %3428 = vmatpush1.bf16.xpose.msra.mxu0 0
    %3429 = vmatprep.subr.bf16.mxu0 0
    %3430 = vmatpush1.bf16.xpose.msra.mxu0 0
    %3431 = vmatprep.subr.bf16.mxu0 0
    %3432 = vmatpush1.bf16.xpose.msra.mxu0 0
    %3433 = vmatprep.subr.bf16.mxu0 0
    %3434 = vmatpush1.bf16.xpose.msra.mxu0 0
    %3435 = vmatprep.mubr.bf16.mxu0 %v3402
    %3436 = vmatmul.mubr.bf16.gmra.mrb[0].mxu0 %v3401
    %v3437 = vpop.f32.mrb[0].mxu0
    %v3438 = vadd.f32 %v409, %v3437
    %v3439 = vpop.f32.mrb[0].mxu0
    %v3440 = vpop.f32.mrb[0].mxu0
    %v3441 = vadd.f32 %v410, %v3440
    %v3442 = vpop.f32.mrb[0].mxu0
    %3443 = vdwg.mxu0
    %3444 = vmax.xlane.f32.xlu0 %v3438
    %v3445 = vpop.xlane.xlu0 %3444
    %3446 = vmax.xlane.f32.xlu0 %v3441
    %v3447 = vpop.xlane.xlu0 %3446
    %v3448 = vsub.f32 %v3438, %v3445
    %v3449 = vsub.f32 %v3441, %v3447
    %v3450 = vmul.f32 %v3448, 1.442695
    %v3451 = vpow.pop %v3450
    %v3452 = vmul.f32 %v3449, 1.442695
    %v3453 = vpow.pop %v3452
    %v3454 = vmul.f32 %v3451, %v411
    %v3455 = vmul.f32 %v3453, %v412
    %3456 = vmatprep.subr.mxu0 0.0
    %3457 = vmatpush1.msra.mxu0 %v413
    %3458 = vmatprep.subr.mxu0 0.0
    %3459 = vmatpush1.msra.mxu0 %v414
    %3460 = vmatprep.subr.mxu0 0.0
    %3461 = vmatpush1.msra.mxu0 %v415
    %3462 = vmatprep.subr.mxu0 0.0
    %3463 = vmatpush1.msra.mxu0 %v416
    %3464 = vmatprep.subr.mxu0 0.0
    %3465 = vmatpush1.msra.mxu0 %v417
    %3466 = vmatprep.subr.mxu0 0.0
    %3467 = vmatpush1.msra.mxu0 %v418
    %3468 = vmatprep.subr.mxu0 0.0
    %3469 = vmatpush1.msra.mxu0 %v419
    %3470 = vmatprep.subr.mxu0 0.0
    %3471 = vmatpush1.msra.mxu0 %v420
    %3472 = vmatprep.subr.mxu0 0.0
    %3473 = vmatpush1.msra.mxu0 %v421
    %3474 = vmatprep.subr.mxu0 0.0
    %3475 = vmatpush1.msra.mxu0 %v422
    %3476 = vmatprep.subr.mxu0 0.0
    %3477 = vmatpush1.msra.mxu0 %v423
    %3478 = vmatprep.subr.mxu0 0.0
    %3479 = vmatpush1.msra.mxu0 %v424
    %3480 = vmatprep.subr.mxu0 0.0
    %3481 = vmatpush1.msra.mxu0 %v425
    %3482 = vmatprep.subr.mxu0 0.0
    %3483 = vmatpush1.msra.mxu0 %v426
    %3484 = vmatprep.subr.mxu0 0.0
    %3485 = vmatpush1.msra.mxu0 %v427
    %3486 = vmatprep.subr.mxu0 0.0
    %3487 = vmatpush1.msra.mxu0 %v428
    %3488 = vmatprep.subr.mxu0 0.0
    %3489 = vmatpush1.msra.mxu0 0.0
    %3490 = vmatprep.subr.mxu0 0.0
    %3491 = vmatpush1.msra.mxu0 0.0
    %3492 = vmatprep.subr.mxu0 0.0
    %3493 = vmatpush1.msra.mxu0 0.0
    %3494 = vmatprep.subr.mxu0 0.0
    %3495 = vmatpush1.msra.mxu0 0.0
    %3496 = vmatprep.subr.mxu0 0.0
    %3497 = vmatpush1.msra.mxu0 0.0
    %3498 = vmatprep.subr.mxu0 0.0
    %3499 = vmatpush1.msra.mxu0 0.0
    %3500 = vmatprep.subr.mxu0 0.0
    %3501 = vmatpush1.msra.mxu0 0.0
    %3502 = vmatprep.subr.mxu0 0.0
    %3503 = vmatpush1.msra.mxu0 0.0
    %3504 = vmatprep.subr.mxu0 0.0
    %3505 = vmatpush1.msra.mxu0 0.0
    %3506 = vmatprep.subr.mxu0 0.0
    %3507 = vmatpush1.msra.mxu0 0.0
    %3508 = vmatprep.subr.mxu0 0.0
    %3509 = vmatpush1.msra.mxu0 0.0
    %3510 = vmatprep.subr.mxu0 0.0
    %3511 = vmatpush1.msra.mxu0 0.0
    %3512 = vmatprep.subr.mxu0 0.0
    %3513 = vmatpush1.msra.mxu0 0.0
    %3514 = vmatprep.subr.mxu0 0.0
    %3515 = vmatpush1.msra.mxu0 0.0
    %3516 = vmatprep.subr.mxu0 0.0
    %3517 = vmatpush1.msra.mxu0 0.0
    %3518 = vmatprep.subr.mxu0 0.0
    %3519 = vmatpush1.msra.mxu0 0.0
    %3520 = vmatprep.mubr.f32.mxu0 0.0
    %3521 = vmatmul.mubr.f32.gmra.mrb[0].mxu0 %v3454
    %v3522 = vpop.f32.mrb[0].mxu0
    %v3523 = vadd.f32 0.0, %v3522
    %v3524 = vpop.f32.mrb[0].mxu0
    %3525 = vmatprep.mubr.f32.mxu0 0.0
    %3526 = vmatmul.mubr.f32.gmra.mrb[0].mxu0 %v3455
    %v3527 = vpop.f32.mrb[0].mxu0
    %v3528 = vadd.f32 0.0, %v3527
    %v3529 = vpop.f32.mrb[0].mxu0
    %3530 = vdwg.mxu0
    %v3531 = vmax.f32 %v3523, 1e-30
    %v3532 = vmax.f32 %v3528, 1e-30
    %v3533 = vrcp.pop %v3531
    %v3534 = vrcp.pop %v3532
    %v3535 = vmul.f32 %v3454, %v3533
    %v3536 = vmul.f32 %v3455, %v3534
    %v3537 = vpack.c.bf16 %v3536, %v3535
    %3538 = vmatprep.subr.bf16.mxu0 %v3386
    %3539 = vmatpush1.bf16.msra.mxu0 %v3385
    %3540 = vmatprep.subr.bf16.mxu0 %v3388
    %3541 = vmatpush1.bf16.msra.mxu0 %v3387
    %3542 = vmatprep.subr.bf16.mxu0 %v3390
    %3543 = vmatpush1.bf16.msra.mxu0 %v3389
    %3544 = vmatprep.subr.bf16.mxu0 %v3392
    %3545 = vmatpush1.bf16.msra.mxu0 %v3391
    %3546 = vmatprep.subr.bf16.mxu0 %v3394
    %3547 = vmatpush1.bf16.msra.mxu0 %v3393
    %3548 = vmatprep.subr.bf16.mxu0 %v3396
    %3549 = vmatpush1.bf16.msra.mxu0 %v3395
    %3550 = vmatprep.subr.bf16.mxu0 %v3398
    %3551 = vmatpush1.bf16.msra.mxu0 %v3397
    %3552 = vmatprep.subr.bf16.mxu0 %v3400
    %3553 = vmatpush1.bf16.msra.mxu0 %v3399
    %3554 = vmatprep.subr.bf16.mxu0 0
    %3555 = vmatpush1.bf16.msra.mxu0 0
    %3556 = vmatprep.subr.bf16.mxu0 0
    %3557 = vmatpush1.bf16.msra.mxu0 0
    %3558 = vmatprep.subr.bf16.mxu0 0
    %3559 = vmatpush1.bf16.msra.mxu0 0
    %3560 = vmatprep.subr.bf16.mxu0 0
    %3561 = vmatpush1.bf16.msra.mxu0 0
    %3562 = vmatprep.subr.bf16.mxu0 0
    %3563 = vmatpush1.bf16.msra.mxu0 0
    %3564 = vmatprep.subr.bf16.mxu0 0
    %3565 = vmatpush1.bf16.msra.mxu0 0
    %3566 = vmatprep.subr.bf16.mxu0 0
    %3567 = vmatpush1.bf16.msra.mxu0 0
    %3568 = vmatprep.subr.bf16.mxu0 0
    %3569 = vmatpush1.bf16.msra.mxu0 0
    %3570 = vmatprep.mubr.bf16.mxu0 0
    %3571 = vmatmul.mubr.bf16.gmra.mrb[0].mxu0 %v3537
    %v3572 = vpop.f32.mrb[0].mxu0
    %v3573 = vadd.f32 %v3261, %v3572
    %v3574 = vpop.f32.mrb[0].mxu0
    %v3575 = vadd.f32 %v3263, %v3574
    %v3576 = vpop.f32.mrb[0].mxu0
    %v3577 = vadd.f32 %v3265, %v3576
    %v3578 = vpop.f32.mrb[0].mxu0
    %v3579 = vadd.f32 %v3267, %v3578
    %3580 = vdwg.mxu0
    %v3581 = vmul.f32 %v3573, 0.5
    %v3582 = vmul.f32 %v3575, 0.5
    %v3583 = vmul.f32 %v3577, 0.5
    %v3584 = vmul.f32 %v3579, 0.5
    %v3585 = vmul.f32 %v3573, 0.044715
    %v3586 = vmul.f32 %v3575, 0.044715
    %v3587 = vmul.f32 %v3577, 0.044715
    %v3588 = vmul.f32 %v3579, 0.044715
    %v3589 = vmul.f32 %v3585, %v3573
    %v3590 = vmul.f32 %v3586, %v3575
    %v3591 = vmul.f32 %v3587, %v3577
    %v3592 = vmul.f32 %v3588, %v3579
    %v3593 = vmul.f32 %v3589, %v3573
    %v3594 = vmul.f32 %v3590, %v3575
    %v3595 = vmul.f32 %v3591, %v3577
    %v3596 = vmul.f32 %v3592, %v3579
    %v3597 = vadd.f32 %v3573, %v3593
    %v3598 = vadd.f32 %v3575, %v3594
    %v3599 = vadd.f32 %v3577, %v3595
    %v3600 = vadd.f32 %v3579, %v3596
    %v3601 = vmul.f32 %v3597, 0.7978846
    %v3602 = vmul.f32 %v3598, 0.7978846
    %v3603 = vmul.f32 %v3599, 0.7978846
    %v3604 = vmul.f32 %v3600, 0.7978846
    %v3605 = vtanh.pop %v3601
    %v3606 = vtanh.pop %v3602
    %v3607 = vtanh.pop %v3603
    %v3608 = vtanh.pop %v3604
    %v3609 = vadd.f32 %v3605, 1.0
    %v3610 = vadd.f32 %v3606, 1.0
    %v3611 = vadd.f32 %v3607, 1.0
    %v3612 = vadd.f32 %v3608, 1.0
    %v3613 = vmul.f32 %v3581, %v3609
    %v3614 = vmul.f32 %v3582, %v3610
    %v3615 = vmul.f32 %v3583, %v3611
    %v3616 = vmul.f32 %v3584, %v3612
    %s3617 = smul.u32 %s2921, 36
    %s3618 = sshll.u32 %s3617, 4
    %3619 = dma.done %s332, %s3618
    %v3620 = vpack.c.bf16 %v3615, %v3613
    %v3621 = vpack.c.bf16 %v3616, %v3614
    %v3622 = vld [vmem:[#allocation6] sm:$0xff]
    %v3623 = vld [vmem:[#allocation6 + $0x8] sm:$0xff]
    %v3624 = vld [vmem:[#allocation6 + $0x10] sm:$0xff]
    %v3625 = vld [vmem:[#allocation6 + $0x18] sm:$0xff]
    %v3626 = vld [vmem:[#allocation6 + $0x20] sm:$0xff]
    %v3627 = vld [vmem:[#allocation6 + $0x28] sm:$0xff]
    %v3628 = vld [vmem:[#allocation6 + $0x30] sm:$0xff]
    %v3629 = vld [vmem:[#allocation6 + $0x38] sm:$0xff]
    %v3630 = vld [vmem:[#allocation6 + $0x40] sm:$0xff]
    %v3631 = vld [vmem:[#allocation6 + $0x48] sm:$0xff]
    %v3632 = vld [vmem:[#allocation6 + $0x50] sm:$0xff]
    %v3633 = vld [vmem:[#allocation6 + $0x58] sm:$0xff]
    %v3634 = vld [vmem:[#allocation6 + $0x60] sm:$0xff]
    %v3635 = vld [vmem:[#allocation6 + $0x68] sm:$0xff]
    %v3636 = vld [vmem:[#allocation6 + $0x70] sm:$0xff]
    %v3637 = vld [vmem:[#allocation6 + $0x78] sm:$0xff]
    %v3638 = vld [vmem:[#allocation6 + $0x80] sm:$0xff]
    %v3639 = vld [vmem:[#allocation6 + $0x88] sm:$0xff]
    %v3640 = vld [vmem:[#allocation6 + $0x90] sm:$0xff]
    %v3641 = vld [vmem:[#allocation6 + $0x98] sm:$0xff]
    %v3642 = vld [vmem:[#allocation6 + $0xa0] sm:$0xff]
    %v3643 = vld [vmem:[#allocation6 + $0xa8] sm:$0xff]
    %v3644 = vld [vmem:[#allocation6 + $0xb0] sm:$0xff]
    %v3645 = vld [vmem:[#allocation6 + $0xb8] sm:$0xff]
    %v3646 = vld [vmem:[#allocation6 + $0xc0] sm:$0xff]
    %v3647 = vld [vmem:[#allocation6 + $0xc8] sm:$0xff]
    %v3648 = vld [vmem:[#allocation6 + $0xd0] sm:$0xff]
    %v3649 = vld [vmem:[#allocation6 + $0xd8] sm:$0xff]
    %v3650 = vld [vmem:[#allocation6 + $0xe0] sm:$0xff]
    %v3651 = vld [vmem:[#allocation6 + $0xe8] sm:$0xff]
    %v3652 = vld [vmem:[#allocation6 + $0xf0] sm:$0xff]
    %v3653 = vld [vmem:[#allocation6 + $0xf8] sm:$0xff]
    %v3654 = vld [vmem:[#allocation6 + $0x100] sm:$0xff]
    %v3655 = vld [vmem:[#allocation6 + $0x108] sm:$0xff]
    %v3656 = vld [vmem:[#allocation6 + $0x110] sm:$0xff]
    %v3657 = vld [vmem:[#allocation6 + $0x118] sm:$0xff]
    %v3658 = vld [vmem:[#allocation6 + $0x120] sm:$0xff]
    %v3659 = vld [vmem:[#allocation6 + $0x128] sm:$0xff]
    %v3660 = vld [vmem:[#allocation6 + $0x130] sm:$0xff]
    %v3661 = vld [vmem:[#allocation6 + $0x138] sm:$0xff]
    %v3662 = vld [vmem:[#allocation6 + $0x140] sm:$0xff]
    %v3663 = vld [vmem:[#allocation6 + $0x148] sm:$0xff]
    %v3664 = vld [vmem:[#allocation6 + $0x150] sm:$0xff]
    %v3665 = vld [vmem:[#allocation6 + $0x158] sm:$0xff]
    %v3666 = vld [vmem:[#allocation6 + $0x160] sm:$0xff]
    %v3667 = vld [vmem:[#allocation6 + $0x168] sm:$0xff]
    %v3668 = vld [vmem:[#allocation6 + $0x170] sm:$0xff]
    %v3669 = vld [vmem:[#allocation6 + $0x178] sm:$0xff]
    %v3670 = vld [vmem:[#allocation6 + $0x180] sm:$0xff]
    %v3671 = vld [vmem:[#allocation6 + $0x188] sm:$0xff]
    %v3672 = vld [vmem:[#allocation6 + $0x190] sm:$0xff]
    %v3673 = vld [vmem:[#allocation6 + $0x198] sm:$0xff]
    %v3674 = vld [vmem:[#allocation6 + $0x1a0] sm:$0xff]
    %v3675 = vld [vmem:[#allocation6 + $0x1a8] sm:$0xff]
    %v3676 = vld [vmem:[#allocation6 + $0x1b0] sm:$0xff]
    %v3677 = vld [vmem:[#allocation6 + $0x1b8] sm:$0xff]
    %v3678 = vld [vmem:[#allocation6 + $0x1c0] sm:$0xff]
    %v3679 = vld [vmem:[#allocation6 + $0x1c8] sm:$0xff]
    %v3680 = vld [vmem:[#allocation6 + $0x1d0] sm:$0xff]
    %v3681 = vld [vmem:[#allocation6 + $0x1d8] sm:$0xff]
    %v3682 = vld [vmem:[#allocation6 + $0x1e0] sm:$0xff]
    %v3683 = vld [vmem:[#allocation6 + $0x1e8] sm:$0xff]
    %v3684 = vld [vmem:[#allocation6 + $0x1f0] sm:$0xff]
    %v3685 = vld [vmem:[#allocation6 + $0x1f8] sm:$0xff]
    %v3686 = vld [vmem:[#allocation6 + $0x200] sm:$0xff]
    %v3687 = vld [vmem:[#allocation6 + $0x208] sm:$0xff]
    %v3688 = vld [vmem:[#allocation6 + $0x210] sm:$0xff]
    %v3689 = vld [vmem:[#allocation6 + $0x218] sm:$0xff]
    %v3690 = vld [vmem:[#allocation6 + $0x220] sm:$0xff]
    %v3691 = vld [vmem:[#allocation6 + $0x228] sm:$0xff]
    %v3692 = vld [vmem:[#allocation6 + $0x230] sm:$0xff]
    %v3693 = vld [vmem:[#allocation6 + $0x238] sm:$0xff]
    %v3694 = vld [vmem:[#allocation6 + $0x240] sm:$0xff]
    %v3695 = vld [vmem:[#allocation6 + $0x248] sm:$0xff]
    %v3696 = vld [vmem:[#allocation6 + $0x250] sm:$0xff]
    %v3697 = vld [vmem:[#allocation6 + $0x258] sm:$0xff]
    %v3698 = vld [vmem:[#allocation6 + $0x260] sm:$0xff]
    %v3699 = vld [vmem:[#allocation6 + $0x268] sm:$0xff]
    %v3700 = vld [vmem:[#allocation6 + $0x270] sm:$0xff]
    %v3701 = vld [vmem:[#allocation6 + $0x278] sm:$0xff]
    %v3702 = vld [vmem:[#allocation6 + $0x280] sm:$0xff]
    %v3703 = vld [vmem:[#allocation6 + $0x288] sm:$0xff]
    %v3704 = vld [vmem:[#allocation6 + $0x290] sm:$0xff]
    %v3705 = vld [vmem:[#allocation6 + $0x298] sm:$0xff]
    %v3706 = vld [vmem:[#allocation6 + $0x2a0] sm:$0xff]
    %v3707 = vld [vmem:[#allocation6 + $0x2a8] sm:$0xff]
    %v3708 = vld [vmem:[#allocation6 + $0x2b0] sm:$0xff]
    %v3709 = vld [vmem:[#allocation6 + $0x2b8] sm:$0xff]
    %v3710 = vld [vmem:[#allocation6 + $0x2c0] sm:$0xff]
    %v3711 = vld [vmem:[#allocation6 + $0x2c8] sm:$0xff]
    %v3712 = vld [vmem:[#allocation6 + $0x2d0] sm:$0xff]
    %v3713 = vld [vmem:[#allocation6 + $0x2d8] sm:$0xff]
    %v3714 = vld [vmem:[#allocation6 + $0x2e0] sm:$0xff]
    %v3715 = vld [vmem:[#allocation6 + $0x2e8] sm:$0xff]
    %v3716 = vld [vmem:[#allocation6 + $0x2f0] sm:$0xff]
    %v3717 = vld [vmem:[#allocation6 + $0x2f8] sm:$0xff]
    %v3718 = vld [vmem:[#allocation6 + $0x300] sm:$0xff]
    %v3719 = vld [vmem:[#allocation6 + $0x308] sm:$0xff]
    %v3720 = vld [vmem:[#allocation6 + $0x310] sm:$0xff]
    %v3721 = vld [vmem:[#allocation6 + $0x318] sm:$0xff]
    %v3722 = vld [vmem:[#allocation6 + $0x320] sm:$0xff]
    %v3723 = vld [vmem:[#allocation6 + $0x328] sm:$0xff]
    %v3724 = vld [vmem:[#allocation6 + $0x330] sm:$0xff]
    %v3725 = vld [vmem:[#allocation6 + $0x338] sm:$0xff]
    %v3726 = vld [vmem:[#allocation6 + $0x340] sm:$0xff]
    %v3727 = vld [vmem:[#allocation6 + $0x348] sm:$0xff]
    %v3728 = vld [vmem:[#allocation6 + $0x350] sm:$0xff]
    %v3729 = vld [vmem:[#allocation6 + $0x358] sm:$0xff]
    %v3730 = vld [vmem:[#allocation6 + $0x360] sm:$0xff]
    %v3731 = vld [vmem:[#allocation6 + $0x368] sm:$0xff]
    %v3732 = vld [vmem:[#allocation6 + $0x370] sm:$0xff]
    %v3733 = vld [vmem:[#allocation6 + $0x378] sm:$0xff]
    %v3734 = vld [vmem:[#allocation6 + $0x380] sm:$0xff]
    %v3735 = vld [vmem:[#allocation6 + $0x388] sm:$0xff]
    %v3736 = vld [vmem:[#allocation6 + $0x390] sm:$0xff]
    %v3737 = vld [vmem:[#allocation6 + $0x398] sm:$0xff]
    %v3738 = vld [vmem:[#allocation6 + $0x3a0] sm:$0xff]
    %v3739 = vld [vmem:[#allocation6 + $0x3a8] sm:$0xff]
    %v3740 = vld [vmem:[#allocation6 + $0x3b0] sm:$0xff]
    %v3741 = vld [vmem:[#allocation6 + $0x3b8] sm:$0xff]
    %v3742 = vld [vmem:[#allocation6 + $0x3c0] sm:$0xff]
    %v3743 = vld [vmem:[#allocation6 + $0x3c8] sm:$0xff]
    %v3744 = vld [vmem:[#allocation6 + $0x3d0] sm:$0xff]
    %v3745 = vld [vmem:[#allocation6 + $0x3d8] sm:$0xff]
    %v3746 = vld [vmem:[#allocation6 + $0x3e0] sm:$0xff]
    %v3747 = vld [vmem:[#allocation6 + $0x3e8] sm:$0xff]
    %v3748 = vld [vmem:[#allocation6 + $0x3f0] sm:$0xff]
    %v3749 = vld [vmem:[#allocation6 + $0x3f8] sm:$0xff]
    %v3750 = vld [vmem:[#allocation6 + $0x400] sm:$0xff]
    %v3751 = vld [vmem:[#allocation6 + $0x408] sm:$0xff]
    %v3752 = vld [vmem:[#allocation6 + $0x410] sm:$0xff]
    %v3753 = vld [vmem:[#allocation6 + $0x418] sm:$0xff]
    %v3754 = vld [vmem:[#allocation6 + $0x420] sm:$0xff]
    %v3755 = vld [vmem:[#allocation6 + $0x428] sm:$0xff]
    %v3756 = vld [vmem:[#allocation6 + $0x430] sm:$0xff]
    %v3757 = vld [vmem:[#allocation6 + $0x438] sm:$0xff]
    %v3758 = vld [vmem:[#allocation6 + $0x440] sm:$0xff]
    %v3759 = vld [vmem:[#allocation6 + $0x448] sm:$0xff]
    %v3760 = vld [vmem:[#allocation6 + $0x450] sm:$0xff]
    %v3761 = vld [vmem:[#allocation6 + $0x458] sm:$0xff]
    %v3762 = vld [vmem:[#allocation6 + $0x460] sm:$0xff]
    %v3763 = vld [vmem:[#allocation6 + $0x468] sm:$0xff]
    %v3764 = vld [vmem:[#allocation6 + $0x470] sm:$0xff]
    %v3765 = vld [vmem:[#allocation6 + $0x478] sm:$0xff]
    %v3766 = vld [vmem:[#allocation6 + $0x480] sm:$0xff]
    %v3767 = vld [vmem:[#allocation6 + $0x488] sm:$0xff]
    %v3768 = vld [vmem:[#allocation6 + $0x490] sm:$0xff]
    %v3769 = vld [vmem:[#allocation6 + $0x498] sm:$0xff]
    %v3770 = vld [vmem:[#allocation6 + $0x4a0] sm:$0xff]
    %v3771 = vld [vmem:[#allocation6 + $0x4a8] sm:$0xff]
    %v3772 = vld [vmem:[#allocation6 + $0x4b0] sm:$0xff]
    %v3773 = vld [vmem:[#allocation6 + $0x4b8] sm:$0xff]
    %v3774 = vld [vmem:[#allocation6 + $0x4c0] sm:$0xff]
    %v3775 = vld [vmem:[#allocation6 + $0x4c8] sm:$0xff]
    %v3776 = vld [vmem:[#allocation6 + $0x4d0] sm:$0xff]
    %v3777 = vld [vmem:[#allocation6 + $0x4d8] sm:$0xff]
    %v3778 = vld [vmem:[#allocation6 + $0x4e0] sm:$0xff]
    %v3779 = vld [vmem:[#allocation6 + $0x4e8] sm:$0xff]
    %v3780 = vld [vmem:[#allocation6 + $0x4f0] sm:$0xff]
    %v3781 = vld [vmem:[#allocation6 + $0x4f8] sm:$0xff]
    %v3782 = vld [vmem:[#allocation6 + $0x500] sm:$0xff]
    %v3783 = vld [vmem:[#allocation6 + $0x508] sm:$0xff]
    %v3784 = vld [vmem:[#allocation6 + $0x510] sm:$0xff]
    %v3785 = vld [vmem:[#allocation6 + $0x518] sm:$0xff]
    %v3786 = vld [vmem:[#allocation6 + $0x520] sm:$0xff]
    %v3787 = vld [vmem:[#allocation6 + $0x528] sm:$0xff]
    %v3788 = vld [vmem:[#allocation6 + $0x530] sm:$0xff]
    %v3789 = vld [vmem:[#allocation6 + $0x538] sm:$0xff]
    %v3790 = vld [vmem:[#allocation6 + $0x540] sm:$0xff]
    %v3791 = vld [vmem:[#allocation6 + $0x548] sm:$0xff]
    %v3792 = vld [vmem:[#allocation6 + $0x550] sm:$0xff]
    %v3793 = vld [vmem:[#allocation6 + $0x558] sm:$0xff]
    %v3794 = vld [vmem:[#allocation6 + $0x560] sm:$0xff]
    %v3795 = vld [vmem:[#allocation6 + $0x568] sm:$0xff]
    %v3796 = vld [vmem:[#allocation6 + $0x570] sm:$0xff]
    %v3797 = vld [vmem:[#allocation6 + $0x578] sm:$0xff]
    %v3798 = vld [vmem:[#allocation6 + $0x580] sm:$0xff]
    %v3799 = vld [vmem:[#allocation6 + $0x588] sm:$0xff]
    %v3800 = vld [vmem:[#allocation6 + $0x590] sm:$0xff]
    %v3801 = vld [vmem:[#allocation6 + $0x598] sm:$0xff]
    %v3802 = vld [vmem:[#allocation6 + $0x5a0] sm:$0xff]
    %v3803 = vld [vmem:[#allocation6 + $0x5a8] sm:$0xff]
    %v3804 = vld [vmem:[#allocation6 + $0x5b0] sm:$0xff]
    %v3805 = vld [vmem:[#allocation6 + $0x5b8] sm:$0xff]
    %v3806 = vld [vmem:[#allocation6 + $0x5c0] sm:$0xff]
    %v3807 = vld [vmem:[#allocation6 + $0x5c8] sm:$0xff]
    %v3808 = vld [vmem:[#allocation6 + $0x5d0] sm:$0xff]
    %v3809 = vld [vmem:[#allocation6 + $0x5d8] sm:$0xff]
    %v3810 = vld [vmem:[#allocation6 + $0x5e0] sm:$0xff]
    %v3811 = vld [vmem:[#allocation6 + $0x5e8] sm:$0xff]
    %v3812 = vld [vmem:[#allocation6 + $0x5f0] sm:$0xff]
    %v3813 = vld [vmem:[#allocation6 + $0x5f8] sm:$0xff]
    %v3814 = vld [vmem:[#allocation6 + $0x600] sm:$0xff]
    %v3815 = vld [vmem:[#allocation6 + $0x608] sm:$0xff]
    %v3816 = vld [vmem:[#allocation6 + $0x610] sm:$0xff]
    %v3817 = vld [vmem:[#allocation6 + $0x618] sm:$0xff]
    %v3818 = vld [vmem:[#allocation6 + $0x620] sm:$0xff]
    %v3819 = vld [vmem:[#allocation6 + $0x628] sm:$0xff]
    %v3820 = vld [vmem:[#allocation6 + $0x630] sm:$0xff]
    %v3821 = vld [vmem:[#allocation6 + $0x638] sm:$0xff]
    %v3822 = vld [vmem:[#allocation6 + $0x640] sm:$0xff]
    %v3823 = vld [vmem:[#allocation6 + $0x648] sm:$0xff]
    %v3824 = vld [vmem:[#allocation6 + $0x650] sm:$0xff]
    %v3825 = vld [vmem:[#allocation6 + $0x658] sm:$0xff]
    %v3826 = vld [vmem:[#allocation6 + $0x660] sm:$0xff]
    %v3827 = vld [vmem:[#allocation6 + $0x668] sm:$0xff]
    %v3828 = vld [vmem:[#allocation6 + $0x670] sm:$0xff]
    %v3829 = vld [vmem:[#allocation6 + $0x678] sm:$0xff]
    %v3830 = vld [vmem:[#allocation6 + $0x680] sm:$0xff]
    %v3831 = vld [vmem:[#allocation6 + $0x688] sm:$0xff]
    %v3832 = vld [vmem:[#allocation6 + $0x690] sm:$0xff]
    %v3833 = vld [vmem:[#allocation6 + $0x698] sm:$0xff]
    %v3834 = vld [vmem:[#allocation6 + $0x6a0] sm:$0xff]
    %v3835 = vld [vmem:[#allocation6 + $0x6a8] sm:$0xff]
    %v3836 = vld [vmem:[#allocation6 + $0x6b0] sm:$0xff]
    %v3837 = vld [vmem:[#allocation6 + $0x6b8] sm:$0xff]
    %v3838 = vld [vmem:[#allocation6 + $0x6c0] sm:$0xff]
    %v3839 = vld [vmem:[#allocation6 + $0x6c8] sm:$0xff]
    %v3840 = vld [vmem:[#allocation6 + $0x6d0] sm:$0xff]
    %v3841 = vld [vmem:[#allocation6 + $0x6d8] sm:$0xff]
    %v3842 = vld [vmem:[#allocation6 + $0x6e0] sm:$0xff]
    %v3843 = vld [vmem:[#allocation6 + $0x6e8] sm:$0xff]
    %v3844 = vld [vmem:[#allocation6 + $0x6f0] sm:$0xff]
    %v3845 = vld [vmem:[#allocation6 + $0x6f8] sm:$0xff]
    %v3846 = vld [vmem:[#allocation6 + $0x700] sm:$0xff]
    %v3847 = vld [vmem:[#allocation6 + $0x708] sm:$0xff]
    %v3848 = vld [vmem:[#allocation6 + $0x710] sm:$0xff]
    %v3849 = vld [vmem:[#allocation6 + $0x718] sm:$0xff]
    %v3850 = vld [vmem:[#allocation6 + $0x720] sm:$0xff]
    %v3851 = vld [vmem:[#allocation6 + $0x728] sm:$0xff]
    %v3852 = vld [vmem:[#allocation6 + $0x730] sm:$0xff]
    %v3853 = vld [vmem:[#allocation6 + $0x738] sm:$0xff]
    %v3854 = vld [vmem:[#allocation6 + $0x740] sm:$0xff]
    %v3855 = vld [vmem:[#allocation6 + $0x748] sm:$0xff]
    %v3856 = vld [vmem:[#allocation6 + $0x750] sm:$0xff]
    %v3857 = vld [vmem:[#allocation6 + $0x758] sm:$0xff]
    %v3858 = vld [vmem:[#allocation6 + $0x760] sm:$0xff]
    %v3859 = vld [vmem:[#allocation6 + $0x768] sm:$0xff]
    %v3860 = vld [vmem:[#allocation6 + $0x770] sm:$0xff]
    %v3861 = vld [vmem:[#allocation6 + $0x778] sm:$0xff]
    %v3862 = vld [vmem:[#allocation6 + $0x780] sm:$0xff]
    %v3863 = vld [vmem:[#allocation6 + $0x788] sm:$0xff]
    %v3864 = vld [vmem:[#allocation6 + $0x790] sm:$0xff]
    %v3865 = vld [vmem:[#allocation6 + $0x798] sm:$0xff]
    %v3866 = vld [vmem:[#allocation6 + $0x7a0] sm:$0xff]
    %v3867 = vld [vmem:[#allocation6 + $0x7a8] sm:$0xff]
    %v3868 = vld [vmem:[#allocation6 + $0x7b0] sm:$0xff]
    %v3869 = vld [vmem:[#allocation6 + $0x7b8] sm:$0xff]
    %v3870 = vld [vmem:[#allocation6 + $0x7c0] sm:$0xff]
    %v3871 = vld [vmem:[#allocation6 + $0x7c8] sm:$0xff]
    %v3872 = vld [vmem:[#allocation6 + $0x7d0] sm:$0xff]
    %v3873 = vld [vmem:[#allocation6 + $0x7d8] sm:$0xff]
    %v3874 = vld [vmem:[#allocation6 + $0x7e0] sm:$0xff]
    %v3875 = vld [vmem:[#allocation6 + $0x7e8] sm:$0xff]
    %v3876 = vld [vmem:[#allocation6 + $0x7f0] sm:$0xff]
    %v3877 = vld [vmem:[#allocation6 + $0x7f8] sm:$0xff]
    %v3878 = vld [vmem:[#allocation6 + $0x800] sm:$0xff]
    %v3879 = vld [vmem:[#allocation6 + $0x808] sm:$0xff]
    %v3880 = vld [vmem:[#allocation6 + $0x810] sm:$0xff]
    %v3881 = vld [vmem:[#allocation6 + $0x818] sm:$0xff]
    %v3882 = vld [vmem:[#allocation6 + $0x820] sm:$0xff]
    %v3883 = vld [vmem:[#allocation6 + $0x828] sm:$0xff]
    %v3884 = vld [vmem:[#allocation6 + $0x830] sm:$0xff]
    %v3885 = vld [vmem:[#allocation6 + $0x838] sm:$0xff]
    %v3886 = vld [vmem:[#allocation6 + $0x840] sm:$0xff]
    %v3887 = vld [vmem:[#allocation6 + $0x848] sm:$0xff]
    %v3888 = vld [vmem:[#allocation6 + $0x850] sm:$0xff]
    %v3889 = vld [vmem:[#allocation6 + $0x858] sm:$0xff]
    %v3890 = vld [vmem:[#allocation6 + $0x860] sm:$0xff]
    %v3891 = vld [vmem:[#allocation6 + $0x868] sm:$0xff]
    %v3892 = vld [vmem:[#allocation6 + $0x870] sm:$0xff]
    %v3893 = vld [vmem:[#allocation6 + $0x878] sm:$0xff]
    %v3894 = vld [vmem:[#allocation6 + $0x880] sm:$0xff]
    %v3895 = vld [vmem:[#allocation6 + $0x888] sm:$0xff]
    %v3896 = vld [vmem:[#allocation6 + $0x890] sm:$0xff]
    %v3897 = vld [vmem:[#allocation6 + $0x898] sm:$0xff]
    %v3898 = vld [vmem:[#allocation6 + $0x8a0] sm:$0xff]
    %v3899 = vld [vmem:[#allocation6 + $0x8a8] sm:$0xff]
    %v3900 = vld [vmem:[#allocation6 + $0x8b0] sm:$0xff]
    %v3901 = vld [vmem:[#allocation6 + $0x8b8] sm:$0xff]
    %v3902 = vld [vmem:[#allocation6 + $0x8c0] sm:$0xff]
    %v3903 = vld [vmem:[#allocation6 + $0x8c8] sm:$0xff]
    %v3904 = vld [vmem:[#allocation6 + $0x8d0] sm:$0xff]
    %v3905 = vld [vmem:[#allocation6 + $0x8d8] sm:$0xff]
    %v3906 = vld [vmem:[#allocation6 + $0x8e0] sm:$0xff]
    %v3907 = vld [vmem:[#allocation6 + $0x8e8] sm:$0xff]
    %v3908 = vld [vmem:[#allocation6 + $0x8f0] sm:$0xff]
    %v3909 = vld [vmem:[#allocation6 + $0x8f8] sm:$0xff]
    %v3910 = vld [vmem:[#allocation6 + $0x900] sm:$0xff]
    %v3911 = vld [vmem:[#allocation6 + $0x908] sm:$0xff]
    %v3912 = vld [vmem:[#allocation6 + $0x910] sm:$0xff]
    %v3913 = vld [vmem:[#allocation6 + $0x918] sm:$0xff]
    %v3914 = vld [vmem:[#allocation6 + $0x920] sm:$0xff]
    %v3915 = vld [vmem:[#allocation6 + $0x928] sm:$0xff]
    %v3916 = vld [vmem:[#allocation6 + $0x930] sm:$0xff]
    %v3917 = vld [vmem:[#allocation6 + $0x938] sm:$0xff]
    %v3918 = vld [vmem:[#allocation6 + $0x940] sm:$0xff]
    %v3919 = vld [vmem:[#allocation6 + $0x948] sm:$0xff]
    %v3920 = vld [vmem:[#allocation6 + $0x950] sm:$0xff]
    %v3921 = vld [vmem:[#allocation6 + $0x958] sm:$0xff]
    %v3922 = vld [vmem:[#allocation6 + $0x960] sm:$0xff]
    %v3923 = vld [vmem:[#allocation6 + $0x968] sm:$0xff]
    %v3924 = vld [vmem:[#allocation6 + $0x970] sm:$0xff]
    %v3925 = vld [vmem:[#allocation6 + $0x978] sm:$0xff]
    %v3926 = vld [vmem:[#allocation6 + $0x980] sm:$0xff]
    %v3927 = vld [vmem:[#allocation6 + $0x988] sm:$0xff]
    %v3928 = vld [vmem:[#allocation6 + $0x990] sm:$0xff]
    %v3929 = vld [vmem:[#allocation6 + $0x998] sm:$0xff]
    %v3930 = vld [vmem:[#allocation6 + $0x9a0] sm:$0xff]
    %v3931 = vld [vmem:[#allocation6 + $0x9a8] sm:$0xff]
    %v3932 = vld [vmem:[#allocation6 + $0x9b0] sm:$0xff]
    %v3933 = vld [vmem:[#allocation6 + $0x9b8] sm:$0xff]
    %v3934 = vld [vmem:[#allocation6 + $0x9c0] sm:$0xff]
    %v3935 = vld [vmem:[#allocation6 + $0x9c8] sm:$0xff]
    %v3936 = vld [vmem:[#allocation6 + $0x9d0] sm:$0xff]
    %v3937 = vld [vmem:[#allocation6 + $0x9d8] sm:$0xff]
    %v3938 = vld [vmem:[#allocation6 + $0x9e0] sm:$0xff]
    %v3939 = vld [vmem:[#allocation6 + $0x9e8] sm:$0xff]
    %v3940 = vld [vmem:[#allocation6 + $0x9f0] sm:$0xff]
    %v3941 = vld [vmem:[#allocation6 + $0x9f8] sm:$0xff]
    %v3942 = vld [vmem:[#allocation6 + $0xa00] sm:$0xff]
    %v3943 = vld [vmem:[#allocation6 + $0xa08] sm:$0xff]
    %v3944 = vld [vmem:[#allocation6 + $0xa10] sm:$0xff]
    %v3945 = vld [vmem:[#allocation6 + $0xa18] sm:$0xff]
    %v3946 = vld [vmem:[#allocation6 + $0xa20] sm:$0xff]
    %v3947 = vld [vmem:[#allocation6 + $0xa28] sm:$0xff]
    %v3948 = vld [vmem:[#allocation6 + $0xa30] sm:$0xff]
    %v3949 = vld [vmem:[#allocation6 + $0xa38] sm:$0xff]
    %v3950 = vld [vmem:[#allocation6 + $0xa40] sm:$0xff]
    %v3951 = vld [vmem:[#allocation6 + $0xa48] sm:$0xff]
    %v3952 = vld [vmem:[#allocation6 + $0xa50] sm:$0xff]
    %v3953 = vld [vmem:[#allocation6 + $0xa58] sm:$0xff]
    %v3954 = vld [vmem:[#allocation6 + $0xa60] sm:$0xff]
    %v3955 = vld [vmem:[#allocation6 + $0xa68] sm:$0xff]
    %v3956 = vld [vmem:[#allocation6 + $0xa70] sm:$0xff]
    %v3957 = vld [vmem:[#allocation6 + $0xa78] sm:$0xff]
    %v3958 = vld [vmem:[#allocation6 + $0xa80] sm:$0xff]
    %v3959 = vld [vmem:[#allocation6 + $0xa88] sm:$0xff]
    %v3960 = vld [vmem:[#allocation6 + $0xa90] sm:$0xff]
    %v3961 = vld [vmem:[#allocation6 + $0xa98] sm:$0xff]
    %v3962 = vld [vmem:[#allocation6 + $0xaa0] sm:$0xff]
    %v3963 = vld [vmem:[#allocation6 + $0xaa8] sm:$0xff]
    %v3964 = vld [vmem:[#allocation6 + $0xab0] sm:$0xff]
    %v3965 = vld [vmem:[#allocation6 + $0xab8] sm:$0xff]
    %v3966 = vld [vmem:[#allocation6 + $0xac0] sm:$0xff]
    %v3967 = vld [vmem:[#allocation6 + $0xac8] sm:$0xff]
    %v3968 = vld [vmem:[#allocation6 + $0xad0] sm:$0xff]
    %v3969 = vld [vmem:[#allocation6 + $0xad8] sm:$0xff]
    %v3970 = vld [vmem:[#allocation6 + $0xae0] sm:$0xff]
    %v3971 = vld [vmem:[#allocation6 + $0xae8] sm:$0xff]
    %v3972 = vld [vmem:[#allocation6 + $0xaf0] sm:$0xff]
    %v3973 = vld [vmem:[#allocation6 + $0xaf8] sm:$0xff]
    %v3974 = vld [vmem:[#allocation6 + $0xb00] sm:$0xff]
    %v3975 = vld [vmem:[#allocation6 + $0xb08] sm:$0xff]
    %v3976 = vld [vmem:[#allocation6 + $0xb10] sm:$0xff]
    %v3977 = vld [vmem:[#allocation6 + $0xb18] sm:$0xff]
    %v3978 = vld [vmem:[#allocation6 + $0xb20] sm:$0xff]
    %v3979 = vld [vmem:[#allocation6 + $0xb28] sm:$0xff]
    %v3980 = vld [vmem:[#allocation6 + $0xb30] sm:$0xff]
    %v3981 = vld [vmem:[#allocation6 + $0xb38] sm:$0xff]
    %v3982 = vld [vmem:[#allocation6 + $0xb40] sm:$0xff]
    %v3983 = vld [vmem:[#allocation6 + $0xb48] sm:$0xff]
    %v3984 = vld [vmem:[#allocation6 + $0xb50] sm:$0xff]
    %v3985 = vld [vmem:[#allocation6 + $0xb58] sm:$0xff]
    %v3986 = vld [vmem:[#allocation6 + $0xb60] sm:$0xff]
    %v3987 = vld [vmem:[#allocation6 + $0xb68] sm:$0xff]
    %v3988 = vld [vmem:[#allocation6 + $0xb70] sm:$0xff]
    %v3989 = vld [vmem:[#allocation6 + $0xb78] sm:$0xff]
    %v3990 = vld [vmem:[#allocation6 + $0xb80] sm:$0xff]
    %v3991 = vld [vmem:[#allocation6 + $0xb88] sm:$0xff]
    %v3992 = vld [vmem:[#allocation6 + $0xb90] sm:$0xff]
    %v3993 = vld [vmem:[#allocation6 + $0xb98] sm:$0xff]
    %v3994 = vld [vmem:[#allocation6 + $0xba0] sm:$0xff]
    %v3995 = vld [vmem:[#allocation6 + $0xba8] sm:$0xff]
    %v3996 = vld [vmem:[#allocation6 + $0xbb0] sm:$0xff]
    %v3997 = vld [vmem:[#allocation6 + $0xbb8] sm:$0xff]
    %v3998 = vld [vmem:[#allocation6 + $0xbc0] sm:$0xff]
    %v3999 = vld [vmem:[#allocation6 + $0xbc8] sm:$0xff]
    %v4000 = vld [vmem:[#allocation6 + $0xbd0] sm:$0xff]
    %v4001 = vld [vmem:[#allocation6 + $0xbd8] sm:$0xff]
    %v4002 = vld [vmem:[#allocation6 + $0xbe0] sm:$0xff]
    %v4003 = vld [vmem:[#allocation6 + $0xbe8] sm:$0xff]
    %v4004 = vld [vmem:[#allocation6 + $0xbf0] sm:$0xff]
    %v4005 = vld [vmem:[#allocation6 + $0xbf8] sm:$0xff]
    %v4006 = vld [vmem:[#allocation6 + $0xc00] sm:$0xff]
    %v4007 = vld [vmem:[#allocation6 + $0xc08] sm:$0xff]
    %v4008 = vld [vmem:[#allocation6 + $0xc10] sm:$0xff]
    %v4009 = vld [vmem:[#allocation6 + $0xc18] sm:$0xff]
    %v4010 = vld [vmem:[#allocation6 + $0xc20] sm:$0xff]
    %v4011 = vld [vmem:[#allocation6 + $0xc28] sm:$0xff]
    %v4012 = vld [vmem:[#allocation6 + $0xc30] sm:$0xff]
    %v4013 = vld [vmem:[#allocation6 + $0xc38] sm:$0xff]
    %v4014 = vld [vmem:[#allocation6 + $0xc40] sm:$0xff]
    %v4015 = vld [vmem:[#allocation6 + $0xc48] sm:$0xff]
    %v4016 = vld [vmem:[#allocation6 + $0xc50] sm:$0xff]
    %v4017 = vld [vmem:[#allocation6 + $0xc58] sm:$0xff]
    %v4018 = vld [vmem:[#allocation6 + $0xc60] sm:$0xff]
    %v4019 = vld [vmem:[#allocation6 + $0xc68] sm:$0xff]
    %v4020 = vld [vmem:[#allocation6 + $0xc70] sm:$0xff]
    %v4021 = vld [vmem:[#allocation6 + $0xc78] sm:$0xff]
    %v4022 = vld [vmem:[#allocation6 + $0xc80] sm:$0xff]
    %v4023 = vld [vmem:[#allocation6 + $0xc88] sm:$0xff]
    %v4024 = vld [vmem:[#allocation6 + $0xc90] sm:$0xff]
    %v4025 = vld [vmem:[#allocation6 + $0xc98] sm:$0xff]
    %v4026 = vld [vmem:[#allocation6 + $0xca0] sm:$0xff]
    %v4027 = vld [vmem:[#allocation6 + $0xca8] sm:$0xff]
    %v4028 = vld [vmem:[#allocation6 + $0xcb0] sm:$0xff]
    %v4029 = vld [vmem:[#allocation6 + $0xcb8] sm:$0xff]
    %v4030 = vld [vmem:[#allocation6 + $0xcc0] sm:$0xff]
    %v4031 = vld [vmem:[#allocation6 + $0xcc8] sm:$0xff]
    %v4032 = vld [vmem:[#allocation6 + $0xcd0] sm:$0xff]
    %v4033 = vld [vmem:[#allocation6 + $0xcd8] sm:$0xff]
    %v4034 = vld [vmem:[#allocation6 + $0xce0] sm:$0xff]
    %v4035 = vld [vmem:[#allocation6 + $0xce8] sm:$0xff]
    %v4036 = vld [vmem:[#allocation6 + $0xcf0] sm:$0xff]
    %v4037 = vld [vmem:[#allocation6 + $0xcf8] sm:$0xff]
    %v4038 = vld [vmem:[#allocation6 + $0xd00] sm:$0xff]
    %v4039 = vld [vmem:[#allocation6 + $0xd08] sm:$0xff]
    %v4040 = vld [vmem:[#allocation6 + $0xd10] sm:$0xff]
    %v4041 = vld [vmem:[#allocation6 + $0xd18] sm:$0xff]
    %v4042 = vld [vmem:[#allocation6 + $0xd20] sm:$0xff]
    %v4043 = vld [vmem:[#allocation6 + $0xd28] sm:$0xff]
    %v4044 = vld [vmem:[#allocation6 + $0xd30] sm:$0xff]
    %v4045 = vld [vmem:[#allocation6 + $0xd38] sm:$0xff]
    %v4046 = vld [vmem:[#allocation6 + $0xd40] sm:$0xff]
    %v4047 = vld [vmem:[#allocation6 + $0xd48] sm:$0xff]
    %v4048 = vld [vmem:[#allocation6 + $0xd50] sm:$0xff]
    %v4049 = vld [vmem:[#allocation6 + $0xd58] sm:$0xff]
    %v4050 = vld [vmem:[#allocation6 + $0xd60] sm:$0xff]
    %v4051 = vld [vmem:[#allocation6 + $0xd68] sm:$0xff]
    %v4052 = vld [vmem:[#allocation6 + $0xd70] sm:$0xff]
    %v4053 = vld [vmem:[#allocation6 + $0xd78] sm:$0xff]
    %v4054 = vld [vmem:[#allocation6 + $0xd80] sm:$0xff]
    %v4055 = vld [vmem:[#allocation6 + $0xd88] sm:$0xff]
    %v4056 = vld [vmem:[#allocation6 + $0xd90] sm:$0xff]
    %v4057 = vld [vmem:[#allocation6 + $0xd98] sm:$0xff]
    %v4058 = vld [vmem:[#allocation6 + $0xda0] sm:$0xff]
    %v4059 = vld [vmem:[#allocation6 + $0xda8] sm:$0xff]
    %v4060 = vld [vmem:[#allocation6 + $0xdb0] sm:$0xff]
    %v4061 = vld [vmem:[#allocation6 + $0xdb8] sm:$0xff]
    %v4062 = vld [vmem:[#allocation6 + $0xdc0] sm:$0xff]
    %v4063 = vld [vmem:[#allocation6 + $0xdc8] sm:$0xff]
    %v4064 = vld [vmem:[#allocation6 + $0xdd0] sm:$0xff]
    %v4065 = vld [vmem:[#allocation6 + $0xdd8] sm:$0xff]
    %v4066 = vld [vmem:[#allocation6 + $0xde0] sm:$0xff]
    %v4067 = vld [vmem:[#allocation6 + $0xde8] sm:$0xff]
    %v4068 = vld [vmem:[#allocation6 + $0xdf0] sm:$0xff]
    %v4069 = vld [vmem:[#allocation6 + $0xdf8] sm:$0xff]
    %v4070 = vld [vmem:[#allocation6 + $0xe00] sm:$0xff]
    %v4071 = vld [vmem:[#allocation6 + $0xe08] sm:$0xff]
    %v4072 = vld [vmem:[#allocation6 + $0xe10] sm:$0xff]
    %v4073 = vld [vmem:[#allocation6 + $0xe18] sm:$0xff]
    %v4074 = vld [vmem:[#allocation6 + $0xe20] sm:$0xff]
    %v4075 = vld [vmem:[#allocation6 + $0xe28] sm:$0xff]
    %v4076 = vld [vmem:[#allocation6 + $0xe30] sm:$0xff]
    %v4077 = vld [vmem:[#allocation6 + $0xe38] sm:$0xff]
    %v4078 = vld [vmem:[#allocation6 + $0xe40] sm:$0xff]
    %v4079 = vld [vmem:[#allocation6 + $0xe48] sm:$0xff]
    %v4080 = vld [vmem:[#allocation6 + $0xe50] sm:$0xff]
    %v4081 = vld [vmem:[#allocation6 + $0xe58] sm:$0xff]
    %v4082 = vld [vmem:[#allocation6 + $0xe60] sm:$0xff]
    %v4083 = vld [vmem:[#allocation6 + $0xe68] sm:$0xff]
    %v4084 = vld [vmem:[#allocation6 + $0xe70] sm:$0xff]
    %v4085 = vld [vmem:[#allocation6 + $0xe78] sm:$0xff]
    %v4086 = vld [vmem:[#allocation6 + $0xe80] sm:$0xff]
    %v4087 = vld [vmem:[#allocation6 + $0xe88] sm:$0xff]
    %v4088 = vld [vmem:[#allocation6 + $0xe90] sm:$0xff]
    %v4089 = vld [vmem:[#allocation6 + $0xe98] sm:$0xff]
    %v4090 = vld [vmem:[#allocation6 + $0xea0] sm:$0xff]
    %v4091 = vld [vmem:[#allocation6 + $0xea8] sm:$0xff]
    %v4092 = vld [vmem:[#allocation6 + $0xeb0] sm:$0xff]
    %v4093 = vld [vmem:[#allocation6 + $0xeb8] sm:$0xff]
    %v4094 = vld [vmem:[#allocation6 + $0xec0] sm:$0xff]
    %v4095 = vld [vmem:[#allocation6 + $0xec8] sm:$0xff]
    %v4096 = vld [vmem:[#allocation6 + $0xed0] sm:$0xff]
    %v4097 = vld [vmem:[#allocation6 + $0xed8] sm:$0xff]
    %v4098 = vld [vmem:[#allocation6 + $0xee0] sm:$0xff]
    %v4099 = vld [vmem:[#allocation6 + $0xee8] sm:$0xff]
    %v4100 = vld [vmem:[#allocation6 + $0xef0] sm:$0xff]
    %v4101 = vld [vmem:[#allocation6 + $0xef8] sm:$0xff]
    %v4102 = vld [vmem:[#allocation6 + $0xf00] sm:$0xff]
    %v4103 = vld [vmem:[#allocation6 + $0xf08] sm:$0xff]
    %v4104 = vld [vmem:[#allocation6 + $0xf10] sm:$0xff]
    %v4105 = vld [vmem:[#allocation6 + $0xf18] sm:$0xff]
    %v4106 = vld [vmem:[#allocation6 + $0xf20] sm:$0xff]
    %v4107 = vld [vmem:[#allocation6 + $0xf28] sm:$0xff]
    %v4108 = vld [vmem:[#allocation6 + $0xf30] sm:$0xff]
    %v4109 = vld [vmem:[#allocation6 + $0xf38] sm:$0xff]
    %v4110 = vld [vmem:[#allocation6 + $0xf40] sm:$0xff]
    %v4111 = vld [vmem:[#allocation6 + $0xf48] sm:$0xff]
    %v4112 = vld [vmem:[#allocation6 + $0xf50] sm:$0xff]
    %v4113 = vld [vmem:[#allocation6 + $0xf58] sm:$0xff]
    %v4114 = vld [vmem:[#allocation6 + $0xf60] sm:$0xff]
    %v4115 = vld [vmem:[#allocation6 + $0xf68] sm:$0xff]
    %v4116 = vld [vmem:[#allocation6 + $0xf70] sm:$0xff]
    %v4117 = vld [vmem:[#allocation6 + $0xf78] sm:$0xff]
    %v4118 = vld [vmem:[#allocation6 + $0xf80] sm:$0xff]
    %v4119 = vld [vmem:[#allocation6 + $0xf88] sm:$0xff]
    %v4120 = vld [vmem:[#allocation6 + $0xf90] sm:$0xff]
    %v4121 = vld [vmem:[#allocation6 + $0xf98] sm:$0xff]
    %v4122 = vld [vmem:[#allocation6 + $0xfa0] sm:$0xff]
    %v4123 = vld [vmem:[#allocation6 + $0xfa8] sm:$0xff]
    %v4124 = vld [vmem:[#allocation6 + $0xfb0] sm:$0xff]
    %v4125 = vld [vmem:[#allocation6 + $0xfb8] sm:$0xff]
    %v4126 = vld [vmem:[#allocation6 + $0xfc0] sm:$0xff]
    %v4127 = vld [vmem:[#allocation6 + $0xfc8] sm:$0xff]
    %v4128 = vld [vmem:[#allocation6 + $0xfd0] sm:$0xff]
    %v4129 = vld [vmem:[#allocation6 + $0xfd8] sm:$0xff]
    %v4130 = vld [vmem:[#allocation6 + $0xfe0] sm:$0xff]
    %v4131 = vld [vmem:[#allocation6 + $0xfe8] sm:$0xff]
    %v4132 = vld [vmem:[#allocation6 + $0xff0] sm:$0xff]
    %v4133 = vld [vmem:[#allocation6 + $0xff8] sm:$0xff]
    %v4134 = vld [vmem:[#allocation6 + $0x1000] sm:$0xff]
    %v4135 = vld [vmem:[#allocation6 + $0x1008] sm:$0xff]
    %v4136 = vld [vmem:[#allocation6 + $0x1010] sm:$0xff]
    %v4137 = vld [vmem:[#allocation6 + $0x1018] sm:$0xff]
    %v4138 = vld [vmem:[#allocation6 + $0x1020] sm:$0xff]
    %v4139 = vld [vmem:[#allocation6 + $0x1028] sm:$0xff]
    %v4140 = vld [vmem:[#allocation6 + $0x1030] sm:$0xff]
    %v4141 = vld [vmem:[#allocation6 + $0x1038] sm:$0xff]
    %v4142 = vld [vmem:[#allocation6 + $0x1040] sm:$0xff]
    %v4143 = vld [vmem:[#allocation6 + $0x1048] sm:$0xff]
    %v4144 = vld [vmem:[#allocation6 + $0x1050] sm:$0xff]
    %v4145 = vld [vmem:[#allocation6 + $0x1058] sm:$0xff]
    %v4146 = vld [vmem:[#allocation6 + $0x1060] sm:$0xff]
    %v4147 = vld [vmem:[#allocation6 + $0x1068] sm:$0xff]
    %v4148 = vld [vmem:[#allocation6 + $0x1070] sm:$0xff]
    %v4149 = vld [vmem:[#allocation6 + $0x1078] sm:$0xff]
    %v4150 = vld [vmem:[#allocation6 + $0x1080] sm:$0xff]
    %v4151 = vld [vmem:[#allocation6 + $0x1088] sm:$0xff]
    %v4152 = vld [vmem:[#allocation6 + $0x1090] sm:$0xff]
    %v4153 = vld [vmem:[#allocation6 + $0x1098] sm:$0xff]
    %v4154 = vld [vmem:[#allocation6 + $0x10a0] sm:$0xff]
    %v4155 = vld [vmem:[#allocation6 + $0x10a8] sm:$0xff]
    %v4156 = vld [vmem:[#allocation6 + $0x10b0] sm:$0xff]
    %v4157 = vld [vmem:[#allocation6 + $0x10b8] sm:$0xff]
    %v4158 = vld [vmem:[#allocation6 + $0x10c0] sm:$0xff]
    %v4159 = vld [vmem:[#allocation6 + $0x10c8] sm:$0xff]
    %v4160 = vld [vmem:[#allocation6 + $0x10d0] sm:$0xff]
    %v4161 = vld [vmem:[#allocation6 + $0x10d8] sm:$0xff]
    %v4162 = vld [vmem:[#allocation6 + $0x10e0] sm:$0xff]
    %v4163 = vld [vmem:[#allocation6 + $0x10e8] sm:$0xff]
    %v4164 = vld [vmem:[#allocation6 + $0x10f0] sm:$0xff]
    %v4165 = vld [vmem:[#allocation6 + $0x10f8] sm:$0xff]
    %v4166 = vld [vmem:[#allocation6 + $0x1100] sm:$0xff]
    %v4167 = vld [vmem:[#allocation6 + $0x1108] sm:$0xff]
    %v4168 = vld [vmem:[#allocation6 + $0x1110] sm:$0xff]
    %v4169 = vld [vmem:[#allocation6 + $0x1118] sm:$0xff]
    %v4170 = vld [vmem:[#allocation6 + $0x1120] sm:$0xff]
    %v4171 = vld [vmem:[#allocation6 + $0x1128] sm:$0xff]
    %v4172 = vld [vmem:[#allocation6 + $0x1130] sm:$0xff]
    %v4173 = vld [vmem:[#allocation6 + $0x1138] sm:$0xff]
    %v4174 = vld [vmem:[#allocation6 + $0x1140] sm:$0xff]
    %v4175 = vld [vmem:[#allocation6 + $0x1148] sm:$0xff]
    %v4176 = vld [vmem:[#allocation6 + $0x1150] sm:$0xff]
    %v4177 = vld [vmem:[#allocation6 + $0x1158] sm:$0xff]
    %v4178 = vld [vmem:[#allocation6 + $0x1160] sm:$0xff]
    %v4179 = vld [vmem:[#allocation6 + $0x1168] sm:$0xff]
    %v4180 = vld [vmem:[#allocation6 + $0x1170] sm:$0xff]
    %v4181 = vld [vmem:[#allocation6 + $0x1178] sm:$0xff]
    %v4182 = vld [vmem:[#allocation6 + $0x1180] sm:$0xff]
    %v4183 = vld [vmem:[#allocation6 + $0x1188] sm:$0xff]
    %v4184 = vld [vmem:[#allocation6 + $0x1190] sm:$0xff]
    %v4185 = vld [vmem:[#allocation6 + $0x1198] sm:$0xff]
    %v4186 = vld [vmem:[#allocation6 + $0x11a0] sm:$0xff]
    %v4187 = vld [vmem:[#allocation6 + $0x11a8] sm:$0xff]
    %v4188 = vld [vmem:[#allocation6 + $0x11b0] sm:$0xff]
    %v4189 = vld [vmem:[#allocation6 + $0x11b8] sm:$0xff]
    %v4190 = vld [vmem:[#allocation6 + $0x11c0] sm:$0xff]
    %v4191 = vld [vmem:[#allocation6 + $0x11c8] sm:$0xff]
    %v4192 = vld [vmem:[#allocation6 + $0x11d0] sm:$0xff]
    %v4193 = vld [vmem:[#allocation6 + $0x11d8] sm:$0xff]
    %v4194 = vld [vmem:[#allocation6 + $0x11e0] sm:$0xff]
    %v4195 = vld [vmem:[#allocation6 + $0x11e8] sm:$0xff]
    %v4196 = vld [vmem:[#allocation6 + $0x11f0] sm:$0xff]
    %v4197 = vld [vmem:[#allocation6 + $0x11f8] sm:$0xff]
    %v4198 = vld [vmem:[#allocation27] sm:$0xff]
    %v4199 = vld [vmem:[#allocation27 + $0x8] sm:$0xff]
    %v4200 = vld [vmem:[#allocation27 + $0x10] sm:$0xff]
    %v4201 = vld [vmem:[#allocation27 + $0x18] sm:$0xff]
    %v4202 = vld [vmem:[#allocation27 + $0x20] sm:$0xf]
    %v4208 = vlaneseq
    %v4209 = vshrl.u32 %v4208, 7
    %v4210 = vsub.s32 0, %v4209
    %v4211 = vrot.slane %v4198, %v4210
    %v4212 = vlaneseq
    %v4213 = vshrl.u32 %v4212, 7
    %v4214 = vsub.s32 1, %v4213
    %v4215 = vrot.slane %v4198, %v4214
    %v4216 = vlaneseq
    %v4217 = vshrl.u32 %v4216, 7
    %v4218 = vsub.s32 2, %v4217
    %v4219 = vrot.slane %v4198, %v4218
    %v4220 = vlaneseq
    %v4221 = vshrl.u32 %v4220, 7
    %v4222 = vsub.s32 3, %v4221
    %v4223 = vrot.slane %v4198, %v4222
    %v4224 = vlaneseq
    %v4225 = vshrl.u32 %v4224, 7
    %v4226 = vsub.s32 4, %v4225
    %v4227 = vrot.slane %v4198, %v4226
    %v4228 = vlaneseq
    %v4229 = vshrl.u32 %v4228, 7
    %v4230 = vsub.s32 5, %v4229
    %v4231 = vrot.slane %v4198, %v4230
    %v4232 = vlaneseq
    %v4233 = vshrl.u32 %v4232, 7
    %v4234 = vsub.s32 6, %v4233
    %v4235 = vrot.slane %v4198, %v4234
    %v4236 = vlaneseq
    %v4237 = vshrl.u32 %v4236, 7
    %v4238 = vsub.s32 7, %v4237
    %v4239 = vrot.slane %v4198, %v4238
    %v4240 = vlaneseq
    %v4241 = vshrl.u32 %v4240, 7
    %v4242 = vsub.s32 0, %v4241
    %v4243 = vrot.slane %v4199, %v4242
    %v4244 = vlaneseq
    %v4245 = vshrl.u32 %v4244, 7
    %v4246 = vsub.s32 1, %v4245
    %v4247 = vrot.slane %v4199, %v4246
    %v4248 = vlaneseq
    %v4249 = vshrl.u32 %v4248, 7
    %v4250 = vsub.s32 2, %v4249
    %v4251 = vrot.slane %v4199, %v4250
    %v4252 = vlaneseq
    %v4253 = vshrl.u32 %v4252, 7
    %v4254 = vsub.s32 3, %v4253
    %v4255 = vrot.slane %v4199, %v4254
    %v4256 = vlaneseq
    %v4257 = vshrl.u32 %v4256, 7
    %v4258 = vsub.s32 4, %v4257
    %v4259 = vrot.slane %v4199, %v4258
    %v4260 = vlaneseq
    %v4261 = vshrl.u32 %v4260, 7
    %v4262 = vsub.s32 5, %v4261
    %v4263 = vrot.slane %v4199, %v4262
    %v4264 = vlaneseq
    %v4265 = vshrl.u32 %v4264, 7
    %v4266 = vsub.s32 6, %v4265
    %v4267 = vrot.slane %v4199, %v4266
    %v4268 = vlaneseq
    %v4269 = vshrl.u32 %v4268, 7
    %v4270 = vsub.s32 7, %v4269
    %v4271 = vrot.slane %v4199, %v4270
    %v4272 = vlaneseq
    %v4273 = vshrl.u32 %v4272, 7
    %v4274 = vsub.s32 0, %v4273
    %v4275 = vrot.slane %v4200, %v4274
    %v4276 = vlaneseq
    %v4277 = vshrl.u32 %v4276, 7
    %v4278 = vsub.s32 1, %v4277
    %v4279 = vrot.slane %v4200, %v4278
    %v4280 = vlaneseq
    %v4281 = vshrl.u32 %v4280, 7
    %v4282 = vsub.s32 2, %v4281
    %v4283 = vrot.slane %v4200, %v4282
    %v4284 = vlaneseq
    %v4285 = vshrl.u32 %v4284, 7
    %v4286 = vsub.s32 3, %v4285
    %v4287 = vrot.slane %v4200, %v4286
    %v4288 = vlaneseq
    %v4289 = vshrl.u32 %v4288, 7
    %v4290 = vsub.s32 4, %v4289
    %v4291 = vrot.slane %v4200, %v4290
    %v4292 = vlaneseq
    %v4293 = vshrl.u32 %v4292, 7
    %v4294 = vsub.s32 5, %v4293
    %v4295 = vrot.slane %v4200, %v4294
    %v4296 = vlaneseq
    %v4297 = vshrl.u32 %v4296, 7
    %v4298 = vsub.s32 6, %v4297
    %v4299 = vrot.slane %v4200, %v4298
    %v4300 = vlaneseq
    %v4301 = vshrl.u32 %v4300, 7
    %v4302 = vsub.s32 7, %v4301
    %v4303 = vrot.slane %v4200, %v4302
    %v4304 = vlaneseq
    %v4305 = vshrl.u32 %v4304, 7
    %v4306 = vsub.s32 0, %v4305
    %v4307 = vrot.slane %v4201, %v4306
    %v4308 = vlaneseq
    %v4309 = vshrl.u32 %v4308, 7
    %v4310 = vsub.s32 1, %v4309
    %v4311 = vrot.slane %v4201, %v4310
    %v4312 = vlaneseq
    %v4313 = vshrl.u32 %v4312, 7
    %v4314 = vsub.s32 2, %v4313
    %v4315 = vrot.slane %v4201, %v4314
    %v4316 = vlaneseq
    %v4317 = vshrl.u32 %v4316, 7
    %v4318 = vsub.s32 3, %v4317
    %v4319 = vrot.slane %v4201, %v4318
    %v4320 = vlaneseq
    %v4321 = vshrl.u32 %v4320, 7
    %v4322 = vsub.s32 4, %v4321
    %v4323 = vrot.slane %v4201, %v4322
    %v4324 = vlaneseq
    %v4325 = vshrl.u32 %v4324, 7
    %v4326 = vsub.s32 5, %v4325
    %v4327 = vrot.slane %v4201, %v4326
    %v4328 = vlaneseq
    %v4329 = vshrl.u32 %v4328, 7
    %v4330 = vsub.s32 6, %v4329
    %v4331 = vrot.slane %v4201, %v4330
    %v4332 = vlaneseq
    %v4333 = vshrl.u32 %v4332, 7
    %v4334 = vsub.s32 7, %v4333
    %v4335 = vrot.slane %v4201, %v4334
    %v4336 = vlaneseq
    %v4337 = vshrl.u32 %v4336, 7
    %v4338 = vsub.s32 0, %v4337
    %v4339 = vrot.slane %v4202, %v4338
    %v4340 = vlaneseq
    %v4341 = vshrl.u32 %v4340, 7
    %v4342 = vsub.s32 1, %v4341
    %v4343 = vrot.slane %v4202, %v4342
    %v4344 = vlaneseq
    %v4345 = vshrl.u32 %v4344, 7
    %v4346 = vsub.s32 2, %v4345
    %v4347 = vrot.slane %v4202, %v4346
    %v4348 = vlaneseq
    %v4349 = vshrl.u32 %v4348, 7
    %v4350 = vsub.s32 3, %v4349
    %v4351 = vrot.slane %v4202, %v4350
    %4388 = vmatprep.subr.bf16.mxu0 %v3623
    %4389 = vmatpush1.bf16.msra.mxu0 %v3622
    %4390 = vmatprep.subr.bf16.mxu0 %v3659
    %4391 = vmatpush1.bf16.msra.mxu0 %v3658
    %4392 = vmatprep.subr.bf16.mxu0 %v3695
    %4393 = vmatpush1.bf16.msra.mxu0 %v3694
    %4394 = vmatprep.subr.bf16.mxu0 %v3731
    %4395 = vmatpush1.bf16.msra.mxu0 %v3730
    %4396 = vmatprep.subr.bf16.mxu0 %v3767
    %4397 = vmatpush1.bf16.msra.mxu0 %v3766
    %4398 = vmatprep.subr.bf16.mxu0 %v3803
    %4399 = vmatpush1.bf16.msra.mxu0 %v3802
    %4400 = vmatprep.subr.bf16.mxu0 %v3839
    %4401 = vmatpush1.bf16.msra.mxu0 %v3838
    %4402 = vmatprep.subr.bf16.mxu0 %v3875
    %4403 = vmatpush1.bf16.msra.mxu0 %v3874
    %4404 = vmatprep.subr.bf16.mxu0 %v3911
    %4405 = vmatpush1.bf16.msra.mxu0 %v3910
    %4406 = vmatprep.subr.bf16.mxu0 %v3947
    %4407 = vmatpush1.bf16.msra.mxu0 %v3946
    %4408 = vmatprep.subr.bf16.mxu0 %v3983
    %4409 = vmatpush1.bf16.msra.mxu0 %v3982
    %4410 = vmatprep.subr.bf16.mxu0 %v4019
    %4411 = vmatpush1.bf16.msra.mxu0 %v4018
    %4412 = vmatprep.subr.bf16.mxu0 %v4055
    %4413 = vmatpush1.bf16.msra.mxu0 %v4054
    %4414 = vmatprep.subr.bf16.mxu0 %v4091
    %4415 = vmatpush1.bf16.msra.mxu0 %v4090
    %4416 = vmatprep.subr.bf16.mxu0 %v4127
    %4417 = vmatpush1.bf16.msra.mxu0 %v4126
    %4418 = vmatprep.subr.bf16.mxu0 %v4163
    %4419 = vmatpush1.bf16.msra.mxu0 %v4162
    %4420 = vmatprep.mubr.bf16.mxu0 %v3621
    %4421 = vmatmul.mubr.bf16.gmra.mrb[0].mxu0 %v3620
    %v4422 = vpop.f32.mrb[0].mxu0
    %v4423 = vadd.f32 %v4211, %v4422
    %v4424 = vpop.f32.mrb[0].mxu0
    %v4425 = vadd.f32 %v4215, %v4424
    %v4426 = vpop.f32.mrb[0].mxu0
    %v4427 = vadd.f32 %v4211, %v4426
    %v4428 = vpop.f32.mrb[0].mxu0
    %v4429 = vadd.f32 %v4215, %v4428
    %4430 = vdwg.mxu0
    %4431 = vmatprep.subr.bf16.mxu0 %v3625
    %4432 = vmatpush1.bf16.msra.mxu0 %v3624
    %4433 = vmatprep.subr.bf16.mxu0 %v3661
    %4434 = vmatpush1.bf16.msra.mxu0 %v3660
    %4435 = vmatprep.subr.bf16.mxu0 %v3697
    %4436 = vmatpush1.bf16.msra.mxu0 %v3696
    %4437 = vmatprep.subr.bf16.mxu0 %v3733
    %4438 = vmatpush1.bf16.msra.mxu0 %v3732
    %4439 = vmatprep.subr.bf16.mxu0 %v3769
    %4440 = vmatpush1.bf16.msra.mxu0 %v3768
    %4441 = vmatprep.subr.bf16.mxu0 %v3805
    %4442 = vmatpush1.bf16.msra.mxu0 %v3804
    %4443 = vmatprep.subr.bf16.mxu0 %v3841
    %4444 = vmatpush1.bf16.msra.mxu0 %v3840
    %4445 = vmatprep.subr.bf16.mxu0 %v3877
    %4446 = vmatpush1.bf16.msra.mxu0 %v3876
    %4447 = vmatprep.subr.bf16.mxu0 %v3913
    %4448 = vmatpush1.bf16.msra.mxu0 %v3912
    %4449 = vmatprep.subr.bf16.mxu0 %v3949
    %4450 = vmatpush1.bf16.msra.mxu0 %v3948
    %4451 = vmatprep.subr.bf16.mxu0 %v3985
    %4452 = vmatpush1.bf16.msra.mxu0 %v3984
    %4453 = vmatprep.subr.bf16.mxu0 %v4021
    %4454 = vmatpush1.bf16.msra.mxu0 %v4020
    %4455 = vmatprep.subr.bf16.mxu0 %v4057
    %4456 = vmatpush1.bf16.msra.mxu0 %v4056
    %4457 = vmatprep.subr.bf16.mxu0 %v4093
    %4458 = vmatpush1.bf16.msra.mxu0 %v4092
    %4459 = vmatprep.subr.bf16.mxu0 %v4129
    %4460 = vmatpush1.bf16.msra.mxu0 %v4128
    %4461 = vmatprep.subr.bf16.mxu0 %v4165
    %4462 = vmatpush1.bf16.msra.mxu0 %v4164
    %4463 = vmatprep.mubr.bf16.mxu0 %v3621
    %4464 = vmatmul.mubr.bf16.gmra.mrb[0].mxu0 %v3620
    %v4465 = vpop.f32.mrb[0].mxu0
    %v4466 = vadd.f32 %v4219, %v4465
    %v4467 = vpop.f32.mrb[0].mxu0
    %v4468 = vadd.f32 %v4223, %v4467
    %v4469 = vpop.f32.mrb[0].mxu0
    %v4470 = vadd.f32 %v4219, %v4469
    %v4471 = vpop.f32.mrb[0].mxu0
    %v4472 = vadd.f32 %v4223, %v4471
    %4473 = vdwg.mxu0
    %4474 = vmatprep.subr.bf16.mxu0 %v3627
    %4475 = vmatpush1.bf16.msra.mxu0 %v3626
    %4476 = vmatprep.subr.bf16.mxu0 %v3663
    %4477 = vmatpush1.bf16.msra.mxu0 %v3662
    %4478 = vmatprep.subr.bf16.mxu0 %v3699
    %4479 = vmatpush1.bf16.msra.mxu0 %v3698
    %4480 = vmatprep.subr.bf16.mxu0 %v3735
    %4481 = vmatpush1.bf16.msra.mxu0 %v3734
    %4482 = vmatprep.subr.bf16.mxu0 %v3771
    %4483 = vmatpush1.bf16.msra.mxu0 %v3770
    %4484 = vmatprep.subr.bf16.mxu0 %v3807
    %4485 = vmatpush1.bf16.msra.mxu0 %v3806
    %4486 = vmatprep.subr.bf16.mxu0 %v3843
    %4487 = vmatpush1.bf16.msra.mxu0 %v3842
    %4488 = vmatprep.subr.bf16.mxu0 %v3879
    %4489 = vmatpush1.bf16.msra.mxu0 %v3878
    %4490 = vmatprep.subr.bf16.mxu0 %v3915
    %4491 = vmatpush1.bf16.msra.mxu0 %v3914
    %4492 = vmatprep.subr.bf16.mxu0 %v3951
    %4493 = vmatpush1.bf16.msra.mxu0 %v3950
    %4494 = vmatprep.subr.bf16.mxu0 %v3987
    %4495 = vmatpush1.bf16.msra.mxu0 %v3986
    %4496 = vmatprep.subr.bf16.mxu0 %v4023
    %4497 = vmatpush1.bf16.msra.mxu0 %v4022
    %4498 = vmatprep.subr.bf16.mxu0 %v4059
    %4499 = vmatpush1.bf16.msra.mxu0 %v4058
    %4500 = vmatprep.subr.bf16.mxu0 %v4095
    %4501 = vmatpush1.bf16.msra.mxu0 %v4094
    %4502 = vmatprep.subr.bf16.mxu0 %v4131
    %4503 = vmatpush1.bf16.msra.mxu0 %v4130
    %4504 = vmatprep.subr.bf16.mxu0 %v4167
    %4505 = vmatpush1.bf16.msra.mxu0 %v4166
    %4506 = vmatprep.mubr.bf16.mxu0 %v3621
    %4507 = vmatmul.mubr.bf16.gmra.mrb[0].mxu0 %v3620
    %v4508 = vpop.f32.mrb[0].mxu0
    %v4509 = vadd.f32 %v4227, %v4508
    %v4510 = vpop.f32.mrb[0].mxu0
    %v4511 = vadd.f32 %v4231, %v4510
    %v4512 = vpop.f32.mrb[0].mxu0
    %v4513 = vadd.f32 %v4227, %v4512
    %v4514 = vpop.f32.mrb[0].mxu0
    %v4515 = vadd.f32 %v4231, %v4514
    %4516 = vdwg.mxu0
    %4517 = vmatprep.subr.bf16.mxu0 %v3629
    %4518 = vmatpush1.bf16.msra.mxu0 %v3628
    %4519 = vmatprep.subr.bf16.mxu0 %v3665
    %4520 = vmatpush1.bf16.msra.mxu0 %v3664
    %4521 = vmatprep.subr.bf16.mxu0 %v3701
    %4522 = vmatpush1.bf16.msra.mxu0 %v3700
    %4523 = vmatprep.subr.bf16.mxu0 %v3737
    %4524 = vmatpush1.bf16.msra.mxu0 %v3736
    %4525 = vmatprep.subr.bf16.mxu0 %v3773
    %4526 = vmatpush1.bf16.msra.mxu0 %v3772
    %4527 = vmatprep.subr.bf16.mxu0 %v3809
    %4528 = vmatpush1.bf16.msra.mxu0 %v3808
    %4529 = vmatprep.subr.bf16.mxu0 %v3845
    %4530 = vmatpush1.bf16.msra.mxu0 %v3844
    %4531 = vmatprep.subr.bf16.mxu0 %v3881
    %4532 = vmatpush1.bf16.msra.mxu0 %v3880
    %4533 = vmatprep.subr.bf16.mxu0 %v3917
    %4534 = vmatpush1.bf16.msra.mxu0 %v3916
    %4535 = vmatprep.subr.bf16.mxu0 %v3953
    %4536 = vmatpush1.bf16.msra.mxu0 %v3952
    %4537 = vmatprep.subr.bf16.mxu0 %v3989
    %4538 = vmatpush1.bf16.msra.mxu0 %v3988
    %4539 = vmatprep.subr.bf16.mxu0 %v4025
    %4540 = vmatpush1.bf16.msra.mxu0 %v4024
    %4541 = vmatprep.subr.bf16.mxu0 %v4061
    %4542 = vmatpush1.bf16.msra.mxu0 %v4060
    %4543 = vmatprep.subr.bf16.mxu0 %v4097
    %4544 = vmatpush1.bf16.msra.mxu0 %v4096
    %4545 = vmatprep.subr.bf16.mxu0 %v4133
    %4546 = vmatpush1.bf16.msra.mxu0 %v4132
    %4547 = vmatprep.subr.bf16.mxu0 %v4169
    %4548 = vmatpush1.bf16.msra.mxu0 %v4168
    %4549 = vmatprep.mubr.bf16.mxu0 %v3621
    %4550 = vmatmul.mubr.bf16.gmra.mrb[0].mxu0 %v3620
    %v4551 = vpop.f32.mrb[0].mxu0
    %v4552 = vadd.f32 %v4235, %v4551
    %v4553 = vpop.f32.mrb[0].mxu0
    %v4554 = vadd.f32 %v4239, %v4553
    %v4555 = vpop.f32.mrb[0].mxu0
    %v4556 = vadd.f32 %v4235, %v4555
    %v4557 = vpop.f32.mrb[0].mxu0
    %v4558 = vadd.f32 %v4239, %v4557
    %4559 = vdwg.mxu0
    %4560 = vmatprep.subr.bf16.mxu0 %v3631
    %4561 = vmatpush1.bf16.msra.mxu0 %v3630
    %4562 = vmatprep.subr.bf16.mxu0 %v3667
    %4563 = vmatpush1.bf16.msra.mxu0 %v3666
    %4564 = vmatprep.subr.bf16.mxu0 %v3703
    %4565 = vmatpush1.bf16.msra.mxu0 %v3702
    %4566 = vmatprep.subr.bf16.mxu0 %v3739
    %4567 = vmatpush1.bf16.msra.mxu0 %v3738
    %4568 = vmatprep.subr.bf16.mxu0 %v3775
    %4569 = vmatpush1.bf16.msra.mxu0 %v3774
    %4570 = vmatprep.subr.bf16.mxu0 %v3811
    %4571 = vmatpush1.bf16.msra.mxu0 %v3810
    %4572 = vmatprep.subr.bf16.mxu0 %v3847
    %4573 = vmatpush1.bf16.msra.mxu0 %v3846
    %4574 = vmatprep.subr.bf16.mxu0 %v3883
    %4575 = vmatpush1.bf16.msra.mxu0 %v3882
    %4576 = vmatprep.subr.bf16.mxu0 %v3919
    %4577 = vmatpush1.bf16.msra.mxu0 %v3918
    %4578 = vmatprep.subr.bf16.mxu0 %v3955
    %4579 = vmatpush1.bf16.msra.mxu0 %v3954
    %4580 = vmatprep.subr.bf16.mxu0 %v3991
    %4581 = vmatpush1.bf16.msra.mxu0 %v3990
    %4582 = vmatprep.subr.bf16.mxu0 %v4027
    %4583 = vmatpush1.bf16.msra.mxu0 %v4026
    %4584 = vmatprep.subr.bf16.mxu0 %v4063
    %4585 = vmatpush1.bf16.msra.mxu0 %v4062
    %4586 = vmatprep.subr.bf16.mxu0 %v4099
    %4587 = vmatpush1.bf16.msra.mxu0 %v4098
    %4588 = vmatprep.subr.bf16.mxu0 %v4135
    %4589 = vmatpush1.bf16.msra.mxu0 %v4134
    %4590 = vmatprep.subr.bf16.mxu0 %v4171
    %4591 = vmatpush1.bf16.msra.mxu0 %v4170
    %4592 = vmatprep.mubr.bf16.mxu0 %v3621
    %4593 = vmatmul.mubr.bf16.gmra.mrb[0].mxu0 %v3620
    %v4594 = vpop.f32.mrb[0].mxu0
    %v4595 = vadd.f32 %v4243, %v4594
    %v4596 = vpop.f32.mrb[0].mxu0
    %v4597 = vadd.f32 %v4247, %v4596
    %v4598 = vpop.f32.mrb[0].mxu0
    %v4599 = vadd.f32 %v4243, %v4598
    %v4600 = vpop.f32.mrb[0].mxu0
    %v4601 = vadd.f32 %v4247, %v4600
    %4602 = vdwg.mxu0
    %4603 = vmatprep.subr.bf16.mxu0 %v3633
    %4604 = vmatpush1.bf16.msra.mxu0 %v3632
    %4605 = vmatprep.subr.bf16.mxu0 %v3669
    %4606 = vmatpush1.bf16.msra.mxu0 %v3668
    %4607 = vmatprep.subr.bf16.mxu0 %v3705
    %4608 = vmatpush1.bf16.msra.mxu0 %v3704
    %4609 = vmatprep.subr.bf16.mxu0 %v3741
    %4610 = vmatpush1.bf16.msra.mxu0 %v3740
    %4611 = vmatprep.subr.bf16.mxu0 %v3777
    %4612 = vmatpush1.bf16.msra.mxu0 %v3776
    %4613 = vmatprep.subr.bf16.mxu0 %v3813
    %4614 = vmatpush1.bf16.msra.mxu0 %v3812
    %4615 = vmatprep.subr.bf16.mxu0 %v3849
    %4616 = vmatpush1.bf16.msra.mxu0 %v3848
    %4617 = vmatprep.subr.bf16.mxu0 %v3885
    %4618 = vmatpush1.bf16.msra.mxu0 %v3884
    %4619 = vmatprep.subr.bf16.mxu0 %v3921
    %4620 = vmatpush1.bf16.msra.mxu0 %v3920
    %4621 = vmatprep.subr.bf16.mxu0 %v3957
    %4622 = vmatpush1.bf16.msra.mxu0 %v3956
    %4623 = vmatprep.subr.bf16.mxu0 %v3993
    %4624 = vmatpush1.bf16.msra.mxu0 %v3992
    %4625 = vmatprep.subr.bf16.mxu0 %v4029
    %4626 = vmatpush1.bf16.msra.mxu0 %v4028
    %4627 = vmatprep.subr.bf16.mxu0 %v4065
    %4628 = vmatpush1.bf16.msra.mxu0 %v4064
    %4629 = vmatprep.subr.bf16.mxu0 %v4101
    %4630 = vmatpush1.bf16.msra.mxu0 %v4100
    %4631 = vmatprep.subr.bf16.mxu0 %v4137
    %4632 = vmatpush1.bf16.msra.mxu0 %v4136
    %4633 = vmatprep.subr.bf16.mxu0 %v4173
    %4634 = vmatpush1.bf16.msra.mxu0 %v4172
    %4635 = vmatprep.mubr.bf16.mxu0 %v3621
    %4636 = vmatmul.mubr.bf16.gmra.mrb[0].mxu0 %v3620
    %v4637 = vpop.f32.mrb[0].mxu0
    %v4638 = vadd.f32 %v4251, %v4637
    %v4639 = vpop.f32.mrb[0].mxu0
    %v4640 = vadd.f32 %v4255, %v4639
    %v4641 = vpop.f32.mrb[0].mxu0
    %v4642 = vadd.f32 %v4251, %v4641
    %v4643 = vpop.f32.mrb[0].mxu0
    %v4644 = vadd.f32 %v4255, %v4643
    %4645 = vdwg.mxu0
    %4646 = vmatprep.subr.bf16.mxu0 %v3635
    %4647 = vmatpush1.bf16.msra.mxu0 %v3634
    %4648 = vmatprep.subr.bf16.mxu0 %v3671
    %4649 = vmatpush1.bf16.msra.mxu0 %v3670
    %4650 = vmatprep.subr.bf16.mxu0 %v3707
    %4651 = vmatpush1.bf16.msra.mxu0 %v3706
    %4652 = vmatprep.subr.bf16.mxu0 %v3743
    %4653 = vmatpush1.bf16.msra.mxu0 %v3742
    %4654 = vmatprep.subr.bf16.mxu0 %v3779
    %4655 = vmatpush1.bf16.msra.mxu0 %v3778
    %4656 = vmatprep.subr.bf16.mxu0 %v3815
    %4657 = vmatpush1.bf16.msra.mxu0 %v3814
    %4658 = vmatprep.subr.bf16.mxu0 %v3851
    %4659 = vmatpush1.bf16.msra.mxu0 %v3850
    %4660 = vmatprep.subr.bf16.mxu0 %v3887
    %4661 = vmatpush1.bf16.msra.mxu0 %v3886
    %4662 = vmatprep.subr.bf16.mxu0 %v3923
    %4663 = vmatpush1.bf16.msra.mxu0 %v3922
    %4664 = vmatprep.subr.bf16.mxu0 %v3959
    %4665 = vmatpush1.bf16.msra.mxu0 %v3958
    %4666 = vmatprep.subr.bf16.mxu0 %v3995
    %4667 = vmatpush1.bf16.msra.mxu0 %v3994
    %4668 = vmatprep.subr.bf16.mxu0 %v4031
    %4669 = vmatpush1.bf16.msra.mxu0 %v4030
    %4670 = vmatprep.subr.bf16.mxu0 %v4067
    %4671 = vmatpush1.bf16.msra.mxu0 %v4066
    %4672 = vmatprep.subr.bf16.mxu0 %v4103
    %4673 = vmatpush1.bf16.msra.mxu0 %v4102
    %4674 = vmatprep.subr.bf16.mxu0 %v4139
    %4675 = vmatpush1.bf16.msra.mxu0 %v4138
    %4676 = vmatprep.subr.bf16.mxu0 %v4175
    %4677 = vmatpush1.bf16.msra.mxu0 %v4174
    %4678 = vmatprep.mubr.bf16.mxu0 %v3621
    %4679 = vmatmul.mubr.bf16.gmra.mrb[0].mxu0 %v3620
    %v4680 = vpop.f32.mrb[0].mxu0
    %v4681 = vadd.f32 %v4259, %v4680
    %v4682 = vpop.f32.mrb[0].mxu0
    %v4683 = vadd.f32 %v4263, %v4682
    %v4684 = vpop.f32.mrb[0].mxu0
    %v4685 = vadd.f32 %v4259, %v4684
    %v4686 = vpop.f32.mrb[0].mxu0
    %v4687 = vadd.f32 %v4263, %v4686
    %4688 = vdwg.mxu0
    %4689 = vmatprep.subr.bf16.mxu0 %v3637
    %4690 = vmatpush1.bf16.msra.mxu0 %v3636
    %4691 = vmatprep.subr.bf16.mxu0 %v3673
    %4692 = vmatpush1.bf16.msra.mxu0 %v3672
    %4693 = vmatprep.subr.bf16.mxu0 %v3709
    %4694 = vmatpush1.bf16.msra.mxu0 %v3708
    %4695 = vmatprep.subr.bf16.mxu0 %v3745
    %4696 = vmatpush1.bf16.msra.mxu0 %v3744
    %4697 = vmatprep.subr.bf16.mxu0 %v3781
    %4698 = vmatpush1.bf16.msra.mxu0 %v3780
    %4699 = vmatprep.subr.bf16.mxu0 %v3817
    %4700 = vmatpush1.bf16.msra.mxu0 %v3816
    %4701 = vmatprep.subr.bf16.mxu0 %v3853
    %4702 = vmatpush1.bf16.msra.mxu0 %v3852
    %4703 = vmatprep.subr.bf16.mxu0 %v3889
    %4704 = vmatpush1.bf16.msra.mxu0 %v3888
    %4705 = vmatprep.subr.bf16.mxu0 %v3925
    %4706 = vmatpush1.bf16.msra.mxu0 %v3924
    %4707 = vmatprep.subr.bf16.mxu0 %v3961
    %4708 = vmatpush1.bf16.msra.mxu0 %v3960
    %4709 = vmatprep.subr.bf16.mxu0 %v3997
    %4710 = vmatpush1.bf16.msra.mxu0 %v3996
    %4711 = vmatprep.subr.bf16.mxu0 %v4033
    %4712 = vmatpush1.bf16.msra.mxu0 %v4032
    %4713 = vmatprep.subr.bf16.mxu0 %v4069
    %4714 = vmatpush1.bf16.msra.mxu0 %v4068
    %4715 = vmatprep.subr.bf16.mxu0 %v4105
    %4716 = vmatpush1.bf16.msra.mxu0 %v4104
    %4717 = vmatprep.subr.bf16.mxu0 %v4141
    %4718 = vmatpush1.bf16.msra.mxu0 %v4140
    %4719 = vmatprep.subr.bf16.mxu0 %v4177
    %4720 = vmatpush1.bf16.msra.mxu0 %v4176
    %4721 = vmatprep.mubr.bf16.mxu0 %v3621
    %4722 = vmatmul.mubr.bf16.gmra.mrb[0].mxu0 %v3620
    %v4723 = vpop.f32.mrb[0].mxu0
    %v4724 = vadd.f32 %v4267, %v4723
    %v4725 = vpop.f32.mrb[0].mxu0
    %v4726 = vadd.f32 %v4271, %v4725
    %v4727 = vpop.f32.mrb[0].mxu0
    %v4728 = vadd.f32 %v4267, %v4727
    %v4729 = vpop.f32.mrb[0].mxu0
    %v4730 = vadd.f32 %v4271, %v4729
    %4731 = vdwg.mxu0
    %4732 = vmatprep.subr.bf16.mxu0 %v3639
    %4733 = vmatpush1.bf16.msra.mxu0 %v3638
    %4734 = vmatprep.subr.bf16.mxu0 %v3675
    %4735 = vmatpush1.bf16.msra.mxu0 %v3674
    %4736 = vmatprep.subr.bf16.mxu0 %v3711
    %4737 = vmatpush1.bf16.msra.mxu0 %v3710
    %4738 = vmatprep.subr.bf16.mxu0 %v3747
    %4739 = vmatpush1.bf16.msra.mxu0 %v3746
    %4740 = vmatprep.subr.bf16.mxu0 %v3783
    %4741 = vmatpush1.bf16.msra.mxu0 %v3782
    %4742 = vmatprep.subr.bf16.mxu0 %v3819
    %4743 = vmatpush1.bf16.msra.mxu0 %v3818
    %4744 = vmatprep.subr.bf16.mxu0 %v3855
    %4745 = vmatpush1.bf16.msra.mxu0 %v3854
    %4746 = vmatprep.subr.bf16.mxu0 %v3891
    %4747 = vmatpush1.bf16.msra.mxu0 %v3890
    %4748 = vmatprep.subr.bf16.mxu0 %v3927
    %4749 = vmatpush1.bf16.msra.mxu0 %v3926
    %4750 = vmatprep.subr.bf16.mxu0 %v3963
    %4751 = vmatpush1.bf16.msra.mxu0 %v3962
    %4752 = vmatprep.subr.bf16.mxu0 %v3999
    %4753 = vmatpush1.bf16.msra.mxu0 %v3998
    %4754 = vmatprep.subr.bf16.mxu0 %v4035
    %4755 = vmatpush1.bf16.msra.mxu0 %v4034
    %4756 = vmatprep.subr.bf16.mxu0 %v4071
    %4757 = vmatpush1.bf16.msra.mxu0 %v4070
    %4758 = vmatprep.subr.bf16.mxu0 %v4107
    %4759 = vmatpush1.bf16.msra.mxu0 %v4106
    %4760 = vmatprep.subr.bf16.mxu0 %v4143
    %4761 = vmatpush1.bf16.msra.mxu0 %v4142
    %4762 = vmatprep.subr.bf16.mxu0 %v4179
    %4763 = vmatpush1.bf16.msra.mxu0 %v4178
    %4764 = vmatprep.mubr.bf16.mxu0 %v3621
    %4765 = vmatmul.mubr.bf16.gmra.mrb[0].mxu0 %v3620
    %v4766 = vpop.f32.mrb[0].mxu0
    %v4767 = vadd.f32 %v4275, %v4766
    %v4768 = vpop.f32.mrb[0].mxu0
    %v4769 = vadd.f32 %v4279, %v4768
    %v4770 = vpop.f32.mrb[0].mxu0
    %v4771 = vadd.f32 %v4275, %v4770
    %v4772 = vpop.f32.mrb[0].mxu0
    %v4773 = vadd.f32 %v4279, %v4772
    %4774 = vdwg.mxu0
    %4775 = vmatprep.subr.bf16.mxu0 %v3641
    %4776 = vmatpush1.bf16.msra.mxu0 %v3640
    %4777 = vmatprep.subr.bf16.mxu0 %v3677
    %4778 = vmatpush1.bf16.msra.mxu0 %v3676
    %4779 = vmatprep.subr.bf16.mxu0 %v3713
    %4780 = vmatpush1.bf16.msra.mxu0 %v3712
    %4781 = vmatprep.subr.bf16.mxu0 %v3749
    %4782 = vmatpush1.bf16.msra.mxu0 %v3748
    %4783 = vmatprep.subr.bf16.mxu0 %v3785
    %4784 = vmatpush1.bf16.msra.mxu0 %v3784
    %4785 = vmatprep.subr.bf16.mxu0 %v3821
    %4786 = vmatpush1.bf16.msra.mxu0 %v3820
    %4787 = vmatprep.subr.bf16.mxu0 %v3857
    %4788 = vmatpush1.bf16.msra.mxu0 %v3856
    %4789 = vmatprep.subr.bf16.mxu0 %v3893
    %4790 = vmatpush1.bf16.msra.mxu0 %v3892
    %4791 = vmatprep.subr.bf16.mxu0 %v3929
    %4792 = vmatpush1.bf16.msra.mxu0 %v3928
    %4793 = vmatprep.subr.bf16.mxu0 %v3965
    %4794 = vmatpush1.bf16.msra.mxu0 %v3964
    %4795 = vmatprep.subr.bf16.mxu0 %v4001
    %4796 = vmatpush1.bf16.msra.mxu0 %v4000
    %4797 = vmatprep.subr.bf16.mxu0 %v4037
    %4798 = vmatpush1.bf16.msra.mxu0 %v4036
    %4799 = vmatprep.subr.bf16.mxu0 %v4073
    %4800 = vmatpush1.bf16.msra.mxu0 %v4072
    %4801 = vmatprep.subr.bf16.mxu0 %v4109
    %4802 = vmatpush1.bf16.msra.mxu0 %v4108
    %4803 = vmatprep.subr.bf16.mxu0 %v4145
    %4804 = vmatpush1.bf16.msra.mxu0 %v4144
    %4805 = vmatprep.subr.bf16.mxu0 %v4181
    %4806 = vmatpush1.bf16.msra.mxu0 %v4180
    %4807 = vmatprep.mubr.bf16.mxu0 %v3621
    %4808 = vmatmul.mubr.bf16.gmra.mrb[0].mxu0 %v3620
    %v4809 = vpop.f32.mrb[0].mxu0
    %v4810 = vadd.f32 %v4283, %v4809
    %v4811 = vpop.f32.mrb[0].mxu0
    %v4812 = vadd.f32 %v4287, %v4811
    %v4813 = vpop.f32.mrb[0].mxu0
    %v4814 = vadd.f32 %v4283, %v4813
    %v4815 = vpop.f32.mrb[0].mxu0
    %v4816 = vadd.f32 %v4287, %v4815
    %4817 = vdwg.mxu0
    %4818 = vmatprep.subr.bf16.mxu0 %v3643
    %4819 = vmatpush1.bf16.msra.mxu0 %v3642
    %4820 = vmatprep.subr.bf16.mxu0 %v3679
    %4821 = vmatpush1.bf16.msra.mxu0 %v3678
    %4822 = vmatprep.subr.bf16.mxu0 %v3715
    %4823 = vmatpush1.bf16.msra.mxu0 %v3714
    %4824 = vmatprep.subr.bf16.mxu0 %v3751
    %4825 = vmatpush1.bf16.msra.mxu0 %v3750
    %4826 = vmatprep.subr.bf16.mxu0 %v3787
    %4827 = vmatpush1.bf16.msra.mxu0 %v3786
    %4828 = vmatprep.subr.bf16.mxu0 %v3823
    %4829 = vmatpush1.bf16.msra.mxu0 %v3822
    %4830 = vmatprep.subr.bf16.mxu0 %v3859
    %4831 = vmatpush1.bf16.msra.mxu0 %v3858
    %4832 = vmatprep.subr.bf16.mxu0 %v3895
    %4833 = vmatpush1.bf16.msra.mxu0 %v3894
    %4834 = vmatprep.subr.bf16.mxu0 %v3931
    %4835 = vmatpush1.bf16.msra.mxu0 %v3930
    %4836 = vmatprep.subr.bf16.mxu0 %v3967
    %4837 = vmatpush1.bf16.msra.mxu0 %v3966
    %4838 = vmatprep.subr.bf16.mxu0 %v4003
    %4839 = vmatpush1.bf16.msra.mxu0 %v4002
    %4840 = vmatprep.subr.bf16.mxu0 %v4039
    %4841 = vmatpush1.bf16.msra.mxu0 %v4038
    %4842 = vmatprep.subr.bf16.mxu0 %v4075
    %4843 = vmatpush1.bf16.msra.mxu0 %v4074
    %4844 = vmatprep.subr.bf16.mxu0 %v4111
    %4845 = vmatpush1.bf16.msra.mxu0 %v4110
    %4846 = vmatprep.subr.bf16.mxu0 %v4147
    %4847 = vmatpush1.bf16.msra.mxu0 %v4146
    %4848 = vmatprep.subr.bf16.mxu0 %v4183
    %4849 = vmatpush1.bf16.msra.mxu0 %v4182
    %4850 = vmatprep.mubr.bf16.mxu0 %v3621
    %4851 = vmatmul.mubr.bf16.gmra.mrb[0].mxu0 %v3620
    %v4852 = vpop.f32.mrb[0].mxu0
    %v4853 = vadd.f32 %v4291, %v4852
    %v4854 = vpop.f32.mrb[0].mxu0
    %v4855 = vadd.f32 %v4295, %v4854
    %v4856 = vpop.f32.mrb[0].mxu0
    %v4857 = vadd.f32 %v4291, %v4856
    %v4858 = vpop.f32.mrb[0].mxu0
    %v4859 = vadd.f32 %v4295, %v4858
    %4860 = vdwg.mxu0
    %4861 = vmatprep.subr.bf16.mxu0 %v3645
    %4862 = vmatpush1.bf16.msra.mxu0 %v3644
    %4863 = vmatprep.subr.bf16.mxu0 %v3681
    %4864 = vmatpush1.bf16.msra.mxu0 %v3680
    %4865 = vmatprep.subr.bf16.mxu0 %v3717
    %4866 = vmatpush1.bf16.msra.mxu0 %v3716
    %4867 = vmatprep.subr.bf16.mxu0 %v3753
    %4868 = vmatpush1.bf16.msra.mxu0 %v3752
    %4869 = vmatprep.subr.bf16.mxu0 %v3789
    %4870 = vmatpush1.bf16.msra.mxu0 %v3788
    %4871 = vmatprep.subr.bf16.mxu0 %v3825
    %4872 = vmatpush1.bf16.msra.mxu0 %v3824
    %4873 = vmatprep.subr.bf16.mxu0 %v3861
    %4874 = vmatpush1.bf16.msra.mxu0 %v3860
    %4875 = vmatprep.subr.bf16.mxu0 %v3897
    %4876 = vmatpush1.bf16.msra.mxu0 %v3896
    %4877 = vmatprep.subr.bf16.mxu0 %v3933
    %4878 = vmatpush1.bf16.msra.mxu0 %v3932
    %4879 = vmatprep.subr.bf16.mxu0 %v3969
    %4880 = vmatpush1.bf16.msra.mxu0 %v3968
    %4881 = vmatprep.subr.bf16.mxu0 %v4005
    %4882 = vmatpush1.bf16.msra.mxu0 %v4004
    %4883 = vmatprep.subr.bf16.mxu0 %v4041
    %4884 = vmatpush1.bf16.msra.mxu0 %v4040
    %4885 = vmatprep.subr.bf16.mxu0 %v4077
    %4886 = vmatpush1.bf16.msra.mxu0 %v4076
    %4887 = vmatprep.subr.bf16.mxu0 %v4113
    %4888 = vmatpush1.bf16.msra.mxu0 %v4112
    %4889 = vmatprep.subr.bf16.mxu0 %v4149
    %4890 = vmatpush1.bf16.msra.mxu0 %v4148
    %4891 = vmatprep.subr.bf16.mxu0 %v4185
    %4892 = vmatpush1.bf16.msra.mxu0 %v4184
    %4893 = vmatprep.mubr.bf16.mxu0 %v3621
    %4894 = vmatmul.mubr.bf16.gmra.mrb[0].mxu0 %v3620
    %v4895 = vpop.f32.mrb[0].mxu0
    %v4896 = vadd.f32 %v4299, %v4895
    %v4897 = vpop.f32.mrb[0].mxu0
    %v4898 = vadd.f32 %v4303, %v4897
    %v4899 = vpop.f32.mrb[0].mxu0
    %v4900 = vadd.f32 %v4299, %v4899
    %v4901 = vpop.f32.mrb[0].mxu0
    %v4902 = vadd.f32 %v4303, %v4901
    %4903 = vdwg.mxu0
    %4904 = vmatprep.subr.bf16.mxu0 %v3647
    %4905 = vmatpush1.bf16.msra.mxu0 %v3646
    %4906 = vmatprep.subr.bf16.mxu0 %v3683
    %4907 = vmatpush1.bf16.msra.mxu0 %v3682
    %4908 = vmatprep.subr.bf16.mxu0 %v3719
    %4909 = vmatpush1.bf16.msra.mxu0 %v3718
    %4910 = vmatprep.subr.bf16.mxu0 %v3755
    %4911 = vmatpush1.bf16.msra.mxu0 %v3754
    %4912 = vmatprep.subr.bf16.mxu0 %v3791
    %4913 = vmatpush1.bf16.msra.mxu0 %v3790
    %4914 = vmatprep.subr.bf16.mxu0 %v3827
    %4915 = vmatpush1.bf16.msra.mxu0 %v3826
    %4916 = vmatprep.subr.bf16.mxu0 %v3863
    %4917 = vmatpush1.bf16.msra.mxu0 %v3862
    %4918 = vmatprep.subr.bf16.mxu0 %v3899
    %4919 = vmatpush1.bf16.msra.mxu0 %v3898
    %4920 = vmatprep.subr.bf16.mxu0 %v3935
    %4921 = vmatpush1.bf16.msra.mxu0 %v3934
    %4922 = vmatprep.subr.bf16.mxu0 %v3971
    %4923 = vmatpush1.bf16.msra.mxu0 %v3970
    %4924 = vmatprep.subr.bf16.mxu0 %v4007
    %4925 = vmatpush1.bf16.msra.mxu0 %v4006
    %4926 = vmatprep.subr.bf16.mxu0 %v4043
    %4927 = vmatpush1.bf16.msra.mxu0 %v4042
    %4928 = vmatprep.subr.bf16.mxu0 %v4079
    %4929 = vmatpush1.bf16.msra.mxu0 %v4078
    %4930 = vmatprep.subr.bf16.mxu0 %v4115
    %4931 = vmatpush1.bf16.msra.mxu0 %v4114
    %4932 = vmatprep.subr.bf16.mxu0 %v4151
    %4933 = vmatpush1.bf16.msra.mxu0 %v4150
    %4934 = vmatprep.subr.bf16.mxu0 %v4187
    %4935 = vmatpush1.bf16.msra.mxu0 %v4186
    %4936 = vmatprep.mubr.bf16.mxu0 %v3621
    %4937 = vmatmul.mubr.bf16.gmra.mrb[0].mxu0 %v3620
    %v4938 = vpop.f32.mrb[0].mxu0
    %v4939 = vadd.f32 %v4307, %v4938
    %v4940 = vpop.f32.mrb[0].mxu0
    %v4941 = vadd.f32 %v4311, %v4940
    %v4942 = vpop.f32.mrb[0].mxu0
    %v4943 = vadd.f32 %v4307, %v4942
    %v4944 = vpop.f32.mrb[0].mxu0
    %v4945 = vadd.f32 %v4311, %v4944
    %4946 = vdwg.mxu0
    %4947 = vmatprep.subr.bf16.mxu0 %v3649
    %4948 = vmatpush1.bf16.msra.mxu0 %v3648
    %4949 = vmatprep.subr.bf16.mxu0 %v3685
    %4950 = vmatpush1.bf16.msra.mxu0 %v3684
    %4951 = vmatprep.subr.bf16.mxu0 %v3721
    %4952 = vmatpush1.bf16.msra.mxu0 %v3720
    %4953 = vmatprep.subr.bf16.mxu0 %v3757
    %4954 = vmatpush1.bf16.msra.mxu0 %v3756
    %4955 = vmatprep.subr.bf16.mxu0 %v3793
    %4956 = vmatpush1.bf16.msra.mxu0 %v3792
    %4957 = vmatprep.subr.bf16.mxu0 %v3829
    %4958 = vmatpush1.bf16.msra.mxu0 %v3828
    %4959 = vmatprep.subr.bf16.mxu0 %v3865
    %4960 = vmatpush1.bf16.msra.mxu0 %v3864
    %4961 = vmatprep.subr.bf16.mxu0 %v3901
    %4962 = vmatpush1.bf16.msra.mxu0 %v3900
    %4963 = vmatprep.subr.bf16.mxu0 %v3937
    %4964 = vmatpush1.bf16.msra.mxu0 %v3936
    %4965 = vmatprep.subr.bf16.mxu0 %v3973
    %4966 = vmatpush1.bf16.msra.mxu0 %v3972
    %4967 = vmatprep.subr.bf16.mxu0 %v4009
    %4968 = vmatpush1.bf16.msra.mxu0 %v4008
    %4969 = vmatprep.subr.bf16.mxu0 %v4045
    %4970 = vmatpush1.bf16.msra.mxu0 %v4044
    %4971 = vmatprep.subr.bf16.mxu0 %v4081
    %4972 = vmatpush1.bf16.msra.mxu0 %v4080
    %4973 = vmatprep.subr.bf16.mxu0 %v4117
    %4974 = vmatpush1.bf16.msra.mxu0 %v4116
    %4975 = vmatprep.subr.bf16.mxu0 %v4153
    %4976 = vmatpush1.bf16.msra.mxu0 %v4152
    %4977 = vmatprep.subr.bf16.mxu0 %v4189
    %4978 = vmatpush1.bf16.msra.mxu0 %v4188
    %4979 = vmatprep.mubr.bf16.mxu0 %v3621
    %4980 = vmatmul.mubr.bf16.gmra.mrb[0].mxu0 %v3620
    %v4981 = vpop.f32.mrb[0].mxu0
    %v4982 = vadd.f32 %v4315, %v4981
    %v4983 = vpop.f32.mrb[0].mxu0
    %v4984 = vadd.f32 %v4319, %v4983
    %v4985 = vpop.f32.mrb[0].mxu0
    %v4986 = vadd.f32 %v4315, %v4985
    %v4987 = vpop.f32.mrb[0].mxu0
    %v4988 = vadd.f32 %v4319, %v4987
    %4989 = vdwg.mxu0
    %4990 = vmatprep.subr.bf16.mxu0 %v3651
    %4991 = vmatpush1.bf16.msra.mxu0 %v3650
    %4992 = vmatprep.subr.bf16.mxu0 %v3687
    %4993 = vmatpush1.bf16.msra.mxu0 %v3686
    %4994 = vmatprep.subr.bf16.mxu0 %v3723
    %4995 = vmatpush1.bf16.msra.mxu0 %v3722
    %4996 = vmatprep.subr.bf16.mxu0 %v3759
    %4997 = vmatpush1.bf16.msra.mxu0 %v3758
    %4998 = vmatprep.subr.bf16.mxu0 %v3795
    %4999 = vmatpush1.bf16.msra.mxu0 %v3794
    %5000 = vmatprep.subr.bf16.mxu0 %v3831
    %5001 = vmatpush1.bf16.msra.mxu0 %v3830
    %5002 = vmatprep.subr.bf16.mxu0 %v3867
    %5003 = vmatpush1.bf16.msra.mxu0 %v3866
    %5004 = vmatprep.subr.bf16.mxu0 %v3903
    %5005 = vmatpush1.bf16.msra.mxu0 %v3902
    %5006 = vmatprep.subr.bf16.mxu0 %v3939
    %5007 = vmatpush1.bf16.msra.mxu0 %v3938
    %5008 = vmatprep.subr.bf16.mxu0 %v3975
    %5009 = vmatpush1.bf16.msra.mxu0 %v3974
    %5010 = vmatprep.subr.bf16.mxu0 %v4011
    %5011 = vmatpush1.bf16.msra.mxu0 %v4010
    %5012 = vmatprep.subr.bf16.mxu0 %v4047
    %5013 = vmatpush1.bf16.msra.mxu0 %v4046
    %5014 = vmatprep.subr.bf16.mxu0 %v4083
    %5015 = vmatpush1.bf16.msra.mxu0 %v4082
    %5016 = vmatprep.subr.bf16.mxu0 %v4119
    %5017 = vmatpush1.bf16.msra.mxu0 %v4118
    %5018 = vmatprep.subr.bf16.mxu0 %v4155
    %5019 = vmatpush1.bf16.msra.mxu0 %v4154
    %5020 = vmatprep.subr.bf16.mxu0 %v4191
    %5021 = vmatpush1.bf16.msra.mxu0 %v4190
    %5022 = vmatprep.mubr.bf16.mxu0 %v3621
    %5023 = vmatmul.mubr.bf16.gmra.mrb[0].mxu0 %v3620
    %v5024 = vpop.f32.mrb[0].mxu0
    %v5025 = vadd.f32 %v4323, %v5024
    %v5026 = vpop.f32.mrb[0].mxu0
    %v5027 = vadd.f32 %v4327, %v5026
    %v5028 = vpop.f32.mrb[0].mxu0
    %v5029 = vadd.f32 %v4323, %v5028
    %v5030 = vpop.f32.mrb[0].mxu0
    %v5031 = vadd.f32 %v4327, %v5030
    %5032 = vdwg.mxu0
    %5033 = vmatprep.subr.bf16.mxu0 %v3653
    %5034 = vmatpush1.bf16.msra.mxu0 %v3652
    %5035 = vmatprep.subr.bf16.mxu0 %v3689
    %5036 = vmatpush1.bf16.msra.mxu0 %v3688
    %5037 = vmatprep.subr.bf16.mxu0 %v3725
    %5038 = vmatpush1.bf16.msra.mxu0 %v3724
    %5039 = vmatprep.subr.bf16.mxu0 %v3761
    %5040 = vmatpush1.bf16.msra.mxu0 %v3760
    %5041 = vmatprep.subr.bf16.mxu0 %v3797
    %5042 = vmatpush1.bf16.msra.mxu0 %v3796
    %5043 = vmatprep.subr.bf16.mxu0 %v3833
    %5044 = vmatpush1.bf16.msra.mxu0 %v3832
    %5045 = vmatprep.subr.bf16.mxu0 %v3869
    %5046 = vmatpush1.bf16.msra.mxu0 %v3868
    %5047 = vmatprep.subr.bf16.mxu0 %v3905
    %5048 = vmatpush1.bf16.msra.mxu0 %v3904
    %5049 = vmatprep.subr.bf16.mxu0 %v3941
    %5050 = vmatpush1.bf16.msra.mxu0 %v3940
    %5051 = vmatprep.subr.bf16.mxu0 %v3977
    %5052 = vmatpush1.bf16.msra.mxu0 %v3976
    %5053 = vmatprep.subr.bf16.mxu0 %v4013
    %5054 = vmatpush1.bf16.msra.mxu0 %v4012
    %5055 = vmatprep.subr.bf16.mxu0 %v4049
    %5056 = vmatpush1.bf16.msra.mxu0 %v4048
    %5057 = vmatprep.subr.bf16.mxu0 %v4085
    %5058 = vmatpush1.bf16.msra.mxu0 %v4084
    %5059 = vmatprep.subr.bf16.mxu0 %v4121
    %5060 = vmatpush1.bf16.msra.mxu0 %v4120
    %5061 = vmatprep.subr.bf16.mxu0 %v4157
    %5062 = vmatpush1.bf16.msra.mxu0 %v4156
    %5063 = vmatprep.subr.bf16.mxu0 %v4193
    %5064 = vmatpush1.bf16.msra.mxu0 %v4192
    %5065 = vmatprep.mubr.bf16.mxu0 %v3621
    %5066 = vmatmul.mubr.bf16.gmra.mrb[0].mxu0 %v3620
    %v5067 = vpop.f32.mrb[0].mxu0
    %v5068 = vadd.f32 %v4331, %v5067
    %v5069 = vpop.f32.mrb[0].mxu0
    %v5070 = vadd.f32 %v4335, %v5069
    %v5071 = vpop.f32.mrb[0].mxu0
    %v5072 = vadd.f32 %v4331, %v5071
    %v5073 = vpop.f32.mrb[0].mxu0
    %v5074 = vadd.f32 %v4335, %v5073
    %5075 = vdwg.mxu0
    %5076 = vmatprep.subr.bf16.mxu0 %v3655
    %5077 = vmatpush1.bf16.msra.mxu0 %v3654
    %5078 = vmatprep.subr.bf16.mxu0 %v3691
    %5079 = vmatpush1.bf16.msra.mxu0 %v3690
    %5080 = vmatprep.subr.bf16.mxu0 %v3727
    %5081 = vmatpush1.bf16.msra.mxu0 %v3726
    %5082 = vmatprep.subr.bf16.mxu0 %v3763
    %5083 = vmatpush1.bf16.msra.mxu0 %v3762
    %5084 = vmatprep.subr.bf16.mxu0 %v3799
    %5085 = vmatpush1.bf16.msra.mxu0 %v3798
    %5086 = vmatprep.subr.bf16.mxu0 %v3835
    %5087 = vmatpush1.bf16.msra.mxu0 %v3834
    %5088 = vmatprep.subr.bf16.mxu0 %v3871
    %5089 = vmatpush1.bf16.msra.mxu0 %v3870
    %5090 = vmatprep.subr.bf16.mxu0 %v3907
    %5091 = vmatpush1.bf16.msra.mxu0 %v3906
    %5092 = vmatprep.subr.bf16.mxu0 %v3943
    %5093 = vmatpush1.bf16.msra.mxu0 %v3942
    %5094 = vmatprep.subr.bf16.mxu0 %v3979
    %5095 = vmatpush1.bf16.msra.mxu0 %v3978
    %5096 = vmatprep.subr.bf16.mxu0 %v4015
    %5097 = vmatpush1.bf16.msra.mxu0 %v4014
    %5098 = vmatprep.subr.bf16.mxu0 %v4051
    %5099 = vmatpush1.bf16.msra.mxu0 %v4050
    %5100 = vmatprep.subr.bf16.mxu0 %v4087
    %5101 = vmatpush1.bf16.msra.mxu0 %v4086
    %5102 = vmatprep.subr.bf16.mxu0 %v4123
    %5103 = vmatpush1.bf16.msra.mxu0 %v4122
    %5104 = vmatprep.subr.bf16.mxu0 %v4159
    %5105 = vmatpush1.bf16.msra.mxu0 %v4158
    %5106 = vmatprep.subr.bf16.mxu0 %v4195
    %5107 = vmatpush1.bf16.msra.mxu0 %v4194
    %5108 = vmatprep.mubr.bf16.mxu0 %v3621
    %5109 = vmatmul.mubr.bf16.gmra.mrb[0].mxu0 %v3620
    %v5110 = vpop.f32.mrb[0].mxu0
    %v5111 = vadd.f32 %v4339, %v5110
    %v5112 = vpop.f32.mrb[0].mxu0
    %v5113 = vadd.f32 %v4343, %v5112
    %v5114 = vpop.f32.mrb[0].mxu0
    %v5115 = vadd.f32 %v4339, %v5114
    %v5116 = vpop.f32.mrb[0].mxu0
    %v5117 = vadd.f32 %v4343, %v5116
    %5118 = vdwg.mxu0
    %5119 = vmatprep.subr.bf16.mxu0 %v3657
    %5120 = vmatpush1.bf16.msra.mxu0 %v3656
    %5121 = vmatprep.subr.bf16.mxu0 %v3693
    %5122 = vmatpush1.bf16.msra.mxu0 %v3692
    %5123 = vmatprep.subr.bf16.mxu0 %v3729
    %5124 = vmatpush1.bf16.msra.mxu0 %v3728
    %5125 = vmatprep.subr.bf16.mxu0 %v3765
    %5126 = vmatpush1.bf16.msra.mxu0 %v3764
    %5127 = vmatprep.subr.bf16.mxu0 %v3801
    %5128 = vmatpush1.bf16.msra.mxu0 %v3800
    %5129 = vmatprep.subr.bf16.mxu0 %v3837
    %5130 = vmatpush1.bf16.msra.mxu0 %v3836
    %5131 = vmatprep.subr.bf16.mxu0 %v3873
    %5132 = vmatpush1.bf16.msra.mxu0 %v3872
    %5133 = vmatprep.subr.bf16.mxu0 %v3909
    %5134 = vmatpush1.bf16.msra.mxu0 %v3908
    %5135 = vmatprep.subr.bf16.mxu0 %v3945
    %5136 = vmatpush1.bf16.msra.mxu0 %v3944
    %5137 = vmatprep.subr.bf16.mxu0 %v3981
    %5138 = vmatpush1.bf16.msra.mxu0 %v3980
    %5139 = vmatprep.subr.bf16.mxu0 %v4017
    %5140 = vmatpush1.bf16.msra.mxu0 %v4016
    %5141 = vmatprep.subr.bf16.mxu0 %v4053
    %5142 = vmatpush1.bf16.msra.mxu0 %v4052
    %5143 = vmatprep.subr.bf16.mxu0 %v4089
    %5144 = vmatpush1.bf16.msra.mxu0 %v4088
    %5145 = vmatprep.subr.bf16.mxu0 %v4125
    %5146 = vmatpush1.bf16.msra.mxu0 %v4124
    %5147 = vmatprep.subr.bf16.mxu0 %v4161
    %5148 = vmatpush1.bf16.msra.mxu0 %v4160
    %5149 = vmatprep.subr.bf16.mxu0 %v4197
    %5150 = vmatpush1.bf16.msra.mxu0 %v4196
    %5151 = vmatprep.mubr.bf16.mxu0 %v3621
    %5152 = vmatmul.mubr.bf16.gmra.mrb[0].mxu0 %v3620
    %v5153 = vpop.f32.mrb[0].mxu0
    %v5154 = vadd.f32 %v4347, %v5153
    %v5155 = vpop.f32.mrb[0].mxu0
    %v5156 = vadd.f32 %v4351, %v5155
    %v5157 = vpop.f32.mrb[0].mxu0
    %v5158 = vadd.f32 %v4347, %v5157
    %v5159 = vpop.f32.mrb[0].mxu0
    %v5160 = vadd.f32 %v4351, %v5159
    %5161 = vdwg.mxu0
    %v5162 = vld [vmem:[#allocation19] sm:$0xff]
    %v5163 = vld [vmem:[#allocation19 + $0x8] sm:$0xff]
    %v5164 = vld [vmem:[#allocation19 + $0x10] sm:$0xff]
    %v5165 = vld [vmem:[#allocation19 + $0x18] sm:$0xff]
    %v5166 = vld [vmem:[#allocation19 + $0x20] sm:$0xf]
    %v5167 = vld [vmem:[#allocation19 + $0x24] sm:$0xff]
    %v5168 = vld [vmem:[#allocation19 + $0x2c] sm:$0xff]
    %v5169 = vld [vmem:[#allocation19 + $0x34] sm:$0xff]
    %v5170 = vld [vmem:[#allocation19 + $0x3c] sm:$0xff]
    %v5171 = vld [vmem:[#allocation19 + $0x44] sm:$0xf]
    %v5172 = vld [vmem:[#allocation19 + $0x48] sm:$0xff]
    %v5173 = vld [vmem:[#allocation19 + $0x50] sm:$0xff]
    %v5174 = vld [vmem:[#allocation19 + $0x58] sm:$0xff]
    %v5175 = vld [vmem:[#allocation19 + $0x60] sm:$0xff]
    %v5176 = vld [vmem:[#allocation19 + $0x68] sm:$0xf]
    %v5177 = vld [vmem:[#allocation19 + $0x6c] sm:$0xff]
    %v5178 = vld [vmem:[#allocation19 + $0x74] sm:$0xff]
    %v5179 = vld [vmem:[#allocation19 + $0x7c] sm:$0xff]
    %v5180 = vld [vmem:[#allocation19 + $0x84] sm:$0xff]
    %v5181 = vld [vmem:[#allocation19 + $0x8c] sm:$0xf]
    %v5182 = vld [vmem:[#allocation19 + $0x90] sm:$0xff]
    %v5183 = vld [vmem:[#allocation19 + $0x98] sm:$0xff]
    %v5184 = vld [vmem:[#allocation19 + $0xa0] sm:$0xff]
    %v5185 = vld [vmem:[#allocation19 + $0xa8] sm:$0xff]
    %v5186 = vld [vmem:[#allocation19 + $0xb0] sm:$0xf]
    %v5187 = vld [vmem:[#allocation19 + $0xb4] sm:$0xff]
    %v5188 = vld [vmem:[#allocation19 + $0xbc] sm:$0xff]
    %v5189 = vld [vmem:[#allocation19 + $0xc4] sm:$0xff]
    %v5190 = vld [vmem:[#allocation19 + $0xcc] sm:$0xff]
    %v5191 = vld [vmem:[#allocation19 + $0xd4] sm:$0xf]
    %v5192 = vld [vmem:[#allocation19 + $0xd8] sm:$0xff]
    %v5193 = vld [vmem:[#allocation19 + $0xe0] sm:$0xff]
    %v5194 = vld [vmem:[#allocation19 + $0xe8] sm:$0xff]
    %v5195 = vld [vmem:[#allocation19 + $0xf0] sm:$0xff]
    %v5196 = vld [vmem:[#allocation19 + $0xf8] sm:$0xf]
    %v5197 = vld [vmem:[#allocation19 + $0xfc] sm:$0xff]
    %v5198 = vld [vmem:[#allocation19 + $0x104] sm:$0xff]
    %v5199 = vld [vmem:[#allocation19 + $0x10c] sm:$0xff]
    %v5200 = vld [vmem:[#allocation19 + $0x114] sm:$0xff]
    %v5201 = vld [vmem:[#allocation19 + $0x11c] sm:$0xf]
    %v5202 = vld [vmem:[#allocation19 + $0x120] sm:$0xff]
    %v5203 = vld [vmem:[#allocation19 + $0x128] sm:$0xff]
    %v5204 = vld [vmem:[#allocation19 + $0x130] sm:$0xff]
    %v5205 = vld [vmem:[#allocation19 + $0x138] sm:$0xff]
    %v5206 = vld [vmem:[#allocation19 + $0x140] sm:$0xf]
    %v5207 = vld [vmem:[#allocation19 + $0x144] sm:$0xff]
    %v5208 = vld [vmem:[#allocation19 + $0x14c] sm:$0xff]
    %v5209 = vld [vmem:[#allocation19 + $0x154] sm:$0xff]
    %v5210 = vld [vmem:[#allocation19 + $0x15c] sm:$0xff]
    %v5211 = vld [vmem:[#allocation19 + $0x164] sm:$0xf]
    %v5212 = vld [vmem:[#allocation19 + $0x168] sm:$0xff]
    %v5213 = vld [vmem:[#allocation19 + $0x170] sm:$0xff]
    %v5214 = vld [vmem:[#allocation19 + $0x178] sm:$0xff]
    %v5215 = vld [vmem:[#allocation19 + $0x180] sm:$0xff]
    %v5216 = vld [vmem:[#allocation19 + $0x188] sm:$0xf]
    %v5217 = vld [vmem:[#allocation19 + $0x18c] sm:$0xff]
    %v5218 = vld [vmem:[#allocation19 + $0x194] sm:$0xff]
    %v5219 = vld [vmem:[#allocation19 + $0x19c] sm:$0xff]
    %v5220 = vld [vmem:[#allocation19 + $0x1a4] sm:$0xff]
    %v5221 = vld [vmem:[#allocation19 + $0x1ac] sm:$0xf]
    %v5222 = vld [vmem:[#allocation19 + $0x1b0] sm:$0xff]
    %v5223 = vld [vmem:[#allocation19 + $0x1b8] sm:$0xff]
    %v5224 = vld [vmem:[#allocation19 + $0x1c0] sm:$0xff]
    %v5225 = vld [vmem:[#allocation19 + $0x1c8] sm:$0xff]
    %v5226 = vld [vmem:[#allocation19 + $0x1d0] sm:$0xf]
    %v5227 = vld [vmem:[#allocation19 + $0x1d4] sm:$0xff]
    %v5228 = vld [vmem:[#allocation19 + $0x1dc] sm:$0xff]
    %v5229 = vld [vmem:[#allocation19 + $0x1e4] sm:$0xff]
    %v5230 = vld [vmem:[#allocation19 + $0x1ec] sm:$0xff]
    %v5231 = vld [vmem:[#allocation19 + $0x1f4] sm:$0xf]
    %v5232 = vld [vmem:[#allocation19 + $0x1f8] sm:$0xff]
    %v5233 = vld [vmem:[#allocation19 + $0x200] sm:$0xff]
    %v5234 = vld [vmem:[#allocation19 + $0x208] sm:$0xff]
    %v5235 = vld [vmem:[#allocation19 + $0x210] sm:$0xff]
    %v5236 = vld [vmem:[#allocation19 + $0x218] sm:$0xf]
    %v5237 = vld [vmem:[#allocation19 + $0x21c] sm:$0xff]
    %v5238 = vld [vmem:[#allocation19 + $0x224] sm:$0xff]
    %v5239 = vld [vmem:[#allocation19 + $0x22c] sm:$0xff]
    %v5240 = vld [vmem:[#allocation19 + $0x234] sm:$0xff]
    %v5241 = vld [vmem:[#allocation19 + $0x23c] sm:$0xf]
    %v5242 = vpack.c.bf16 %v4601, %v4597
    %v5243 = vpack.c.bf16 %v4642, %v4638
    %v5244 = vpack.c.bf16 %v4644, %v4640
    %v5245 = vpack.c.bf16 %v4685, %v4681
    %v5246 = vpack.c.bf16 %v4687, %v4683
    %v5247 = vpack.c.bf16 %v4728, %v4724
    %v5248 = vpack.c.bf16 %v4730, %v4726
    %v5249 = vpack.c.bf16 %v4771, %v4767
    %v5250 = vpack.c.bf16 %v4773, %v4769
    %v5331 = vunpack.c.l.b16 %v5162
    %v5332 = vunpack.c.h.b16 %v5162
    %v5333 = vunpack.c.l.b16 %v5163
    %v5334 = vunpack.c.h.b16 %v5163
    %v5335 = vunpack.c.l.b16 %v5164
    %v5336 = vunpack.c.h.b16 %v5164
    %v5337 = vunpack.c.l.b16 %v5165
    %v5338 = vunpack.c.h.b16 %v5165
    %v5339 = vunpack.c.l.b16 %v5166
    %v5340 = vunpack.c.l.b16 %v5167
    %v5341 = vunpack.c.h.b16 %v5167
    %v5342 = vunpack.c.l.b16 %v5168
    %v5343 = vunpack.c.h.b16 %v5168
    %v5344 = vunpack.c.l.b16 %v5169
    %v5345 = vunpack.c.h.b16 %v5169
    %v5346 = vunpack.c.l.b16 %v5170
    %v5347 = vunpack.c.h.b16 %v5170
    %v5348 = vunpack.c.l.b16 %v5171
    %v5349 = vunpack.c.l.b16 %v5172
    %v5350 = vunpack.c.h.b16 %v5172
    %v5351 = vunpack.c.l.b16 %v5173
    %v5352 = vunpack.c.h.b16 %v5173
    %v5353 = vunpack.c.l.b16 %v5174
    %v5354 = vunpack.c.h.b16 %v5174
    %v5355 = vunpack.c.l.b16 %v5175
    %v5356 = vunpack.c.h.b16 %v5175
    %v5357 = vunpack.c.l.b16 %v5176
    %v5358 = vunpack.c.l.b16 %v5177
    %v5359 = vunpack.c.h.b16 %v5177
    %v5360 = vunpack.c.l.b16 %v5178
    %v5361 = vunpack.c.h.b16 %v5178
    %v5362 = vunpack.c.l.b16 %v5179
    %v5363 = vunpack.c.h.b16 %v5179
    %v5364 = vunpack.c.l.b16 %v5180
    %v5365 = vunpack.c.h.b16 %v5180
    %v5366 = vunpack.c.l.b16 %v5181
    %v5367 = vunpack.c.l.b16 %v5182
    %v5368 = vunpack.c.h.b16 %v5182
    %v5369 = vunpack.c.l.b16 %v5183
    %v5370 = vunpack.c.h.b16 %v5183
    %v5371 = vunpack.c.l.b16 %v5184
    %v5372 = vunpack.c.h.b16 %v5184
    %v5373 = vunpack.c.l.b16 %v5185
    %v5374 = vunpack.c.h.b16 %v5185
    %v5375 = vunpack.c.l.b16 %v5186
    %v5376 = vunpack.c.l.b16 %v5187
    %v5377 = vunpack.c.h.b16 %v5187
    %v5378 = vunpack.c.l.b16 %v5188
    %v5379 = vunpack.c.h.b16 %v5188
    %v5380 = vunpack.c.l.b16 %v5189
    %v5381 = vunpack.c.h.b16 %v5189
    %v5382 = vunpack.c.l.b16 %v5190
    %v5383 = vunpack.c.h.b16 %v5190
    %v5384 = vunpack.c.l.b16 %v5191
    %v5385 = vunpack.c.l.b16 %v5192
    %v5386 = vunpack.c.h.b16 %v5192
    %v5387 = vunpack.c.l.b16 %v5193
    %v5388 = vunpack.c.h.b16 %v5193
    %v5389 = vunpack.c.l.b16 %v5194
    %v5390 = vunpack.c.h.b16 %v5194
    %v5391 = vunpack.c.l.b16 %v5195
    %v5392 = vunpack.c.h.b16 %v5195
    %v5393 = vunpack.c.l.b16 %v5196
    %v5394 = vunpack.c.l.b16 %v5197
    %v5395 = vunpack.c.h.b16 %v5197
    %v5396 = vunpack.c.l.b16 %v5198
    %v5397 = vunpack.c.h.b16 %v5198
    %v5398 = vunpack.c.l.b16 %v5199
    %v5399 = vunpack.c.h.b16 %v5199
    %v5400 = vunpack.c.l.b16 %v5200
    %v5401 = vunpack.c.h.b16 %v5200
    %v5402 = vunpack.c.l.b16 %v5201
    %v5403 = vunpack.c.l.b16 %v5202
    %v5404 = vunpack.c.h.b16 %v5202
    %v5405 = vunpack.c.l.b16 %v5203
    %v5406 = vunpack.c.h.b16 %v5203
    %v5407 = vunpack.c.l.b16 %v5204
    %v5408 = vunpack.c.h.b16 %v5204
    %v5409 = vunpack.c.l.b16 %v5205
    %v5410 = vunpack.c.h.b16 %v5205
    %v5411 = vunpack.c.l.b16 %v5206
    %v5412 = vunpack.c.l.b16 %v5207
    %v5413 = vunpack.c.h.b16 %v5207
    %v5414 = vunpack.c.l.b16 %v5208
    %v5415 = vunpack.c.h.b16 %v5208
    %v5416 = vunpack.c.l.b16 %v5209
    %v5417 = vunpack.c.h.b16 %v5209
    %v5418 = vunpack.c.l.b16 %v5210
    %v5419 = vunpack.c.h.b16 %v5210
    %v5420 = vunpack.c.l.b16 %v5211
    %v5421 = vunpack.c.l.b16 %v5212
    %v5422 = vunpack.c.h.b16 %v5212
    %v5423 = vunpack.c.l.b16 %v5213
    %v5424 = vunpack.c.h.b16 %v5213
    %v5425 = vunpack.c.l.b16 %v5214
    %v5426 = vunpack.c.h.b16 %v5214
    %v5427 = vunpack.c.l.b16 %v5215
    %v5428 = vunpack.c.h.b16 %v5215
    %v5429 = vunpack.c.l.b16 %v5216
    %v5430 = vunpack.c.l.b16 %v5217
    %v5431 = vunpack.c.h.b16 %v5217
    %v5432 = vunpack.c.l.b16 %v5218
    %v5433 = vunpack.c.h.b16 %v5218
    %v5434 = vunpack.c.l.b16 %v5219
    %v5435 = vunpack.c.h.b16 %v5219
    %v5436 = vunpack.c.l.b16 %v5220
    %v5437 = vunpack.c.h.b16 %v5220
    %v5438 = vunpack.c.l.b16 %v5221
    %v5439 = vunpack.c.l.b16 %v5222
    %v5440 = vunpack.c.h.b16 %v5222
    %v5441 = vunpack.c.l.b16 %v5223
    %v5442 = vunpack.c.h.b16 %v5223
    %v5443 = vunpack.c.l.b16 %v5224
    %v5444 = vunpack.c.h.b16 %v5224
    %v5445 = vunpack.c.l.b16 %v5225
    %v5446 = vunpack.c.h.b16 %v5225
    %v5447 = vunpack.c.l.b16 %v5226
    %v5448 = vunpack.c.l.b16 %v5227
    %v5449 = vunpack.c.h.b16 %v5227
    %v5450 = vunpack.c.l.b16 %v5228
    %v5451 = vunpack.c.h.b16 %v5228
    %v5452 = vunpack.c.l.b16 %v5229
    %v5453 = vunpack.c.h.b16 %v5229
    %v5454 = vunpack.c.l.b16 %v5230
    %v5455 = vunpack.c.h.b16 %v5230
    %v5456 = vunpack.c.l.b16 %v5231
    %v5457 = vunpack.c.l.b16 %v5232
    %v5458 = vunpack.c.h.b16 %v5232
    %v5459 = vunpack.c.l.b16 %v5233
    %v5460 = vunpack.c.h.b16 %v5233
    %v5461 = vunpack.c.l.b16 %v5234
    %v5462 = vunpack.c.h.b16 %v5234
    %v5463 = vunpack.c.l.b16 %v5235
    %v5464 = vunpack.c.h.b16 %v5235
    %v5465 = vunpack.c.l.b16 %v5236
    %v5466 = vunpack.c.l.b16 %v5237
    %v5467 = vunpack.c.h.b16 %v5237
    %v5468 = vunpack.c.l.b16 %v5238
    %v5469 = vunpack.c.h.b16 %v5238
    %v5470 = vunpack.c.l.b16 %v5239
    %v5471 = vunpack.c.h.b16 %v5239
    %v5472 = vunpack.c.l.b16 %v5240
    %v5473 = vunpack.c.h.b16 %v5240
    %v5474 = vunpack.c.l.b16 %v5241
    %v5475 = vpack.c.b16 %v5340, %v5331
    %v5476 = vpack.c.b16 %v5341, %v5332
    %v5477 = vpack.c.b16 %v5342, %v5333
    %v5478 = vpack.c.b16 %v5343, %v5334
    %v5479 = vpack.c.b16 %v5344, %v5335
    %v5480 = vpack.c.b16 %v5345, %v5336
    %v5481 = vpack.c.b16 %v5346, %v5337
    %v5482 = vpack.c.b16 %v5347, %v5338
    %v5483 = vpack.c.b16 %v5348, %v5339
    %v5484 = vpack.c.b16 %v5358, %v5349
    %v5485 = vpack.c.b16 %v5359, %v5350
    %v5486 = vpack.c.b16 %v5360, %v5351
    %v5487 = vpack.c.b16 %v5361, %v5352
    %v5488 = vpack.c.b16 %v5362, %v5353
    %v5489 = vpack.c.b16 %v5363, %v5354
    %v5490 = vpack.c.b16 %v5364, %v5355
    %v5491 = vpack.c.b16 %v5365, %v5356
    %v5492 = vpack.c.b16 %v5366, %v5357
    %v5493 = vpack.c.b16 %v5376, %v5367
    %v5494 = vpack.c.b16 %v5377, %v5368
    %v5495 = vpack.c.b16 %v5378, %v5369
    %v5496 = vpack.c.b16 %v5379, %v5370
    %v5497 = vpack.c.b16 %v5380, %v5371
    %v5498 = vpack.c.b16 %v5381, %v5372
    %v5499 = vpack.c.b16 %v5382, %v5373
    %v5500 = vpack.c.b16 %v5383, %v5374
    %v5501 = vpack.c.b16 %v5384, %v5375
    %v5502 = vpack.c.b16 %v5394, %v5385
    %v5503 = vpack.c.b16 %v5395, %v5386
    %v5504 = vpack.c.b16 %v5396, %v5387
    %v5505 = vpack.c.b16 %v5397, %v5388
    %v5506 = vpack.c.b16 %v5398, %v5389
    %v5507 = vpack.c.b16 %v5399, %v5390
    %v5508 = vpack.c.b16 %v5400, %v5391
    %v5509 = vpack.c.b16 %v5401, %v5392
    %v5510 = vpack.c.b16 %v5402, %v5393
    %v5511 = vpack.c.b16 %v5412, %v5403
    %v5512 = vpack.c.b16 %v5413, %v5404
    %v5513 = vpack.c.b16 %v5414, %v5405
    %v5514 = vpack.c.b16 %v5415, %v5406
    %v5515 = vpack.c.b16 %v5416, %v5407
    %v5516 = vpack.c.b16 %v5417, %v5408
    %v5517 = vpack.c.b16 %v5418, %v5409
    %v5518 = vpack.c.b16 %v5419, %v5410
    %v5519 = vpack.c.b16 %v5420, %v5411
    %v5520 = vpack.c.b16 %v5430, %v5421
    %v5521 = vpack.c.b16 %v5431, %v5422
    %v5522 = vpack.c.b16 %v5432, %v5423
    %v5523 = vpack.c.b16 %v5433, %v5424
    %v5524 = vpack.c.b16 %v5434, %v5425
    %v5525 = vpack.c.b16 %v5435, %v5426
    %v5526 = vpack.c.b16 %v5436, %v5427
    %v5527 = vpack.c.b16 %v5437, %v5428
    %v5528 = vpack.c.b16 %v5438, %v5429
    %v5529 = vpack.c.b16 %v5448, %v5439
    %v5530 = vpack.c.b16 %v5449, %v5440
    %v5531 = vpack.c.b16 %v5450, %v5441
    %v5532 = vpack.c.b16 %v5451, %v5442
    %v5533 = vpack.c.b16 %v5452, %v5443
    %v5534 = vpack.c.b16 %v5453, %v5444
    %v5535 = vpack.c.b16 %v5454, %v5445
    %v5536 = vpack.c.b16 %v5455, %v5446
    %v5537 = vpack.c.b16 %v5456, %v5447
    %v5538 = vpack.c.b16 %v5466, %v5457
    %v5539 = vpack.c.b16 %v5467, %v5458
    %v5540 = vpack.c.b16 %v5468, %v5459
    %v5541 = vpack.c.b16 %v5469, %v5460
    %v5542 = vpack.c.b16 %v5470, %v5461
    %v5543 = vpack.c.b16 %v5471, %v5462
    %v5544 = vpack.c.b16 %v5472, %v5463
    %v5545 = vpack.c.b16 %v5473, %v5464
    %v5546 = vpack.c.b16 %v5474, %v5465
    %v5619 = vmul.bf16 %v5242, %v5475
    %v5620 = vmul.bf16 %v5243, %v5476
    %v5621 = vmul.bf16 %v5244, %v5477
    %v5622 = vmul.bf16 %v5245, %v5478
    %v5623 = vmul.bf16 %v5246, %v5479
    %v5624 = vmul.bf16 %v5247, %v5480
    %v5625 = vmul.bf16 %v5248, %v5481
    %v5626 = vmul.bf16 %v5249, %v5482
    %v5627 = vmul.bf16 %v5250, %v5483
    %v5628 = vmul.bf16 %v5242, %v5484
    %v5629 = vmul.bf16 %v5243, %v5485
    %v5630 = vmul.bf16 %v5244, %v5486
    %v5631 = vmul.bf16 %v5245, %v5487
    %v5632 = vmul.bf16 %v5246, %v5488
    %v5633 = vmul.bf16 %v5247, %v5489
    %v5634 = vmul.bf16 %v5248, %v5490
    %v5635 = vmul.bf16 %v5249, %v5491
    %v5636 = vmul.bf16 %v5250, %v5492
    %v5637 = vmul.bf16 %v5242, %v5493
    %v5638 = vmul.bf16 %v5243, %v5494
    %v5639 = vmul.bf16 %v5244, %v5495
    %v5640 = vmul.bf16 %v5245, %v5496
    %v5641 = vmul.bf16 %v5246, %v5497
    %v5642 = vmul.bf16 %v5247, %v5498
    %v5643 = vmul.bf16 %v5248, %v5499
    %v5644 = vmul.bf16 %v5249, %v5500
    %v5645 = vmul.bf16 %v5250, %v5501
    %v5646 = vmul.bf16 %v5242, %v5502
    %v5647 = vmul.bf16 %v5243, %v5503
    %v5648 = vmul.bf16 %v5244, %v5504
    %v5649 = vmul.bf16 %v5245, %v5505
    %v5650 = vmul.bf16 %v5246, %v5506
    %v5651 = vmul.bf16 %v5247, %v5507
    %v5652 = vmul.bf16 %v5248, %v5508
    %v5653 = vmul.bf16 %v5249, %v5509
    %v5654 = vmul.bf16 %v5250, %v5510
    %v5655 = vmul.bf16 %v5242, %v5511
    %v5656 = vmul.bf16 %v5243, %v5512
    %v5657 = vmul.bf16 %v5244, %v5513
    %v5658 = vmul.bf16 %v5245, %v5514
    %v5659 = vmul.bf16 %v5246, %v5515
    %v5660 = vmul.bf16 %v5247, %v5516
    %v5661 = vmul.bf16 %v5248, %v5517
    %v5662 = vmul.bf16 %v5249, %v5518
    %v5663 = vmul.bf16 %v5250, %v5519
    %v5664 = vmul.bf16 %v5242, %v5520
    %v5665 = vmul.bf16 %v5243, %v5521
    %v5666 = vmul.bf16 %v5244, %v5522
    %v5667 = vmul.bf16 %v5245, %v5523
    %v5668 = vmul.bf16 %v5246, %v5524
    %v5669 = vmul.bf16 %v5247, %v5525
    %v5670 = vmul.bf16 %v5248, %v5526
    %v5671 = vmul.bf16 %v5249, %v5527
    %v5672 = vmul.bf16 %v5250, %v5528
    %v5673 = vmul.bf16 %v5242, %v5529
    %v5674 = vmul.bf16 %v5243, %v5530
    %v5675 = vmul.bf16 %v5244, %v5531
    %v5676 = vmul.bf16 %v5245, %v5532
    %v5677 = vmul.bf16 %v5246, %v5533
    %v5678 = vmul.bf16 %v5247, %v5534
    %v5679 = vmul.bf16 %v5248, %v5535
    %v5680 = vmul.bf16 %v5249, %v5536
    %v5681 = vmul.bf16 %v5250, %v5537
    %v5682 = vmul.bf16 %v5242, %v5538
    %v5683 = vmul.bf16 %v5243, %v5539
    %v5684 = vmul.bf16 %v5244, %v5540
    %v5685 = vmul.bf16 %v5245, %v5541
    %v5686 = vmul.bf16 %v5246, %v5542
    %v5687 = vmul.bf16 %v5247, %v5543
    %v5688 = vmul.bf16 %v5248, %v5544
    %v5689 = vmul.bf16 %v5249, %v5545
    %v5690 = vmul.bf16 %v5250, %v5546
    %v5691 = vpack.c.bf16 %v4814, %v4810
    %v5692 = vpack.c.bf16 %v4816, %v4812
    %v5693 = vpack.c.bf16 %v4857, %v4853
    %v5694 = vpack.c.bf16 %v4859, %v4855
    %v5695 = vpack.c.bf16 %v4900, %v4896
    %v5696 = vpack.c.bf16 %v4902, %v4898
    %v5697 = vpack.c.bf16 %v4943, %v4939
    %v5698 = vpack.c.bf16 %v4945, %v4941
    %v5699 = vpack.c.bf16 %v4986, %v4982
    %v5700 = vmul.bf16 %v5691, %v5475
    %v5701 = vmul.bf16 %v5692, %v5476
    %v5702 = vmul.bf16 %v5693, %v5477
    %v5703 = vmul.bf16 %v5694, %v5478
    %v5704 = vmul.bf16 %v5695, %v5479
    %v5705 = vmul.bf16 %v5696, %v5480
    %v5706 = vmul.bf16 %v5697, %v5481
    %v5707 = vmul.bf16 %v5698, %v5482
    %v5708 = vmul.bf16 %v5699, %v5483
    %v5709 = vmul.bf16 %v5691, %v5484
    %v5710 = vmul.bf16 %v5692, %v5485
    %v5711 = vmul.bf16 %v5693, %v5486
    %v5712 = vmul.bf16 %v5694, %v5487
    %v5713 = vmul.bf16 %v5695, %v5488
    %v5714 = vmul.bf16 %v5696, %v5489
    %v5715 = vmul.bf16 %v5697, %v5490
    %v5716 = vmul.bf16 %v5698, %v5491
    %v5717 = vmul.bf16 %v5699, %v5492
    %v5718 = vmul.bf16 %v5691, %v5493
    %v5719 = vmul.bf16 %v5692, %v5494
    %v5720 = vmul.bf16 %v5693, %v5495
    %v5721 = vmul.bf16 %v5694, %v5496
    %v5722 = vmul.bf16 %v5695, %v5497
    %v5723 = vmul.bf16 %v5696, %v5498
    %v5724 = vmul.bf16 %v5697, %v5499
    %v5725 = vmul.bf16 %v5698, %v5500
    %v5726 = vmul.bf16 %v5699, %v5501
    %v5727 = vmul.bf16 %v5691, %v5502
    %v5728 = vmul.bf16 %v5692, %v5503
    %v5729 = vmul.bf16 %v5693, %v5504
    %v5730 = vmul.bf16 %v5694, %v5505
    %v5731 = vmul.bf16 %v5695, %v5506
    %v5732 = vmul.bf16 %v5696, %v5507
    %v5733 = vmul.bf16 %v5697, %v5508
    %v5734 = vmul.bf16 %v5698, %v5509
    %v5735 = vmul.bf16 %v5699, %v5510
    %v5736 = vmul.bf16 %v5691, %v5511
    %v5737 = vmul.bf16 %v5692, %v5512
    %v5738 = vmul.bf16 %v5693, %v5513
    %v5739 = vmul.bf16 %v5694, %v5514
    %v5740 = vmul.bf16 %v5695, %v5515
    %v5741 = vmul.bf16 %v5696, %v5516
    %v5742 = vmul.bf16 %v5697, %v5517
    %v5743 = vmul.bf16 %v5698, %v5518
    %v5744 = vmul.bf16 %v5699, %v5519
    %v5745 = vmul.bf16 %v5691, %v5520
    %v5746 = vmul.bf16 %v5692, %v5521
    %v5747 = vmul.bf16 %v5693, %v5522
    %v5748 = vmul.bf16 %v5694, %v5523
    %v5749 = vmul.bf16 %v5695, %v5524
    %v5750 = vmul.bf16 %v5696, %v5525
    %v5751 = vmul.bf16 %v5697, %v5526
    %v5752 = vmul.bf16 %v5698, %v5527
    %v5753 = vmul.bf16 %v5699, %v5528
    %v5754 = vmul.bf16 %v5691, %v5529
    %v5755 = vmul.bf16 %v5692, %v5530
    %v5756 = vmul.bf16 %v5693, %v5531
    %v5757 = vmul.bf16 %v5694, %v5532
    %v5758 = vmul.bf16 %v5695, %v5533
    %v5759 = vmul.bf16 %v5696, %v5534
    %v5760 = vmul.bf16 %v5697, %v5535
    %v5761 = vmul.bf16 %v5698, %v5536
    %v5762 = vmul.bf16 %v5699, %v5537
    %v5763 = vmul.bf16 %v5691, %v5538
    %v5764 = vmul.bf16 %v5692, %v5539
    %v5765 = vmul.bf16 %v5693, %v5540
    %v5766 = vmul.bf16 %v5694, %v5541
    %v5767 = vmul.bf16 %v5695, %v5542
    %v5768 = vmul.bf16 %v5696, %v5543
    %v5769 = vmul.bf16 %v5697, %v5544
    %v5770 = vmul.bf16 %v5698, %v5545
    %v5771 = vmul.bf16 %v5699, %v5546
    %v5772 = vpack.c.bf16 %v4427, %v4423
    %v5773 = vpack.c.bf16 %v4429, %v4425
    %v5774 = vpack.c.bf16 %v4470, %v4466
    %v5775 = vpack.c.bf16 %v4472, %v4468
    %v5776 = vpack.c.bf16 %v4513, %v4509
    %v5777 = vpack.c.bf16 %v4515, %v4511
    %v5778 = vpack.c.bf16 %v4556, %v4552
    %v5779 = vpack.c.bf16 %v4558, %v4554
    %v5780 = vpack.c.bf16 %v4599, %v4595
    %5781 = vmatprep.subr.bf16.mxu0 %v5620
    %5782 = vmatpush1.bf16.xpose.msra.mxu0 %v5619
    %5783 = vmatprep.subr.bf16.mxu0 %v5629
    %5784 = vmatpush1.bf16.xpose.msra.mxu0 %v5628
    %5785 = vmatprep.subr.bf16.mxu0 %v5638
    %5786 = vmatpush1.bf16.xpose.msra.mxu0 %v5637
    %5787 = vmatprep.subr.bf16.mxu0 %v5647
    %5788 = vmatpush1.bf16.xpose.msra.mxu0 %v5646
    %5789 = vmatprep.subr.bf16.mxu0 %v5656
    %5790 = vmatpush1.bf16.xpose.msra.mxu0 %v5655
    %5791 = vmatprep.subr.bf16.mxu0 %v5665
    %5792 = vmatpush1.bf16.xpose.msra.mxu0 %v5664
    %5793 = vmatprep.subr.bf16.mxu0 %v5674
    %5794 = vmatpush1.bf16.xpose.msra.mxu0 %v5673
    %5795 = vmatprep.subr.bf16.mxu0 %v5683
    %5796 = vmatpush1.bf16.xpose.msra.mxu0 %v5682
    %5797 = vmatprep.subr.bf16.mxu0 0
    %5798 = vmatpush1.bf16.xpose.msra.mxu0 0
    %5799 = vmatprep.subr.bf16.mxu0 0
    %5800 = vmatpush1.bf16.xpose.msra.mxu0 0
    %5801 = vmatprep.subr.bf16.mxu0 0
    %5802 = vmatpush1.bf16.xpose.msra.mxu0 0
    %5803 = vmatprep.subr.bf16.mxu0 0
    %5804 = vmatpush1.bf16.xpose.msra.mxu0 0
    %5805 = vmatprep.subr.bf16.mxu0 0
    %5806 = vmatpush1.bf16.xpose.msra.mxu0 0
    %5807 = vmatprep.subr.bf16.mxu0 0
    %5808 = vmatpush1.bf16.xpose.msra.mxu0 0
    %5809 = vmatprep.subr.bf16.mxu0 0
    %5810 = vmatpush1.bf16.xpose.msra.mxu0 0
    %5811 = vmatprep.subr.bf16.mxu0 0
    %5812 = vmatpush1.bf16.xpose.msra.mxu0 0
    %5813 = vmatprep.mubr.bf16.mxu0 %v5773
    %5814 = vmatmul.mubr.bf16.gmra.mrb[0].mxu0 %v5772
    %v5815 = vpop.f32.mrb[0].mxu0
    %v5816 = vadd.f32 %v409, %v5815
    %v5817 = vpop.f32.mrb[0].mxu0
    %v5818 = vpop.f32.mrb[0].mxu0
    %v5819 = vadd.f32 %v410, %v5818
    %v5820 = vpop.f32.mrb[0].mxu0
    %5821 = vdwg.mxu0
    %5822 = vmatprep.subr.bf16.mxu0 %v5622
    %5823 = vmatpush1.bf16.xpose.msra.mxu0 %v5621
    %5824 = vmatprep.subr.bf16.mxu0 %v5631
    %5825 = vmatpush1.bf16.xpose.msra.mxu0 %v5630
    %5826 = vmatprep.subr.bf16.mxu0 %v5640
    %5827 = vmatpush1.bf16.xpose.msra.mxu0 %v5639
    %5828 = vmatprep.subr.bf16.mxu0 %v5649
    %5829 = vmatpush1.bf16.xpose.msra.mxu0 %v5648
    %5830 = vmatprep.subr.bf16.mxu0 %v5658
    %5831 = vmatpush1.bf16.xpose.msra.mxu0 %v5657
    %5832 = vmatprep.subr.bf16.mxu0 %v5667
    %5833 = vmatpush1.bf16.xpose.msra.mxu0 %v5666
    %5834 = vmatprep.subr.bf16.mxu0 %v5676
    %5835 = vmatpush1.bf16.xpose.msra.mxu0 %v5675
    %5836 = vmatprep.subr.bf16.mxu0 %v5685
    %5837 = vmatpush1.bf16.xpose.msra.mxu0 %v5684
    %5838 = vmatprep.subr.bf16.mxu0 0
    %5839 = vmatpush1.bf16.xpose.msra.mxu0 0
    %5840 = vmatprep.subr.bf16.mxu0 0
    %5841 = vmatpush1.bf16.xpose.msra.mxu0 0
    %5842 = vmatprep.subr.bf16.mxu0 0
    %5843 = vmatpush1.bf16.xpose.msra.mxu0 0
    %5844 = vmatprep.subr.bf16.mxu0 0
    %5845 = vmatpush1.bf16.xpose.msra.mxu0 0
    %5846 = vmatprep.subr.bf16.mxu0 0
    %5847 = vmatpush1.bf16.xpose.msra.mxu0 0
    %5848 = vmatprep.subr.bf16.mxu0 0
    %5849 = vmatpush1.bf16.xpose.msra.mxu0 0
    %5850 = vmatprep.subr.bf16.mxu0 0
    %5851 = vmatpush1.bf16.xpose.msra.mxu0 0
    %5852 = vmatprep.subr.bf16.mxu0 0
    %5853 = vmatpush1.bf16.xpose.msra.mxu0 0
    %5854 = vmatprep.mubr.bf16.mxu0 %v5775
    %5855 = vmatmul.mubr.bf16.gmra.mrb[0].mxu0 %v5774
    %v5856 = vpop.f32.mrb[0].mxu0
    %v5857 = vadd.f32 %v5816, %v5856
    %v5858 = vpop.f32.mrb[0].mxu0
    %v5859 = vpop.f32.mrb[0].mxu0
    %v5860 = vadd.f32 %v5819, %v5859
    %v5861 = vpop.f32.mrb[0].mxu0
    %5862 = vdwg.mxu0
    %5863 = vmatprep.subr.bf16.mxu0 %v5624
    %5864 = vmatpush1.bf16.xpose.msra.mxu0 %v5623
    %5865 = vmatprep.subr.bf16.mxu0 %v5633
    %5866 = vmatpush1.bf16.xpose.msra.mxu0 %v5632
    %5867 = vmatprep.subr.bf16.mxu0 %v5642
    %5868 = vmatpush1.bf16.xpose.msra.mxu0 %v5641
    %5869 = vmatprep.subr.bf16.mxu0 %v5651
    %5870 = vmatpush1.bf16.xpose.msra.mxu0 %v5650
    %5871 = vmatprep.subr.bf16.mxu0 %v5660
    %5872 = vmatpush1.bf16.xpose.msra.mxu0 %v5659
    %5873 = vmatprep.subr.bf16.mxu0 %v5669
    %5874 = vmatpush1.bf16.xpose.msra.mxu0 %v5668
    %5875 = vmatprep.subr.bf16.mxu0 %v5678
    %5876 = vmatpush1.bf16.xpose.msra.mxu0 %v5677
    %5877 = vmatprep.subr.bf16.mxu0 %v5687
    %5878 = vmatpush1.bf16.xpose.msra.mxu0 %v5686
    %5879 = vmatprep.subr.bf16.mxu0 0
    %5880 = vmatpush1.bf16.xpose.msra.mxu0 0
    %5881 = vmatprep.subr.bf16.mxu0 0
    %5882 = vmatpush1.bf16.xpose.msra.mxu0 0
    %5883 = vmatprep.subr.bf16.mxu0 0
    %5884 = vmatpush1.bf16.xpose.msra.mxu0 0
    %5885 = vmatprep.subr.bf16.mxu0 0
    %5886 = vmatpush1.bf16.xpose.msra.mxu0 0
    %5887 = vmatprep.subr.bf16.mxu0 0
    %5888 = vmatpush1.bf16.xpose.msra.mxu0 0
    %5889 = vmatprep.subr.bf16.mxu0 0
    %5890 = vmatpush1.bf16.xpose.msra.mxu0 0
    %5891 = vmatprep.subr.bf16.mxu0 0
    %5892 = vmatpush1.bf16.xpose.msra.mxu0 0
    %5893 = vmatprep.subr.bf16.mxu0 0
    %5894 = vmatpush1.bf16.xpose.msra.mxu0 0
    %5895 = vmatprep.mubr.bf16.mxu0 %v5777
    %5896 = vmatmul.mubr.bf16.gmra.mrb[0].mxu0 %v5776
    %v5897 = vpop.f32.mrb[0].mxu0
    %v5898 = vadd.f32 %v5857, %v5897
    %v5899 = vpop.f32.mrb[0].mxu0
    %v5900 = vpop.f32.mrb[0].mxu0
    %v5901 = vadd.f32 %v5860, %v5900
    %v5902 = vpop.f32.mrb[0].mxu0
    %5903 = vdwg.mxu0
    %5904 = vmatprep.subr.bf16.mxu0 %v5626
    %5905 = vmatpush1.bf16.xpose.msra.mxu0 %v5625
    %5906 = vmatprep.subr.bf16.mxu0 %v5635
    %5907 = vmatpush1.bf16.xpose.msra.mxu0 %v5634
    %5908 = vmatprep.subr.bf16.mxu0 %v5644
    %5909 = vmatpush1.bf16.xpose.msra.mxu0 %v5643
    %5910 = vmatprep.subr.bf16.mxu0 %v5653
    %5911 = vmatpush1.bf16.xpose.msra.mxu0 %v5652
    %5912 = vmatprep.subr.bf16.mxu0 %v5662
    %5913 = vmatpush1.bf16.xpose.msra.mxu0 %v5661
    %5914 = vmatprep.subr.bf16.mxu0 %v5671
    %5915 = vmatpush1.bf16.xpose.msra.mxu0 %v5670
    %5916 = vmatprep.subr.bf16.mxu0 %v5680
    %5917 = vmatpush1.bf16.xpose.msra.mxu0 %v5679
    %5918 = vmatprep.subr.bf16.mxu0 %v5689
    %5919 = vmatpush1.bf16.xpose.msra.mxu0 %v5688
    %5920 = vmatprep.subr.bf16.mxu0 0
    %5921 = vmatpush1.bf16.xpose.msra.mxu0 0
    %5922 = vmatprep.subr.bf16.mxu0 0
    %5923 = vmatpush1.bf16.xpose.msra.mxu0 0
    %5924 = vmatprep.subr.bf16.mxu0 0
    %5925 = vmatpush1.bf16.xpose.msra.mxu0 0
    %5926 = vmatprep.subr.bf16.mxu0 0
    %5927 = vmatpush1.bf16.xpose.msra.mxu0 0
    %5928 = vmatprep.subr.bf16.mxu0 0
    %5929 = vmatpush1.bf16.xpose.msra.mxu0 0
    %5930 = vmatprep.subr.bf16.mxu0 0
    %5931 = vmatpush1.bf16.xpose.msra.mxu0 0
    %5932 = vmatprep.subr.bf16.mxu0 0
    %5933 = vmatpush1.bf16.xpose.msra.mxu0 0
    %5934 = vmatprep.subr.bf16.mxu0 0
    %5935 = vmatpush1.bf16.xpose.msra.mxu0 0
    %5936 = vmatprep.mubr.bf16.mxu0 %v5779
    %5937 = vmatmul.mubr.bf16.gmra.mrb[0].mxu0 %v5778
    %v5938 = vpop.f32.mrb[0].mxu0
    %v5939 = vadd.f32 %v5898, %v5938
    %v5940 = vpop.f32.mrb[0].mxu0
    %v5941 = vpop.f32.mrb[0].mxu0
    %v5942 = vadd.f32 %v5901, %v5941
    %v5943 = vpop.f32.mrb[0].mxu0
    %5944 = vdwg.mxu0
    %5945 = vmatprep.subr.bf16.mxu0 0
    %5946 = vmatpush1.bf16.xpose.msra.mxu0 %v5627
    %5947 = vmatprep.subr.bf16.mxu0 0
    %5948 = vmatpush1.bf16.xpose.msra.mxu0 %v5636
    %5949 = vmatprep.subr.bf16.mxu0 0
    %5950 = vmatpush1.bf16.xpose.msra.mxu0 %v5645
    %5951 = vmatprep.subr.bf16.mxu0 0
    %5952 = vmatpush1.bf16.xpose.msra.mxu0 %v5654
    %5953 = vmatprep.subr.bf16.mxu0 0
    %5954 = vmatpush1.bf16.xpose.msra.mxu0 %v5663
    %5955 = vmatprep.subr.bf16.mxu0 0
    %5956 = vmatpush1.bf16.xpose.msra.mxu0 %v5672
    %5957 = vmatprep.subr.bf16.mxu0 0
    %5958 = vmatpush1.bf16.xpose.msra.mxu0 %v5681
    %5959 = vmatprep.subr.bf16.mxu0 0
    %5960 = vmatpush1.bf16.xpose.msra.mxu0 %v5690
    %5961 = vmatprep.subr.bf16.mxu0 0
    %5962 = vmatpush1.bf16.xpose.msra.mxu0 0
    %5963 = vmatprep.subr.bf16.mxu0 0
    %5964 = vmatpush1.bf16.xpose.msra.mxu0 0
    %5965 = vmatprep.subr.bf16.mxu0 0
    %5966 = vmatpush1.bf16.xpose.msra.mxu0 0
    %5967 = vmatprep.subr.bf16.mxu0 0
    %5968 = vmatpush1.bf16.xpose.msra.mxu0 0
    %5969 = vmatprep.subr.bf16.mxu0 0
    %5970 = vmatpush1.bf16.xpose.msra.mxu0 0
    %5971 = vmatprep.subr.bf16.mxu0 0
    %5972 = vmatpush1.bf16.xpose.msra.mxu0 0
    %5973 = vmatprep.subr.bf16.mxu0 0
    %5974 = vmatpush1.bf16.xpose.msra.mxu0 0
    %5975 = vmatprep.subr.bf16.mxu0 0
    %5976 = vmatpush1.bf16.xpose.msra.mxu0 0
    %5977 = vmatprep.mubr.bf16.mxu0 0
    %5978 = vmatmul.mubr.bf16.gmra.mrb[0].mxu0 %v5780
    %v5979 = vpop.f32.mrb[0].mxu0
    %v5980 = vadd.f32 %v5939, %v5979
    %v5981 = vpop.f32.mrb[0].mxu0
    %v5982 = vpop.f32.mrb[0].mxu0
    %v5983 = vadd.f32 %v5942, %v5982
    %v5984 = vpop.f32.mrb[0].mxu0
    %5985 = vdwg.mxu0
    %5986 = vmax.xlane.f32.xlu0 %v5980
    %v5987 = vpop.xlane.xlu0 %5986
    %5988 = vmax.xlane.f32.xlu0 %v5983
    %v5989 = vpop.xlane.xlu0 %5988
    %v5990 = vsub.f32 %v5980, %v5987
    %v5991 = vsub.f32 %v5983, %v5989
    %v5992 = vmul.f32 %v5990, 1.442695
    %v5993 = vpow.pop %v5992
    %v5994 = vmul.f32 %v5991, 1.442695
    %v5995 = vpow.pop %v5994
    %v5996 = vmul.f32 %v5993, %v411
    %v5997 = vmul.f32 %v5995, %v412
    %5998 = vmatprep.subr.mxu0 0.0
    %5999 = vmatpush1.msra.mxu0 %v413
    %6000 = vmatprep.subr.mxu0 0.0
    %6001 = vmatpush1.msra.mxu0 %v414
    %6002 = vmatprep.subr.mxu0 0.0
    %6003 = vmatpush1.msra.mxu0 %v415
    %6004 = vmatprep.subr.mxu0 0.0
    %6005 = vmatpush1.msra.mxu0 %v416
    %6006 = vmatprep.subr.mxu0 0.0
    %6007 = vmatpush1.msra.mxu0 %v417
    %6008 = vmatprep.subr.mxu0 0.0
    %6009 = vmatpush1.msra.mxu0 %v418
    %6010 = vmatprep.subr.mxu0 0.0
    %6011 = vmatpush1.msra.mxu0 %v419
    %6012 = vmatprep.subr.mxu0 0.0
    %6013 = vmatpush1.msra.mxu0 %v420
    %6014 = vmatprep.subr.mxu0 0.0
    %6015 = vmatpush1.msra.mxu0 %v421
    %6016 = vmatprep.subr.mxu0 0.0
    %6017 = vmatpush1.msra.mxu0 %v422
    %6018 = vmatprep.subr.mxu0 0.0
    %6019 = vmatpush1.msra.mxu0 %v423
    %6020 = vmatprep.subr.mxu0 0.0
    %6021 = vmatpush1.msra.mxu0 %v424
    %6022 = vmatprep.subr.mxu0 0.0
    %6023 = vmatpush1.msra.mxu0 %v425
    %6024 = vmatprep.subr.mxu0 0.0
    %6025 = vmatpush1.msra.mxu0 %v426
    %6026 = vmatprep.subr.mxu0 0.0
    %6027 = vmatpush1.msra.mxu0 %v427
    %6028 = vmatprep.subr.mxu0 0.0
    %6029 = vmatpush1.msra.mxu0 %v428
    %6030 = vmatprep.subr.mxu0 0.0
    %6031 = vmatpush1.msra.mxu0 0.0
    %6032 = vmatprep.subr.mxu0 0.0
    %6033 = vmatpush1.msra.mxu0 0.0
    %6034 = vmatprep.subr.mxu0 0.0
    %6035 = vmatpush1.msra.mxu0 0.0
    %6036 = vmatprep.subr.mxu0 0.0
    %6037 = vmatpush1.msra.mxu0 0.0
    %6038 = vmatprep.subr.mxu0 0.0
    %6039 = vmatpush1.msra.mxu0 0.0
    %6040 = vmatprep.subr.mxu0 0.0
    %6041 = vmatpush1.msra.mxu0 0.0
    %6042 = vmatprep.subr.mxu0 0.0
    %6043 = vmatpush1.msra.mxu0 0.0
    %6044 = vmatprep.subr.mxu0 0.0
    %6045 = vmatpush1.msra.mxu0 0.0
    %6046 = vmatprep.subr.mxu0 0.0
    %6047 = vmatpush1.msra.mxu0 0.0
    %6048 = vmatprep.subr.mxu0 0.0
    %6049 = vmatpush1.msra.mxu0 0.0
    %6050 = vmatprep.subr.mxu0 0.0
    %6051 = vmatpush1.msra.mxu0 0.0
    %6052 = vmatprep.subr.mxu0 0.0
    %6053 = vmatpush1.msra.mxu0 0.0
    %6054 = vmatprep.subr.mxu0 0.0
    %6055 = vmatpush1.msra.mxu0 0.0
    %6056 = vmatprep.subr.mxu0 0.0
    %6057 = vmatpush1.msra.mxu0 0.0
    %6058 = vmatprep.subr.mxu0 0.0
    %6059 = vmatpush1.msra.mxu0 0.0
    %6060 = vmatprep.subr.mxu0 0.0
    %6061 = vmatpush1.msra.mxu0 0.0
    %6062 = vmatprep.mubr.f32.mxu0 0.0
    %6063 = vmatmul.mubr.f32.gmra.mrb[0].mxu0 %v5996
    %v6064 = vpop.f32.mrb[0].mxu0
    %v6065 = vadd.f32 0.0, %v6064
    %v6066 = vpop.f32.mrb[0].mxu0
    %6067 = vmatprep.mubr.f32.mxu0 0.0
    %6068 = vmatmul.mubr.f32.gmra.mrb[0].mxu0 %v5997
    %v6069 = vpop.f32.mrb[0].mxu0
    %v6070 = vadd.f32 0.0, %v6069
    %v6071 = vpop.f32.mrb[0].mxu0
    %6072 = vdwg.mxu0
    %v6073 = vmax.f32 %v6065, 1e-30
    %v6074 = vmax.f32 %v6070, 1e-30
    %v6075 = vrcp.pop %v6073
    %v6076 = vrcp.pop %v6074
    %v6077 = vmul.f32 %v5996, %v6075
    %v6078 = vmul.f32 %v5997, %v6076
    %v6079 = vpack.c.bf16 %v6078, %v6077
    %6080 = vmatprep.subr.bf16.mxu0 %v5701
    %6081 = vmatpush1.bf16.msra.mxu0 %v5700
    %6082 = vmatprep.subr.bf16.mxu0 %v5710
    %6083 = vmatpush1.bf16.msra.mxu0 %v5709
    %6084 = vmatprep.subr.bf16.mxu0 %v5719
    %6085 = vmatpush1.bf16.msra.mxu0 %v5718
    %6086 = vmatprep.subr.bf16.mxu0 %v5728
    %6087 = vmatpush1.bf16.msra.mxu0 %v5727
    %6088 = vmatprep.subr.bf16.mxu0 %v5737
    %6089 = vmatpush1.bf16.msra.mxu0 %v5736
    %6090 = vmatprep.subr.bf16.mxu0 %v5746
    %6091 = vmatpush1.bf16.msra.mxu0 %v5745
    %6092 = vmatprep.subr.bf16.mxu0 %v5755
    %6093 = vmatpush1.bf16.msra.mxu0 %v5754
    %6094 = vmatprep.subr.bf16.mxu0 %v5764
    %6095 = vmatpush1.bf16.msra.mxu0 %v5763
    %6096 = vmatprep.subr.bf16.mxu0 0
    %6097 = vmatpush1.bf16.msra.mxu0 0
    %6098 = vmatprep.subr.bf16.mxu0 0
    %6099 = vmatpush1.bf16.msra.mxu0 0
    %6100 = vmatprep.subr.bf16.mxu0 0
    %6101 = vmatpush1.bf16.msra.mxu0 0
    %6102 = vmatprep.subr.bf16.mxu0 0
    %6103 = vmatpush1.bf16.msra.mxu0 0
    %6104 = vmatprep.subr.bf16.mxu0 0
    %6105 = vmatpush1.bf16.msra.mxu0 0
    %6106 = vmatprep.subr.bf16.mxu0 0
    %6107 = vmatpush1.bf16.msra.mxu0 0
    %6108 = vmatprep.subr.bf16.mxu0 0
    %6109 = vmatpush1.bf16.msra.mxu0 0
    %6110 = vmatprep.subr.bf16.mxu0 0
    %6111 = vmatpush1.bf16.msra.mxu0 0
    %6112 = vmatprep.mubr.bf16.mxu0 0
    %6113 = vmatmul.mubr.bf16.gmra.mrb[0].mxu0 %v6079
    %v6114 = vpop.f32.mrb[0].mxu0
    %v6115 = vadd.f32 %v4984, %v6114
    %v6116 = vpop.f32.mrb[0].mxu0
    %v6117 = vadd.f32 %v5025, %v6116
    %v6118 = vpop.f32.mrb[0].mxu0
    %v6119 = vadd.f32 %v4988, %v6118
    %v6120 = vpop.f32.mrb[0].mxu0
    %v6121 = vadd.f32 %v5029, %v6120
    %6122 = vdwg.mxu0
    %6123 = vmatprep.subr.bf16.mxu0 %v5703
    %6124 = vmatpush1.bf16.msra.mxu0 %v5702
    %6125 = vmatprep.subr.bf16.mxu0 %v5712
    %6126 = vmatpush1.bf16.msra.mxu0 %v5711
    %6127 = vmatprep.subr.bf16.mxu0 %v5721
    %6128 = vmatpush1.bf16.msra.mxu0 %v5720
    %6129 = vmatprep.subr.bf16.mxu0 %v5730
    %6130 = vmatpush1.bf16.msra.mxu0 %v5729
    %6131 = vmatprep.subr.bf16.mxu0 %v5739
    %6132 = vmatpush1.bf16.msra.mxu0 %v5738
    %6133 = vmatprep.subr.bf16.mxu0 %v5748
    %6134 = vmatpush1.bf16.msra.mxu0 %v5747
    %6135 = vmatprep.subr.bf16.mxu0 %v5757
    %6136 = vmatpush1.bf16.msra.mxu0 %v5756
    %6137 = vmatprep.subr.bf16.mxu0 %v5766
    %6138 = vmatpush1.bf16.msra.mxu0 %v5765
    %6139 = vmatprep.subr.bf16.mxu0 0
    %6140 = vmatpush1.bf16.msra.mxu0 0
    %6141 = vmatprep.subr.bf16.mxu0 0
    %6142 = vmatpush1.bf16.msra.mxu0 0
    %6143 = vmatprep.subr.bf16.mxu0 0
    %6144 = vmatpush1.bf16.msra.mxu0 0
    %6145 = vmatprep.subr.bf16.mxu0 0
    %6146 = vmatpush1.bf16.msra.mxu0 0
    %6147 = vmatprep.subr.bf16.mxu0 0
    %6148 = vmatpush1.bf16.msra.mxu0 0
    %6149 = vmatprep.subr.bf16.mxu0 0
    %6150 = vmatpush1.bf16.msra.mxu0 0
    %6151 = vmatprep.subr.bf16.mxu0 0
    %6152 = vmatpush1.bf16.msra.mxu0 0
    %6153 = vmatprep.subr.bf16.mxu0 0
    %6154 = vmatpush1.bf16.msra.mxu0 0
    %6155 = vmatprep.mubr.bf16.mxu0 0
    %6156 = vmatmul.mubr.bf16.gmra.mrb[0].mxu0 %v6079
    %v6157 = vpop.f32.mrb[0].mxu0
    %v6158 = vadd.f32 %v5027, %v6157
    %v6159 = vpop.f32.mrb[0].mxu0
    %v6160 = vadd.f32 %v5068, %v6159
    %v6161 = vpop.f32.mrb[0].mxu0
    %v6162 = vadd.f32 %v5031, %v6161
    %v6163 = vpop.f32.mrb[0].mxu0
    %v6164 = vadd.f32 %v5072, %v6163
    %6165 = vdwg.mxu0
    %6166 = vmatprep.subr.bf16.mxu0 %v5705
    %6167 = vmatpush1.bf16.msra.mxu0 %v5704
    %6168 = vmatprep.subr.bf16.mxu0 %v5714
    %6169 = vmatpush1.bf16.msra.mxu0 %v5713
    %6170 = vmatprep.subr.bf16.mxu0 %v5723
    %6171 = vmatpush1.bf16.msra.mxu0 %v5722
    %6172 = vmatprep.subr.bf16.mxu0 %v5732
    %6173 = vmatpush1.bf16.msra.mxu0 %v5731
    %6174 = vmatprep.subr.bf16.mxu0 %v5741
    %6175 = vmatpush1.bf16.msra.mxu0 %v5740
    %6176 = vmatprep.subr.bf16.mxu0 %v5750
    %6177 = vmatpush1.bf16.msra.mxu0 %v5749
    %6178 = vmatprep.subr.bf16.mxu0 %v5759
    %6179 = vmatpush1.bf16.msra.mxu0 %v5758
    %6180 = vmatprep.subr.bf16.mxu0 %v5768
    %6181 = vmatpush1.bf16.msra.mxu0 %v5767
    %6182 = vmatprep.subr.bf16.mxu0 0
    %6183 = vmatpush1.bf16.msra.mxu0 0
    %6184 = vmatprep.subr.bf16.mxu0 0
    %6185 = vmatpush1.bf16.msra.mxu0 0
    %6186 = vmatprep.subr.bf16.mxu0 0
    %6187 = vmatpush1.bf16.msra.mxu0 0
    %6188 = vmatprep.subr.bf16.mxu0 0
    %6189 = vmatpush1.bf16.msra.mxu0 0
    %6190 = vmatprep.subr.bf16.mxu0 0
    %6191 = vmatpush1.bf16.msra.mxu0 0
    %6192 = vmatprep.subr.bf16.mxu0 0
    %6193 = vmatpush1.bf16.msra.mxu0 0
    %6194 = vmatprep.subr.bf16.mxu0 0
    %6195 = vmatpush1.bf16.msra.mxu0 0
    %6196 = vmatprep.subr.bf16.mxu0 0
    %6197 = vmatpush1.bf16.msra.mxu0 0
    %6198 = vmatprep.mubr.bf16.mxu0 0
    %6199 = vmatmul.mubr.bf16.gmra.mrb[0].mxu0 %v6079
    %v6200 = vpop.f32.mrb[0].mxu0
    %v6201 = vadd.f32 %v5070, %v6200
    %v6202 = vpop.f32.mrb[0].mxu0
    %v6203 = vadd.f32 %v5111, %v6202
    %v6204 = vpop.f32.mrb[0].mxu0
    %v6205 = vadd.f32 %v5074, %v6204
    %v6206 = vpop.f32.mrb[0].mxu0
    %v6207 = vadd.f32 %v5115, %v6206
    %6208 = vdwg.mxu0
    %6209 = vmatprep.subr.bf16.mxu0 %v5707
    %6210 = vmatpush1.bf16.msra.mxu0 %v5706
    %6211 = vmatprep.subr.bf16.mxu0 %v5716
    %6212 = vmatpush1.bf16.msra.mxu0 %v5715
    %6213 = vmatprep.subr.bf16.mxu0 %v5725
    %6214 = vmatpush1.bf16.msra.mxu0 %v5724
    %6215 = vmatprep.subr.bf16.mxu0 %v5734
    %6216 = vmatpush1.bf16.msra.mxu0 %v5733
    %6217 = vmatprep.subr.bf16.mxu0 %v5743
    %6218 = vmatpush1.bf16.msra.mxu0 %v5742
    %6219 = vmatprep.subr.bf16.mxu0 %v5752
    %6220 = vmatpush1.bf16.msra.mxu0 %v5751
    %6221 = vmatprep.subr.bf16.mxu0 %v5761
    %6222 = vmatpush1.bf16.msra.mxu0 %v5760
    %6223 = vmatprep.subr.bf16.mxu0 %v5770
    %6224 = vmatpush1.bf16.msra.mxu0 %v5769
    %6225 = vmatprep.subr.bf16.mxu0 0
    %6226 = vmatpush1.bf16.msra.mxu0 0
    %6227 = vmatprep.subr.bf16.mxu0 0
    %6228 = vmatpush1.bf16.msra.mxu0 0
    %6229 = vmatprep.subr.bf16.mxu0 0
    %6230 = vmatpush1.bf16.msra.mxu0 0
    %6231 = vmatprep.subr.bf16.mxu0 0
    %6232 = vmatpush1.bf16.msra.mxu0 0
    %6233 = vmatprep.subr.bf16.mxu0 0
    %6234 = vmatpush1.bf16.msra.mxu0 0
    %6235 = vmatprep.subr.bf16.mxu0 0
    %6236 = vmatpush1.bf16.msra.mxu0 0
    %6237 = vmatprep.subr.bf16.mxu0 0
    %6238 = vmatpush1.bf16.msra.mxu0 0
    %6239 = vmatprep.subr.bf16.mxu0 0
    %6240 = vmatpush1.bf16.msra.mxu0 0
    %6241 = vmatprep.mubr.bf16.mxu0 0
    %6242 = vmatmul.mubr.bf16.gmra.mrb[0].mxu0 %v6079
    %v6243 = vpop.f32.mrb[0].mxu0
    %v6244 = vadd.f32 %v5113, %v6243
    %v6245 = vpop.f32.mrb[0].mxu0
    %v6246 = vadd.f32 %v5154, %v6245
    %v6247 = vpop.f32.mrb[0].mxu0
    %v6248 = vadd.f32 %v5117, %v6247
    %v6249 = vpop.f32.mrb[0].mxu0
    %v6250 = vadd.f32 %v5158, %v6249
    %6251 = vdwg.mxu0
    %6252 = vmatprep.subr.bf16.mxu0 0
    %6253 = vmatpush1.bf16.msra.mxu0 %v5708
    %6254 = vmatprep.subr.bf16.mxu0 0
    %6255 = vmatpush1.bf16.msra.mxu0 %v5717
    %6256 = vmatprep.subr.bf16.mxu0 0
    %6257 = vmatpush1.bf16.msra.mxu0 %v5726
    %6258 = vmatprep.subr.bf16.mxu0 0
    %6259 = vmatpush1.bf16.msra.mxu0 %v5735
    %6260 = vmatprep.subr.bf16.mxu0 0
    %6261 = vmatpush1.bf16.msra.mxu0 %v5744
    %6262 = vmatprep.subr.bf16.mxu0 0
    %6263 = vmatpush1.bf16.msra.mxu0 %v5753
    %6264 = vmatprep.subr.bf16.mxu0 0
    %6265 = vmatpush1.bf16.msra.mxu0 %v5762
    %6266 = vmatprep.subr.bf16.mxu0 0
    %6267 = vmatpush1.bf16.msra.mxu0 %v5771
    %6268 = vmatprep.subr.bf16.mxu0 0
    %6269 = vmatpush1.bf16.msra.mxu0 0
    %6270 = vmatprep.subr.bf16.mxu0 0
    %6271 = vmatpush1.bf16.msra.mxu0 0
    %6272 = vmatprep.subr.bf16.mxu0 0
    %6273 = vmatpush1.bf16.msra.mxu0 0
    %6274 = vmatprep.subr.bf16.mxu0 0
    %6275 = vmatpush1.bf16.msra.mxu0 0
    %6276 = vmatprep.subr.bf16.mxu0 0
    %6277 = vmatpush1.bf16.msra.mxu0 0
    %6278 = vmatprep.subr.bf16.mxu0 0
    %6279 = vmatpush1.bf16.msra.mxu0 0
    %6280 = vmatprep.subr.bf16.mxu0 0
    %6281 = vmatpush1.bf16.msra.mxu0 0
    %6282 = vmatprep.subr.bf16.mxu0 0
    %6283 = vmatpush1.bf16.msra.mxu0 0
    %6284 = vmatprep.mubr.bf16.mxu0 0
    %6285 = vmatmul.mubr.bf16.gmra.mrb[0].mxu0 %v6079
    %v6286 = vpop.f32.mrb[0].mxu0
    %v6287 = vadd.f32 %v5156, %v6286
    %v6288 = vpop.f32.mrb[0].mxu0
    %v6289 = vpop.f32.mrb[0].mxu0
    %v6290 = vadd.f32 %v5160, %v6289
    %v6291 = vpop.f32.mrb[0].mxu0
    %6292 = vdwg.mxu0
    %v6293 = vadd.f32 %v6115, %v905
    %v6294 = vadd.f32 %v6117, %v907
    %v6295 = vadd.f32 %v6158, %v948
    %v6296 = vadd.f32 %v6160, %v950
    %v6297 = vadd.f32 %v6201, %v991
    %v6298 = vadd.f32 %v6203, %v993
    %v6299 = vadd.f32 %v6244, %v1034
    %v6300 = vadd.f32 %v6246, %v1036
    %v6301 = vadd.f32 %v6287, %v1077
    %v6302 = vadd.f32 %v6119, %v909
    %v6303 = vadd.f32 %v6121, %v911
    %v6304 = vadd.f32 %v6162, %v952
    %v6305 = vadd.f32 %v6164, %v954
    %v6306 = vadd.f32 %v6205, %v995
    %v6307 = vadd.f32 %v6207, %v997
    %v6308 = vadd.f32 %v6248, %v1038
    %v6309 = vadd.f32 %v6250, %v1040
    %v6310 = vadd.f32 %v6290, %v1080
    %s6311 = sshll.u32 %s430, 4
    %6312 = dma.done %s367, %s6311
    %v6313 = vpack.c.bf16 %v6302, %v6293
    %v6314 = vpack.c.bf16 %v6303, %v6294
    %v6315 = vpack.c.bf16 %v6304, %v6295
    %v6316 = vpack.c.bf16 %v6305, %v6296
    %v6317 = vpack.c.bf16 %v6306, %v6297
    %v6318 = vpack.c.bf16 %v6307, %v6298
    %v6319 = vpack.c.bf16 %v6308, %v6299
    %v6320 = vpack.c.bf16 %v6309, %v6300
    %v6321 = vpack.c.bf16 %v6310, %v6301
    %v6322 = vld [vmem:[#allocation7] sm:$0xff]
    %v6323 = vld [vmem:[#allocation7 + $0x8] sm:$0xff]
    %v6324 = vld [vmem:[#allocation7 + $0x10] sm:$0xff]
    %v6325 = vld [vmem:[#allocation7 + $0x18] sm:$0xff]
    %v6326 = vld [vmem:[#allocation7 + $0x20] sm:$0xff]
    %v6327 = vld [vmem:[#allocation7 + $0x28] sm:$0xff]
    %v6328 = vld [vmem:[#allocation7 + $0x30] sm:$0xff]
    %v6329 = vld [vmem:[#allocation7 + $0x38] sm:$0xff]
    %v6330 = vld [vmem:[#allocation7 + $0x40] sm:$0xff]
    %v6331 = vld [vmem:[#allocation7 + $0x48] sm:$0xff]
    %v6332 = vld [vmem:[#allocation7 + $0x50] sm:$0xff]
    %v6333 = vld [vmem:[#allocation7 + $0x58] sm:$0xff]
    %v6334 = vld [vmem:[#allocation7 + $0x60] sm:$0xff]
    %v6335 = vld [vmem:[#allocation7 + $0x68] sm:$0xff]
    %v6336 = vld [vmem:[#allocation7 + $0x70] sm:$0xff]
    %v6337 = vld [vmem:[#allocation7 + $0x78] sm:$0xff]
    %v6338 = vld [vmem:[#allocation7 + $0x80] sm:$0xff]
    %v6339 = vld [vmem:[#allocation7 + $0x88] sm:$0xff]
    %v6340 = vld [vmem:[#allocation7 + $0x90] sm:$0xff]
    %v6341 = vld [vmem:[#allocation7 + $0x98] sm:$0xff]
    %v6342 = vld [vmem:[#allocation7 + $0xa0] sm:$0xff]
    %v6343 = vld [vmem:[#allocation7 + $0xa8] sm:$0xff]
    %v6344 = vld [vmem:[#allocation7 + $0xb0] sm:$0xff]
    %v6345 = vld [vmem:[#allocation7 + $0xb8] sm:$0xff]
    %v6346 = vld [vmem:[#allocation7 + $0xc0] sm:$0xff]
    %v6347 = vld [vmem:[#allocation7 + $0xc8] sm:$0xff]
    %v6348 = vld [vmem:[#allocation7 + $0xd0] sm:$0xff]
    %v6349 = vld [vmem:[#allocation7 + $0xd8] sm:$0xff]
    %v6350 = vld [vmem:[#allocation7 + $0xe0] sm:$0xff]
    %v6351 = vld [vmem:[#allocation7 + $0xe8] sm:$0xff]
    %v6352 = vld [vmem:[#allocation7 + $0xf0] sm:$0xff]
    %v6353 = vld [vmem:[#allocation7 + $0xf8] sm:$0xff]
    %v6354 = vld [vmem:[#allocation7 + $0x100] sm:$0xff]
    %v6355 = vld [vmem:[#allocation7 + $0x108] sm:$0xff]
    %v6356 = vld [vmem:[#allocation7 + $0x110] sm:$0xff]
    %v6357 = vld [vmem:[#allocation7 + $0x118] sm:$0xff]
    %v6358 = vld [vmem:[#allocation7 + $0x120] sm:$0xff]
    %v6359 = vld [vmem:[#allocation7 + $0x128] sm:$0xff]
    %v6360 = vld [vmem:[#allocation7 + $0x130] sm:$0xff]
    %v6361 = vld [vmem:[#allocation7 + $0x138] sm:$0xff]
    %v6362 = vld [vmem:[#allocation7 + $0x140] sm:$0xff]
    %v6363 = vld [vmem:[#allocation7 + $0x148] sm:$0xff]
    %v6364 = vld [vmem:[#allocation7 + $0x150] sm:$0xff]
    %v6365 = vld [vmem:[#allocation7 + $0x158] sm:$0xff]
    %v6366 = vld [vmem:[#allocation7 + $0x160] sm:$0xff]
    %v6367 = vld [vmem:[#allocation7 + $0x168] sm:$0xff]
    %v6368 = vld [vmem:[#allocation7 + $0x170] sm:$0xff]
    %v6369 = vld [vmem:[#allocation7 + $0x178] sm:$0xff]
    %v6370 = vld [vmem:[#allocation7 + $0x180] sm:$0xff]
    %v6371 = vld [vmem:[#allocation7 + $0x188] sm:$0xff]
    %v6372 = vld [vmem:[#allocation7 + $0x190] sm:$0xff]
    %v6373 = vld [vmem:[#allocation7 + $0x198] sm:$0xff]
    %v6374 = vld [vmem:[#allocation7 + $0x1a0] sm:$0xff]
    %v6375 = vld [vmem:[#allocation7 + $0x1a8] sm:$0xff]
    %v6376 = vld [vmem:[#allocation7 + $0x1b0] sm:$0xff]
    %v6377 = vld [vmem:[#allocation7 + $0x1b8] sm:$0xff]
    %v6378 = vld [vmem:[#allocation7 + $0x1c0] sm:$0xff]
    %v6379 = vld [vmem:[#allocation7 + $0x1c8] sm:$0xff]
    %v6380 = vld [vmem:[#allocation7 + $0x1d0] sm:$0xff]
    %v6381 = vld [vmem:[#allocation7 + $0x1d8] sm:$0xff]
    %v6382 = vld [vmem:[#allocation7 + $0x1e0] sm:$0xff]
    %v6383 = vld [vmem:[#allocation7 + $0x1e8] sm:$0xff]
    %v6384 = vld [vmem:[#allocation7 + $0x1f0] sm:$0xff]
    %v6385 = vld [vmem:[#allocation7 + $0x1f8] sm:$0xff]
    %v6386 = vld [vmem:[#allocation7 + $0x200] sm:$0xff]
    %v6387 = vld [vmem:[#allocation7 + $0x208] sm:$0xff]
    %v6388 = vld [vmem:[#allocation7 + $0x210] sm:$0xff]
    %v6389 = vld [vmem:[#allocation7 + $0x218] sm:$0xff]
    %v6390 = vld [vmem:[#allocation7 + $0x220] sm:$0xff]
    %v6391 = vld [vmem:[#allocation7 + $0x228] sm:$0xff]
    %v6392 = vld [vmem:[#allocation7 + $0x230] sm:$0xff]
    %v6393 = vld [vmem:[#allocation7 + $0x238] sm:$0xff]
    %v6394 = vld [vmem:[#allocation28] sm:$0x1]
    %v6396 = vlaneseq
    %v6397 = vshrl.u32 %v6396, 7
    %v6398 = vsub.s32 0, %v6397
    %v6399 = vrot.slane %v6394, %v6398
    %6401 = vmatprep.subr.bf16.mxu0 0
    %6402 = vmatpush1.bf16.msra.mxu0 %v6322
    %6403 = vmatprep.subr.bf16.mxu0 0
    %6404 = vmatpush1.bf16.msra.mxu0 %v6323
    %6405 = vmatprep.subr.bf16.mxu0 0
    %6406 = vmatpush1.bf16.msra.mxu0 %v6324
    %6407 = vmatprep.subr.bf16.mxu0 0
    %6408 = vmatpush1.bf16.msra.mxu0 %v6325
    %6409 = vmatprep.subr.bf16.mxu0 0
    %6410 = vmatpush1.bf16.msra.mxu0 %v6326
    %6411 = vmatprep.subr.bf16.mxu0 0
    %6412 = vmatpush1.bf16.msra.mxu0 %v6327
    %6413 = vmatprep.subr.bf16.mxu0 0
    %6414 = vmatpush1.bf16.msra.mxu0 %v6328
    %6415 = vmatprep.subr.bf16.mxu0 0
    %6416 = vmatpush1.bf16.msra.mxu0 %v6329
    %6417 = vmatprep.subr.bf16.mxu0 0
    %6418 = vmatpush1.bf16.msra.mxu0 %v6330
    %6419 = vmatprep.subr.bf16.mxu0 0
    %6420 = vmatpush1.bf16.msra.mxu0 %v6331
    %6421 = vmatprep.subr.bf16.mxu0 0
    %6422 = vmatpush1.bf16.msra.mxu0 %v6332
    %6423 = vmatprep.subr.bf16.mxu0 0
    %6424 = vmatpush1.bf16.msra.mxu0 %v6333
    %6425 = vmatprep.subr.bf16.mxu0 0
    %6426 = vmatpush1.bf16.msra.mxu0 %v6334
    %6427 = vmatprep.subr.bf16.mxu0 0
    %6428 = vmatpush1.bf16.msra.mxu0 %v6335
    %6429 = vmatprep.subr.bf16.mxu0 0
    %6430 = vmatpush1.bf16.msra.mxu0 %v6336
    %6431 = vmatprep.subr.bf16.mxu0 0
    %6432 = vmatpush1.bf16.msra.mxu0 %v6337
    %6433 = vmatprep.mubr.bf16.mxu0 %v6314
    %6434 = vmatmul.mubr.bf16.gmra.mrb[0].mxu0 %v6313
    %v6435 = vpop.f32.mrb[0].mxu0
    %v6436 = vadd.f32 %v6399, %v6435
    %v6437 = vpop.f32.mrb[0].mxu0
    %v6438 = vpop.f32.mrb[0].mxu0
    %v6439 = vadd.f32 %v6399, %v6438
    %v6440 = vpop.f32.mrb[0].mxu0
    %6441 = vdwg.mxu0
    %6442 = vmatprep.subr.bf16.mxu0 0
    %6443 = vmatpush1.bf16.msra.mxu0 %v6338
    %6444 = vmatprep.subr.bf16.mxu0 0
    %6445 = vmatpush1.bf16.msra.mxu0 %v6339
    %6446 = vmatprep.subr.bf16.mxu0 0
    %6447 = vmatpush1.bf16.msra.mxu0 %v6340
    %6448 = vmatprep.subr.bf16.mxu0 0
    %6449 = vmatpush1.bf16.msra.mxu0 %v6341
    %6450 = vmatprep.subr.bf16.mxu0 0
    %6451 = vmatpush1.bf16.msra.mxu0 %v6342
    %6452 = vmatprep.subr.bf16.mxu0 0
    %6453 = vmatpush1.bf16.msra.mxu0 %v6343
    %6454 = vmatprep.subr.bf16.mxu0 0
    %6455 = vmatpush1.bf16.msra.mxu0 %v6344
    %6456 = vmatprep.subr.bf16.mxu0 0
    %6457 = vmatpush1.bf16.msra.mxu0 %v6345
    %6458 = vmatprep.subr.bf16.mxu0 0
    %6459 = vmatpush1.bf16.msra.mxu0 %v6346
    %6460 = vmatprep.subr.bf16.mxu0 0
    %6461 = vmatpush1.bf16.msra.mxu0 %v6347
    %6462 = vmatprep.subr.bf16.mxu0 0
    %6463 = vmatpush1.bf16.msra.mxu0 %v6348
    %6464 = vmatprep.subr.bf16.mxu0 0
    %6465 = vmatpush1.bf16.msra.mxu0 %v6349
    %6466 = vmatprep.subr.bf16.mxu0 0
    %6467 = vmatpush1.bf16.msra.mxu0 %v6350
    %6468 = vmatprep.subr.bf16.mxu0 0
    %6469 = vmatpush1.bf16.msra.mxu0 %v6351
    %6470 = vmatprep.subr.bf16.mxu0 0
    %6471 = vmatpush1.bf16.msra.mxu0 %v6352
    %6472 = vmatprep.subr.bf16.mxu0 0
    %6473 = vmatpush1.bf16.msra.mxu0 %v6353
    %6474 = vmatprep.mubr.bf16.mxu0 %v6316
    %6475 = vmatmul.mubr.bf16.gmra.mrb[0].mxu0 %v6315
    %v6476 = vpop.f32.mrb[0].mxu0
    %v6477 = vadd.f32 %v6436, %v6476
    %v6478 = vpop.f32.mrb[0].mxu0
    %v6479 = vpop.f32.mrb[0].mxu0
    %v6480 = vadd.f32 %v6439, %v6479
    %v6481 = vpop.f32.mrb[0].mxu0
    %6482 = vdwg.mxu0
    %6483 = vmatprep.subr.bf16.mxu0 0
    %6484 = vmatpush1.bf16.msra.mxu0 %v6354
    %6485 = vmatprep.subr.bf16.mxu0 0
    %6486 = vmatpush1.bf16.msra.mxu0 %v6355
    %6487 = vmatprep.subr.bf16.mxu0 0
    %6488 = vmatpush1.bf16.msra.mxu0 %v6356
    %6489 = vmatprep.subr.bf16.mxu0 0
    %6490 = vmatpush1.bf16.msra.mxu0 %v6357
    %6491 = vmatprep.subr.bf16.mxu0 0
    %6492 = vmatpush1.bf16.msra.mxu0 %v6358
    %6493 = vmatprep.subr.bf16.mxu0 0
    %6494 = vmatpush1.bf16.msra.mxu0 %v6359
    %6495 = vmatprep.subr.bf16.mxu0 0
    %6496 = vmatpush1.bf16.msra.mxu0 %v6360
    %6497 = vmatprep.subr.bf16.mxu0 0
    %6498 = vmatpush1.bf16.msra.mxu0 %v6361
    %6499 = vmatprep.subr.bf16.mxu0 0
    %6500 = vmatpush1.bf16.msra.mxu0 %v6362
    %6501 = vmatprep.subr.bf16.mxu0 0
    %6502 = vmatpush1.bf16.msra.mxu0 %v6363
    %6503 = vmatprep.subr.bf16.mxu0 0
    %6504 = vmatpush1.bf16.msra.mxu0 %v6364
    %6505 = vmatprep.subr.bf16.mxu0 0
    %6506 = vmatpush1.bf16.msra.mxu0 %v6365
    %6507 = vmatprep.subr.bf16.mxu0 0
    %6508 = vmatpush1.bf16.msra.mxu0 %v6366
    %6509 = vmatprep.subr.bf16.mxu0 0
    %6510 = vmatpush1.bf16.msra.mxu0 %v6367
    %6511 = vmatprep.subr.bf16.mxu0 0
    %6512 = vmatpush1.bf16.msra.mxu0 %v6368
    %6513 = vmatprep.subr.bf16.mxu0 0
    %6514 = vmatpush1.bf16.msra.mxu0 %v6369
    %6515 = vmatprep.mubr.bf16.mxu0 %v6318
    %6516 = vmatmul.mubr.bf16.gmra.mrb[0].mxu0 %v6317
    %v6517 = vpop.f32.mrb[0].mxu0
    %v6518 = vadd.f32 %v6477, %v6517
    %v6519 = vpop.f32.mrb[0].mxu0
    %v6520 = vpop.f32.mrb[0].mxu0
    %v6521 = vadd.f32 %v6480, %v6520
    %v6522 = vpop.f32.mrb[0].mxu0
    %6523 = vdwg.mxu0
    %6524 = vmatprep.subr.bf16.mxu0 0
    %6525 = vmatpush1.bf16.msra.mxu0 %v6370
    %6526 = vmatprep.subr.bf16.mxu0 0
    %6527 = vmatpush1.bf16.msra.mxu0 %v6371
    %6528 = vmatprep.subr.bf16.mxu0 0
    %6529 = vmatpush1.bf16.msra.mxu0 %v6372
    %6530 = vmatprep.subr.bf16.mxu0 0
    %6531 = vmatpush1.bf16.msra.mxu0 %v6373
    %6532 = vmatprep.subr.bf16.mxu0 0
    %6533 = vmatpush1.bf16.msra.mxu0 %v6374
    %6534 = vmatprep.subr.bf16.mxu0 0
    %6535 = vmatpush1.bf16.msra.mxu0 %v6375
    %6536 = vmatprep.subr.bf16.mxu0 0
    %6537 = vmatpush1.bf16.msra.mxu0 %v6376
    %6538 = vmatprep.subr.bf16.mxu0 0
    %6539 = vmatpush1.bf16.msra.mxu0 %v6377
    %6540 = vmatprep.subr.bf16.mxu0 0
    %6541 = vmatpush1.bf16.msra.mxu0 %v6378
    %6542 = vmatprep.subr.bf16.mxu0 0
    %6543 = vmatpush1.bf16.msra.mxu0 %v6379
    %6544 = vmatprep.subr.bf16.mxu0 0
    %6545 = vmatpush1.bf16.msra.mxu0 %v6380
    %6546 = vmatprep.subr.bf16.mxu0 0
    %6547 = vmatpush1.bf16.msra.mxu0 %v6381
    %6548 = vmatprep.subr.bf16.mxu0 0
    %6549 = vmatpush1.bf16.msra.mxu0 %v6382
    %6550 = vmatprep.subr.bf16.mxu0 0
    %6551 = vmatpush1.bf16.msra.mxu0 %v6383
    %6552 = vmatprep.subr.bf16.mxu0 0
    %6553 = vmatpush1.bf16.msra.mxu0 %v6384
    %6554 = vmatprep.subr.bf16.mxu0 0
    %6555 = vmatpush1.bf16.msra.mxu0 %v6385
    %6556 = vmatprep.mubr.bf16.mxu0 %v6320
    %6557 = vmatmul.mubr.bf16.gmra.mrb[0].mxu0 %v6319
    %v6558 = vpop.f32.mrb[0].mxu0
    %v6559 = vadd.f32 %v6518, %v6558
    %v6560 = vpop.f32.mrb[0].mxu0
    %v6561 = vpop.f32.mrb[0].mxu0
    %v6562 = vadd.f32 %v6521, %v6561
    %v6563 = vpop.f32.mrb[0].mxu0
    %6564 = vdwg.mxu0
    %6565 = vmatprep.subr.bf16.mxu0 0
    %6566 = vmatpush1.bf16.msra.mxu0 %v6386
    %6567 = vmatprep.subr.bf16.mxu0 0
    %6568 = vmatpush1.bf16.msra.mxu0 %v6387
    %6569 = vmatprep.subr.bf16.mxu0 0
    %6570 = vmatpush1.bf16.msra.mxu0 %v6388
    %6571 = vmatprep.subr.bf16.mxu0 0
    %6572 = vmatpush1.bf16.msra.mxu0 %v6389
    %6573 = vmatprep.subr.bf16.mxu0 0
    %6574 = vmatpush1.bf16.msra.mxu0 %v6390
    %6575 = vmatprep.subr.bf16.mxu0 0
    %6576 = vmatpush1.bf16.msra.mxu0 %v6391
    %6577 = vmatprep.subr.bf16.mxu0 0
    %6578 = vmatpush1.bf16.msra.mxu0 %v6392
    %6579 = vmatprep.subr.bf16.mxu0 0
    %6580 = vmatpush1.bf16.msra.mxu0 %v6393
    %6581 = vmatprep.subr.bf16.mxu0 0
    %6582 = vmatpush1.bf16.msra.mxu0 0
    %6583 = vmatprep.subr.bf16.mxu0 0
    %6584 = vmatpush1.bf16.msra.mxu0 0
    %6585 = vmatprep.subr.bf16.mxu0 0
    %6586 = vmatpush1.bf16.msra.mxu0 0
    %6587 = vmatprep.subr.bf16.mxu0 0
    %6588 = vmatpush1.bf16.msra.mxu0 0
    %6589 = vmatprep.subr.bf16.mxu0 0
    %6590 = vmatpush1.bf16.msra.mxu0 0
    %6591 = vmatprep.subr.bf16.mxu0 0
    %6592 = vmatpush1.bf16.msra.mxu0 0
    %6593 = vmatprep.subr.bf16.mxu0 0
    %6594 = vmatpush1.bf16.msra.mxu0 0
    %6595 = vmatprep.subr.bf16.mxu0 0
    %6596 = vmatpush1.bf16.msra.mxu0 0
    %6597 = vmatprep.mubr.bf16.mxu0 0
    %6598 = vmatmul.mubr.bf16.gmra.mrb[0].mxu0 %v6321
    %v6599 = vpop.f32.mrb[0].mxu0
    %v6600 = vadd.f32 %v6559, %v6599
    %v6601 = vpop.f32.mrb[0].mxu0
    %v6602 = vpop.f32.mrb[0].mxu0
    %v6603 = vadd.f32 %v6562, %v6602
    %v6604 = vpop.f32.mrb[0].mxu0
    %6605 = vdwg.mxu0
    %v6606 = vmul.f32 %v6600, 0.5
    %v6607 = vmul.f32 %v6603, 0.5
    %v6608 = vmul.f32 %v6600, 0.044715
    %v6609 = vmul.f32 %v6603, 0.044715
    %v6610 = vmul.f32 %v6608, %v6600
    %v6611 = vmul.f32 %v6609, %v6603
    %v6612 = vmul.f32 %v6610, %v6600
    %v6613 = vmul.f32 %v6611, %v6603
    %v6614 = vadd.f32 %v6600, %v6612
    %v6615 = vadd.f32 %v6603, %v6613
    %v6616 = vmul.f32 %v6614, 0.7978846
    %v6617 = vmul.f32 %v6615, 0.7978846
    %v6618 = vtanh.pop %v6616
    %v6619 = vtanh.pop %v6617
    %v6620 = vadd.f32 %v6618, 1.0
    %v6621 = vadd.f32 %v6619, 1.0
    %v6622 = vmul.f32 %v6606, %v6620
    %v6623 = vmul.f32 %v6607, %v6621
    %s6624 = smul.u32 %s744, 1
    %s6625 = sshll.u32 %s6624, 4
    %6626 = dma.done %s379, %s6625
    %v6627 = vpack.c.bf16 %v6623, %v6622
    %v6628 = vld [vmem:[#allocation8] sm:$0xff]
    %v6629 = vld [vmem:[#allocation8 + $0x8] sm:$0xff]
    %v6630 = vld [vmem:[#allocation8 + $0x10] sm:$0xff]
    %v6631 = vld [vmem:[#allocation8 + $0x18] sm:$0xff]
    %v6632 = vld [vmem:[#allocation8 + $0x20] sm:$0xff]
    %v6633 = vld [vmem:[#allocation8 + $0x28] sm:$0xff]
    %v6634 = vld [vmem:[#allocation8 + $0x30] sm:$0xff]
    %v6635 = vld [vmem:[#allocation8 + $0x38] sm:$0xff]
    %v6636 = vld [vmem:[#allocation30] sm:$0x1]
    %v6638 = vlaneseq
    %v6639 = vshrl.u32 %v6638, 7
    %v6640 = vsub.s32 0, %v6639
    %v6641 = vrot.slane %v6636, %v6640
    %6643 = vmatprep.subr.bf16.mxu0 0
    %6644 = vmatpush1.bf16.msra.mxu0 %v6628
    %6645 = vmatprep.subr.bf16.mxu0 0
    %6646 = vmatpush1.bf16.msra.mxu0 %v6629
    %6647 = vmatprep.subr.bf16.mxu0 0
    %6648 = vmatpush1.bf16.msra.mxu0 %v6630
    %6649 = vmatprep.subr.bf16.mxu0 0
    %6650 = vmatpush1.bf16.msra.mxu0 %v6631
    %6651 = vmatprep.subr.bf16.mxu0 0
    %6652 = vmatpush1.bf16.msra.mxu0 %v6632
    %6653 = vmatprep.subr.bf16.mxu0 0
    %6654 = vmatpush1.bf16.msra.mxu0 %v6633
    %6655 = vmatprep.subr.bf16.mxu0 0
    %6656 = vmatpush1.bf16.msra.mxu0 %v6634
    %6657 = vmatprep.subr.bf16.mxu0 0
    %6658 = vmatpush1.bf16.msra.mxu0 %v6635
    %6659 = vmatprep.subr.bf16.mxu0 0
    %6660 = vmatpush1.bf16.msra.mxu0 0
    %6661 = vmatprep.subr.bf16.mxu0 0
    %6662 = vmatpush1.bf16.msra.mxu0 0
    %6663 = vmatprep.subr.bf16.mxu0 0
    %6664 = vmatpush1.bf16.msra.mxu0 0
    %6665 = vmatprep.subr.bf16.mxu0 0
    %6666 = vmatpush1.bf16.msra.mxu0 0
    %6667 = vmatprep.subr.bf16.mxu0 0
    %6668 = vmatpush1.bf16.msra.mxu0 0
    %6669 = vmatprep.subr.bf16.mxu0 0
    %6670 = vmatpush1.bf16.msra.mxu0 0
    %6671 = vmatprep.subr.bf16.mxu0 0
    %6672 = vmatpush1.bf16.msra.mxu0 0
    %6673 = vmatprep.subr.bf16.mxu0 0
    %6674 = vmatpush1.bf16.msra.mxu0 0
    %6675 = vmatprep.mubr.bf16.mxu0 0
    %6676 = vmatmul.mubr.bf16.gmra.mrb[0].mxu0 %v6627
    %v6677 = vpop.f32.mrb[0].mxu0
    %v6678 = vadd.f32 %v6641, %v6677
    %v6679 = vpop.f32.mrb[0].mxu0
    %v6680 = vpop.f32.mrb[0].mxu0
    %v6681 = vadd.f32 %v6641, %v6680
    %v6682 = vpop.f32.mrb[0].mxu0
    %6683 = vdwg.mxu0
    %6684 = vst [vmem:[#allocation31] sm:$0xff] %v6678
    %6685 = vst [vmem:[#allocation31 + $0x8] sm:$0xff] %v6681
    // Predicated region
    $region118: #{tpu_custom_call.1} parent=1 // pred_check
      _
    $region119: #{tpu_custom_call.1} parent=1 // pred_check_branch
      %6687 = sbr.rel (0) target = $region121
    $region120: #{tpu_custom_call.1} parent=1 // pred_region
      %s6689 = ssub.s32 256, 256
      %6690 = vsyncadd [#allocation12], %s6689
      %s6691 = sshll.u32 [#allocation31], 4
      %s6692 = int_to_ptr.vmem [resolvable:$true] %s6691
      %6697 = dma.vmem_to_hbm [thread:$0]  %s6692, 256, %s20, [#allocation12], 128, 128, 8
    $region121: #{tpu_custom_call.1} parent=1 // pred_fallthru
      _
    // Predicated region
    $region122: #{tpu_custom_call.1} parent=1 // pred_check
      _
    $region123: #{tpu_custom_call.1} parent=1 // pred_check_branch
      %6699 = sbr.rel (0) target = $region125
    $region124: #{tpu_custom_call.1} parent=1 // pred_region
      %6700 = dma.done [#allocation12], 256
    $region125: #{tpu_custom_call.1} parent=1 // pred_fallthru
      _
    %6701 = vsyncpa [#allocation11], 1
    %6702 = vsyncpa [#allocation14], 1
    %6703 = vsyncpa [#allocation17], 1
    %6704 = vsyncpa [#allocation20], 1
    %6705 = vsyncpa [#allocation23], 1
    %6706 = vsyncpa [#allocation26], 1
    %6707 = vsyncpa [#allocation29], 1
    %6708 = vsyncpa [#allocation12], 1
  %6709 = vsyncmov [#allocation9]
  %s6710 = vpop.sfrf %6709
  %p6711 = scmp.eq.s32.totalorder %s6710, 0
  %p6712 = pneg %p6711
  %6714 = shalt.err (%p6712)
  %s6715 = scalar_lea.sflag [#allocation9], 1
  %6716 = vsyncmov %s6715
  %s6717 = vpop.sfrf %6716
  %p6718 = scmp.eq.s32.totalorder %s6717, 0
  %p6719 = pneg %p6718
  %6721 = shalt.err (%p6719)
  %s6722 = scalar_lea.sflag [#allocation9], 2
  %6723 = vsyncmov %s6722
  %s6724 = vpop.sfrf %6723
  %p6725 = scmp.eq.s32.totalorder %s6724, 0
  %p6726 = pneg %p6725
  %6728 = shalt.err (%p6726)
  %s6729 = scalar_lea.sflag [#allocation9], 3
  %6730 = vsyncmov %s6729
  %s6731 = vpop.sfrf %6730
  %p6732 = scmp.eq.s32.totalorder %s6731, 0
  %p6733 = pneg %p6732
  %6735 = shalt.err (%p6733)
  %s6736 = scalar_lea.sflag [#allocation9], 4
  %6737 = vsyncmov %s6736
  %s6738 = vpop.sfrf %6737
  %p6739 = scmp.eq.s32.totalorder %s6738, 0
  %p6740 = pneg %p6739
  %6742 = shalt.err (%p6740)
  %s6743 = scalar_lea.sflag [#allocation9], 5
  %6744 = vsyncmov %s6743
  %s6745 = vpop.sfrf %6744
  %p6746 = scmp.eq.s32.totalorder %s6745, 0
  %p6747 = pneg %p6746
  %6749 = shalt.err (%p6747)
  %s6750 = scalar_lea.sflag [#allocation9], 6
  %6751 = vsyncmov %s6750
  %s6752 = vpop.sfrf %6751
  %p6753 = scmp.eq.s32.totalorder %s6752, 0
  %p6754 = pneg %p6753
  %6756 = shalt.err (%p6754)

</llo_original>
